<compile_context>
chip_gen: v7x
topology: tpu7x:2x2x1
jax: 0.10.0
libtpu: 0.0.40
codegen_flags: <defaults>
</compile_context>

<pallas_src>
import numpy as np
import jax
import jax.numpy as jnp
from jax.experimental import pallas as pl
from jax.experimental.pallas import tpu as pltpu


def _make_fused_kernel(c, H, W, Ha, Wa, th, tw, p):
    pp = float(p * p)

    def kernel(x1_ref, x2_ref,
               w1_ref, b1_ref, cv1_ref,
               w2_ref, b2_ref, cv2_ref,
               prow_ref, prow_t_ref, pcol_ref, pcol_t_ref,
               rexp_ref, cexp_ref,
               out_ref):
        x1 = x1_ref[...][0]          # (c, Ha, Wa)
        x2 = x2_ref[...][0]

        # crop once per input (one relayout instead of one per channel)
        x1c = x1[:, th:th + H, tw:tw + W]   # (c, H, W)
        x2c = x2[:, th:th + H, tw:tw + W]

        prow = prow_ref[...]         # (Hp, H)   one-hot row-pooling
        prow_t = prow_t_ref[...]     # (H, Hp)
        pcol = pcol_ref[...]         # (W, Wp)   one-hot col-pooling
        pcol_t = pcol_t_ref[...]     # (Wp, W)

        # per-window edge masks (window-local ReflectionPad2d(1)), computed once.
        # Float floor-div trick avoids vector integer div/rem; exact here.
        col_i = jax.lax.broadcasted_iota(jnp.int32, (H, W), 1).astype(jnp.float32)
        row_i = jax.lax.broadcasted_iota(jnp.int32, (H, W), 0).astype(jnp.float32)
        col_pos = col_i - jnp.floor(col_i / float(p)) * float(p)
        row_pos = row_i - jnp.floor(row_i / float(p)) * float(p)
        col_first = col_pos < 0.5
        col_last = col_pos > float(p) - 1.5
        row_first = row_pos < 0.5
        row_last = row_pos > float(p) - 1.5

        zrow = jnp.zeros((3, W + 6), jnp.float32)
        zcol = jnp.zeros((H, 3), jnp.float32)

        def zpad3(v):                # zero pad by 3 on both spatial dims (conv7)
            return jnp.concatenate(
                [zrow, jnp.concatenate([zcol, v, zcol], axis=1), zrow], axis=0)

        def pool(v):                 # per-window sum: (H, W) -> (Hp, Wp)
            return jnp.dot(jnp.dot(prow, v, preferred_element_type=jnp.float32),
                           pcol, preferred_element_type=jnp.float32)

        def expand(v):               # per-window value -> pixels: (Hp, Wp) -> (H, W)
            return jnp.dot(jnp.dot(prow_t, v, preferred_element_type=jnp.float32),
                           pcol_t, preferred_element_type=jnp.float32)

        def branch_map(xc, w_ref, b_ref, cv_ref):
            # ---- 1x1 conv as channel-plane FMAs + channel mean / max ----
            s = None
            mx = None
            for co in range(c):
                acc = xc[0] * w_ref[co * c + 0]
                for ci in range(1, c):
                    acc = acc + xc[ci] * w_ref[co * c + ci]
                acc = acc + b_ref[co]
                if co == 0:
                    s, mx = acc, acc
                else:
                    s = s + acc
                    mx = jnp.maximum(mx, acc)
            mean = s * (1.0 / c)

            # ---- 7x7 conv, 2 -> 1, zero padding 3, weights as SMEM scalars ----
            acc7 = jnp.zeros((H, W), jnp.float32)
            for ci2, plane in enumerate((mean, mx)):
                xp = zpad3(plane)                          # (H+6, W+6)
                for ky in range(7):
                    row = xp[ky:ky + H, :]                 # (H, W+6)
                    for kx in range(7):
                        acc7 = acc7 + row[:, kx:kx + W] * cv_ref[ci2 * 49 + ky * 7 + kx]
            return acc7                                     # (H, W)

        def win_score(m):
            # unbiased per-window std (two-pass for numerical robustness)
            wmean = pool(m) * (1.0 / pp)                    # (Hp, Wp)
            dev = m - expand(wmean)
            var = pool(dev * dev) * (1.0 / (pp - 1.0))
            std = jnp.sqrt(jnp.maximum(var, 0.0))

            # window-local reflected 3x3 neighbours (ReflectionPad2d(1) per window)
            from_lt = jnp.roll(m, 1, axis=1)                # value at j taken from j-1
            from_rt = jnp.roll(m, -1, axis=1)               # value at j taken from j+1
            left = jnp.where(col_first, from_rt, from_lt)
            right = jnp.where(col_last, from_lt, from_rt)

            def vert(v):
                v_up = jnp.roll(v, 1, axis=0)               # from i-1
                v_dn = jnp.roll(v, -1, axis=0)              # from i+1
                return (jnp.where(row_first, v_dn, v_up),
                        jnp.where(row_last, v_up, v_dn))

            up, down = vert(m)
            ul, dl = vert(left)
            ur, dr = vert(right)
            gx = -ul + ur - 2.0 * left + 2.0 * right - dl + dr
            gy = -ul - 2.0 * up - ur + dl + 2.0 * down + dr
            grad = jnp.abs(gx) + jnp.abs(gy)
            avg_grad = pool(grad) * (1.0 / pp)
            return std + avg_grad                           # (Hp, Wp)

        m1 = branch_map(x1c, w1_ref, b1_ref, cv1_ref)
        m2 = branch_map(x2c, w2_ref, b2_ref, cv2_ref)

        s1 = win_score(m1)
        s2 = win_score(m2)
        mmax = jnp.maximum(s1, s2)
        e1 = jnp.exp(s1 - mmax)
        e2 = jnp.exp(s2 - mmax)
        wwin = e1 / (e1 + e2)                               # softmax channel 0, (Hp, Wp)

        # window_reverse + final ReflectionPad2d fused as one-hot expansion matmuls
        wfull = jnp.dot(jnp.dot(rexp_ref[...], wwin, preferred_element_type=jnp.float32),
                        cexp_ref[...], preferred_element_type=jnp.float32)   # (Ha, Wa)
        wb = wfull[None, :, :]
        out_ref[0] = (x1 * wb + x2 * (1.0 - wb)).astype(out_ref.dtype)

    return kernel


def inforpatch_addfusion_forward(x1, x2, params, patch, scale):
    bs, c, Ha, Wa = x1.shape
    img_h = 512 // scale
    img_w = 640 // scale
    assert 0 < img_h <= Ha and 0 < img_w <= Wa
    assert (Ha - img_h) % 2 == 0 and (Wa - img_w) % 2 == 0
    H, W = img_h, img_w
    th, tw = (Ha - H) // 2, (Wa - W) // 2
    p = patch
    assert p >= 2 and H % p == 0 and W % p == 0
    Hp, Wp = H // p, W // p
    pad_h, pad_w = th, tw
    assert pad_h <= H - 1 and pad_w <= W - 1            # ReflectionPad2d constraint

    # static one-hot pooling / expansion matrices (host numpy constants)
    prow = (np.arange(H)[None, :] // p == np.arange(Hp)[:, None]).astype(np.float32)   # (Hp, H)
    pcol = (np.arange(W)[:, None] // p == np.arange(Wp)[None, :]).astype(np.float32)   # (W, Wp)

    def reflect_idx(n_out, pad, n_in):
        i = np.arange(n_out) - pad
        i = np.where(i < 0, -i, i)
        i = np.where(i >= n_in, 2 * (n_in - 1) - i, i)
        return i

    row_src = reflect_idx(Ha, pad_h, H) // p            # (Ha,) -> window row
    col_src = reflect_idx(Wa, pad_w, W) // p            # (Wa,) -> window col
    rexp = (row_src[:, None] == np.arange(Hp)[None, :]).astype(np.float32)   # (Ha, Hp)
    cexp = (np.arange(Wp)[:, None] == col_src[None, :]).astype(np.float32)   # (Wp, Wa)

    kernel = _make_fused_kernel(c, H, W, Ha, Wa, th, tw, p)
    smem_spec = pl.BlockSpec(memory_space=pltpu.MemorySpace.SMEM)

    out = pl.pallas_call(
        kernel,
        out_shape=jax.ShapeDtypeStruct((bs, c, Ha, Wa), jnp.float32),
        grid=(bs,),
        in_specs=[
            pl.BlockSpec((1, c, Ha, Wa), lambda b: (b, 0, 0, 0)),   # x1 (full, uncropped)
            pl.BlockSpec((1, c, Ha, Wa), lambda b: (b, 0, 0, 0)),   # x2
            smem_spec, smem_spec, smem_spec,                        # conv1_w, conv1_b, cv1_w
            smem_spec, smem_spec, smem_spec,                        # conv2_w, conv2_b, cv2_w
            pl.BlockSpec((Hp, H), lambda b: (0, 0)),                # prow
            pl.BlockSpec((H, Hp), lambda b: (0, 0)),                # prow^T
            pl.BlockSpec((W, Wp), lambda b: (0, 0)),                # pcol
            pl.BlockSpec((Wp, W), lambda b: (0, 0)),                # pcol^T
            pl.BlockSpec((Ha, Hp), lambda b: (0, 0)),               # row expansion (reflect)
            pl.BlockSpec((Wp, Wa), lambda b: (0, 0)),               # col expansion (reflect)
        ],
        out_specs=pl.BlockSpec((1, c, Ha, Wa), lambda b: (b, 0, 0, 0)),
        compiler_params=pltpu.CompilerParams(
            dimension_semantics=("parallel",),
            vmem_limit_bytes=64 << 20),
    )(
        x1.astype(jnp.float32), x2.astype(jnp.float32),
        params['conv1_w'].reshape(-1).astype(jnp.float32),
        params['conv1_b'].reshape(-1).astype(jnp.float32),
        params['cv1_w'].reshape(-1).astype(jnp.float32),
        params['conv2_w'].reshape(-1).astype(jnp.float32),
        params['conv2_b'].reshape(-1).astype(jnp.float32),
        params['cv2_w'].reshape(-1).astype(jnp.float32),
        jnp.asarray(prow), jnp.asarray(np.ascontiguousarray(prow.T)),
        jnp.asarray(pcol), jnp.asarray(np.ascontiguousarray(pcol.T)),
        jnp.asarray(rexp), jnp.asarray(cexp),
    )
    return out


# ------------------------------------------------------------------
# pure-JAX reference (mirrors the PyTorch module) for a correctness check
# ------------------------------------------------------------------
def _reference_forward(x1, x2, params, patch, scale):
    bs, c, Ha, Wa = x1.shape
    img_h, img_w = 512 // scale, 640 // scale
    th, tw = (Ha - img_h) // 2, (Wa - img_w) // 2
    H, W = img_h, img_w
    p = patch
    Hp, Wp = H // p, W // p
    x1c = x1[:, :, th:th + H, tw:tw + W]
    x2c = x2[:, :, th:th + H, tw:tw + W]

    def branch(xc, w, b, cv):
        y = jnp.einsum('oc,bchw->bohw', w, xc) + b[None, :, None, None]
        st = jnp.stack([jnp.mean(y, axis=1), jnp.max(y, axis=1)], axis=1)
        stp = jnp.pad(st, ((0, 0), (0, 0), (3, 3), (3, 3)))
        out = jnp.zeros((bs, H, W), jnp.float32)
        for ci in range(2):
            for ky in range(7):
                for kx in range(7):
                    out = out + stp[:, ci, ky:ky + H, kx:kx + W] * cv[ci, ky, kx]
        return out

    m1 = branch(x1c, params['conv1_w'], params['conv1_b'], params['cv1_w'])
    m2 = branch(x2c, params['conv2_w'], params['conv2_b'], params['cv2_w'])
    m12 = jnp.stack([m1, m2], axis=1)
    win = m12.reshape(bs, 2, Hp, p, Wp, p).transpose(0, 1, 2, 4, 3, 5)
    win = win.reshape(bs, 2, Hp * Wp, p, p)
    wmean = win.mean(axis=(-1, -2), keepdims=True)
    var = ((win - wmean) ** 2).sum(axis=(-1, -2)) / (p * p - 1)
    std = jnp.sqrt(var)
    wp_ = jnp.pad(win, ((0, 0), (0, 0), (0, 0), (1, 1), (1, 1)), mode='reflect')
    gx = (-wp_[..., 0:p, 0:p] + wp_[..., 0:p, 2:p + 2]
          - 2 * wp_[..., 1:p + 1, 0:p] + 2 * wp_[..., 1:p + 1, 2:p + 2]
          - wp_[..., 2:p + 2, 0:p] + wp_[..., 2:p + 2, 2:p + 2])
    gy = (-wp_[..., 0:p, 0:p] - 2 * wp_[..., 0:p, 1:p + 1] - wp_[..., 0:p, 2:p + 2]
          + wp_[..., 2:p + 2, 0:p] + 2 * wp_[..., 2:p + 2, 1:p + 1] + wp_[..., 2:p + 2, 2:p + 2])
    avg_grad = (jnp.abs(gx) + jnp.abs(gy)).sum(axis=(-1, -2)) / (p * p)
    w12 = std + avg_grad
    w1 = jax.nn.softmax(w12, axis=1)[:, 0]
    wgrid = w1.reshape(bs, Hp, Wp)
    wmap = jnp.repeat(jnp.repeat(wgrid, p, axis=1), p, axis=2)
    wfull = jnp.pad(wmap, ((0, 0), (th, th), (tw, tw)), mode='reflect')[:, None]
    return x1 * wfull + x2 * (1.0 - wfull)


if __name__ == "__main__":
    bs, c = 2, 4
    Ha, Wa = 20, 24
    patch, scale = 4, 32        # crop -> 16 x 20, 4 x 5 = 20 windows, reflect pads (2, 2)

    key = jax.random.PRNGKey(0)
    keys = jax.random.split(key, 8)
    params = {
        'conv1_w': jax.random.normal(keys[0], (c, c), jnp.float32) * 0.2,
        'conv1_b': jax.random.normal(keys[1], (c,), jnp.float32) * 0.1,
        'conv2_w': jax.random.normal(keys[2], (c, c), jnp.float32) * 0.2,
        'conv2_b': jax.random.normal(keys[3], (c,), jnp.float32) * 0.1,
        'cv1_w': jax.random.normal(keys[4], (2, 7, 7), jnp.float32) * 0.1,
        'cv2_w': jax.random.normal(keys[5], (2, 7, 7), jnp.float32) * 0.1,
    }
    x1 = jax.random.normal(keys[6], (bs, c, Ha, Wa), jnp.float32)
    x2 = jax.random.normal(keys[7], (bs, c, Ha, Wa), jnp.float32)

    out = inforpatch_addfusion_forward(x1, x2, params, patch=patch, scale=scale)
    out = jax.block_until_ready(out)
    assert out.shape == (bs, c, Ha, Wa)

    ref = _reference_forward(x1, x2, params, patch=patch, scale=scale)
    ref = jax.block_until_ready(ref)
    # loose tolerance: kernel pooling/expansion run on the MXU whose default f32
    # precision may use reduced-precision passes; structural bugs are >> this.
    assert jnp.allclose(out, ref, atol=3e-2, rtol=3e-2), float(jnp.max(jnp.abs(out - ref)))

    print("KERNEL_OK")
</pallas_src>

<mosaic_0001>
module attributes {stable_mosaic.version = 11 : i64} {
  func.func @kernel(%arg0: i32, %arg1: memref<1x4x20x24xf32, #tpu.memory_space<vmem>>, %arg2: memref<1x4x20x24xf32, #tpu.memory_space<vmem>>, %arg3: memref<16xf32, #tpu.memory_space<smem>>, %arg4: memref<4xf32, #tpu.memory_space<smem>>, %arg5: memref<98xf32, #tpu.memory_space<smem>>, %arg6: memref<16xf32, #tpu.memory_space<smem>>, %arg7: memref<4xf32, #tpu.memory_space<smem>>, %arg8: memref<98xf32, #tpu.memory_space<smem>>, %arg9: memref<4x16xf32, #tpu.memory_space<vmem>>, %arg10: memref<16x4xf32, #tpu.memory_space<vmem>>, %arg11: memref<20x5xf32, #tpu.memory_space<vmem>>, %arg12: memref<5x20xf32, #tpu.memory_space<vmem>>, %arg13: memref<20x4xf32, #tpu.memory_space<vmem>>, %arg14: memref<5x24xf32, #tpu.memory_space<vmem>>, %arg15: memref<1x4x20x24xf32, #tpu.memory_space<vmem>>) attributes {dimension_semantics = [#tpu.dimension_semantics<parallel>], iteration_bounds = array<i64: 2>, scalar_prefetch = 0 : i64, scratch_operands = 0 : i64, tpu.core_type = #tpu.core_type<tc>, window_params = [{transform_indices = @transform_0, window_bounds = array<i64: 1, 4, 20, 24>}, {transform_indices = @transform_1, window_bounds = array<i64: 1, 4, 20, 24>}, {transform_indices = @transform_2, window_bounds = array<i64: 16>}, {transform_indices = @transform_3, window_bounds = array<i64: 4>}, {transform_indices = @transform_4, window_bounds = array<i64: 98>}, {transform_indices = @transform_5, window_bounds = array<i64: 16>}, {transform_indices = @transform_6, window_bounds = array<i64: 4>}, {transform_indices = @transform_7, window_bounds = array<i64: 98>}, {pipeline_mode = #tpu.pipeline_mode<synchronous>, transform_indices = @transform_8, window_bounds = array<i64: 4, 16>}, {pipeline_mode = #tpu.pipeline_mode<synchronous>, transform_indices = @transform_9, window_bounds = array<i64: 16, 4>}, {pipeline_mode = #tpu.pipeline_mode<synchronous>, transform_indices = @transform_10, window_bounds = array<i64: 20, 5>}, {pipeline_mode = #tpu.pipeline_mode<synchronous>, transform_indices = @transform_11, window_bounds = array<i64: 5, 20>}, {pipeline_mode = #tpu.pipeline_mode<synchronous>, transform_indices = @transform_12, window_bounds = array<i64: 20, 4>}, {pipeline_mode = #tpu.pipeline_mode<synchronous>, transform_indices = @transform_13, window_bounds = array<i64: 5, 24>}, {transform_indices = @transform_14, window_bounds = array<i64: 1, 4, 20, 24>}]} {
    %c0 = arith.constant 0 : index
    %c0_0 = arith.constant 0 : index
    %c0_1 = arith.constant 0 : index
    %c0_2 = arith.constant 0 : index
    %0 = vector.load %arg1[%c0, %c0_0, %c0_1, %c0_2] : memref<1x4x20x24xf32, #tpu.memory_space<vmem>>, vector<1x4x20x24xf32>
    %1 = vector.shape_cast %0 : vector<1x4x20x24xf32> to vector<4x20x24xf32>
    %c0_3 = arith.constant 0 : index
    %c0_4 = arith.constant 0 : index
    %c0_5 = arith.constant 0 : index
    %c0_6 = arith.constant 0 : index
    %2 = vector.load %arg2[%c0_3, %c0_4, %c0_5, %c0_6] : memref<1x4x20x24xf32, #tpu.memory_space<vmem>>, vector<1x4x20x24xf32>
    %3 = vector.shape_cast %2 : vector<1x4x20x24xf32> to vector<4x20x24xf32>
    %4 = vector.extract_strided_slice %1 {offsets = [0, 2, 2], sizes = [4, 16, 20], strides = [1, 1, 1]} : vector<4x20x24xf32> to vector<4x16x20xf32>
    %5 = vector.extract_strided_slice %3 {offsets = [0, 2, 2], sizes = [4, 16, 20], strides = [1, 1, 1]} : vector<4x20x24xf32> to vector<4x16x20xf32>
    %c0_7 = arith.constant 0 : index
    %c0_8 = arith.constant 0 : index
    %6 = vector.load %arg9[%c0_7, %c0_8] : memref<4x16xf32, #tpu.memory_space<vmem>>, vector<4x16xf32>
    %c0_9 = arith.constant 0 : index
    %c0_10 = arith.constant 0 : index
    %7 = vector.load %arg10[%c0_9, %c0_10] : memref<16x4xf32, #tpu.memory_space<vmem>>, vector<16x4xf32>
    %c0_11 = arith.constant 0 : index
    %c0_12 = arith.constant 0 : index
    %8 = vector.load %arg11[%c0_11, %c0_12] : memref<20x5xf32, #tpu.memory_space<vmem>>, vector<20x5xf32>
    %c0_13 = arith.constant 0 : index
    %c0_14 = arith.constant 0 : index
    %9 = vector.load %arg12[%c0_13, %c0_14] : memref<5x20xf32, #tpu.memory_space<vmem>>, vector<5x20xf32>
    %10 = tpu.iota {dimensions = array<i32: 1>} : vector<16x20xi32>
    %11 = arith.sitofp %10 : vector<16x20xi32> to vector<16x20xf32>
    %12 = tpu.iota {dimensions = array<i32: 0>} : vector<16x20xi32>
    %13 = arith.sitofp %12 : vector<16x20xi32> to vector<16x20xf32>
    %cst = arith.constant 4.000000e+00 : f32
    %14 = vector.broadcast %cst : f32 to vector<16x20xf32>
    %15 = arith.divf %11, %14 : vector<16x20xf32>
    %16 = math.floor %15 : vector<16x20xf32>
    %cst_15 = arith.constant 4.000000e+00 : f32
    %17 = vector.broadcast %cst_15 : f32 to vector<16x20xf32>
    %18 = arith.mulf %16, %17 : vector<16x20xf32>
    %19 = arith.subf %11, %18 : vector<16x20xf32>
    %cst_16 = arith.constant 4.000000e+00 : f32
    %20 = vector.broadcast %cst_16 : f32 to vector<16x20xf32>
    %21 = arith.divf %13, %20 : vector<16x20xf32>
    %22 = math.floor %21 : vector<16x20xf32>
    %cst_17 = arith.constant 4.000000e+00 : f32
    %23 = vector.broadcast %cst_17 : f32 to vector<16x20xf32>
    %24 = arith.mulf %22, %23 : vector<16x20xf32>
    %25 = arith.subf %13, %24 : vector<16x20xf32>
    %cst_18 = arith.constant 5.000000e-01 : f32
    %26 = vector.broadcast %cst_18 : f32 to vector<16x20xf32>
    %27 = arith.cmpf olt, %19, %26 : vector<16x20xf32>
    %cst_19 = arith.constant 2.500000e+00 : f32
    %28 = vector.broadcast %cst_19 : f32 to vector<16x20xf32>
    %29 = arith.cmpf ogt, %19, %28 : vector<16x20xf32>
    %cst_20 = arith.constant 5.000000e-01 : f32
    %30 = vector.broadcast %cst_20 : f32 to vector<16x20xf32>
    %31 = arith.cmpf olt, %25, %30 : vector<16x20xf32>
    %cst_21 = arith.constant 2.500000e+00 : f32
    %32 = vector.broadcast %cst_21 : f32 to vector<16x20xf32>
    %33 = arith.cmpf ogt, %25, %32 : vector<16x20xf32>
    %cst_22 = arith.constant 0.000000e+00 : f32
    %34 = vector.broadcast %cst_22 : f32 to vector<3x26xf32>
    %cst_23 = arith.constant 0.000000e+00 : f32
    %35 = vector.broadcast %cst_23 : f32 to vector<16x3xf32>
    %36 = vector.extract_strided_slice %4 {offsets = [0, 0, 0], sizes = [1, 16, 20], strides = [1, 1, 1]} : vector<4x16x20xf32> to vector<1x16x20xf32>
    %37 = vector.shape_cast %36 : vector<1x16x20xf32> to vector<16x20xf32>
    %c0_24 = arith.constant 0 : index
    %38 = memref.load %arg3[%c0_24] : memref<16xf32, #tpu.memory_space<smem>>
    %39 = vector.broadcast %38 : f32 to vector<16x20xf32>
    %40 = arith.mulf %37, %39 : vector<16x20xf32>
    %41 = vector.extract_strided_slice %4 {offsets = [1, 0, 0], sizes = [1, 16, 20], strides = [1, 1, 1]} : vector<4x16x20xf32> to vector<1x16x20xf32>
    %42 = vector.shape_cast %41 : vector<1x16x20xf32> to vector<16x20xf32>
    %c1 = arith.constant 1 : index
    %43 = memref.load %arg3[%c1] : memref<16xf32, #tpu.memory_space<smem>>
    %44 = vector.broadcast %43 : f32 to vector<16x20xf32>
    %45 = arith.mulf %42, %44 : vector<16x20xf32>
    %46 = arith.addf %40, %45 : vector<16x20xf32>
    %47 = vector.extract_strided_slice %4 {offsets = [2, 0, 0], sizes = [1, 16, 20], strides = [1, 1, 1]} : vector<4x16x20xf32> to vector<1x16x20xf32>
    %48 = vector.shape_cast %47 : vector<1x16x20xf32> to vector<16x20xf32>
    %c2 = arith.constant 2 : index
    %49 = memref.load %arg3[%c2] : memref<16xf32, #tpu.memory_space<smem>>
    %50 = vector.broadcast %49 : f32 to vector<16x20xf32>
    %51 = arith.mulf %48, %50 : vector<16x20xf32>
    %52 = arith.addf %46, %51 : vector<16x20xf32>
    %53 = vector.extract_strided_slice %4 {offsets = [3, 0, 0], sizes = [1, 16, 20], strides = [1, 1, 1]} : vector<4x16x20xf32> to vector<1x16x20xf32>
    %54 = vector.shape_cast %53 : vector<1x16x20xf32> to vector<16x20xf32>
    %c3 = arith.constant 3 : index
    %55 = memref.load %arg3[%c3] : memref<16xf32, #tpu.memory_space<smem>>
    %56 = vector.broadcast %55 : f32 to vector<16x20xf32>
    %57 = arith.mulf %54, %56 : vector<16x20xf32>
    %58 = arith.addf %52, %57 : vector<16x20xf32>
    %c0_25 = arith.constant 0 : index
    %59 = memref.load %arg4[%c0_25] : memref<4xf32, #tpu.memory_space<smem>>
    %60 = vector.broadcast %59 : f32 to vector<16x20xf32>
    %61 = arith.addf %58, %60 : vector<16x20xf32>
    %62 = vector.extract_strided_slice %4 {offsets = [0, 0, 0], sizes = [1, 16, 20], strides = [1, 1, 1]} : vector<4x16x20xf32> to vector<1x16x20xf32>
    %63 = vector.shape_cast %62 : vector<1x16x20xf32> to vector<16x20xf32>
    %c4 = arith.constant 4 : index
    %64 = memref.load %arg3[%c4] : memref<16xf32, #tpu.memory_space<smem>>
    %65 = vector.broadcast %64 : f32 to vector<16x20xf32>
    %66 = arith.mulf %63, %65 : vector<16x20xf32>
    %67 = vector.extract_strided_slice %4 {offsets = [1, 0, 0], sizes = [1, 16, 20], strides = [1, 1, 1]} : vector<4x16x20xf32> to vector<1x16x20xf32>
    %68 = vector.shape_cast %67 : vector<1x16x20xf32> to vector<16x20xf32>
    %c5 = arith.constant 5 : index
    %69 = memref.load %arg3[%c5] : memref<16xf32, #tpu.memory_space<smem>>
    %70 = vector.broadcast %69 : f32 to vector<16x20xf32>
    %71 = arith.mulf %68, %70 : vector<16x20xf32>
    %72 = arith.addf %66, %71 : vector<16x20xf32>
    %73 = vector.extract_strided_slice %4 {offsets = [2, 0, 0], sizes = [1, 16, 20], strides = [1, 1, 1]} : vector<4x16x20xf32> to vector<1x16x20xf32>
    %74 = vector.shape_cast %73 : vector<1x16x20xf32> to vector<16x20xf32>
    %c6 = arith.constant 6 : index
    %75 = memref.load %arg3[%c6] : memref<16xf32, #tpu.memory_space<smem>>
    %76 = vector.broadcast %75 : f32 to vector<16x20xf32>
    %77 = arith.mulf %74, %76 : vector<16x20xf32>
    %78 = arith.addf %72, %77 : vector<16x20xf32>
    %79 = vector.extract_strided_slice %4 {offsets = [3, 0, 0], sizes = [1, 16, 20], strides = [1, 1, 1]} : vector<4x16x20xf32> to vector<1x16x20xf32>
    %80 = vector.shape_cast %79 : vector<1x16x20xf32> to vector<16x20xf32>
    %c7 = arith.constant 7 : index
    %81 = memref.load %arg3[%c7] : memref<16xf32, #tpu.memory_space<smem>>
    %82 = vector.broadcast %81 : f32 to vector<16x20xf32>
    %83 = arith.mulf %80, %82 : vector<16x20xf32>
    %84 = arith.addf %78, %83 : vector<16x20xf32>
    %c1_26 = arith.constant 1 : index
    %85 = memref.load %arg4[%c1_26] : memref<4xf32, #tpu.memory_space<smem>>
    %86 = vector.broadcast %85 : f32 to vector<16x20xf32>
    %87 = arith.addf %84, %86 : vector<16x20xf32>
    %88 = arith.addf %61, %87 : vector<16x20xf32>
    %89 = arith.maximumf %61, %87 : vector<16x20xf32>
    %90 = vector.extract_strided_slice %4 {offsets = [0, 0, 0], sizes = [1, 16, 20], strides = [1, 1, 1]} : vector<4x16x20xf32> to vector<1x16x20xf32>
    %91 = vector.shape_cast %90 : vector<1x16x20xf32> to vector<16x20xf32>
    %c8 = arith.constant 8 : index
    %92 = memref.load %arg3[%c8] : memref<16xf32, #tpu.memory_space<smem>>
    %93 = vector.broadcast %92 : f32 to vector<16x20xf32>
    %94 = arith.mulf %91, %93 : vector<16x20xf32>
    %95 = vector.extract_strided_slice %4 {offsets = [1, 0, 0], sizes = [1, 16, 20], strides = [1, 1, 1]} : vector<4x16x20xf32> to vector<1x16x20xf32>
    %96 = vector.shape_cast %95 : vector<1x16x20xf32> to vector<16x20xf32>
    %c9 = arith.constant 9 : index
    %97 = memref.load %arg3[%c9] : memref<16xf32, #tpu.memory_space<smem>>
    %98 = vector.broadcast %97 : f32 to vector<16x20xf32>
    %99 = arith.mulf %96, %98 : vector<16x20xf32>
    %100 = arith.addf %94, %99 : vector<16x20xf32>
    %101 = vector.extract_strided_slice %4 {offsets = [2, 0, 0], sizes = [1, 16, 20], strides = [1, 1, 1]} : vector<4x16x20xf32> to vector<1x16x20xf32>
    %102 = vector.shape_cast %101 : vector<1x16x20xf32> to vector<16x20xf32>
    %c10 = arith.constant 10 : index
    %103 = memref.load %arg3[%c10] : memref<16xf32, #tpu.memory_space<smem>>
    %104 = vector.broadcast %103 : f32 to vector<16x20xf32>
    %105 = arith.mulf %102, %104 : vector<16x20xf32>
    %106 = arith.addf %100, %105 : vector<16x20xf32>
    %107 = vector.extract_strided_slice %4 {offsets = [3, 0, 0], sizes = [1, 16, 20], strides = [1, 1, 1]} : vector<4x16x20xf32> to vector<1x16x20xf32>
    %108 = vector.shape_cast %107 : vector<1x16x20xf32> to vector<16x20xf32>
    %c11 = arith.constant 11 : index
    %109 = memref.load %arg3[%c11] : memref<16xf32, #tpu.memory_space<smem>>
    %110 = vector.broadcast %109 : f32 to vector<16x20xf32>
    %111 = arith.mulf %108, %110 : vector<16x20xf32>
    %112 = arith.addf %106, %111 : vector<16x20xf32>
    %c2_27 = arith.constant 2 : index
    %113 = memref.load %arg4[%c2_27] : memref<4xf32, #tpu.memory_space<smem>>
    %114 = vector.broadcast %113 : f32 to vector<16x20xf32>
    %115 = arith.addf %112, %114 : vector<16x20xf32>
    %116 = arith.addf %88, %115 : vector<16x20xf32>
    %117 = arith.maximumf %89, %115 : vector<16x20xf32>
    %118 = vector.extract_strided_slice %4 {offsets = [0, 0, 0], sizes = [1, 16, 20], strides = [1, 1, 1]} : vector<4x16x20xf32> to vector<1x16x20xf32>
    %119 = vector.shape_cast %118 : vector<1x16x20xf32> to vector<16x20xf32>
    %c12 = arith.constant 12 : index
    %120 = memref.load %arg3[%c12] : memref<16xf32, #tpu.memory_space<smem>>
    %121 = vector.broadcast %120 : f32 to vector<16x20xf32>
    %122 = arith.mulf %119, %121 : vector<16x20xf32>
    %123 = vector.extract_strided_slice %4 {offsets = [1, 0, 0], sizes = [1, 16, 20], strides = [1, 1, 1]} : vector<4x16x20xf32> to vector<1x16x20xf32>
    %124 = vector.shape_cast %123 : vector<1x16x20xf32> to vector<16x20xf32>
    %c13 = arith.constant 13 : index
    %125 = memref.load %arg3[%c13] : memref<16xf32, #tpu.memory_space<smem>>
    %126 = vector.broadcast %125 : f32 to vector<16x20xf32>
    %127 = arith.mulf %124, %126 : vector<16x20xf32>
    %128 = arith.addf %122, %127 : vector<16x20xf32>
    %129 = vector.extract_strided_slice %4 {offsets = [2, 0, 0], sizes = [1, 16, 20], strides = [1, 1, 1]} : vector<4x16x20xf32> to vector<1x16x20xf32>
    %130 = vector.shape_cast %129 : vector<1x16x20xf32> to vector<16x20xf32>
    %c14 = arith.constant 14 : index
    %131 = memref.load %arg3[%c14] : memref<16xf32, #tpu.memory_space<smem>>
    %132 = vector.broadcast %131 : f32 to vector<16x20xf32>
    %133 = arith.mulf %130, %132 : vector<16x20xf32>
    %134 = arith.addf %128, %133 : vector<16x20xf32>
    %135 = vector.extract_strided_slice %4 {offsets = [3, 0, 0], sizes = [1, 16, 20], strides = [1, 1, 1]} : vector<4x16x20xf32> to vector<1x16x20xf32>
    %136 = vector.shape_cast %135 : vector<1x16x20xf32> to vector<16x20xf32>
    %c15 = arith.constant 15 : index
    %137 = memref.load %arg3[%c15] : memref<16xf32, #tpu.memory_space<smem>>
    %138 = vector.broadcast %137 : f32 to vector<16x20xf32>
    %139 = arith.mulf %136, %138 : vector<16x20xf32>
    %140 = arith.addf %134, %139 : vector<16x20xf32>
    %c3_28 = arith.constant 3 : index
    %141 = memref.load %arg4[%c3_28] : memref<4xf32, #tpu.memory_space<smem>>
    %142 = vector.broadcast %141 : f32 to vector<16x20xf32>
    %143 = arith.addf %140, %142 : vector<16x20xf32>
    %144 = arith.addf %116, %143 : vector<16x20xf32>
    %145 = arith.maximumf %117, %143 : vector<16x20xf32>
    %cst_29 = arith.constant 2.500000e-01 : f32
    %146 = vector.broadcast %cst_29 : f32 to vector<16x20xf32>
    %147 = arith.mulf %144, %146 : vector<16x20xf32>
    %cst_30 = arith.constant 0.000000e+00 : f32
    %148 = vector.broadcast %cst_30 : f32 to vector<16x20xf32>
    %149 = tpu.concatenate %35, %147, %35 in 1 : vector<16x3xf32>, vector<16x20xf32>, vector<16x3xf32> -> vector<16x26xf32>
    %150 = tpu.concatenate %34, %149, %34 in 0 : vector<3x26xf32>, vector<16x26xf32>, vector<3x26xf32> -> vector<22x26xf32>
    %151 = vector.extract_strided_slice %150 {offsets = [0, 0], sizes = [16, 26], strides = [1, 1]} : vector<22x26xf32> to vector<16x26xf32>
    %152 = vector.extract_strided_slice %151 {offsets = [0, 0], sizes = [16, 20], strides = [1, 1]} : vector<16x26xf32> to vector<16x20xf32>
    %c0_31 = arith.constant 0 : index
    %153 = memref.load %arg5[%c0_31] : memref<98xf32, #tpu.memory_space<smem>>
    %154 = vector.broadcast %153 : f32 to vector<16x20xf32>
    %155 = arith.mulf %152, %154 : vector<16x20xf32>
    %156 = arith.addf %148, %155 : vector<16x20xf32>
    %157 = vector.extract_strided_slice %151 {offsets = [0, 1], sizes = [16, 20], strides = [1, 1]} : vector<16x26xf32> to vector<16x20xf32>
    %c1_32 = arith.constant 1 : index
    %158 = memref.load %arg5[%c1_32] : memref<98xf32, #tpu.memory_space<smem>>
    %159 = vector.broadcast %158 : f32 to vector<16x20xf32>
    %160 = arith.mulf %157, %159 : vector<16x20xf32>
    %161 = arith.addf %156, %160 : vector<16x20xf32>
    %162 = vector.extract_strided_slice %151 {offsets = [0, 2], sizes = [16, 20], strides = [1, 1]} : vector<16x26xf32> to vector<16x20xf32>
    %c2_33 = arith.constant 2 : index
    %163 = memref.load %arg5[%c2_33] : memref<98xf32, #tpu.memory_space<smem>>
    %164 = vector.broadcast %163 : f32 to vector<16x20xf32>
    %165 = arith.mulf %162, %164 : vector<16x20xf32>
    %166 = arith.addf %161, %165 : vector<16x20xf32>
    %167 = vector.extract_strided_slice %151 {offsets = [0, 3], sizes = [16, 20], strides = [1, 1]} : vector<16x26xf32> to vector<16x20xf32>
    %c3_34 = arith.constant 3 : index
    %168 = memref.load %arg5[%c3_34] : memref<98xf32, #tpu.memory_space<smem>>
    %169 = vector.broadcast %168 : f32 to vector<16x20xf32>
    %170 = arith.mulf %167, %169 : vector<16x20xf32>
    %171 = arith.addf %166, %170 : vector<16x20xf32>
    %172 = vector.extract_strided_slice %151 {offsets = [0, 4], sizes = [16, 20], strides = [1, 1]} : vector<16x26xf32> to vector<16x20xf32>
    %c4_35 = arith.constant 4 : index
    %173 = memref.load %arg5[%c4_35] : memref<98xf32, #tpu.memory_space<smem>>
    %174 = vector.broadcast %173 : f32 to vector<16x20xf32>
    %175 = arith.mulf %172, %174 : vector<16x20xf32>
    %176 = arith.addf %171, %175 : vector<16x20xf32>
    %177 = vector.extract_strided_slice %151 {offsets = [0, 5], sizes = [16, 20], strides = [1, 1]} : vector<16x26xf32> to vector<16x20xf32>
    %c5_36 = arith.constant 5 : index
    %178 = memref.load %arg5[%c5_36] : memref<98xf32, #tpu.memory_space<smem>>
    %179 = vector.broadcast %178 : f32 to vector<16x20xf32>
    %180 = arith.mulf %177, %179 : vector<16x20xf32>
    %181 = arith.addf %176, %180 : vector<16x20xf32>
    %182 = vector.extract_strided_slice %151 {offsets = [0, 6], sizes = [16, 20], strides = [1, 1]} : vector<16x26xf32> to vector<16x20xf32>
    %c6_37 = arith.constant 6 : index
    %183 = memref.load %arg5[%c6_37] : memref<98xf32, #tpu.memory_space<smem>>
    %184 = vector.broadcast %183 : f32 to vector<16x20xf32>
    %185 = arith.mulf %182, %184 : vector<16x20xf32>
    %186 = arith.addf %181, %185 : vector<16x20xf32>
    %187 = vector.extract_strided_slice %150 {offsets = [1, 0], sizes = [16, 26], strides = [1, 1]} : vector<22x26xf32> to vector<16x26xf32>
    %188 = vector.extract_strided_slice %187 {offsets = [0, 0], sizes = [16, 20], strides = [1, 1]} : vector<16x26xf32> to vector<16x20xf32>
    %c7_38 = arith.constant 7 : index
    %189 = memref.load %arg5[%c7_38] : memref<98xf32, #tpu.memory_space<smem>>
    %190 = vector.broadcast %189 : f32 to vector<16x20xf32>
    %191 = arith.mulf %188, %190 : vector<16x20xf32>
    %192 = arith.addf %186, %191 : vector<16x20xf32>
    %193 = vector.extract_strided_slice %187 {offsets = [0, 1], sizes = [16, 20], strides = [1, 1]} : vector<16x26xf32> to vector<16x20xf32>
    %c8_39 = arith.constant 8 : index
    %194 = memref.load %arg5[%c8_39] : memref<98xf32, #tpu.memory_space<smem>>
    %195 = vector.broadcast %194 : f32 to vector<16x20xf32>
    %196 = arith.mulf %193, %195 : vector<16x20xf32>
    %197 = arith.addf %192, %196 : vector<16x20xf32>
    %198 = vector.extract_strided_slice %187 {offsets = [0, 2], sizes = [16, 20], strides = [1, 1]} : vector<16x26xf32> to vector<16x20xf32>
    %c9_40 = arith.constant 9 : index
    %199 = memref.load %arg5[%c9_40] : memref<98xf32, #tpu.memory_space<smem>>
    %200 = vector.broadcast %199 : f32 to vector<16x20xf32>
    %201 = arith.mulf %198, %200 : vector<16x20xf32>
    %202 = arith.addf %197, %201 : vector<16x20xf32>
    %203 = vector.extract_strided_slice %187 {offsets = [0, 3], sizes = [16, 20], strides = [1, 1]} : vector<16x26xf32> to vector<16x20xf32>
    %c10_41 = arith.constant 10 : index
    %204 = memref.load %arg5[%c10_41] : memref<98xf32, #tpu.memory_space<smem>>
    %205 = vector.broadcast %204 : f32 to vector<16x20xf32>
    %206 = arith.mulf %203, %205 : vector<16x20xf32>
    %207 = arith.addf %202, %206 : vector<16x20xf32>
    %208 = vector.extract_strided_slice %187 {offsets = [0, 4], sizes = [16, 20], strides = [1, 1]} : vector<16x26xf32> to vector<16x20xf32>
    %c11_42 = arith.constant 11 : index
    %209 = memref.load %arg5[%c11_42] : memref<98xf32, #tpu.memory_space<smem>>
    %210 = vector.broadcast %209 : f32 to vector<16x20xf32>
    %211 = arith.mulf %208, %210 : vector<16x20xf32>
    %212 = arith.addf %207, %211 : vector<16x20xf32>
    %213 = vector.extract_strided_slice %187 {offsets = [0, 5], sizes = [16, 20], strides = [1, 1]} : vector<16x26xf32> to vector<16x20xf32>
    %c12_43 = arith.constant 12 : index
    %214 = memref.load %arg5[%c12_43] : memref<98xf32, #tpu.memory_space<smem>>
    %215 = vector.broadcast %214 : f32 to vector<16x20xf32>
    %216 = arith.mulf %213, %215 : vector<16x20xf32>
    %217 = arith.addf %212, %216 : vector<16x20xf32>
    %218 = vector.extract_strided_slice %187 {offsets = [0, 6], sizes = [16, 20], strides = [1, 1]} : vector<16x26xf32> to vector<16x20xf32>
    %c13_44 = arith.constant 13 : index
    %219 = memref.load %arg5[%c13_44] : memref<98xf32, #tpu.memory_space<smem>>
    %220 = vector.broadcast %219 : f32 to vector<16x20xf32>
    %221 = arith.mulf %218, %220 : vector<16x20xf32>
    %222 = arith.addf %217, %221 : vector<16x20xf32>
    %223 = vector.extract_strided_slice %150 {offsets = [2, 0], sizes = [16, 26], strides = [1, 1]} : vector<22x26xf32> to vector<16x26xf32>
    %224 = vector.extract_strided_slice %223 {offsets = [0, 0], sizes = [16, 20], strides = [1, 1]} : vector<16x26xf32> to vector<16x20xf32>
    %c14_45 = arith.constant 14 : index
    %225 = memref.load %arg5[%c14_45] : memref<98xf32, #tpu.memory_space<smem>>
    %226 = vector.broadcast %225 : f32 to vector<16x20xf32>
    %227 = arith.mulf %224, %226 : vector<16x20xf32>
    %228 = arith.addf %222, %227 : vector<16x20xf32>
    %229 = vector.extract_strided_slice %223 {offsets = [0, 1], sizes = [16, 20], strides = [1, 1]} : vector<16x26xf32> to vector<16x20xf32>
    %c15_46 = arith.constant 15 : index
    %230 = memref.load %arg5[%c15_46] : memref<98xf32, #tpu.memory_space<smem>>
    %231 = vector.broadcast %230 : f32 to vector<16x20xf32>
    %232 = arith.mulf %229, %231 : vector<16x20xf32>
    %233 = arith.addf %228, %232 : vector<16x20xf32>
    %234 = vector.extract_strided_slice %223 {offsets = [0, 2], sizes = [16, 20], strides = [1, 1]} : vector<16x26xf32> to vector<16x20xf32>
    %c16 = arith.constant 16 : index
    %235 = memref.load %arg5[%c16] : memref<98xf32, #tpu.memory_space<smem>>
    %236 = vector.broadcast %235 : f32 to vector<16x20xf32>
    %237 = arith.mulf %234, %236 : vector<16x20xf32>
    %238 = arith.addf %233, %237 : vector<16x20xf32>
    %239 = vector.extract_strided_slice %223 {offsets = [0, 3], sizes = [16, 20], strides = [1, 1]} : vector<16x26xf32> to vector<16x20xf32>
    %c17 = arith.constant 17 : index
    %240 = memref.load %arg5[%c17] : memref<98xf32, #tpu.memory_space<smem>>
    %241 = vector.broadcast %240 : f32 to vector<16x20xf32>
    %242 = arith.mulf %239, %241 : vector<16x20xf32>
    %243 = arith.addf %238, %242 : vector<16x20xf32>
    %244 = vector.extract_strided_slice %223 {offsets = [0, 4], sizes = [16, 20], strides = [1, 1]} : vector<16x26xf32> to vector<16x20xf32>
    %c18 = arith.constant 18 : index
    %245 = memref.load %arg5[%c18] : memref<98xf32, #tpu.memory_space<smem>>
    %246 = vector.broadcast %245 : f32 to vector<16x20xf32>
    %247 = arith.mulf %244, %246 : vector<16x20xf32>
    %248 = arith.addf %243, %247 : vector<16x20xf32>
    %249 = vector.extract_strided_slice %223 {offsets = [0, 5], sizes = [16, 20], strides = [1, 1]} : vector<16x26xf32> to vector<16x20xf32>
    %c19 = arith.constant 19 : index
    %250 = memref.load %arg5[%c19] : memref<98xf32, #tpu.memory_space<smem>>
    %251 = vector.broadcast %250 : f32 to vector<16x20xf32>
    %252 = arith.mulf %249, %251 : vector<16x20xf32>
    %253 = arith.addf %248, %252 : vector<16x20xf32>
    %254 = vector.extract_strided_slice %223 {offsets = [0, 6], sizes = [16, 20], strides = [1, 1]} : vector<16x26xf32> to vector<16x20xf32>
    %c20 = arith.constant 20 : index
    %255 = memref.load %arg5[%c20] : memref<98xf32, #tpu.memory_space<smem>>
    %256 = vector.broadcast %255 : f32 to vector<16x20xf32>
    %257 = arith.mulf %254, %256 : vector<16x20xf32>
    %258 = arith.addf %253, %257 : vector<16x20xf32>
    %259 = vector.extract_strided_slice %150 {offsets = [3, 0], sizes = [16, 26], strides = [1, 1]} : vector<22x26xf32> to vector<16x26xf32>
    %260 = vector.extract_strided_slice %259 {offsets = [0, 0], sizes = [16, 20], strides = [1, 1]} : vector<16x26xf32> to vector<16x20xf32>
    %c21 = arith.constant 21 : index
    %261 = memref.load %arg5[%c21] : memref<98xf32, #tpu.memory_space<smem>>
    %262 = vector.broadcast %261 : f32 to vector<16x20xf32>
    %263 = arith.mulf %260, %262 : vector<16x20xf32>
    %264 = arith.addf %258, %263 : vector<16x20xf32>
    %265 = vector.extract_strided_slice %259 {offsets = [0, 1], sizes = [16, 20], strides = [1, 1]} : vector<16x26xf32> to vector<16x20xf32>
    %c22 = arith.constant 22 : index
    %266 = memref.load %arg5[%c22] : memref<98xf32, #tpu.memory_space<smem>>
    %267 = vector.broadcast %266 : f32 to vector<16x20xf32>
    %268 = arith.mulf %265, %267 : vector<16x20xf32>
    %269 = arith.addf %264, %268 : vector<16x20xf32>
    %270 = vector.extract_strided_slice %259 {offsets = [0, 2], sizes = [16, 20], strides = [1, 1]} : vector<16x26xf32> to vector<16x20xf32>
    %c23 = arith.constant 23 : index
    %271 = memref.load %arg5[%c23] : memref<98xf32, #tpu.memory_space<smem>>
    %272 = vector.broadcast %271 : f32 to vector<16x20xf32>
    %273 = arith.mulf %270, %272 : vector<16x20xf32>
    %274 = arith.addf %269, %273 : vector<16x20xf32>
    %275 = vector.extract_strided_slice %259 {offsets = [0, 3], sizes = [16, 20], strides = [1, 1]} : vector<16x26xf32> to vector<16x20xf32>
    %c24 = arith.constant 24 : index
    %276 = memref.load %arg5[%c24] : memref<98xf32, #tpu.memory_space<smem>>
    %277 = vector.broadcast %276 : f32 to vector<16x20xf32>
    %278 = arith.mulf %275, %277 : vector<16x20xf32>
    %279 = arith.addf %274, %278 : vector<16x20xf32>
    %280 = vector.extract_strided_slice %259 {offsets = [0, 4], sizes = [16, 20], strides = [1, 1]} : vector<16x26xf32> to vector<16x20xf32>
    %c25 = arith.constant 25 : index
    %281 = memref.load %arg5[%c25] : memref<98xf32, #tpu.memory_space<smem>>
    %282 = vector.broadcast %281 : f32 to vector<16x20xf32>
    %283 = arith.mulf %280, %282 : vector<16x20xf32>
    %284 = arith.addf %279, %283 : vector<16x20xf32>
    %285 = vector.extract_strided_slice %259 {offsets = [0, 5], sizes = [16, 20], strides = [1, 1]} : vector<16x26xf32> to vector<16x20xf32>
    %c26 = arith.constant 26 : index
    %286 = memref.load %arg5[%c26] : memref<98xf32, #tpu.memory_space<smem>>
    %287 = vector.broadcast %286 : f32 to vector<16x20xf32>
    %288 = arith.mulf %285, %287 : vector<16x20xf32>
    %289 = arith.addf %284, %288 : vector<16x20xf32>
    %290 = vector.extract_strided_slice %259 {offsets = [0, 6], sizes = [16, 20], strides = [1, 1]} : vector<16x26xf32> to vector<16x20xf32>
    %c27 = arith.constant 27 : index
    %291 = memref.load %arg5[%c27] : memref<98xf32, #tpu.memory_space<smem>>
    %292 = vector.broadcast %291 : f32 to vector<16x20xf32>
    %293 = arith.mulf %290, %292 : vector<16x20xf32>
    %294 = arith.addf %289, %293 : vector<16x20xf32>
    %295 = vector.extract_strided_slice %150 {offsets = [4, 0], sizes = [16, 26], strides = [1, 1]} : vector<22x26xf32> to vector<16x26xf32>
    %296 = vector.extract_strided_slice %295 {offsets = [0, 0], sizes = [16, 20], strides = [1, 1]} : vector<16x26xf32> to vector<16x20xf32>
    %c28 = arith.constant 28 : index
    %297 = memref.load %arg5[%c28] : memref<98xf32, #tpu.memory_space<smem>>
    %298 = vector.broadcast %297 : f32 to vector<16x20xf32>
    %299 = arith.mulf %296, %298 : vector<16x20xf32>
    %300 = arith.addf %294, %299 : vector<16x20xf32>
    %301 = vector.extract_strided_slice %295 {offsets = [0, 1], sizes = [16, 20], strides = [1, 1]} : vector<16x26xf32> to vector<16x20xf32>
    %c29 = arith.constant 29 : index
    %302 = memref.load %arg5[%c29] : memref<98xf32, #tpu.memory_space<smem>>
    %303 = vector.broadcast %302 : f32 to vector<16x20xf32>
    %304 = arith.mulf %301, %303 : vector<16x20xf32>
    %305 = arith.addf %300, %304 : vector<16x20xf32>
    %306 = vector.extract_strided_slice %295 {offsets = [0, 2], sizes = [16, 20], strides = [1, 1]} : vector<16x26xf32> to vector<16x20xf32>
    %c30 = arith.constant 30 : index
    %307 = memref.load %arg5[%c30] : memref<98xf32, #tpu.memory_space<smem>>
    %308 = vector.broadcast %307 : f32 to vector<16x20xf32>
    %309 = arith.mulf %306, %308 : vector<16x20xf32>
    %310 = arith.addf %305, %309 : vector<16x20xf32>
    %311 = vector.extract_strided_slice %295 {offsets = [0, 3], sizes = [16, 20], strides = [1, 1]} : vector<16x26xf32> to vector<16x20xf32>
    %c31 = arith.constant 31 : index
    %312 = memref.load %arg5[%c31] : memref<98xf32, #tpu.memory_space<smem>>
    %313 = vector.broadcast %312 : f32 to vector<16x20xf32>
    %314 = arith.mulf %311, %313 : vector<16x20xf32>
    %315 = arith.addf %310, %314 : vector<16x20xf32>
    %316 = vector.extract_strided_slice %295 {offsets = [0, 4], sizes = [16, 20], strides = [1, 1]} : vector<16x26xf32> to vector<16x20xf32>
    %c32 = arith.constant 32 : index
    %317 = memref.load %arg5[%c32] : memref<98xf32, #tpu.memory_space<smem>>
    %318 = vector.broadcast %317 : f32 to vector<16x20xf32>
    %319 = arith.mulf %316, %318 : vector<16x20xf32>
    %320 = arith.addf %315, %319 : vector<16x20xf32>
    %321 = vector.extract_strided_slice %295 {offsets = [0, 5], sizes = [16, 20], strides = [1, 1]} : vector<16x26xf32> to vector<16x20xf32>
    %c33 = arith.constant 33 : index
    %322 = memref.load %arg5[%c33] : memref<98xf32, #tpu.memory_space<smem>>
    %323 = vector.broadcast %322 : f32 to vector<16x20xf32>
    %324 = arith.mulf %321, %323 : vector<16x20xf32>
    %325 = arith.addf %320, %324 : vector<16x20xf32>
    %326 = vector.extract_strided_slice %295 {offsets = [0, 6], sizes = [16, 20], strides = [1, 1]} : vector<16x26xf32> to vector<16x20xf32>
    %c34 = arith.constant 34 : index
    %327 = memref.load %arg5[%c34] : memref<98xf32, #tpu.memory_space<smem>>
    %328 = vector.broadcast %327 : f32 to vector<16x20xf32>
    %329 = arith.mulf %326, %328 : vector<16x20xf32>
    %330 = arith.addf %325, %329 : vector<16x20xf32>
    %331 = vector.extract_strided_slice %150 {offsets = [5, 0], sizes = [16, 26], strides = [1, 1]} : vector<22x26xf32> to vector<16x26xf32>
    %332 = vector.extract_strided_slice %331 {offsets = [0, 0], sizes = [16, 20], strides = [1, 1]} : vector<16x26xf32> to vector<16x20xf32>
    %c35 = arith.constant 35 : index
    %333 = memref.load %arg5[%c35] : memref<98xf32, #tpu.memory_space<smem>>
    %334 = vector.broadcast %333 : f32 to vector<16x20xf32>
    %335 = arith.mulf %332, %334 : vector<16x20xf32>
    %336 = arith.addf %330, %335 : vector<16x20xf32>
    %337 = vector.extract_strided_slice %331 {offsets = [0, 1], sizes = [16, 20], strides = [1, 1]} : vector<16x26xf32> to vector<16x20xf32>
    %c36 = arith.constant 36 : index
    %338 = memref.load %arg5[%c36] : memref<98xf32, #tpu.memory_space<smem>>
    %339 = vector.broadcast %338 : f32 to vector<16x20xf32>
    %340 = arith.mulf %337, %339 : vector<16x20xf32>
    %341 = arith.addf %336, %340 : vector<16x20xf32>
    %342 = vector.extract_strided_slice %331 {offsets = [0, 2], sizes = [16, 20], strides = [1, 1]} : vector<16x26xf32> to vector<16x20xf32>
    %c37 = arith.constant 37 : index
    %343 = memref.load %arg5[%c37] : memref<98xf32, #tpu.memory_space<smem>>
    %344 = vector.broadcast %343 : f32 to vector<16x20xf32>
    %345 = arith.mulf %342, %344 : vector<16x20xf32>
    %346 = arith.addf %341, %345 : vector<16x20xf32>
    %347 = vector.extract_strided_slice %331 {offsets = [0, 3], sizes = [16, 20], strides = [1, 1]} : vector<16x26xf32> to vector<16x20xf32>
    %c38 = arith.constant 38 : index
    %348 = memref.load %arg5[%c38] : memref<98xf32, #tpu.memory_space<smem>>
    %349 = vector.broadcast %348 : f32 to vector<16x20xf32>
    %350 = arith.mulf %347, %349 : vector<16x20xf32>
    %351 = arith.addf %346, %350 : vector<16x20xf32>
    %352 = vector.extract_strided_slice %331 {offsets = [0, 4], sizes = [16, 20], strides = [1, 1]} : vector<16x26xf32> to vector<16x20xf32>
    %c39 = arith.constant 39 : index
    %353 = memref.load %arg5[%c39] : memref<98xf32, #tpu.memory_space<smem>>
    %354 = vector.broadcast %353 : f32 to vector<16x20xf32>
    %355 = arith.mulf %352, %354 : vector<16x20xf32>
    %356 = arith.addf %351, %355 : vector<16x20xf32>
    %357 = vector.extract_strided_slice %331 {offsets = [0, 5], sizes = [16, 20], strides = [1, 1]} : vector<16x26xf32> to vector<16x20xf32>
    %c40 = arith.constant 40 : index
    %358 = memref.load %arg5[%c40] : memref<98xf32, #tpu.memory_space<smem>>
    %359 = vector.broadcast %358 : f32 to vector<16x20xf32>
    %360 = arith.mulf %357, %359 : vector<16x20xf32>
    %361 = arith.addf %356, %360 : vector<16x20xf32>
    %362 = vector.extract_strided_slice %331 {offsets = [0, 6], sizes = [16, 20], strides = [1, 1]} : vector<16x26xf32> to vector<16x20xf32>
    %c41 = arith.constant 41 : index
    %363 = memref.load %arg5[%c41] : memref<98xf32, #tpu.memory_space<smem>>
    %364 = vector.broadcast %363 : f32 to vector<16x20xf32>
    %365 = arith.mulf %362, %364 : vector<16x20xf32>
    %366 = arith.addf %361, %365 : vector<16x20xf32>
    %367 = vector.extract_strided_slice %150 {offsets = [6, 0], sizes = [16, 26], strides = [1, 1]} : vector<22x26xf32> to vector<16x26xf32>
    %368 = vector.extract_strided_slice %367 {offsets = [0, 0], sizes = [16, 20], strides = [1, 1]} : vector<16x26xf32> to vector<16x20xf32>
    %c42 = arith.constant 42 : index
    %369 = memref.load %arg5[%c42] : memref<98xf32, #tpu.memory_space<smem>>
    %370 = vector.broadcast %369 : f32 to vector<16x20xf32>
    %371 = arith.mulf %368, %370 : vector<16x20xf32>
    %372 = arith.addf %366, %371 : vector<16x20xf32>
    %373 = vector.extract_strided_slice %367 {offsets = [0, 1], sizes = [16, 20], strides = [1, 1]} : vector<16x26xf32> to vector<16x20xf32>
    %c43 = arith.constant 43 : index
    %374 = memref.load %arg5[%c43] : memref<98xf32, #tpu.memory_space<smem>>
    %375 = vector.broadcast %374 : f32 to vector<16x20xf32>
    %376 = arith.mulf %373, %375 : vector<16x20xf32>
    %377 = arith.addf %372, %376 : vector<16x20xf32>
    %378 = vector.extract_strided_slice %367 {offsets = [0, 2], sizes = [16, 20], strides = [1, 1]} : vector<16x26xf32> to vector<16x20xf32>
    %c44 = arith.constant 44 : index
    %379 = memref.load %arg5[%c44] : memref<98xf32, #tpu.memory_space<smem>>
    %380 = vector.broadcast %379 : f32 to vector<16x20xf32>
    %381 = arith.mulf %378, %380 : vector<16x20xf32>
    %382 = arith.addf %377, %381 : vector<16x20xf32>
    %383 = vector.extract_strided_slice %367 {offsets = [0, 3], sizes = [16, 20], strides = [1, 1]} : vector<16x26xf32> to vector<16x20xf32>
    %c45 = arith.constant 45 : index
    %384 = memref.load %arg5[%c45] : memref<98xf32, #tpu.memory_space<smem>>
    %385 = vector.broadcast %384 : f32 to vector<16x20xf32>
    %386 = arith.mulf %383, %385 : vector<16x20xf32>
    %387 = arith.addf %382, %386 : vector<16x20xf32>
    %388 = vector.extract_strided_slice %367 {offsets = [0, 4], sizes = [16, 20], strides = [1, 1]} : vector<16x26xf32> to vector<16x20xf32>
    %c46 = arith.constant 46 : index
    %389 = memref.load %arg5[%c46] : memref<98xf32, #tpu.memory_space<smem>>
    %390 = vector.broadcast %389 : f32 to vector<16x20xf32>
    %391 = arith.mulf %388, %390 : vector<16x20xf32>
    %392 = arith.addf %387, %391 : vector<16x20xf32>
    %393 = vector.extract_strided_slice %367 {offsets = [0, 5], sizes = [16, 20], strides = [1, 1]} : vector<16x26xf32> to vector<16x20xf32>
    %c47 = arith.constant 47 : index
    %394 = memref.load %arg5[%c47] : memref<98xf32, #tpu.memory_space<smem>>
    %395 = vector.broadcast %394 : f32 to vector<16x20xf32>
    %396 = arith.mulf %393, %395 : vector<16x20xf32>
    %397 = arith.addf %392, %396 : vector<16x20xf32>
    %398 = vector.extract_strided_slice %367 {offsets = [0, 6], sizes = [16, 20], strides = [1, 1]} : vector<16x26xf32> to vector<16x20xf32>
    %c48 = arith.constant 48 : index
    %399 = memref.load %arg5[%c48] : memref<98xf32, #tpu.memory_space<smem>>
    %400 = vector.broadcast %399 : f32 to vector<16x20xf32>
    %401 = arith.mulf %398, %400 : vector<16x20xf32>
    %402 = arith.addf %397, %401 : vector<16x20xf32>
    %403 = tpu.concatenate %35, %145, %35 in 1 : vector<16x3xf32>, vector<16x20xf32>, vector<16x3xf32> -> vector<16x26xf32>
    %404 = tpu.concatenate %34, %403, %34 in 0 : vector<3x26xf32>, vector<16x26xf32>, vector<3x26xf32> -> vector<22x26xf32>
    %405 = vector.extract_strided_slice %404 {offsets = [0, 0], sizes = [16, 26], strides = [1, 1]} : vector<22x26xf32> to vector<16x26xf32>
    %406 = vector.extract_strided_slice %405 {offsets = [0, 0], sizes = [16, 20], strides = [1, 1]} : vector<16x26xf32> to vector<16x20xf32>
    %c49 = arith.constant 49 : index
    %407 = memref.load %arg5[%c49] : memref<98xf32, #tpu.memory_space<smem>>
    %408 = vector.broadcast %407 : f32 to vector<16x20xf32>
    %409 = arith.mulf %406, %408 : vector<16x20xf32>
    %410 = arith.addf %402, %409 : vector<16x20xf32>
    %411 = vector.extract_strided_slice %405 {offsets = [0, 1], sizes = [16, 20], strides = [1, 1]} : vector<16x26xf32> to vector<16x20xf32>
    %c50 = arith.constant 50 : index
    %412 = memref.load %arg5[%c50] : memref<98xf32, #tpu.memory_space<smem>>
    %413 = vector.broadcast %412 : f32 to vector<16x20xf32>
    %414 = arith.mulf %411, %413 : vector<16x20xf32>
    %415 = arith.addf %410, %414 : vector<16x20xf32>
    %416 = vector.extract_strided_slice %405 {offsets = [0, 2], sizes = [16, 20], strides = [1, 1]} : vector<16x26xf32> to vector<16x20xf32>
    %c51 = arith.constant 51 : index
    %417 = memref.load %arg5[%c51] : memref<98xf32, #tpu.memory_space<smem>>
    %418 = vector.broadcast %417 : f32 to vector<16x20xf32>
    %419 = arith.mulf %416, %418 : vector<16x20xf32>
    %420 = arith.addf %415, %419 : vector<16x20xf32>
    %421 = vector.extract_strided_slice %405 {offsets = [0, 3], sizes = [16, 20], strides = [1, 1]} : vector<16x26xf32> to vector<16x20xf32>
    %c52 = arith.constant 52 : index
    %422 = memref.load %arg5[%c52] : memref<98xf32, #tpu.memory_space<smem>>
    %423 = vector.broadcast %422 : f32 to vector<16x20xf32>
    %424 = arith.mulf %421, %423 : vector<16x20xf32>
    %425 = arith.addf %420, %424 : vector<16x20xf32>
    %426 = vector.extract_strided_slice %405 {offsets = [0, 4], sizes = [16, 20], strides = [1, 1]} : vector<16x26xf32> to vector<16x20xf32>
    %c53 = arith.constant 53 : index
    %427 = memref.load %arg5[%c53] : memref<98xf32, #tpu.memory_space<smem>>
    %428 = vector.broadcast %427 : f32 to vector<16x20xf32>
    %429 = arith.mulf %426, %428 : vector<16x20xf32>
    %430 = arith.addf %425, %429 : vector<16x20xf32>
    %431 = vector.extract_strided_slice %405 {offsets = [0, 5], sizes = [16, 20], strides = [1, 1]} : vector<16x26xf32> to vector<16x20xf32>
    %c54 = arith.constant 54 : index
    %432 = memref.load %arg5[%c54] : memref<98xf32, #tpu.memory_space<smem>>
    %433 = vector.broadcast %432 : f32 to vector<16x20xf32>
    %434 = arith.mulf %431, %433 : vector<16x20xf32>
    %435 = arith.addf %430, %434 : vector<16x20xf32>
    %436 = vector.extract_strided_slice %405 {offsets = [0, 6], sizes = [16, 20], strides = [1, 1]} : vector<16x26xf32> to vector<16x20xf32>
    %c55 = arith.constant 55 : index
    %437 = memref.load %arg5[%c55] : memref<98xf32, #tpu.memory_space<smem>>
    %438 = vector.broadcast %437 : f32 to vector<16x20xf32>
    %439 = arith.mulf %436, %438 : vector<16x20xf32>
    %440 = arith.addf %435, %439 : vector<16x20xf32>
    %441 = vector.extract_strided_slice %404 {offsets = [1, 0], sizes = [16, 26], strides = [1, 1]} : vector<22x26xf32> to vector<16x26xf32>
    %442 = vector.extract_strided_slice %441 {offsets = [0, 0], sizes = [16, 20], strides = [1, 1]} : vector<16x26xf32> to vector<16x20xf32>
    %c56 = arith.constant 56 : index
    %443 = memref.load %arg5[%c56] : memref<98xf32, #tpu.memory_space<smem>>
    %444 = vector.broadcast %443 : f32 to vector<16x20xf32>
    %445 = arith.mulf %442, %444 : vector<16x20xf32>
    %446 = arith.addf %440, %445 : vector<16x20xf32>
    %447 = vector.extract_strided_slice %441 {offsets = [0, 1], sizes = [16, 20], strides = [1, 1]} : vector<16x26xf32> to vector<16x20xf32>
    %c57 = arith.constant 57 : index
    %448 = memref.load %arg5[%c57] : memref<98xf32, #tpu.memory_space<smem>>
    %449 = vector.broadcast %448 : f32 to vector<16x20xf32>
    %450 = arith.mulf %447, %449 : vector<16x20xf32>
    %451 = arith.addf %446, %450 : vector<16x20xf32>
    %452 = vector.extract_strided_slice %441 {offsets = [0, 2], sizes = [16, 20], strides = [1, 1]} : vector<16x26xf32> to vector<16x20xf32>
    %c58 = arith.constant 58 : index
    %453 = memref.load %arg5[%c58] : memref<98xf32, #tpu.memory_space<smem>>
    %454 = vector.broadcast %453 : f32 to vector<16x20xf32>
    %455 = arith.mulf %452, %454 : vector<16x20xf32>
    %456 = arith.addf %451, %455 : vector<16x20xf32>
    %457 = vector.extract_strided_slice %441 {offsets = [0, 3], sizes = [16, 20], strides = [1, 1]} : vector<16x26xf32> to vector<16x20xf32>
    %c59 = arith.constant 59 : index
    %458 = memref.load %arg5[%c59] : memref<98xf32, #tpu.memory_space<smem>>
    %459 = vector.broadcast %458 : f32 to vector<16x20xf32>
    %460 = arith.mulf %457, %459 : vector<16x20xf32>
    %461 = arith.addf %456, %460 : vector<16x20xf32>
    %462 = vector.extract_strided_slice %441 {offsets = [0, 4], sizes = [16, 20], strides = [1, 1]} : vector<16x26xf32> to vector<16x20xf32>
    %c60 = arith.constant 60 : index
    %463 = memref.load %arg5[%c60] : memref<98xf32, #tpu.memory_space<smem>>
    %464 = vector.broadcast %463 : f32 to vector<16x20xf32>
    %465 = arith.mulf %462, %464 : vector<16x20xf32>
    %466 = arith.addf %461, %465 : vector<16x20xf32>
    %467 = vector.extract_strided_slice %441 {offsets = [0, 5], sizes = [16, 20], strides = [1, 1]} : vector<16x26xf32> to vector<16x20xf32>
    %c61 = arith.constant 61 : index
    %468 = memref.load %arg5[%c61] : memref<98xf32, #tpu.memory_space<smem>>
    %469 = vector.broadcast %468 : f32 to vector<16x20xf32>
    %470 = arith.mulf %467, %469 : vector<16x20xf32>
    %471 = arith.addf %466, %470 : vector<16x20xf32>
    %472 = vector.extract_strided_slice %441 {offsets = [0, 6], sizes = [16, 20], strides = [1, 1]} : vector<16x26xf32> to vector<16x20xf32>
    %c62 = arith.constant 62 : index
    %473 = memref.load %arg5[%c62] : memref<98xf32, #tpu.memory_space<smem>>
    %474 = vector.broadcast %473 : f32 to vector<16x20xf32>
    %475 = arith.mulf %472, %474 : vector<16x20xf32>
    %476 = arith.addf %471, %475 : vector<16x20xf32>
    %477 = vector.extract_strided_slice %404 {offsets = [2, 0], sizes = [16, 26], strides = [1, 1]} : vector<22x26xf32> to vector<16x26xf32>
    %478 = vector.extract_strided_slice %477 {offsets = [0, 0], sizes = [16, 20], strides = [1, 1]} : vector<16x26xf32> to vector<16x20xf32>
    %c63 = arith.constant 63 : index
    %479 = memref.load %arg5[%c63] : memref<98xf32, #tpu.memory_space<smem>>
    %480 = vector.broadcast %479 : f32 to vector<16x20xf32>
    %481 = arith.mulf %478, %480 : vector<16x20xf32>
    %482 = arith.addf %476, %481 : vector<16x20xf32>
    %483 = vector.extract_strided_slice %477 {offsets = [0, 1], sizes = [16, 20], strides = [1, 1]} : vector<16x26xf32> to vector<16x20xf32>
    %c64 = arith.constant 64 : index
    %484 = memref.load %arg5[%c64] : memref<98xf32, #tpu.memory_space<smem>>
    %485 = vector.broadcast %484 : f32 to vector<16x20xf32>
    %486 = arith.mulf %483, %485 : vector<16x20xf32>
    %487 = arith.addf %482, %486 : vector<16x20xf32>
    %488 = vector.extract_strided_slice %477 {offsets = [0, 2], sizes = [16, 20], strides = [1, 1]} : vector<16x26xf32> to vector<16x20xf32>
    %c65 = arith.constant 65 : index
    %489 = memref.load %arg5[%c65] : memref<98xf32, #tpu.memory_space<smem>>
    %490 = vector.broadcast %489 : f32 to vector<16x20xf32>
    %491 = arith.mulf %488, %490 : vector<16x20xf32>
    %492 = arith.addf %487, %491 : vector<16x20xf32>
    %493 = vector.extract_strided_slice %477 {offsets = [0, 3], sizes = [16, 20], strides = [1, 1]} : vector<16x26xf32> to vector<16x20xf32>
    %c66 = arith.constant 66 : index
    %494 = memref.load %arg5[%c66] : memref<98xf32, #tpu.memory_space<smem>>
    %495 = vector.broadcast %494 : f32 to vector<16x20xf32>
    %496 = arith.mulf %493, %495 : vector<16x20xf32>
    %497 = arith.addf %492, %496 : vector<16x20xf32>
    %498 = vector.extract_strided_slice %477 {offsets = [0, 4], sizes = [16, 20], strides = [1, 1]} : vector<16x26xf32> to vector<16x20xf32>
    %c67 = arith.constant 67 : index
    %499 = memref.load %arg5[%c67] : memref<98xf32, #tpu.memory_space<smem>>
    %500 = vector.broadcast %499 : f32 to vector<16x20xf32>
    %501 = arith.mulf %498, %500 : vector<16x20xf32>
    %502 = arith.addf %497, %501 : vector<16x20xf32>
    %503 = vector.extract_strided_slice %477 {offsets = [0, 5], sizes = [16, 20], strides = [1, 1]} : vector<16x26xf32> to vector<16x20xf32>
    %c68 = arith.constant 68 : index
    %504 = memref.load %arg5[%c68] : memref<98xf32, #tpu.memory_space<smem>>
    %505 = vector.broadcast %504 : f32 to vector<16x20xf32>
    %506 = arith.mulf %503, %505 : vector<16x20xf32>
    %507 = arith.addf %502, %506 : vector<16x20xf32>
    %508 = vector.extract_strided_slice %477 {offsets = [0, 6], sizes = [16, 20], strides = [1, 1]} : vector<16x26xf32> to vector<16x20xf32>
    %c69 = arith.constant 69 : index
    %509 = memref.load %arg5[%c69] : memref<98xf32, #tpu.memory_space<smem>>
    %510 = vector.broadcast %509 : f32 to vector<16x20xf32>
    %511 = arith.mulf %508, %510 : vector<16x20xf32>
    %512 = arith.addf %507, %511 : vector<16x20xf32>
    %513 = vector.extract_strided_slice %404 {offsets = [3, 0], sizes = [16, 26], strides = [1, 1]} : vector<22x26xf32> to vector<16x26xf32>
    %514 = vector.extract_strided_slice %513 {offsets = [0, 0], sizes = [16, 20], strides = [1, 1]} : vector<16x26xf32> to vector<16x20xf32>
    %c70 = arith.constant 70 : index
    %515 = memref.load %arg5[%c70] : memref<98xf32, #tpu.memory_space<smem>>
    %516 = vector.broadcast %515 : f32 to vector<16x20xf32>
    %517 = arith.mulf %514, %516 : vector<16x20xf32>
    %518 = arith.addf %512, %517 : vector<16x20xf32>
    %519 = vector.extract_strided_slice %513 {offsets = [0, 1], sizes = [16, 20], strides = [1, 1]} : vector<16x26xf32> to vector<16x20xf32>
    %c71 = arith.constant 71 : index
    %520 = memref.load %arg5[%c71] : memref<98xf32, #tpu.memory_space<smem>>
    %521 = vector.broadcast %520 : f32 to vector<16x20xf32>
    %522 = arith.mulf %519, %521 : vector<16x20xf32>
    %523 = arith.addf %518, %522 : vector<16x20xf32>
    %524 = vector.extract_strided_slice %513 {offsets = [0, 2], sizes = [16, 20], strides = [1, 1]} : vector<16x26xf32> to vector<16x20xf32>
    %c72 = arith.constant 72 : index
    %525 = memref.load %arg5[%c72] : memref<98xf32, #tpu.memory_space<smem>>
    %526 = vector.broadcast %525 : f32 to vector<16x20xf32>
    %527 = arith.mulf %524, %526 : vector<16x20xf32>
    %528 = arith.addf %523, %527 : vector<16x20xf32>
    %529 = vector.extract_strided_slice %513 {offsets = [0, 3], sizes = [16, 20], strides = [1, 1]} : vector<16x26xf32> to vector<16x20xf32>
    %c73 = arith.constant 73 : index
    %530 = memref.load %arg5[%c73] : memref<98xf32, #tpu.memory_space<smem>>
    %531 = vector.broadcast %530 : f32 to vector<16x20xf32>
    %532 = arith.mulf %529, %531 : vector<16x20xf32>
    %533 = arith.addf %528, %532 : vector<16x20xf32>
    %534 = vector.extract_strided_slice %513 {offsets = [0, 4], sizes = [16, 20], strides = [1, 1]} : vector<16x26xf32> to vector<16x20xf32>
    %c74 = arith.constant 74 : index
    %535 = memref.load %arg5[%c74] : memref<98xf32, #tpu.memory_space<smem>>
    %536 = vector.broadcast %535 : f32 to vector<16x20xf32>
    %537 = arith.mulf %534, %536 : vector<16x20xf32>
    %538 = arith.addf %533, %537 : vector<16x20xf32>
    %539 = vector.extract_strided_slice %513 {offsets = [0, 5], sizes = [16, 20], strides = [1, 1]} : vector<16x26xf32> to vector<16x20xf32>
    %c75 = arith.constant 75 : index
    %540 = memref.load %arg5[%c75] : memref<98xf32, #tpu.memory_space<smem>>
    %541 = vector.broadcast %540 : f32 to vector<16x20xf32>
    %542 = arith.mulf %539, %541 : vector<16x20xf32>
    %543 = arith.addf %538, %542 : vector<16x20xf32>
    %544 = vector.extract_strided_slice %513 {offsets = [0, 6], sizes = [16, 20], strides = [1, 1]} : vector<16x26xf32> to vector<16x20xf32>
    %c76 = arith.constant 76 : index
    %545 = memref.load %arg5[%c76] : memref<98xf32, #tpu.memory_space<smem>>
    %546 = vector.broadcast %545 : f32 to vector<16x20xf32>
    %547 = arith.mulf %544, %546 : vector<16x20xf32>
    %548 = arith.addf %543, %547 : vector<16x20xf32>
    %549 = vector.extract_strided_slice %404 {offsets = [4, 0], sizes = [16, 26], strides = [1, 1]} : vector<22x26xf32> to vector<16x26xf32>
    %550 = vector.extract_strided_slice %549 {offsets = [0, 0], sizes = [16, 20], strides = [1, 1]} : vector<16x26xf32> to vector<16x20xf32>
    %c77 = arith.constant 77 : index
    %551 = memref.load %arg5[%c77] : memref<98xf32, #tpu.memory_space<smem>>
    %552 = vector.broadcast %551 : f32 to vector<16x20xf32>
    %553 = arith.mulf %550, %552 : vector<16x20xf32>
    %554 = arith.addf %548, %553 : vector<16x20xf32>
    %555 = vector.extract_strided_slice %549 {offsets = [0, 1], sizes = [16, 20], strides = [1, 1]} : vector<16x26xf32> to vector<16x20xf32>
    %c78 = arith.constant 78 : index
    %556 = memref.load %arg5[%c78] : memref<98xf32, #tpu.memory_space<smem>>
    %557 = vector.broadcast %556 : f32 to vector<16x20xf32>
    %558 = arith.mulf %555, %557 : vector<16x20xf32>
    %559 = arith.addf %554, %558 : vector<16x20xf32>
    %560 = vector.extract_strided_slice %549 {offsets = [0, 2], sizes = [16, 20], strides = [1, 1]} : vector<16x26xf32> to vector<16x20xf32>
    %c79 = arith.constant 79 : index
    %561 = memref.load %arg5[%c79] : memref<98xf32, #tpu.memory_space<smem>>
    %562 = vector.broadcast %561 : f32 to vector<16x20xf32>
    %563 = arith.mulf %560, %562 : vector<16x20xf32>
    %564 = arith.addf %559, %563 : vector<16x20xf32>
    %565 = vector.extract_strided_slice %549 {offsets = [0, 3], sizes = [16, 20], strides = [1, 1]} : vector<16x26xf32> to vector<16x20xf32>
    %c80 = arith.constant 80 : index
    %566 = memref.load %arg5[%c80] : memref<98xf32, #tpu.memory_space<smem>>
    %567 = vector.broadcast %566 : f32 to vector<16x20xf32>
    %568 = arith.mulf %565, %567 : vector<16x20xf32>
    %569 = arith.addf %564, %568 : vector<16x20xf32>
    %570 = vector.extract_strided_slice %549 {offsets = [0, 4], sizes = [16, 20], strides = [1, 1]} : vector<16x26xf32> to vector<16x20xf32>
    %c81 = arith.constant 81 : index
    %571 = memref.load %arg5[%c81] : memref<98xf32, #tpu.memory_space<smem>>
    %572 = vector.broadcast %571 : f32 to vector<16x20xf32>
    %573 = arith.mulf %570, %572 : vector<16x20xf32>
    %574 = arith.addf %569, %573 : vector<16x20xf32>
    %575 = vector.extract_strided_slice %549 {offsets = [0, 5], sizes = [16, 20], strides = [1, 1]} : vector<16x26xf32> to vector<16x20xf32>
    %c82 = arith.constant 82 : index
    %576 = memref.load %arg5[%c82] : memref<98xf32, #tpu.memory_space<smem>>
    %577 = vector.broadcast %576 : f32 to vector<16x20xf32>
    %578 = arith.mulf %575, %577 : vector<16x20xf32>
    %579 = arith.addf %574, %578 : vector<16x20xf32>
    %580 = vector.extract_strided_slice %549 {offsets = [0, 6], sizes = [16, 20], strides = [1, 1]} : vector<16x26xf32> to vector<16x20xf32>
    %c83 = arith.constant 83 : index
    %581 = memref.load %arg5[%c83] : memref<98xf32, #tpu.memory_space<smem>>
    %582 = vector.broadcast %581 : f32 to vector<16x20xf32>
    %583 = arith.mulf %580, %582 : vector<16x20xf32>
    %584 = arith.addf %579, %583 : vector<16x20xf32>
    %585 = vector.extract_strided_slice %404 {offsets = [5, 0], sizes = [16, 26], strides = [1, 1]} : vector<22x26xf32> to vector<16x26xf32>
    %586 = vector.extract_strided_slice %585 {offsets = [0, 0], sizes = [16, 20], strides = [1, 1]} : vector<16x26xf32> to vector<16x20xf32>
    %c84 = arith.constant 84 : index
    %587 = memref.load %arg5[%c84] : memref<98xf32, #tpu.memory_space<smem>>
    %588 = vector.broadcast %587 : f32 to vector<16x20xf32>
    %589 = arith.mulf %586, %588 : vector<16x20xf32>
    %590 = arith.addf %584, %589 : vector<16x20xf32>
    %591 = vector.extract_strided_slice %585 {offsets = [0, 1], sizes = [16, 20], strides = [1, 1]} : vector<16x26xf32> to vector<16x20xf32>
    %c85 = arith.constant 85 : index
    %592 = memref.load %arg5[%c85] : memref<98xf32, #tpu.memory_space<smem>>
    %593 = vector.broadcast %592 : f32 to vector<16x20xf32>
    %594 = arith.mulf %591, %593 : vector<16x20xf32>
    %595 = arith.addf %590, %594 : vector<16x20xf32>
    %596 = vector.extract_strided_slice %585 {offsets = [0, 2], sizes = [16, 20], strides = [1, 1]} : vector<16x26xf32> to vector<16x20xf32>
    %c86 = arith.constant 86 : index
    %597 = memref.load %arg5[%c86] : memref<98xf32, #tpu.memory_space<smem>>
    %598 = vector.broadcast %597 : f32 to vector<16x20xf32>
    %599 = arith.mulf %596, %598 : vector<16x20xf32>
    %600 = arith.addf %595, %599 : vector<16x20xf32>
    %601 = vector.extract_strided_slice %585 {offsets = [0, 3], sizes = [16, 20], strides = [1, 1]} : vector<16x26xf32> to vector<16x20xf32>
    %c87 = arith.constant 87 : index
    %602 = memref.load %arg5[%c87] : memref<98xf32, #tpu.memory_space<smem>>
    %603 = vector.broadcast %602 : f32 to vector<16x20xf32>
    %604 = arith.mulf %601, %603 : vector<16x20xf32>
    %605 = arith.addf %600, %604 : vector<16x20xf32>
    %606 = vector.extract_strided_slice %585 {offsets = [0, 4], sizes = [16, 20], strides = [1, 1]} : vector<16x26xf32> to vector<16x20xf32>
    %c88 = arith.constant 88 : index
    %607 = memref.load %arg5[%c88] : memref<98xf32, #tpu.memory_space<smem>>
    %608 = vector.broadcast %607 : f32 to vector<16x20xf32>
    %609 = arith.mulf %606, %608 : vector<16x20xf32>
    %610 = arith.addf %605, %609 : vector<16x20xf32>
    %611 = vector.extract_strided_slice %585 {offsets = [0, 5], sizes = [16, 20], strides = [1, 1]} : vector<16x26xf32> to vector<16x20xf32>
    %c89 = arith.constant 89 : index
    %612 = memref.load %arg5[%c89] : memref<98xf32, #tpu.memory_space<smem>>
    %613 = vector.broadcast %612 : f32 to vector<16x20xf32>
    %614 = arith.mulf %611, %613 : vector<16x20xf32>
    %615 = arith.addf %610, %614 : vector<16x20xf32>
    %616 = vector.extract_strided_slice %585 {offsets = [0, 6], sizes = [16, 20], strides = [1, 1]} : vector<16x26xf32> to vector<16x20xf32>
    %c90 = arith.constant 90 : index
    %617 = memref.load %arg5[%c90] : memref<98xf32, #tpu.memory_space<smem>>
    %618 = vector.broadcast %617 : f32 to vector<16x20xf32>
    %619 = arith.mulf %616, %618 : vector<16x20xf32>
    %620 = arith.addf %615, %619 : vector<16x20xf32>
    %621 = vector.extract_strided_slice %404 {offsets = [6, 0], sizes = [16, 26], strides = [1, 1]} : vector<22x26xf32> to vector<16x26xf32>
    %622 = vector.extract_strided_slice %621 {offsets = [0, 0], sizes = [16, 20], strides = [1, 1]} : vector<16x26xf32> to vector<16x20xf32>
    %c91 = arith.constant 91 : index
    %623 = memref.load %arg5[%c91] : memref<98xf32, #tpu.memory_space<smem>>
    %624 = vector.broadcast %623 : f32 to vector<16x20xf32>
    %625 = arith.mulf %622, %624 : vector<16x20xf32>
    %626 = arith.addf %620, %625 : vector<16x20xf32>
    %627 = vector.extract_strided_slice %621 {offsets = [0, 1], sizes = [16, 20], strides = [1, 1]} : vector<16x26xf32> to vector<16x20xf32>
    %c92 = arith.constant 92 : index
    %628 = memref.load %arg5[%c92] : memref<98xf32, #tpu.memory_space<smem>>
    %629 = vector.broadcast %628 : f32 to vector<16x20xf32>
    %630 = arith.mulf %627, %629 : vector<16x20xf32>
    %631 = arith.addf %626, %630 : vector<16x20xf32>
    %632 = vector.extract_strided_slice %621 {offsets = [0, 2], sizes = [16, 20], strides = [1, 1]} : vector<16x26xf32> to vector<16x20xf32>
    %c93 = arith.constant 93 : index
    %633 = memref.load %arg5[%c93] : memref<98xf32, #tpu.memory_space<smem>>
    %634 = vector.broadcast %633 : f32 to vector<16x20xf32>
    %635 = arith.mulf %632, %634 : vector<16x20xf32>
    %636 = arith.addf %631, %635 : vector<16x20xf32>
    %637 = vector.extract_strided_slice %621 {offsets = [0, 3], sizes = [16, 20], strides = [1, 1]} : vector<16x26xf32> to vector<16x20xf32>
    %c94 = arith.constant 94 : index
    %638 = memref.load %arg5[%c94] : memref<98xf32, #tpu.memory_space<smem>>
    %639 = vector.broadcast %638 : f32 to vector<16x20xf32>
    %640 = arith.mulf %637, %639 : vector<16x20xf32>
    %641 = arith.addf %636, %640 : vector<16x20xf32>
    %642 = vector.extract_strided_slice %621 {offsets = [0, 4], sizes = [16, 20], strides = [1, 1]} : vector<16x26xf32> to vector<16x20xf32>
    %c95 = arith.constant 95 : index
    %643 = memref.load %arg5[%c95] : memref<98xf32, #tpu.memory_space<smem>>
    %644 = vector.broadcast %643 : f32 to vector<16x20xf32>
    %645 = arith.mulf %642, %644 : vector<16x20xf32>
    %646 = arith.addf %641, %645 : vector<16x20xf32>
    %647 = vector.extract_strided_slice %621 {offsets = [0, 5], sizes = [16, 20], strides = [1, 1]} : vector<16x26xf32> to vector<16x20xf32>
    %c96 = arith.constant 96 : index
    %648 = memref.load %arg5[%c96] : memref<98xf32, #tpu.memory_space<smem>>
    %649 = vector.broadcast %648 : f32 to vector<16x20xf32>
    %650 = arith.mulf %647, %649 : vector<16x20xf32>
    %651 = arith.addf %646, %650 : vector<16x20xf32>
    %652 = vector.extract_strided_slice %621 {offsets = [0, 6], sizes = [16, 20], strides = [1, 1]} : vector<16x26xf32> to vector<16x20xf32>
    %c97 = arith.constant 97 : index
    %653 = memref.load %arg5[%c97] : memref<98xf32, #tpu.memory_space<smem>>
    %654 = vector.broadcast %653 : f32 to vector<16x20xf32>
    %655 = arith.mulf %652, %654 : vector<16x20xf32>
    %656 = arith.addf %651, %655 : vector<16x20xf32>
    %657 = vector.extract_strided_slice %5 {offsets = [0, 0, 0], sizes = [1, 16, 20], strides = [1, 1, 1]} : vector<4x16x20xf32> to vector<1x16x20xf32>
    %658 = vector.shape_cast %657 : vector<1x16x20xf32> to vector<16x20xf32>
    %c0_47 = arith.constant 0 : index
    %659 = memref.load %arg6[%c0_47] : memref<16xf32, #tpu.memory_space<smem>>
    %660 = vector.broadcast %659 : f32 to vector<16x20xf32>
    %661 = arith.mulf %658, %660 : vector<16x20xf32>
    %662 = vector.extract_strided_slice %5 {offsets = [1, 0, 0], sizes = [1, 16, 20], strides = [1, 1, 1]} : vector<4x16x20xf32> to vector<1x16x20xf32>
    %663 = vector.shape_cast %662 : vector<1x16x20xf32> to vector<16x20xf32>
    %c1_48 = arith.constant 1 : index
    %664 = memref.load %arg6[%c1_48] : memref<16xf32, #tpu.memory_space<smem>>
    %665 = vector.broadcast %664 : f32 to vector<16x20xf32>
    %666 = arith.mulf %663, %665 : vector<16x20xf32>
    %667 = arith.addf %661, %666 : vector<16x20xf32>
    %668 = vector.extract_strided_slice %5 {offsets = [2, 0, 0], sizes = [1, 16, 20], strides = [1, 1, 1]} : vector<4x16x20xf32> to vector<1x16x20xf32>
    %669 = vector.shape_cast %668 : vector<1x16x20xf32> to vector<16x20xf32>
    %c2_49 = arith.constant 2 : index
    %670 = memref.load %arg6[%c2_49] : memref<16xf32, #tpu.memory_space<smem>>
    %671 = vector.broadcast %670 : f32 to vector<16x20xf32>
    %672 = arith.mulf %669, %671 : vector<16x20xf32>
    %673 = arith.addf %667, %672 : vector<16x20xf32>
    %674 = vector.extract_strided_slice %5 {offsets = [3, 0, 0], sizes = [1, 16, 20], strides = [1, 1, 1]} : vector<4x16x20xf32> to vector<1x16x20xf32>
    %675 = vector.shape_cast %674 : vector<1x16x20xf32> to vector<16x20xf32>
    %c3_50 = arith.constant 3 : index
    %676 = memref.load %arg6[%c3_50] : memref<16xf32, #tpu.memory_space<smem>>
    %677 = vector.broadcast %676 : f32 to vector<16x20xf32>
    %678 = arith.mulf %675, %677 : vector<16x20xf32>
    %679 = arith.addf %673, %678 : vector<16x20xf32>
    %c0_51 = arith.constant 0 : index
    %680 = memref.load %arg7[%c0_51] : memref<4xf32, #tpu.memory_space<smem>>
    %681 = vector.broadcast %680 : f32 to vector<16x20xf32>
    %682 = arith.addf %679, %681 : vector<16x20xf32>
    %683 = vector.extract_strided_slice %5 {offsets = [0, 0, 0], sizes = [1, 16, 20], strides = [1, 1, 1]} : vector<4x16x20xf32> to vector<1x16x20xf32>
    %684 = vector.shape_cast %683 : vector<1x16x20xf32> to vector<16x20xf32>
    %c4_52 = arith.constant 4 : index
    %685 = memref.load %arg6[%c4_52] : memref<16xf32, #tpu.memory_space<smem>>
    %686 = vector.broadcast %685 : f32 to vector<16x20xf32>
    %687 = arith.mulf %684, %686 : vector<16x20xf32>
    %688 = vector.extract_strided_slice %5 {offsets = [1, 0, 0], sizes = [1, 16, 20], strides = [1, 1, 1]} : vector<4x16x20xf32> to vector<1x16x20xf32>
    %689 = vector.shape_cast %688 : vector<1x16x20xf32> to vector<16x20xf32>
    %c5_53 = arith.constant 5 : index
    %690 = memref.load %arg6[%c5_53] : memref<16xf32, #tpu.memory_space<smem>>
    %691 = vector.broadcast %690 : f32 to vector<16x20xf32>
    %692 = arith.mulf %689, %691 : vector<16x20xf32>
    %693 = arith.addf %687, %692 : vector<16x20xf32>
    %694 = vector.extract_strided_slice %5 {offsets = [2, 0, 0], sizes = [1, 16, 20], strides = [1, 1, 1]} : vector<4x16x20xf32> to vector<1x16x20xf32>
    %695 = vector.shape_cast %694 : vector<1x16x20xf32> to vector<16x20xf32>
    %c6_54 = arith.constant 6 : index
    %696 = memref.load %arg6[%c6_54] : memref<16xf32, #tpu.memory_space<smem>>
    %697 = vector.broadcast %696 : f32 to vector<16x20xf32>
    %698 = arith.mulf %695, %697 : vector<16x20xf32>
    %699 = arith.addf %693, %698 : vector<16x20xf32>
    %700 = vector.extract_strided_slice %5 {offsets = [3, 0, 0], sizes = [1, 16, 20], strides = [1, 1, 1]} : vector<4x16x20xf32> to vector<1x16x20xf32>
    %701 = vector.shape_cast %700 : vector<1x16x20xf32> to vector<16x20xf32>
    %c7_55 = arith.constant 7 : index
    %702 = memref.load %arg6[%c7_55] : memref<16xf32, #tpu.memory_space<smem>>
    %703 = vector.broadcast %702 : f32 to vector<16x20xf32>
    %704 = arith.mulf %701, %703 : vector<16x20xf32>
    %705 = arith.addf %699, %704 : vector<16x20xf32>
    %c1_56 = arith.constant 1 : index
    %706 = memref.load %arg7[%c1_56] : memref<4xf32, #tpu.memory_space<smem>>
    %707 = vector.broadcast %706 : f32 to vector<16x20xf32>
    %708 = arith.addf %705, %707 : vector<16x20xf32>
    %709 = arith.addf %682, %708 : vector<16x20xf32>
    %710 = arith.maximumf %682, %708 : vector<16x20xf32>
    %711 = vector.extract_strided_slice %5 {offsets = [0, 0, 0], sizes = [1, 16, 20], strides = [1, 1, 1]} : vector<4x16x20xf32> to vector<1x16x20xf32>
    %712 = vector.shape_cast %711 : vector<1x16x20xf32> to vector<16x20xf32>
    %c8_57 = arith.constant 8 : index
    %713 = memref.load %arg6[%c8_57] : memref<16xf32, #tpu.memory_space<smem>>
    %714 = vector.broadcast %713 : f32 to vector<16x20xf32>
    %715 = arith.mulf %712, %714 : vector<16x20xf32>
    %716 = vector.extract_strided_slice %5 {offsets = [1, 0, 0], sizes = [1, 16, 20], strides = [1, 1, 1]} : vector<4x16x20xf32> to vector<1x16x20xf32>
    %717 = vector.shape_cast %716 : vector<1x16x20xf32> to vector<16x20xf32>
    %c9_58 = arith.constant 9 : index
    %718 = memref.load %arg6[%c9_58] : memref<16xf32, #tpu.memory_space<smem>>
    %719 = vector.broadcast %718 : f32 to vector<16x20xf32>
    %720 = arith.mulf %717, %719 : vector<16x20xf32>
    %721 = arith.addf %715, %720 : vector<16x20xf32>
    %722 = vector.extract_strided_slice %5 {offsets = [2, 0, 0], sizes = [1, 16, 20], strides = [1, 1, 1]} : vector<4x16x20xf32> to vector<1x16x20xf32>
    %723 = vector.shape_cast %722 : vector<1x16x20xf32> to vector<16x20xf32>
    %c10_59 = arith.constant 10 : index
    %724 = memref.load %arg6[%c10_59] : memref<16xf32, #tpu.memory_space<smem>>
    %725 = vector.broadcast %724 : f32 to vector<16x20xf32>
    %726 = arith.mulf %723, %725 : vector<16x20xf32>
    %727 = arith.addf %721, %726 : vector<16x20xf32>
    %728 = vector.extract_strided_slice %5 {offsets = [3, 0, 0], sizes = [1, 16, 20], strides = [1, 1, 1]} : vector<4x16x20xf32> to vector<1x16x20xf32>
    %729 = vector.shape_cast %728 : vector<1x16x20xf32> to vector<16x20xf32>
    %c11_60 = arith.constant 11 : index
    %730 = memref.load %arg6[%c11_60] : memref<16xf32, #tpu.memory_space<smem>>
    %731 = vector.broadcast %730 : f32 to vector<16x20xf32>
    %732 = arith.mulf %729, %731 : vector<16x20xf32>
    %733 = arith.addf %727, %732 : vector<16x20xf32>
    %c2_61 = arith.constant 2 : index
    %734 = memref.load %arg7[%c2_61] : memref<4xf32, #tpu.memory_space<smem>>
    %735 = vector.broadcast %734 : f32 to vector<16x20xf32>
    %736 = arith.addf %733, %735 : vector<16x20xf32>
    %737 = arith.addf %709, %736 : vector<16x20xf32>
    %738 = arith.maximumf %710, %736 : vector<16x20xf32>
    %739 = vector.extract_strided_slice %5 {offsets = [0, 0, 0], sizes = [1, 16, 20], strides = [1, 1, 1]} : vector<4x16x20xf32> to vector<1x16x20xf32>
    %740 = vector.shape_cast %739 : vector<1x16x20xf32> to vector<16x20xf32>
    %c12_62 = arith.constant 12 : index
    %741 = memref.load %arg6[%c12_62] : memref<16xf32, #tpu.memory_space<smem>>
    %742 = vector.broadcast %741 : f32 to vector<16x20xf32>
    %743 = arith.mulf %740, %742 : vector<16x20xf32>
    %744 = vector.extract_strided_slice %5 {offsets = [1, 0, 0], sizes = [1, 16, 20], strides = [1, 1, 1]} : vector<4x16x20xf32> to vector<1x16x20xf32>
    %745 = vector.shape_cast %744 : vector<1x16x20xf32> to vector<16x20xf32>
    %c13_63 = arith.constant 13 : index
    %746 = memref.load %arg6[%c13_63] : memref<16xf32, #tpu.memory_space<smem>>
    %747 = vector.broadcast %746 : f32 to vector<16x20xf32>
    %748 = arith.mulf %745, %747 : vector<16x20xf32>
    %749 = arith.addf %743, %748 : vector<16x20xf32>
    %750 = vector.extract_strided_slice %5 {offsets = [2, 0, 0], sizes = [1, 16, 20], strides = [1, 1, 1]} : vector<4x16x20xf32> to vector<1x16x20xf32>
    %751 = vector.shape_cast %750 : vector<1x16x20xf32> to vector<16x20xf32>
    %c14_64 = arith.constant 14 : index
    %752 = memref.load %arg6[%c14_64] : memref<16xf32, #tpu.memory_space<smem>>
    %753 = vector.broadcast %752 : f32 to vector<16x20xf32>
    %754 = arith.mulf %751, %753 : vector<16x20xf32>
    %755 = arith.addf %749, %754 : vector<16x20xf32>
    %756 = vector.extract_strided_slice %5 {offsets = [3, 0, 0], sizes = [1, 16, 20], strides = [1, 1, 1]} : vector<4x16x20xf32> to vector<1x16x20xf32>
    %757 = vector.shape_cast %756 : vector<1x16x20xf32> to vector<16x20xf32>
    %c15_65 = arith.constant 15 : index
    %758 = memref.load %arg6[%c15_65] : memref<16xf32, #tpu.memory_space<smem>>
    %759 = vector.broadcast %758 : f32 to vector<16x20xf32>
    %760 = arith.mulf %757, %759 : vector<16x20xf32>
    %761 = arith.addf %755, %760 : vector<16x20xf32>
    %c3_66 = arith.constant 3 : index
    %762 = memref.load %arg7[%c3_66] : memref<4xf32, #tpu.memory_space<smem>>
    %763 = vector.broadcast %762 : f32 to vector<16x20xf32>
    %764 = arith.addf %761, %763 : vector<16x20xf32>
    %765 = arith.addf %737, %764 : vector<16x20xf32>
    %766 = arith.maximumf %738, %764 : vector<16x20xf32>
    %cst_67 = arith.constant 2.500000e-01 : f32
    %767 = vector.broadcast %cst_67 : f32 to vector<16x20xf32>
    %768 = arith.mulf %765, %767 : vector<16x20xf32>
    %cst_68 = arith.constant 0.000000e+00 : f32
    %769 = vector.broadcast %cst_68 : f32 to vector<16x20xf32>
    %770 = tpu.concatenate %35, %768, %35 in 1 : vector<16x3xf32>, vector<16x20xf32>, vector<16x3xf32> -> vector<16x26xf32>
    %771 = tpu.concatenate %34, %770, %34 in 0 : vector<3x26xf32>, vector<16x26xf32>, vector<3x26xf32> -> vector<22x26xf32>
    %772 = vector.extract_strided_slice %771 {offsets = [0, 0], sizes = [16, 26], strides = [1, 1]} : vector<22x26xf32> to vector<16x26xf32>
    %773 = vector.extract_strided_slice %772 {offsets = [0, 0], sizes = [16, 20], strides = [1, 1]} : vector<16x26xf32> to vector<16x20xf32>
    %c0_69 = arith.constant 0 : index
    %774 = memref.load %arg8[%c0_69] : memref<98xf32, #tpu.memory_space<smem>>
    %775 = vector.broadcast %774 : f32 to vector<16x20xf32>
    %776 = arith.mulf %773, %775 : vector<16x20xf32>
    %777 = arith.addf %769, %776 : vector<16x20xf32>
    %778 = vector.extract_strided_slice %772 {offsets = [0, 1], sizes = [16, 20], strides = [1, 1]} : vector<16x26xf32> to vector<16x20xf32>
    %c1_70 = arith.constant 1 : index
    %779 = memref.load %arg8[%c1_70] : memref<98xf32, #tpu.memory_space<smem>>
    %780 = vector.broadcast %779 : f32 to vector<16x20xf32>
    %781 = arith.mulf %778, %780 : vector<16x20xf32>
    %782 = arith.addf %777, %781 : vector<16x20xf32>
    %783 = vector.extract_strided_slice %772 {offsets = [0, 2], sizes = [16, 20], strides = [1, 1]} : vector<16x26xf32> to vector<16x20xf32>
    %c2_71 = arith.constant 2 : index
    %784 = memref.load %arg8[%c2_71] : memref<98xf32, #tpu.memory_space<smem>>
    %785 = vector.broadcast %784 : f32 to vector<16x20xf32>
    %786 = arith.mulf %783, %785 : vector<16x20xf32>
    %787 = arith.addf %782, %786 : vector<16x20xf32>
    %788 = vector.extract_strided_slice %772 {offsets = [0, 3], sizes = [16, 20], strides = [1, 1]} : vector<16x26xf32> to vector<16x20xf32>
    %c3_72 = arith.constant 3 : index
    %789 = memref.load %arg8[%c3_72] : memref<98xf32, #tpu.memory_space<smem>>
    %790 = vector.broadcast %789 : f32 to vector<16x20xf32>
    %791 = arith.mulf %788, %790 : vector<16x20xf32>
    %792 = arith.addf %787, %791 : vector<16x20xf32>
    %793 = vector.extract_strided_slice %772 {offsets = [0, 4], sizes = [16, 20], strides = [1, 1]} : vector<16x26xf32> to vector<16x20xf32>
    %c4_73 = arith.constant 4 : index
    %794 = memref.load %arg8[%c4_73] : memref<98xf32, #tpu.memory_space<smem>>
    %795 = vector.broadcast %794 : f32 to vector<16x20xf32>
    %796 = arith.mulf %793, %795 : vector<16x20xf32>
    %797 = arith.addf %792, %796 : vector<16x20xf32>
    %798 = vector.extract_strided_slice %772 {offsets = [0, 5], sizes = [16, 20], strides = [1, 1]} : vector<16x26xf32> to vector<16x20xf32>
    %c5_74 = arith.constant 5 : index
    %799 = memref.load %arg8[%c5_74] : memref<98xf32, #tpu.memory_space<smem>>
    %800 = vector.broadcast %799 : f32 to vector<16x20xf32>
    %801 = arith.mulf %798, %800 : vector<16x20xf32>
    %802 = arith.addf %797, %801 : vector<16x20xf32>
    %803 = vector.extract_strided_slice %772 {offsets = [0, 6], sizes = [16, 20], strides = [1, 1]} : vector<16x26xf32> to vector<16x20xf32>
    %c6_75 = arith.constant 6 : index
    %804 = memref.load %arg8[%c6_75] : memref<98xf32, #tpu.memory_space<smem>>
    %805 = vector.broadcast %804 : f32 to vector<16x20xf32>
    %806 = arith.mulf %803, %805 : vector<16x20xf32>
    %807 = arith.addf %802, %806 : vector<16x20xf32>
    %808 = vector.extract_strided_slice %771 {offsets = [1, 0], sizes = [16, 26], strides = [1, 1]} : vector<22x26xf32> to vector<16x26xf32>
    %809 = vector.extract_strided_slice %808 {offsets = [0, 0], sizes = [16, 20], strides = [1, 1]} : vector<16x26xf32> to vector<16x20xf32>
    %c7_76 = arith.constant 7 : index
    %810 = memref.load %arg8[%c7_76] : memref<98xf32, #tpu.memory_space<smem>>
    %811 = vector.broadcast %810 : f32 to vector<16x20xf32>
    %812 = arith.mulf %809, %811 : vector<16x20xf32>
    %813 = arith.addf %807, %812 : vector<16x20xf32>
    %814 = vector.extract_strided_slice %808 {offsets = [0, 1], sizes = [16, 20], strides = [1, 1]} : vector<16x26xf32> to vector<16x20xf32>
    %c8_77 = arith.constant 8 : index
    %815 = memref.load %arg8[%c8_77] : memref<98xf32, #tpu.memory_space<smem>>
    %816 = vector.broadcast %815 : f32 to vector<16x20xf32>
    %817 = arith.mulf %814, %816 : vector<16x20xf32>
    %818 = arith.addf %813, %817 : vector<16x20xf32>
    %819 = vector.extract_strided_slice %808 {offsets = [0, 2], sizes = [16, 20], strides = [1, 1]} : vector<16x26xf32> to vector<16x20xf32>
    %c9_78 = arith.constant 9 : index
    %820 = memref.load %arg8[%c9_78] : memref<98xf32, #tpu.memory_space<smem>>
    %821 = vector.broadcast %820 : f32 to vector<16x20xf32>
    %822 = arith.mulf %819, %821 : vector<16x20xf32>
    %823 = arith.addf %818, %822 : vector<16x20xf32>
    %824 = vector.extract_strided_slice %808 {offsets = [0, 3], sizes = [16, 20], strides = [1, 1]} : vector<16x26xf32> to vector<16x20xf32>
    %c10_79 = arith.constant 10 : index
    %825 = memref.load %arg8[%c10_79] : memref<98xf32, #tpu.memory_space<smem>>
    %826 = vector.broadcast %825 : f32 to vector<16x20xf32>
    %827 = arith.mulf %824, %826 : vector<16x20xf32>
    %828 = arith.addf %823, %827 : vector<16x20xf32>
    %829 = vector.extract_strided_slice %808 {offsets = [0, 4], sizes = [16, 20], strides = [1, 1]} : vector<16x26xf32> to vector<16x20xf32>
    %c11_80 = arith.constant 11 : index
    %830 = memref.load %arg8[%c11_80] : memref<98xf32, #tpu.memory_space<smem>>
    %831 = vector.broadcast %830 : f32 to vector<16x20xf32>
    %832 = arith.mulf %829, %831 : vector<16x20xf32>
    %833 = arith.addf %828, %832 : vector<16x20xf32>
    %834 = vector.extract_strided_slice %808 {offsets = [0, 5], sizes = [16, 20], strides = [1, 1]} : vector<16x26xf32> to vector<16x20xf32>
    %c12_81 = arith.constant 12 : index
    %835 = memref.load %arg8[%c12_81] : memref<98xf32, #tpu.memory_space<smem>>
    %836 = vector.broadcast %835 : f32 to vector<16x20xf32>
    %837 = arith.mulf %834, %836 : vector<16x20xf32>
    %838 = arith.addf %833, %837 : vector<16x20xf32>
    %839 = vector.extract_strided_slice %808 {offsets = [0, 6], sizes = [16, 20], strides = [1, 1]} : vector<16x26xf32> to vector<16x20xf32>
    %c13_82 = arith.constant 13 : index
    %840 = memref.load %arg8[%c13_82] : memref<98xf32, #tpu.memory_space<smem>>
    %841 = vector.broadcast %840 : f32 to vector<16x20xf32>
    %842 = arith.mulf %839, %841 : vector<16x20xf32>
    %843 = arith.addf %838, %842 : vector<16x20xf32>
    %844 = vector.extract_strided_slice %771 {offsets = [2, 0], sizes = [16, 26], strides = [1, 1]} : vector<22x26xf32> to vector<16x26xf32>
    %845 = vector.extract_strided_slice %844 {offsets = [0, 0], sizes = [16, 20], strides = [1, 1]} : vector<16x26xf32> to vector<16x20xf32>
    %c14_83 = arith.constant 14 : index
    %846 = memref.load %arg8[%c14_83] : memref<98xf32, #tpu.memory_space<smem>>
    %847 = vector.broadcast %846 : f32 to vector<16x20xf32>
    %848 = arith.mulf %845, %847 : vector<16x20xf32>
    %849 = arith.addf %843, %848 : vector<16x20xf32>
    %850 = vector.extract_strided_slice %844 {offsets = [0, 1], sizes = [16, 20], strides = [1, 1]} : vector<16x26xf32> to vector<16x20xf32>
    %c15_84 = arith.constant 15 : index
    %851 = memref.load %arg8[%c15_84] : memref<98xf32, #tpu.memory_space<smem>>
    %852 = vector.broadcast %851 : f32 to vector<16x20xf32>
    %853 = arith.mulf %850, %852 : vector<16x20xf32>
    %854 = arith.addf %849, %853 : vector<16x20xf32>
    %855 = vector.extract_strided_slice %844 {offsets = [0, 2], sizes = [16, 20], strides = [1, 1]} : vector<16x26xf32> to vector<16x20xf32>
    %c16_85 = arith.constant 16 : index
    %856 = memref.load %arg8[%c16_85] : memref<98xf32, #tpu.memory_space<smem>>
    %857 = vector.broadcast %856 : f32 to vector<16x20xf32>
    %858 = arith.mulf %855, %857 : vector<16x20xf32>
    %859 = arith.addf %854, %858 : vector<16x20xf32>
    %860 = vector.extract_strided_slice %844 {offsets = [0, 3], sizes = [16, 20], strides = [1, 1]} : vector<16x26xf32> to vector<16x20xf32>
    %c17_86 = arith.constant 17 : index
    %861 = memref.load %arg8[%c17_86] : memref<98xf32, #tpu.memory_space<smem>>
    %862 = vector.broadcast %861 : f32 to vector<16x20xf32>
    %863 = arith.mulf %860, %862 : vector<16x20xf32>
    %864 = arith.addf %859, %863 : vector<16x20xf32>
    %865 = vector.extract_strided_slice %844 {offsets = [0, 4], sizes = [16, 20], strides = [1, 1]} : vector<16x26xf32> to vector<16x20xf32>
    %c18_87 = arith.constant 18 : index
    %866 = memref.load %arg8[%c18_87] : memref<98xf32, #tpu.memory_space<smem>>
    %867 = vector.broadcast %866 : f32 to vector<16x20xf32>
    %868 = arith.mulf %865, %867 : vector<16x20xf32>
    %869 = arith.addf %864, %868 : vector<16x20xf32>
    %870 = vector.extract_strided_slice %844 {offsets = [0, 5], sizes = [16, 20], strides = [1, 1]} : vector<16x26xf32> to vector<16x20xf32>
    %c19_88 = arith.constant 19 : index
    %871 = memref.load %arg8[%c19_88] : memref<98xf32, #tpu.memory_space<smem>>
    %872 = vector.broadcast %871 : f32 to vector<16x20xf32>
    %873 = arith.mulf %870, %872 : vector<16x20xf32>
    %874 = arith.addf %869, %873 : vector<16x20xf32>
    %875 = vector.extract_strided_slice %844 {offsets = [0, 6], sizes = [16, 20], strides = [1, 1]} : vector<16x26xf32> to vector<16x20xf32>
    %c20_89 = arith.constant 20 : index
    %876 = memref.load %arg8[%c20_89] : memref<98xf32, #tpu.memory_space<smem>>
    %877 = vector.broadcast %876 : f32 to vector<16x20xf32>
    %878 = arith.mulf %875, %877 : vector<16x20xf32>
    %879 = arith.addf %874, %878 : vector<16x20xf32>
    %880 = vector.extract_strided_slice %771 {offsets = [3, 0], sizes = [16, 26], strides = [1, 1]} : vector<22x26xf32> to vector<16x26xf32>
    %881 = vector.extract_strided_slice %880 {offsets = [0, 0], sizes = [16, 20], strides = [1, 1]} : vector<16x26xf32> to vector<16x20xf32>
    %c21_90 = arith.constant 21 : index
    %882 = memref.load %arg8[%c21_90] : memref<98xf32, #tpu.memory_space<smem>>
    %883 = vector.broadcast %882 : f32 to vector<16x20xf32>
    %884 = arith.mulf %881, %883 : vector<16x20xf32>
    %885 = arith.addf %879, %884 : vector<16x20xf32>
    %886 = vector.extract_strided_slice %880 {offsets = [0, 1], sizes = [16, 20], strides = [1, 1]} : vector<16x26xf32> to vector<16x20xf32>
    %c22_91 = arith.constant 22 : index
    %887 = memref.load %arg8[%c22_91] : memref<98xf32, #tpu.memory_space<smem>>
    %888 = vector.broadcast %887 : f32 to vector<16x20xf32>
    %889 = arith.mulf %886, %888 : vector<16x20xf32>
    %890 = arith.addf %885, %889 : vector<16x20xf32>
    %891 = vector.extract_strided_slice %880 {offsets = [0, 2], sizes = [16, 20], strides = [1, 1]} : vector<16x26xf32> to vector<16x20xf32>
    %c23_92 = arith.constant 23 : index
    %892 = memref.load %arg8[%c23_92] : memref<98xf32, #tpu.memory_space<smem>>
    %893 = vector.broadcast %892 : f32 to vector<16x20xf32>
    %894 = arith.mulf %891, %893 : vector<16x20xf32>
    %895 = arith.addf %890, %894 : vector<16x20xf32>
    %896 = vector.extract_strided_slice %880 {offsets = [0, 3], sizes = [16, 20], strides = [1, 1]} : vector<16x26xf32> to vector<16x20xf32>
    %c24_93 = arith.constant 24 : index
    %897 = memref.load %arg8[%c24_93] : memref<98xf32, #tpu.memory_space<smem>>
    %898 = vector.broadcast %897 : f32 to vector<16x20xf32>
    %899 = arith.mulf %896, %898 : vector<16x20xf32>
    %900 = arith.addf %895, %899 : vector<16x20xf32>
    %901 = vector.extract_strided_slice %880 {offsets = [0, 4], sizes = [16, 20], strides = [1, 1]} : vector<16x26xf32> to vector<16x20xf32>
    %c25_94 = arith.constant 25 : index
    %902 = memref.load %arg8[%c25_94] : memref<98xf32, #tpu.memory_space<smem>>
    %903 = vector.broadcast %902 : f32 to vector<16x20xf32>
    %904 = arith.mulf %901, %903 : vector<16x20xf32>
    %905 = arith.addf %900, %904 : vector<16x20xf32>
    %906 = vector.extract_strided_slice %880 {offsets = [0, 5], sizes = [16, 20], strides = [1, 1]} : vector<16x26xf32> to vector<16x20xf32>
    %c26_95 = arith.constant 26 : index
    %907 = memref.load %arg8[%c26_95] : memref<98xf32, #tpu.memory_space<smem>>
    %908 = vector.broadcast %907 : f32 to vector<16x20xf32>
    %909 = arith.mulf %906, %908 : vector<16x20xf32>
    %910 = arith.addf %905, %909 : vector<16x20xf32>
    %911 = vector.extract_strided_slice %880 {offsets = [0, 6], sizes = [16, 20], strides = [1, 1]} : vector<16x26xf32> to vector<16x20xf32>
    %c27_96 = arith.constant 27 : index
    %912 = memref.load %arg8[%c27_96] : memref<98xf32, #tpu.memory_space<smem>>
    %913 = vector.broadcast %912 : f32 to vector<16x20xf32>
    %914 = arith.mulf %911, %913 : vector<16x20xf32>
    %915 = arith.addf %910, %914 : vector<16x20xf32>
    %916 = vector.extract_strided_slice %771 {offsets = [4, 0], sizes = [16, 26], strides = [1, 1]} : vector<22x26xf32> to vector<16x26xf32>
    %917 = vector.extract_strided_slice %916 {offsets = [0, 0], sizes = [16, 20], strides = [1, 1]} : vector<16x26xf32> to vector<16x20xf32>
    %c28_97 = arith.constant 28 : index
    %918 = memref.load %arg8[%c28_97] : memref<98xf32, #tpu.memory_space<smem>>
    %919 = vector.broadcast %918 : f32 to vector<16x20xf32>
    %920 = arith.mulf %917, %919 : vector<16x20xf32>
    %921 = arith.addf %915, %920 : vector<16x20xf32>
    %922 = vector.extract_strided_slice %916 {offsets = [0, 1], sizes = [16, 20], strides = [1, 1]} : vector<16x26xf32> to vector<16x20xf32>
    %c29_98 = arith.constant 29 : index
    %923 = memref.load %arg8[%c29_98] : memref<98xf32, #tpu.memory_space<smem>>
    %924 = vector.broadcast %923 : f32 to vector<16x20xf32>
    %925 = arith.mulf %922, %924 : vector<16x20xf32>
    %926 = arith.addf %921, %925 : vector<16x20xf32>
    %927 = vector.extract_strided_slice %916 {offsets = [0, 2], sizes = [16, 20], strides = [1, 1]} : vector<16x26xf32> to vector<16x20xf32>
    %c30_99 = arith.constant 30 : index
    %928 = memref.load %arg8[%c30_99] : memref<98xf32, #tpu.memory_space<smem>>
    %929 = vector.broadcast %928 : f32 to vector<16x20xf32>
    %930 = arith.mulf %927, %929 : vector<16x20xf32>
    %931 = arith.addf %926, %930 : vector<16x20xf32>
    %932 = vector.extract_strided_slice %916 {offsets = [0, 3], sizes = [16, 20], strides = [1, 1]} : vector<16x26xf32> to vector<16x20xf32>
    %c31_100 = arith.constant 31 : index
    %933 = memref.load %arg8[%c31_100] : memref<98xf32, #tpu.memory_space<smem>>
    %934 = vector.broadcast %933 : f32 to vector<16x20xf32>
    %935 = arith.mulf %932, %934 : vector<16x20xf32>
    %936 = arith.addf %931, %935 : vector<16x20xf32>
    %937 = vector.extract_strided_slice %916 {offsets = [0, 4], sizes = [16, 20], strides = [1, 1]} : vector<16x26xf32> to vector<16x20xf32>
    %c32_101 = arith.constant 32 : index
    %938 = memref.load %arg8[%c32_101] : memref<98xf32, #tpu.memory_space<smem>>
    %939 = vector.broadcast %938 : f32 to vector<16x20xf32>
    %940 = arith.mulf %937, %939 : vector<16x20xf32>
    %941 = arith.addf %936, %940 : vector<16x20xf32>
    %942 = vector.extract_strided_slice %916 {offsets = [0, 5], sizes = [16, 20], strides = [1, 1]} : vector<16x26xf32> to vector<16x20xf32>
    %c33_102 = arith.constant 33 : index
    %943 = memref.load %arg8[%c33_102] : memref<98xf32, #tpu.memory_space<smem>>
    %944 = vector.broadcast %943 : f32 to vector<16x20xf32>
    %945 = arith.mulf %942, %944 : vector<16x20xf32>
    %946 = arith.addf %941, %945 : vector<16x20xf32>
    %947 = vector.extract_strided_slice %916 {offsets = [0, 6], sizes = [16, 20], strides = [1, 1]} : vector<16x26xf32> to vector<16x20xf32>
    %c34_103 = arith.constant 34 : index
    %948 = memref.load %arg8[%c34_103] : memref<98xf32, #tpu.memory_space<smem>>
    %949 = vector.broadcast %948 : f32 to vector<16x20xf32>
    %950 = arith.mulf %947, %949 : vector<16x20xf32>
    %951 = arith.addf %946, %950 : vector<16x20xf32>
    %952 = vector.extract_strided_slice %771 {offsets = [5, 0], sizes = [16, 26], strides = [1, 1]} : vector<22x26xf32> to vector<16x26xf32>
    %953 = vector.extract_strided_slice %952 {offsets = [0, 0], sizes = [16, 20], strides = [1, 1]} : vector<16x26xf32> to vector<16x20xf32>
    %c35_104 = arith.constant 35 : index
    %954 = memref.load %arg8[%c35_104] : memref<98xf32, #tpu.memory_space<smem>>
    %955 = vector.broadcast %954 : f32 to vector<16x20xf32>
    %956 = arith.mulf %953, %955 : vector<16x20xf32>
    %957 = arith.addf %951, %956 : vector<16x20xf32>
    %958 = vector.extract_strided_slice %952 {offsets = [0, 1], sizes = [16, 20], strides = [1, 1]} : vector<16x26xf32> to vector<16x20xf32>
    %c36_105 = arith.constant 36 : index
    %959 = memref.load %arg8[%c36_105] : memref<98xf32, #tpu.memory_space<smem>>
    %960 = vector.broadcast %959 : f32 to vector<16x20xf32>
    %961 = arith.mulf %958, %960 : vector<16x20xf32>
    %962 = arith.addf %957, %961 : vector<16x20xf32>
    %963 = vector.extract_strided_slice %952 {offsets = [0, 2], sizes = [16, 20], strides = [1, 1]} : vector<16x26xf32> to vector<16x20xf32>
    %c37_106 = arith.constant 37 : index
    %964 = memref.load %arg8[%c37_106] : memref<98xf32, #tpu.memory_space<smem>>
    %965 = vector.broadcast %964 : f32 to vector<16x20xf32>
    %966 = arith.mulf %963, %965 : vector<16x20xf32>
    %967 = arith.addf %962, %966 : vector<16x20xf32>
    %968 = vector.extract_strided_slice %952 {offsets = [0, 3], sizes = [16, 20], strides = [1, 1]} : vector<16x26xf32> to vector<16x20xf32>
    %c38_107 = arith.constant 38 : index
    %969 = memref.load %arg8[%c38_107] : memref<98xf32, #tpu.memory_space<smem>>
    %970 = vector.broadcast %969 : f32 to vector<16x20xf32>
    %971 = arith.mulf %968, %970 : vector<16x20xf32>
    %972 = arith.addf %967, %971 : vector<16x20xf32>
    %973 = vector.extract_strided_slice %952 {offsets = [0, 4], sizes = [16, 20], strides = [1, 1]} : vector<16x26xf32> to vector<16x20xf32>
    %c39_108 = arith.constant 39 : index
    %974 = memref.load %arg8[%c39_108] : memref<98xf32, #tpu.memory_space<smem>>
    %975 = vector.broadcast %974 : f32 to vector<16x20xf32>
    %976 = arith.mulf %973, %975 : vector<16x20xf32>
    %977 = arith.addf %972, %976 : vector<16x20xf32>
    %978 = vector.extract_strided_slice %952 {offsets = [0, 5], sizes = [16, 20], strides = [1, 1]} : vector<16x26xf32> to vector<16x20xf32>
    %c40_109 = arith.constant 40 : index
    %979 = memref.load %arg8[%c40_109] : memref<98xf32, #tpu.memory_space<smem>>
    %980 = vector.broadcast %979 : f32 to vector<16x20xf32>
    %981 = arith.mulf %978, %980 : vector<16x20xf32>
    %982 = arith.addf %977, %981 : vector<16x20xf32>
    %983 = vector.extract_strided_slice %952 {offsets = [0, 6], sizes = [16, 20], strides = [1, 1]} : vector<16x26xf32> to vector<16x20xf32>
    %c41_110 = arith.constant 41 : index
    %984 = memref.load %arg8[%c41_110] : memref<98xf32, #tpu.memory_space<smem>>
    %985 = vector.broadcast %984 : f32 to vector<16x20xf32>
    %986 = arith.mulf %983, %985 : vector<16x20xf32>
    %987 = arith.addf %982, %986 : vector<16x20xf32>
    %988 = vector.extract_strided_slice %771 {offsets = [6, 0], sizes = [16, 26], strides = [1, 1]} : vector<22x26xf32> to vector<16x26xf32>
    %989 = vector.extract_strided_slice %988 {offsets = [0, 0], sizes = [16, 20], strides = [1, 1]} : vector<16x26xf32> to vector<16x20xf32>
    %c42_111 = arith.constant 42 : index
    %990 = memref.load %arg8[%c42_111] : memref<98xf32, #tpu.memory_space<smem>>
    %991 = vector.broadcast %990 : f32 to vector<16x20xf32>
    %992 = arith.mulf %989, %991 : vector<16x20xf32>
    %993 = arith.addf %987, %992 : vector<16x20xf32>
    %994 = vector.extract_strided_slice %988 {offsets = [0, 1], sizes = [16, 20], strides = [1, 1]} : vector<16x26xf32> to vector<16x20xf32>
    %c43_112 = arith.constant 43 : index
    %995 = memref.load %arg8[%c43_112] : memref<98xf32, #tpu.memory_space<smem>>
    %996 = vector.broadcast %995 : f32 to vector<16x20xf32>
    %997 = arith.mulf %994, %996 : vector<16x20xf32>
    %998 = arith.addf %993, %997 : vector<16x20xf32>
    %999 = vector.extract_strided_slice %988 {offsets = [0, 2], sizes = [16, 20], strides = [1, 1]} : vector<16x26xf32> to vector<16x20xf32>
    %c44_113 = arith.constant 44 : index
    %1000 = memref.load %arg8[%c44_113] : memref<98xf32, #tpu.memory_space<smem>>
    %1001 = vector.broadcast %1000 : f32 to vector<16x20xf32>
    %1002 = arith.mulf %999, %1001 : vector<16x20xf32>
    %1003 = arith.addf %998, %1002 : vector<16x20xf32>
    %1004 = vector.extract_strided_slice %988 {offsets = [0, 3], sizes = [16, 20], strides = [1, 1]} : vector<16x26xf32> to vector<16x20xf32>
    %c45_114 = arith.constant 45 : index
    %1005 = memref.load %arg8[%c45_114] : memref<98xf32, #tpu.memory_space<smem>>
    %1006 = vector.broadcast %1005 : f32 to vector<16x20xf32>
    %1007 = arith.mulf %1004, %1006 : vector<16x20xf32>
    %1008 = arith.addf %1003, %1007 : vector<16x20xf32>
    %1009 = vector.extract_strided_slice %988 {offsets = [0, 4], sizes = [16, 20], strides = [1, 1]} : vector<16x26xf32> to vector<16x20xf32>
    %c46_115 = arith.constant 46 : index
    %1010 = memref.load %arg8[%c46_115] : memref<98xf32, #tpu.memory_space<smem>>
    %1011 = vector.broadcast %1010 : f32 to vector<16x20xf32>
    %1012 = arith.mulf %1009, %1011 : vector<16x20xf32>
    %1013 = arith.addf %1008, %1012 : vector<16x20xf32>
    %1014 = vector.extract_strided_slice %988 {offsets = [0, 5], sizes = [16, 20], strides = [1, 1]} : vector<16x26xf32> to vector<16x20xf32>
    %c47_116 = arith.constant 47 : index
    %1015 = memref.load %arg8[%c47_116] : memref<98xf32, #tpu.memory_space<smem>>
    %1016 = vector.broadcast %1015 : f32 to vector<16x20xf32>
    %1017 = arith.mulf %1014, %1016 : vector<16x20xf32>
    %1018 = arith.addf %1013, %1017 : vector<16x20xf32>
    %1019 = vector.extract_strided_slice %988 {offsets = [0, 6], sizes = [16, 20], strides = [1, 1]} : vector<16x26xf32> to vector<16x20xf32>
    %c48_117 = arith.constant 48 : index
    %1020 = memref.load %arg8[%c48_117] : memref<98xf32, #tpu.memory_space<smem>>
    %1021 = vector.broadcast %1020 : f32 to vector<16x20xf32>
    %1022 = arith.mulf %1019, %1021 : vector<16x20xf32>
    %1023 = arith.addf %1018, %1022 : vector<16x20xf32>
    %1024 = tpu.concatenate %35, %766, %35 in 1 : vector<16x3xf32>, vector<16x20xf32>, vector<16x3xf32> -> vector<16x26xf32>
    %1025 = tpu.concatenate %34, %1024, %34 in 0 : vector<3x26xf32>, vector<16x26xf32>, vector<3x26xf32> -> vector<22x26xf32>
    %1026 = vector.extract_strided_slice %1025 {offsets = [0, 0], sizes = [16, 26], strides = [1, 1]} : vector<22x26xf32> to vector<16x26xf32>
    %1027 = vector.extract_strided_slice %1026 {offsets = [0, 0], sizes = [16, 20], strides = [1, 1]} : vector<16x26xf32> to vector<16x20xf32>
    %c49_118 = arith.constant 49 : index
    %1028 = memref.load %arg8[%c49_118] : memref<98xf32, #tpu.memory_space<smem>>
    %1029 = vector.broadcast %1028 : f32 to vector<16x20xf32>
    %1030 = arith.mulf %1027, %1029 : vector<16x20xf32>
    %1031 = arith.addf %1023, %1030 : vector<16x20xf32>
    %1032 = vector.extract_strided_slice %1026 {offsets = [0, 1], sizes = [16, 20], strides = [1, 1]} : vector<16x26xf32> to vector<16x20xf32>
    %c50_119 = arith.constant 50 : index
    %1033 = memref.load %arg8[%c50_119] : memref<98xf32, #tpu.memory_space<smem>>
    %1034 = vector.broadcast %1033 : f32 to vector<16x20xf32>
    %1035 = arith.mulf %1032, %1034 : vector<16x20xf32>
    %1036 = arith.addf %1031, %1035 : vector<16x20xf32>
    %1037 = vector.extract_strided_slice %1026 {offsets = [0, 2], sizes = [16, 20], strides = [1, 1]} : vector<16x26xf32> to vector<16x20xf32>
    %c51_120 = arith.constant 51 : index
    %1038 = memref.load %arg8[%c51_120] : memref<98xf32, #tpu.memory_space<smem>>
    %1039 = vector.broadcast %1038 : f32 to vector<16x20xf32>
    %1040 = arith.mulf %1037, %1039 : vector<16x20xf32>
    %1041 = arith.addf %1036, %1040 : vector<16x20xf32>
    %1042 = vector.extract_strided_slice %1026 {offsets = [0, 3], sizes = [16, 20], strides = [1, 1]} : vector<16x26xf32> to vector<16x20xf32>
    %c52_121 = arith.constant 52 : index
    %1043 = memref.load %arg8[%c52_121] : memref<98xf32, #tpu.memory_space<smem>>
    %1044 = vector.broadcast %1043 : f32 to vector<16x20xf32>
    %1045 = arith.mulf %1042, %1044 : vector<16x20xf32>
    %1046 = arith.addf %1041, %1045 : vector<16x20xf32>
    %1047 = vector.extract_strided_slice %1026 {offsets = [0, 4], sizes = [16, 20], strides = [1, 1]} : vector<16x26xf32> to vector<16x20xf32>
    %c53_122 = arith.constant 53 : index
    %1048 = memref.load %arg8[%c53_122] : memref<98xf32, #tpu.memory_space<smem>>
    %1049 = vector.broadcast %1048 : f32 to vector<16x20xf32>
    %1050 = arith.mulf %1047, %1049 : vector<16x20xf32>
    %1051 = arith.addf %1046, %1050 : vector<16x20xf32>
    %1052 = vector.extract_strided_slice %1026 {offsets = [0, 5], sizes = [16, 20], strides = [1, 1]} : vector<16x26xf32> to vector<16x20xf32>
    %c54_123 = arith.constant 54 : index
    %1053 = memref.load %arg8[%c54_123] : memref<98xf32, #tpu.memory_space<smem>>
    %1054 = vector.broadcast %1053 : f32 to vector<16x20xf32>
    %1055 = arith.mulf %1052, %1054 : vector<16x20xf32>
    %1056 = arith.addf %1051, %1055 : vector<16x20xf32>
    %1057 = vector.extract_strided_slice %1026 {offsets = [0, 6], sizes = [16, 20], strides = [1, 1]} : vector<16x26xf32> to vector<16x20xf32>
    %c55_124 = arith.constant 55 : index
    %1058 = memref.load %arg8[%c55_124] : memref<98xf32, #tpu.memory_space<smem>>
    %1059 = vector.broadcast %1058 : f32 to vector<16x20xf32>
    %1060 = arith.mulf %1057, %1059 : vector<16x20xf32>
    %1061 = arith.addf %1056, %1060 : vector<16x20xf32>
    %1062 = vector.extract_strided_slice %1025 {offsets = [1, 0], sizes = [16, 26], strides = [1, 1]} : vector<22x26xf32> to vector<16x26xf32>
    %1063 = vector.extract_strided_slice %1062 {offsets = [0, 0], sizes = [16, 20], strides = [1, 1]} : vector<16x26xf32> to vector<16x20xf32>
    %c56_125 = arith.constant 56 : index
    %1064 = memref.load %arg8[%c56_125] : memref<98xf32, #tpu.memory_space<smem>>
    %1065 = vector.broadcast %1064 : f32 to vector<16x20xf32>
    %1066 = arith.mulf %1063, %1065 : vector<16x20xf32>
    %1067 = arith.addf %1061, %1066 : vector<16x20xf32>
    %1068 = vector.extract_strided_slice %1062 {offsets = [0, 1], sizes = [16, 20], strides = [1, 1]} : vector<16x26xf32> to vector<16x20xf32>
    %c57_126 = arith.constant 57 : index
    %1069 = memref.load %arg8[%c57_126] : memref<98xf32, #tpu.memory_space<smem>>
    %1070 = vector.broadcast %1069 : f32 to vector<16x20xf32>
    %1071 = arith.mulf %1068, %1070 : vector<16x20xf32>
    %1072 = arith.addf %1067, %1071 : vector<16x20xf32>
    %1073 = vector.extract_strided_slice %1062 {offsets = [0, 2], sizes = [16, 20], strides = [1, 1]} : vector<16x26xf32> to vector<16x20xf32>
    %c58_127 = arith.constant 58 : index
    %1074 = memref.load %arg8[%c58_127] : memref<98xf32, #tpu.memory_space<smem>>
    %1075 = vector.broadcast %1074 : f32 to vector<16x20xf32>
    %1076 = arith.mulf %1073, %1075 : vector<16x20xf32>
    %1077 = arith.addf %1072, %1076 : vector<16x20xf32>
    %1078 = vector.extract_strided_slice %1062 {offsets = [0, 3], sizes = [16, 20], strides = [1, 1]} : vector<16x26xf32> to vector<16x20xf32>
    %c59_128 = arith.constant 59 : index
    %1079 = memref.load %arg8[%c59_128] : memref<98xf32, #tpu.memory_space<smem>>
    %1080 = vector.broadcast %1079 : f32 to vector<16x20xf32>
    %1081 = arith.mulf %1078, %1080 : vector<16x20xf32>
    %1082 = arith.addf %1077, %1081 : vector<16x20xf32>
    %1083 = vector.extract_strided_slice %1062 {offsets = [0, 4], sizes = [16, 20], strides = [1, 1]} : vector<16x26xf32> to vector<16x20xf32>
    %c60_129 = arith.constant 60 : index
    %1084 = memref.load %arg8[%c60_129] : memref<98xf32, #tpu.memory_space<smem>>
    %1085 = vector.broadcast %1084 : f32 to vector<16x20xf32>
    %1086 = arith.mulf %1083, %1085 : vector<16x20xf32>
    %1087 = arith.addf %1082, %1086 : vector<16x20xf32>
    %1088 = vector.extract_strided_slice %1062 {offsets = [0, 5], sizes = [16, 20], strides = [1, 1]} : vector<16x26xf32> to vector<16x20xf32>
    %c61_130 = arith.constant 61 : index
    %1089 = memref.load %arg8[%c61_130] : memref<98xf32, #tpu.memory_space<smem>>
    %1090 = vector.broadcast %1089 : f32 to vector<16x20xf32>
    %1091 = arith.mulf %1088, %1090 : vector<16x20xf32>
    %1092 = arith.addf %1087, %1091 : vector<16x20xf32>
    %1093 = vector.extract_strided_slice %1062 {offsets = [0, 6], sizes = [16, 20], strides = [1, 1]} : vector<16x26xf32> to vector<16x20xf32>
    %c62_131 = arith.constant 62 : index
    %1094 = memref.load %arg8[%c62_131] : memref<98xf32, #tpu.memory_space<smem>>
    %1095 = vector.broadcast %1094 : f32 to vector<16x20xf32>
    %1096 = arith.mulf %1093, %1095 : vector<16x20xf32>
    %1097 = arith.addf %1092, %1096 : vector<16x20xf32>
    %1098 = vector.extract_strided_slice %1025 {offsets = [2, 0], sizes = [16, 26], strides = [1, 1]} : vector<22x26xf32> to vector<16x26xf32>
    %1099 = vector.extract_strided_slice %1098 {offsets = [0, 0], sizes = [16, 20], strides = [1, 1]} : vector<16x26xf32> to vector<16x20xf32>
    %c63_132 = arith.constant 63 : index
    %1100 = memref.load %arg8[%c63_132] : memref<98xf32, #tpu.memory_space<smem>>
    %1101 = vector.broadcast %1100 : f32 to vector<16x20xf32>
    %1102 = arith.mulf %1099, %1101 : vector<16x20xf32>
    %1103 = arith.addf %1097, %1102 : vector<16x20xf32>
    %1104 = vector.extract_strided_slice %1098 {offsets = [0, 1], sizes = [16, 20], strides = [1, 1]} : vector<16x26xf32> to vector<16x20xf32>
    %c64_133 = arith.constant 64 : index
    %1105 = memref.load %arg8[%c64_133] : memref<98xf32, #tpu.memory_space<smem>>
    %1106 = vector.broadcast %1105 : f32 to vector<16x20xf32>
    %1107 = arith.mulf %1104, %1106 : vector<16x20xf32>
    %1108 = arith.addf %1103, %1107 : vector<16x20xf32>
    %1109 = vector.extract_strided_slice %1098 {offsets = [0, 2], sizes = [16, 20], strides = [1, 1]} : vector<16x26xf32> to vector<16x20xf32>
    %c65_134 = arith.constant 65 : index
    %1110 = memref.load %arg8[%c65_134] : memref<98xf32, #tpu.memory_space<smem>>
    %1111 = vector.broadcast %1110 : f32 to vector<16x20xf32>
    %1112 = arith.mulf %1109, %1111 : vector<16x20xf32>
    %1113 = arith.addf %1108, %1112 : vector<16x20xf32>
    %1114 = vector.extract_strided_slice %1098 {offsets = [0, 3], sizes = [16, 20], strides = [1, 1]} : vector<16x26xf32> to vector<16x20xf32>
    %c66_135 = arith.constant 66 : index
    %1115 = memref.load %arg8[%c66_135] : memref<98xf32, #tpu.memory_space<smem>>
    %1116 = vector.broadcast %1115 : f32 to vector<16x20xf32>
    %1117 = arith.mulf %1114, %1116 : vector<16x20xf32>
    %1118 = arith.addf %1113, %1117 : vector<16x20xf32>
    %1119 = vector.extract_strided_slice %1098 {offsets = [0, 4], sizes = [16, 20], strides = [1, 1]} : vector<16x26xf32> to vector<16x20xf32>
    %c67_136 = arith.constant 67 : index
    %1120 = memref.load %arg8[%c67_136] : memref<98xf32, #tpu.memory_space<smem>>
    %1121 = vector.broadcast %1120 : f32 to vector<16x20xf32>
    %1122 = arith.mulf %1119, %1121 : vector<16x20xf32>
    %1123 = arith.addf %1118, %1122 : vector<16x20xf32>
    %1124 = vector.extract_strided_slice %1098 {offsets = [0, 5], sizes = [16, 20], strides = [1, 1]} : vector<16x26xf32> to vector<16x20xf32>
    %c68_137 = arith.constant 68 : index
    %1125 = memref.load %arg8[%c68_137] : memref<98xf32, #tpu.memory_space<smem>>
    %1126 = vector.broadcast %1125 : f32 to vector<16x20xf32>
    %1127 = arith.mulf %1124, %1126 : vector<16x20xf32>
    %1128 = arith.addf %1123, %1127 : vector<16x20xf32>
    %1129 = vector.extract_strided_slice %1098 {offsets = [0, 6], sizes = [16, 20], strides = [1, 1]} : vector<16x26xf32> to vector<16x20xf32>
    %c69_138 = arith.constant 69 : index
    %1130 = memref.load %arg8[%c69_138] : memref<98xf32, #tpu.memory_space<smem>>
    %1131 = vector.broadcast %1130 : f32 to vector<16x20xf32>
    %1132 = arith.mulf %1129, %1131 : vector<16x20xf32>
    %1133 = arith.addf %1128, %1132 : vector<16x20xf32>
    %1134 = vector.extract_strided_slice %1025 {offsets = [3, 0], sizes = [16, 26], strides = [1, 1]} : vector<22x26xf32> to vector<16x26xf32>
    %1135 = vector.extract_strided_slice %1134 {offsets = [0, 0], sizes = [16, 20], strides = [1, 1]} : vector<16x26xf32> to vector<16x20xf32>
    %c70_139 = arith.constant 70 : index
    %1136 = memref.load %arg8[%c70_139] : memref<98xf32, #tpu.memory_space<smem>>
    %1137 = vector.broadcast %1136 : f32 to vector<16x20xf32>
    %1138 = arith.mulf %1135, %1137 : vector<16x20xf32>
    %1139 = arith.addf %1133, %1138 : vector<16x20xf32>
    %1140 = vector.extract_strided_slice %1134 {offsets = [0, 1], sizes = [16, 20], strides = [1, 1]} : vector<16x26xf32> to vector<16x20xf32>
    %c71_140 = arith.constant 71 : index
    %1141 = memref.load %arg8[%c71_140] : memref<98xf32, #tpu.memory_space<smem>>
    %1142 = vector.broadcast %1141 : f32 to vector<16x20xf32>
    %1143 = arith.mulf %1140, %1142 : vector<16x20xf32>
    %1144 = arith.addf %1139, %1143 : vector<16x20xf32>
    %1145 = vector.extract_strided_slice %1134 {offsets = [0, 2], sizes = [16, 20], strides = [1, 1]} : vector<16x26xf32> to vector<16x20xf32>
    %c72_141 = arith.constant 72 : index
    %1146 = memref.load %arg8[%c72_141] : memref<98xf32, #tpu.memory_space<smem>>
    %1147 = vector.broadcast %1146 : f32 to vector<16x20xf32>
    %1148 = arith.mulf %1145, %1147 : vector<16x20xf32>
    %1149 = arith.addf %1144, %1148 : vector<16x20xf32>
    %1150 = vector.extract_strided_slice %1134 {offsets = [0, 3], sizes = [16, 20], strides = [1, 1]} : vector<16x26xf32> to vector<16x20xf32>
    %c73_142 = arith.constant 73 : index
    %1151 = memref.load %arg8[%c73_142] : memref<98xf32, #tpu.memory_space<smem>>
    %1152 = vector.broadcast %1151 : f32 to vector<16x20xf32>
    %1153 = arith.mulf %1150, %1152 : vector<16x20xf32>
    %1154 = arith.addf %1149, %1153 : vector<16x20xf32>
    %1155 = vector.extract_strided_slice %1134 {offsets = [0, 4], sizes = [16, 20], strides = [1, 1]} : vector<16x26xf32> to vector<16x20xf32>
    %c74_143 = arith.constant 74 : index
    %1156 = memref.load %arg8[%c74_143] : memref<98xf32, #tpu.memory_space<smem>>
    %1157 = vector.broadcast %1156 : f32 to vector<16x20xf32>
    %1158 = arith.mulf %1155, %1157 : vector<16x20xf32>
    %1159 = arith.addf %1154, %1158 : vector<16x20xf32>
    %1160 = vector.extract_strided_slice %1134 {offsets = [0, 5], sizes = [16, 20], strides = [1, 1]} : vector<16x26xf32> to vector<16x20xf32>
    %c75_144 = arith.constant 75 : index
    %1161 = memref.load %arg8[%c75_144] : memref<98xf32, #tpu.memory_space<smem>>
    %1162 = vector.broadcast %1161 : f32 to vector<16x20xf32>
    %1163 = arith.mulf %1160, %1162 : vector<16x20xf32>
    %1164 = arith.addf %1159, %1163 : vector<16x20xf32>
    %1165 = vector.extract_strided_slice %1134 {offsets = [0, 6], sizes = [16, 20], strides = [1, 1]} : vector<16x26xf32> to vector<16x20xf32>
    %c76_145 = arith.constant 76 : index
    %1166 = memref.load %arg8[%c76_145] : memref<98xf32, #tpu.memory_space<smem>>
    %1167 = vector.broadcast %1166 : f32 to vector<16x20xf32>
    %1168 = arith.mulf %1165, %1167 : vector<16x20xf32>
    %1169 = arith.addf %1164, %1168 : vector<16x20xf32>
    %1170 = vector.extract_strided_slice %1025 {offsets = [4, 0], sizes = [16, 26], strides = [1, 1]} : vector<22x26xf32> to vector<16x26xf32>
    %1171 = vector.extract_strided_slice %1170 {offsets = [0, 0], sizes = [16, 20], strides = [1, 1]} : vector<16x26xf32> to vector<16x20xf32>
    %c77_146 = arith.constant 77 : index
    %1172 = memref.load %arg8[%c77_146] : memref<98xf32, #tpu.memory_space<smem>>
    %1173 = vector.broadcast %1172 : f32 to vector<16x20xf32>
    %1174 = arith.mulf %1171, %1173 : vector<16x20xf32>
    %1175 = arith.addf %1169, %1174 : vector<16x20xf32>
    %1176 = vector.extract_strided_slice %1170 {offsets = [0, 1], sizes = [16, 20], strides = [1, 1]} : vector<16x26xf32> to vector<16x20xf32>
    %c78_147 = arith.constant 78 : index
    %1177 = memref.load %arg8[%c78_147] : memref<98xf32, #tpu.memory_space<smem>>
    %1178 = vector.broadcast %1177 : f32 to vector<16x20xf32>
    %1179 = arith.mulf %1176, %1178 : vector<16x20xf32>
    %1180 = arith.addf %1175, %1179 : vector<16x20xf32>
    %1181 = vector.extract_strided_slice %1170 {offsets = [0, 2], sizes = [16, 20], strides = [1, 1]} : vector<16x26xf32> to vector<16x20xf32>
    %c79_148 = arith.constant 79 : index
    %1182 = memref.load %arg8[%c79_148] : memref<98xf32, #tpu.memory_space<smem>>
    %1183 = vector.broadcast %1182 : f32 to vector<16x20xf32>
    %1184 = arith.mulf %1181, %1183 : vector<16x20xf32>
    %1185 = arith.addf %1180, %1184 : vector<16x20xf32>
    %1186 = vector.extract_strided_slice %1170 {offsets = [0, 3], sizes = [16, 20], strides = [1, 1]} : vector<16x26xf32> to vector<16x20xf32>
    %c80_149 = arith.constant 80 : index
    %1187 = memref.load %arg8[%c80_149] : memref<98xf32, #tpu.memory_space<smem>>
    %1188 = vector.broadcast %1187 : f32 to vector<16x20xf32>
    %1189 = arith.mulf %1186, %1188 : vector<16x20xf32>
    %1190 = arith.addf %1185, %1189 : vector<16x20xf32>
    %1191 = vector.extract_strided_slice %1170 {offsets = [0, 4], sizes = [16, 20], strides = [1, 1]} : vector<16x26xf32> to vector<16x20xf32>
    %c81_150 = arith.constant 81 : index
    %1192 = memref.load %arg8[%c81_150] : memref<98xf32, #tpu.memory_space<smem>>
    %1193 = vector.broadcast %1192 : f32 to vector<16x20xf32>
    %1194 = arith.mulf %1191, %1193 : vector<16x20xf32>
    %1195 = arith.addf %1190, %1194 : vector<16x20xf32>
    %1196 = vector.extract_strided_slice %1170 {offsets = [0, 5], sizes = [16, 20], strides = [1, 1]} : vector<16x26xf32> to vector<16x20xf32>
    %c82_151 = arith.constant 82 : index
    %1197 = memref.load %arg8[%c82_151] : memref<98xf32, #tpu.memory_space<smem>>
    %1198 = vector.broadcast %1197 : f32 to vector<16x20xf32>
    %1199 = arith.mulf %1196, %1198 : vector<16x20xf32>
    %1200 = arith.addf %1195, %1199 : vector<16x20xf32>
    %1201 = vector.extract_strided_slice %1170 {offsets = [0, 6], sizes = [16, 20], strides = [1, 1]} : vector<16x26xf32> to vector<16x20xf32>
    %c83_152 = arith.constant 83 : index
    %1202 = memref.load %arg8[%c83_152] : memref<98xf32, #tpu.memory_space<smem>>
    %1203 = vector.broadcast %1202 : f32 to vector<16x20xf32>
    %1204 = arith.mulf %1201, %1203 : vector<16x20xf32>
    %1205 = arith.addf %1200, %1204 : vector<16x20xf32>
    %1206 = vector.extract_strided_slice %1025 {offsets = [5, 0], sizes = [16, 26], strides = [1, 1]} : vector<22x26xf32> to vector<16x26xf32>
    %1207 = vector.extract_strided_slice %1206 {offsets = [0, 0], sizes = [16, 20], strides = [1, 1]} : vector<16x26xf32> to vector<16x20xf32>
    %c84_153 = arith.constant 84 : index
    %1208 = memref.load %arg8[%c84_153] : memref<98xf32, #tpu.memory_space<smem>>
    %1209 = vector.broadcast %1208 : f32 to vector<16x20xf32>
    %1210 = arith.mulf %1207, %1209 : vector<16x20xf32>
    %1211 = arith.addf %1205, %1210 : vector<16x20xf32>
    %1212 = vector.extract_strided_slice %1206 {offsets = [0, 1], sizes = [16, 20], strides = [1, 1]} : vector<16x26xf32> to vector<16x20xf32>
    %c85_154 = arith.constant 85 : index
    %1213 = memref.load %arg8[%c85_154] : memref<98xf32, #tpu.memory_space<smem>>
    %1214 = vector.broadcast %1213 : f32 to vector<16x20xf32>
    %1215 = arith.mulf %1212, %1214 : vector<16x20xf32>
    %1216 = arith.addf %1211, %1215 : vector<16x20xf32>
    %1217 = vector.extract_strided_slice %1206 {offsets = [0, 2], sizes = [16, 20], strides = [1, 1]} : vector<16x26xf32> to vector<16x20xf32>
    %c86_155 = arith.constant 86 : index
    %1218 = memref.load %arg8[%c86_155] : memref<98xf32, #tpu.memory_space<smem>>
    %1219 = vector.broadcast %1218 : f32 to vector<16x20xf32>
    %1220 = arith.mulf %1217, %1219 : vector<16x20xf32>
    %1221 = arith.addf %1216, %1220 : vector<16x20xf32>
    %1222 = vector.extract_strided_slice %1206 {offsets = [0, 3], sizes = [16, 20], strides = [1, 1]} : vector<16x26xf32> to vector<16x20xf32>
    %c87_156 = arith.constant 87 : index
    %1223 = memref.load %arg8[%c87_156] : memref<98xf32, #tpu.memory_space<smem>>
    %1224 = vector.broadcast %1223 : f32 to vector<16x20xf32>
    %1225 = arith.mulf %1222, %1224 : vector<16x20xf32>
    %1226 = arith.addf %1221, %1225 : vector<16x20xf32>
    %1227 = vector.extract_strided_slice %1206 {offsets = [0, 4], sizes = [16, 20], strides = [1, 1]} : vector<16x26xf32> to vector<16x20xf32>
    %c88_157 = arith.constant 88 : index
    %1228 = memref.load %arg8[%c88_157] : memref<98xf32, #tpu.memory_space<smem>>
    %1229 = vector.broadcast %1228 : f32 to vector<16x20xf32>
    %1230 = arith.mulf %1227, %1229 : vector<16x20xf32>
    %1231 = arith.addf %1226, %1230 : vector<16x20xf32>
    %1232 = vector.extract_strided_slice %1206 {offsets = [0, 5], sizes = [16, 20], strides = [1, 1]} : vector<16x26xf32> to vector<16x20xf32>
    %c89_158 = arith.constant 89 : index
    %1233 = memref.load %arg8[%c89_158] : memref<98xf32, #tpu.memory_space<smem>>
    %1234 = vector.broadcast %1233 : f32 to vector<16x20xf32>
    %1235 = arith.mulf %1232, %1234 : vector<16x20xf32>
    %1236 = arith.addf %1231, %1235 : vector<16x20xf32>
    %1237 = vector.extract_strided_slice %1206 {offsets = [0, 6], sizes = [16, 20], strides = [1, 1]} : vector<16x26xf32> to vector<16x20xf32>
    %c90_159 = arith.constant 90 : index
    %1238 = memref.load %arg8[%c90_159] : memref<98xf32, #tpu.memory_space<smem>>
    %1239 = vector.broadcast %1238 : f32 to vector<16x20xf32>
    %1240 = arith.mulf %1237, %1239 : vector<16x20xf32>
    %1241 = arith.addf %1236, %1240 : vector<16x20xf32>
    %1242 = vector.extract_strided_slice %1025 {offsets = [6, 0], sizes = [16, 26], strides = [1, 1]} : vector<22x26xf32> to vector<16x26xf32>
    %1243 = vector.extract_strided_slice %1242 {offsets = [0, 0], sizes = [16, 20], strides = [1, 1]} : vector<16x26xf32> to vector<16x20xf32>
    %c91_160 = arith.constant 91 : index
    %1244 = memref.load %arg8[%c91_160] : memref<98xf32, #tpu.memory_space<smem>>
    %1245 = vector.broadcast %1244 : f32 to vector<16x20xf32>
    %1246 = arith.mulf %1243, %1245 : vector<16x20xf32>
    %1247 = arith.addf %1241, %1246 : vector<16x20xf32>
    %1248 = vector.extract_strided_slice %1242 {offsets = [0, 1], sizes = [16, 20], strides = [1, 1]} : vector<16x26xf32> to vector<16x20xf32>
    %c92_161 = arith.constant 92 : index
    %1249 = memref.load %arg8[%c92_161] : memref<98xf32, #tpu.memory_space<smem>>
    %1250 = vector.broadcast %1249 : f32 to vector<16x20xf32>
    %1251 = arith.mulf %1248, %1250 : vector<16x20xf32>
    %1252 = arith.addf %1247, %1251 : vector<16x20xf32>
    %1253 = vector.extract_strided_slice %1242 {offsets = [0, 2], sizes = [16, 20], strides = [1, 1]} : vector<16x26xf32> to vector<16x20xf32>
    %c93_162 = arith.constant 93 : index
    %1254 = memref.load %arg8[%c93_162] : memref<98xf32, #tpu.memory_space<smem>>
    %1255 = vector.broadcast %1254 : f32 to vector<16x20xf32>
    %1256 = arith.mulf %1253, %1255 : vector<16x20xf32>
    %1257 = arith.addf %1252, %1256 : vector<16x20xf32>
    %1258 = vector.extract_strided_slice %1242 {offsets = [0, 3], sizes = [16, 20], strides = [1, 1]} : vector<16x26xf32> to vector<16x20xf32>
    %c94_163 = arith.constant 94 : index
    %1259 = memref.load %arg8[%c94_163] : memref<98xf32, #tpu.memory_space<smem>>
    %1260 = vector.broadcast %1259 : f32 to vector<16x20xf32>
    %1261 = arith.mulf %1258, %1260 : vector<16x20xf32>
    %1262 = arith.addf %1257, %1261 : vector<16x20xf32>
    %1263 = vector.extract_strided_slice %1242 {offsets = [0, 4], sizes = [16, 20], strides = [1, 1]} : vector<16x26xf32> to vector<16x20xf32>
    %c95_164 = arith.constant 95 : index
    %1264 = memref.load %arg8[%c95_164] : memref<98xf32, #tpu.memory_space<smem>>
    %1265 = vector.broadcast %1264 : f32 to vector<16x20xf32>
    %1266 = arith.mulf %1263, %1265 : vector<16x20xf32>
    %1267 = arith.addf %1262, %1266 : vector<16x20xf32>
    %1268 = vector.extract_strided_slice %1242 {offsets = [0, 5], sizes = [16, 20], strides = [1, 1]} : vector<16x26xf32> to vector<16x20xf32>
    %c96_165 = arith.constant 96 : index
    %1269 = memref.load %arg8[%c96_165] : memref<98xf32, #tpu.memory_space<smem>>
    %1270 = vector.broadcast %1269 : f32 to vector<16x20xf32>
    %1271 = arith.mulf %1268, %1270 : vector<16x20xf32>
    %1272 = arith.addf %1267, %1271 : vector<16x20xf32>
    %1273 = vector.extract_strided_slice %1242 {offsets = [0, 6], sizes = [16, 20], strides = [1, 1]} : vector<16x26xf32> to vector<16x20xf32>
    %c97_166 = arith.constant 97 : index
    %1274 = memref.load %arg8[%c97_166] : memref<98xf32, #tpu.memory_space<smem>>
    %1275 = vector.broadcast %1274 : f32 to vector<16x20xf32>
    %1276 = arith.mulf %1273, %1275 : vector<16x20xf32>
    %1277 = arith.addf %1272, %1276 : vector<16x20xf32>
    %cst_167 = arith.constant dense<0.000000e+00> : vector<4x20xf32>
    %1278 = tpu.matmul %6, %656, %cst_167 {dimension_numbers = #tpu.dot_dimension_numbers<[1], [0], [0], [1], [0, 0, 1, 1], [], []>} : vector<4x16xf32>, vector<16x20xf32>, vector<4x20xf32> -> vector<4x20xf32>
    %cst_168 = arith.constant dense<0.000000e+00> : vector<4x5xf32>
    %1279 = tpu.matmul %1278, %8, %cst_168 {dimension_numbers = #tpu.dot_dimension_numbers<[1], [0], [0], [1], [0, 0, 1, 1], [], []>} : vector<4x20xf32>, vector<20x5xf32>, vector<4x5xf32> -> vector<4x5xf32>
    %cst_169 = arith.constant 6.250000e-02 : f32
    %1280 = vector.broadcast %cst_169 : f32 to vector<4x5xf32>
    %1281 = arith.mulf %1279, %1280 : vector<4x5xf32>
    %cst_170 = arith.constant dense<0.000000e+00> : vector<16x5xf32>
    %1282 = tpu.matmul %7, %1281, %cst_170 {dimension_numbers = #tpu.dot_dimension_numbers<[1], [0], [0], [1], [0, 0, 1, 1], [], []>} : vector<16x4xf32>, vector<4x5xf32>, vector<16x5xf32> -> vector<16x5xf32>
    %cst_171 = arith.constant dense<0.000000e+00> : vector<16x20xf32>
    %1283 = tpu.matmul %1282, %9, %cst_171 {dimension_numbers = #tpu.dot_dimension_numbers<[1], [0], [0], [1], [0, 0, 1, 1], [], []>} : vector<16x5xf32>, vector<5x20xf32>, vector<16x20xf32> -> vector<16x20xf32>
    %1284 = arith.subf %656, %1283 : vector<16x20xf32>
    %1285 = arith.mulf %1284, %1284 : vector<16x20xf32>
    %cst_172 = arith.constant dense<0.000000e+00> : vector<4x20xf32>
    %1286 = tpu.matmul %6, %1285, %cst_172 {dimension_numbers = #tpu.dot_dimension_numbers<[1], [0], [0], [1], [0, 0, 1, 1], [], []>} : vector<4x16xf32>, vector<16x20xf32>, vector<4x20xf32> -> vector<4x20xf32>
    %cst_173 = arith.constant dense<0.000000e+00> : vector<4x5xf32>
    %1287 = tpu.matmul %1286, %8, %cst_173 {dimension_numbers = #tpu.dot_dimension_numbers<[1], [0], [0], [1], [0, 0, 1, 1], [], []>} : vector<4x20xf32>, vector<20x5xf32>, vector<4x5xf32> -> vector<4x5xf32>
    %cst_174 = arith.constant 0.0666666701 : f32
    %1288 = vector.broadcast %cst_174 : f32 to vector<4x5xf32>
    %1289 = arith.mulf %1287, %1288 : vector<4x5xf32>
    %cst_175 = arith.constant 0.000000e+00 : f32
    %1290 = vector.broadcast %cst_175 : f32 to vector<4x5xf32>
    %1291 = arith.maximumf %1289, %1290 : vector<4x5xf32>
    %1292 = math.sqrt %1291 : vector<4x5xf32>
    %1293 = vector.extract_strided_slice %656 {offsets = [0, 19], sizes = [16, 1], strides = [1, 1]} : vector<16x20xf32> to vector<16x1xf32>
    %1294 = vector.extract_strided_slice %656 {offsets = [0, 0], sizes = [16, 19], strides = [1, 1]} : vector<16x20xf32> to vector<16x19xf32>
    %1295 = tpu.concatenate %1293, %1294 in 1 : vector<16x1xf32>, vector<16x19xf32> -> vector<16x20xf32>
    %1296 = vector.extract_strided_slice %656 {offsets = [0, 1], sizes = [16, 19], strides = [1, 1]} : vector<16x20xf32> to vector<16x19xf32>
    %1297 = vector.extract_strided_slice %656 {offsets = [0, 0], sizes = [16, 1], strides = [1, 1]} : vector<16x20xf32> to vector<16x1xf32>
    %1298 = tpu.concatenate %1296, %1297 in 1 : vector<16x19xf32>, vector<16x1xf32> -> vector<16x20xf32>
    %1299 = arith.select %27, %1298, %1295 : vector<16x20xi1>, vector<16x20xf32>
    %1300 = arith.select %29, %1295, %1298 : vector<16x20xi1>, vector<16x20xf32>
    %1301 = vector.extract_strided_slice %656 {offsets = [15, 0], sizes = [1, 20], strides = [1, 1]} : vector<16x20xf32> to vector<1x20xf32>
    %1302 = vector.extract_strided_slice %656 {offsets = [0, 0], sizes = [15, 20], strides = [1, 1]} : vector<16x20xf32> to vector<15x20xf32>
    %1303 = tpu.concatenate %1301, %1302 in 0 : vector<1x20xf32>, vector<15x20xf32> -> vector<16x20xf32>
    %1304 = vector.extract_strided_slice %656 {offsets = [1, 0], sizes = [15, 20], strides = [1, 1]} : vector<16x20xf32> to vector<15x20xf32>
    %1305 = vector.extract_strided_slice %656 {offsets = [0, 0], sizes = [1, 20], strides = [1, 1]} : vector<16x20xf32> to vector<1x20xf32>
    %1306 = tpu.concatenate %1304, %1305 in 0 : vector<15x20xf32>, vector<1x20xf32> -> vector<16x20xf32>
    %1307 = arith.select %31, %1306, %1303 : vector<16x20xi1>, vector<16x20xf32>
    %1308 = arith.select %33, %1303, %1306 : vector<16x20xi1>, vector<16x20xf32>
    %1309 = vector.extract_strided_slice %1299 {offsets = [15, 0], sizes = [1, 20], strides = [1, 1]} : vector<16x20xf32> to vector<1x20xf32>
    %1310 = vector.extract_strided_slice %1299 {offsets = [0, 0], sizes = [15, 20], strides = [1, 1]} : vector<16x20xf32> to vector<15x20xf32>
    %1311 = tpu.concatenate %1309, %1310 in 0 : vector<1x20xf32>, vector<15x20xf32> -> vector<16x20xf32>
    %1312 = vector.extract_strided_slice %1299 {offsets = [1, 0], sizes = [15, 20], strides = [1, 1]} : vector<16x20xf32> to vector<15x20xf32>
    %1313 = vector.extract_strided_slice %1299 {offsets = [0, 0], sizes = [1, 20], strides = [1, 1]} : vector<16x20xf32> to vector<1x20xf32>
    %1314 = tpu.concatenate %1312, %1313 in 0 : vector<15x20xf32>, vector<1x20xf32> -> vector<16x20xf32>
    %1315 = arith.select %31, %1314, %1311 : vector<16x20xi1>, vector<16x20xf32>
    %1316 = arith.select %33, %1311, %1314 : vector<16x20xi1>, vector<16x20xf32>
    %1317 = vector.extract_strided_slice %1300 {offsets = [15, 0], sizes = [1, 20], strides = [1, 1]} : vector<16x20xf32> to vector<1x20xf32>
    %1318 = vector.extract_strided_slice %1300 {offsets = [0, 0], sizes = [15, 20], strides = [1, 1]} : vector<16x20xf32> to vector<15x20xf32>
    %1319 = tpu.concatenate %1317, %1318 in 0 : vector<1x20xf32>, vector<15x20xf32> -> vector<16x20xf32>
    %1320 = vector.extract_strided_slice %1300 {offsets = [1, 0], sizes = [15, 20], strides = [1, 1]} : vector<16x20xf32> to vector<15x20xf32>
    %1321 = vector.extract_strided_slice %1300 {offsets = [0, 0], sizes = [1, 20], strides = [1, 1]} : vector<16x20xf32> to vector<1x20xf32>
    %1322 = tpu.concatenate %1320, %1321 in 0 : vector<15x20xf32>, vector<1x20xf32> -> vector<16x20xf32>
    %1323 = arith.select %31, %1322, %1319 : vector<16x20xi1>, vector<16x20xf32>
    %1324 = arith.select %33, %1319, %1322 : vector<16x20xi1>, vector<16x20xf32>
    %cst_176 = arith.constant 0.000000e+00 : f32
    %1325 = vector.broadcast %cst_176 : f32 to vector<16x20xf32>
    %1326 = arith.subf %1325, %1315 : vector<16x20xf32>
    %1327 = arith.addf %1326, %1323 : vector<16x20xf32>
    %cst_177 = arith.constant 2.000000e+00 : f32
    %1328 = vector.broadcast %cst_177 : f32 to vector<16x20xf32>
    %1329 = arith.mulf %1328, %1299 : vector<16x20xf32>
    %1330 = arith.subf %1327, %1329 : vector<16x20xf32>
    %cst_178 = arith.constant 2.000000e+00 : f32
    %1331 = vector.broadcast %cst_178 : f32 to vector<16x20xf32>
    %1332 = arith.mulf %1331, %1300 : vector<16x20xf32>
    %1333 = arith.addf %1330, %1332 : vector<16x20xf32>
    %1334 = arith.subf %1333, %1316 : vector<16x20xf32>
    %1335 = arith.addf %1334, %1324 : vector<16x20xf32>
    %cst_179 = arith.constant 0.000000e+00 : f32
    %1336 = vector.broadcast %cst_179 : f32 to vector<16x20xf32>
    %1337 = arith.subf %1336, %1315 : vector<16x20xf32>
    %cst_180 = arith.constant 2.000000e+00 : f32
    %1338 = vector.broadcast %cst_180 : f32 to vector<16x20xf32>
    %1339 = arith.mulf %1338, %1307 : vector<16x20xf32>
    %1340 = arith.subf %1337, %1339 : vector<16x20xf32>
    %1341 = arith.subf %1340, %1323 : vector<16x20xf32>
    %1342 = arith.addf %1341, %1316 : vector<16x20xf32>
    %cst_181 = arith.constant 2.000000e+00 : f32
    %1343 = vector.broadcast %cst_181 : f32 to vector<16x20xf32>
    %1344 = arith.mulf %1343, %1308 : vector<16x20xf32>
    %1345 = arith.addf %1342, %1344 : vector<16x20xf32>
    %1346 = arith.addf %1345, %1324 : vector<16x20xf32>
    %1347 = math.absf %1335 : vector<16x20xf32>
    %1348 = math.absf %1346 : vector<16x20xf32>
    %1349 = arith.addf %1347, %1348 : vector<16x20xf32>
    %cst_182 = arith.constant dense<0.000000e+00> : vector<4x20xf32>
    %1350 = tpu.matmul %6, %1349, %cst_182 {dimension_numbers = #tpu.dot_dimension_numbers<[1], [0], [0], [1], [0, 0, 1, 1], [], []>} : vector<4x16xf32>, vector<16x20xf32>, vector<4x20xf32> -> vector<4x20xf32>
    %cst_183 = arith.constant dense<0.000000e+00> : vector<4x5xf32>
    %1351 = tpu.matmul %1350, %8, %cst_183 {dimension_numbers = #tpu.dot_dimension_numbers<[1], [0], [0], [1], [0, 0, 1, 1], [], []>} : vector<4x20xf32>, vector<20x5xf32>, vector<4x5xf32> -> vector<4x5xf32>
    %cst_184 = arith.constant 6.250000e-02 : f32
    %1352 = vector.broadcast %cst_184 : f32 to vector<4x5xf32>
    %1353 = arith.mulf %1351, %1352 : vector<4x5xf32>
    %1354 = arith.addf %1292, %1353 : vector<4x5xf32>
    %cst_185 = arith.constant dense<0.000000e+00> : vector<4x20xf32>
    %1355 = tpu.matmul %6, %1277, %cst_185 {dimension_numbers = #tpu.dot_dimension_numbers<[1], [0], [0], [1], [0, 0, 1, 1], [], []>} : vector<4x16xf32>, vector<16x20xf32>, vector<4x20xf32> -> vector<4x20xf32>
    %cst_186 = arith.constant dense<0.000000e+00> : vector<4x5xf32>
    %1356 = tpu.matmul %1355, %8, %cst_186 {dimension_numbers = #tpu.dot_dimension_numbers<[1], [0], [0], [1], [0, 0, 1, 1], [], []>} : vector<4x20xf32>, vector<20x5xf32>, vector<4x5xf32> -> vector<4x5xf32>
    %cst_187 = arith.constant 6.250000e-02 : f32
    %1357 = vector.broadcast %cst_187 : f32 to vector<4x5xf32>
    %1358 = arith.mulf %1356, %1357 : vector<4x5xf32>
    %cst_188 = arith.constant dense<0.000000e+00> : vector<16x5xf32>
    %1359 = tpu.matmul %7, %1358, %cst_188 {dimension_numbers = #tpu.dot_dimension_numbers<[1], [0], [0], [1], [0, 0, 1, 1], [], []>} : vector<16x4xf32>, vector<4x5xf32>, vector<16x5xf32> -> vector<16x5xf32>
    %cst_189 = arith.constant dense<0.000000e+00> : vector<16x20xf32>
    %1360 = tpu.matmul %1359, %9, %cst_189 {dimension_numbers = #tpu.dot_dimension_numbers<[1], [0], [0], [1], [0, 0, 1, 1], [], []>} : vector<16x5xf32>, vector<5x20xf32>, vector<16x20xf32> -> vector<16x20xf32>
    %1361 = arith.subf %1277, %1360 : vector<16x20xf32>
    %1362 = arith.mulf %1361, %1361 : vector<16x20xf32>
    %cst_190 = arith.constant dense<0.000000e+00> : vector<4x20xf32>
    %1363 = tpu.matmul %6, %1362, %cst_190 {dimension_numbers = #tpu.dot_dimension_numbers<[1], [0], [0], [1], [0, 0, 1, 1], [], []>} : vector<4x16xf32>, vector<16x20xf32>, vector<4x20xf32> -> vector<4x20xf32>
    %cst_191 = arith.constant dense<0.000000e+00> : vector<4x5xf32>
    %1364 = tpu.matmul %1363, %8, %cst_191 {dimension_numbers = #tpu.dot_dimension_numbers<[1], [0], [0], [1], [0, 0, 1, 1], [], []>} : vector<4x20xf32>, vector<20x5xf32>, vector<4x5xf32> -> vector<4x5xf32>
    %cst_192 = arith.constant 0.0666666701 : f32
    %1365 = vector.broadcast %cst_192 : f32 to vector<4x5xf32>
    %1366 = arith.mulf %1364, %1365 : vector<4x5xf32>
    %cst_193 = arith.constant 0.000000e+00 : f32
    %1367 = vector.broadcast %cst_193 : f32 to vector<4x5xf32>
    %1368 = arith.maximumf %1366, %1367 : vector<4x5xf32>
    %1369 = math.sqrt %1368 : vector<4x5xf32>
    %1370 = vector.extract_strided_slice %1277 {offsets = [0, 19], sizes = [16, 1], strides = [1, 1]} : vector<16x20xf32> to vector<16x1xf32>
    %1371 = vector.extract_strided_slice %1277 {offsets = [0, 0], sizes = [16, 19], strides = [1, 1]} : vector<16x20xf32> to vector<16x19xf32>
    %1372 = tpu.concatenate %1370, %1371 in 1 : vector<16x1xf32>, vector<16x19xf32> -> vector<16x20xf32>
    %1373 = vector.extract_strided_slice %1277 {offsets = [0, 1], sizes = [16, 19], strides = [1, 1]} : vector<16x20xf32> to vector<16x19xf32>
    %1374 = vector.extract_strided_slice %1277 {offsets = [0, 0], sizes = [16, 1], strides = [1, 1]} : vector<16x20xf32> to vector<16x1xf32>
    %1375 = tpu.concatenate %1373, %1374 in 1 : vector<16x19xf32>, vector<16x1xf32> -> vector<16x20xf32>
    %1376 = arith.select %27, %1375, %1372 : vector<16x20xi1>, vector<16x20xf32>
    %1377 = arith.select %29, %1372, %1375 : vector<16x20xi1>, vector<16x20xf32>
    %1378 = vector.extract_strided_slice %1277 {offsets = [15, 0], sizes = [1, 20], strides = [1, 1]} : vector<16x20xf32> to vector<1x20xf32>
    %1379 = vector.extract_strided_slice %1277 {offsets = [0, 0], sizes = [15, 20], strides = [1, 1]} : vector<16x20xf32> to vector<15x20xf32>
    %1380 = tpu.concatenate %1378, %1379 in 0 : vector<1x20xf32>, vector<15x20xf32> -> vector<16x20xf32>
    %1381 = vector.extract_strided_slice %1277 {offsets = [1, 0], sizes = [15, 20], strides = [1, 1]} : vector<16x20xf32> to vector<15x20xf32>
    %1382 = vector.extract_strided_slice %1277 {offsets = [0, 0], sizes = [1, 20], strides = [1, 1]} : vector<16x20xf32> to vector<1x20xf32>
    %1383 = tpu.concatenate %1381, %1382 in 0 : vector<15x20xf32>, vector<1x20xf32> -> vector<16x20xf32>
    %1384 = arith.select %31, %1383, %1380 : vector<16x20xi1>, vector<16x20xf32>
    %1385 = arith.select %33, %1380, %1383 : vector<16x20xi1>, vector<16x20xf32>
    %1386 = vector.extract_strided_slice %1376 {offsets = [15, 0], sizes = [1, 20], strides = [1, 1]} : vector<16x20xf32> to vector<1x20xf32>
    %1387 = vector.extract_strided_slice %1376 {offsets = [0, 0], sizes = [15, 20], strides = [1, 1]} : vector<16x20xf32> to vector<15x20xf32>
    %1388 = tpu.concatenate %1386, %1387 in 0 : vector<1x20xf32>, vector<15x20xf32> -> vector<16x20xf32>
    %1389 = vector.extract_strided_slice %1376 {offsets = [1, 0], sizes = [15, 20], strides = [1, 1]} : vector<16x20xf32> to vector<15x20xf32>
    %1390 = vector.extract_strided_slice %1376 {offsets = [0, 0], sizes = [1, 20], strides = [1, 1]} : vector<16x20xf32> to vector<1x20xf32>
    %1391 = tpu.concatenate %1389, %1390 in 0 : vector<15x20xf32>, vector<1x20xf32> -> vector<16x20xf32>
    %1392 = arith.select %31, %1391, %1388 : vector<16x20xi1>, vector<16x20xf32>
    %1393 = arith.select %33, %1388, %1391 : vector<16x20xi1>, vector<16x20xf32>
    %1394 = vector.extract_strided_slice %1377 {offsets = [15, 0], sizes = [1, 20], strides = [1, 1]} : vector<16x20xf32> to vector<1x20xf32>
    %1395 = vector.extract_strided_slice %1377 {offsets = [0, 0], sizes = [15, 20], strides = [1, 1]} : vector<16x20xf32> to vector<15x20xf32>
    %1396 = tpu.concatenate %1394, %1395 in 0 : vector<1x20xf32>, vector<15x20xf32> -> vector<16x20xf32>
    %1397 = vector.extract_strided_slice %1377 {offsets = [1, 0], sizes = [15, 20], strides = [1, 1]} : vector<16x20xf32> to vector<15x20xf32>
    %1398 = vector.extract_strided_slice %1377 {offsets = [0, 0], sizes = [1, 20], strides = [1, 1]} : vector<16x20xf32> to vector<1x20xf32>
    %1399 = tpu.concatenate %1397, %1398 in 0 : vector<15x20xf32>, vector<1x20xf32> -> vector<16x20xf32>
    %1400 = arith.select %31, %1399, %1396 : vector<16x20xi1>, vector<16x20xf32>
    %1401 = arith.select %33, %1396, %1399 : vector<16x20xi1>, vector<16x20xf32>
    %cst_194 = arith.constant 0.000000e+00 : f32
    %1402 = vector.broadcast %cst_194 : f32 to vector<16x20xf32>
    %1403 = arith.subf %1402, %1392 : vector<16x20xf32>
    %1404 = arith.addf %1403, %1400 : vector<16x20xf32>
    %cst_195 = arith.constant 2.000000e+00 : f32
    %1405 = vector.broadcast %cst_195 : f32 to vector<16x20xf32>
    %1406 = arith.mulf %1405, %1376 : vector<16x20xf32>
    %1407 = arith.subf %1404, %1406 : vector<16x20xf32>
    %cst_196 = arith.constant 2.000000e+00 : f32
    %1408 = vector.broadcast %cst_196 : f32 to vector<16x20xf32>
    %1409 = arith.mulf %1408, %1377 : vector<16x20xf32>
    %1410 = arith.addf %1407, %1409 : vector<16x20xf32>
    %1411 = arith.subf %1410, %1393 : vector<16x20xf32>
    %1412 = arith.addf %1411, %1401 : vector<16x20xf32>
    %cst_197 = arith.constant 0.000000e+00 : f32
    %1413 = vector.broadcast %cst_197 : f32 to vector<16x20xf32>
    %1414 = arith.subf %1413, %1392 : vector<16x20xf32>
    %cst_198 = arith.constant 2.000000e+00 : f32
    %1415 = vector.broadcast %cst_198 : f32 to vector<16x20xf32>
    %1416 = arith.mulf %1415, %1384 : vector<16x20xf32>
    %1417 = arith.subf %1414, %1416 : vector<16x20xf32>
    %1418 = arith.subf %1417, %1400 : vector<16x20xf32>
    %1419 = arith.addf %1418, %1393 : vector<16x20xf32>
    %cst_199 = arith.constant 2.000000e+00 : f32
    %1420 = vector.broadcast %cst_199 : f32 to vector<16x20xf32>
    %1421 = arith.mulf %1420, %1385 : vector<16x20xf32>
    %1422 = arith.addf %1419, %1421 : vector<16x20xf32>
    %1423 = arith.addf %1422, %1401 : vector<16x20xf32>
    %1424 = math.absf %1412 : vector<16x20xf32>
    %1425 = math.absf %1423 : vector<16x20xf32>
    %1426 = arith.addf %1424, %1425 : vector<16x20xf32>
    %cst_200 = arith.constant dense<0.000000e+00> : vector<4x20xf32>
    %1427 = tpu.matmul %6, %1426, %cst_200 {dimension_numbers = #tpu.dot_dimension_numbers<[1], [0], [0], [1], [0, 0, 1, 1], [], []>} : vector<4x16xf32>, vector<16x20xf32>, vector<4x20xf32> -> vector<4x20xf32>
    %cst_201 = arith.constant dense<0.000000e+00> : vector<4x5xf32>
    %1428 = tpu.matmul %1427, %8, %cst_201 {dimension_numbers = #tpu.dot_dimension_numbers<[1], [0], [0], [1], [0, 0, 1, 1], [], []>} : vector<4x20xf32>, vector<20x5xf32>, vector<4x5xf32> -> vector<4x5xf32>
    %cst_202 = arith.constant 6.250000e-02 : f32
    %1429 = vector.broadcast %cst_202 : f32 to vector<4x5xf32>
    %1430 = arith.mulf %1428, %1429 : vector<4x5xf32>
    %1431 = arith.addf %1369, %1430 : vector<4x5xf32>
    %1432 = arith.maximumf %1354, %1431 : vector<4x5xf32>
    %1433 = arith.subf %1354, %1432 : vector<4x5xf32>
    %1434 = math.exp %1433 : vector<4x5xf32>
    %1435 = arith.subf %1431, %1432 : vector<4x5xf32>
    %1436 = math.exp %1435 : vector<4x5xf32>
    %1437 = arith.addf %1434, %1436 : vector<4x5xf32>
    %1438 = arith.divf %1434, %1437 : vector<4x5xf32>
    %c0_203 = arith.constant 0 : index
    %c0_204 = arith.constant 0 : index
    %1439 = vector.load %arg13[%c0_203, %c0_204] : memref<20x4xf32, #tpu.memory_space<vmem>>, vector<20x4xf32>
    %cst_205 = arith.constant dense<0.000000e+00> : vector<20x5xf32>
    %1440 = tpu.matmul %1439, %1438, %cst_205 {dimension_numbers = #tpu.dot_dimension_numbers<[1], [0], [0], [1], [0, 0, 1, 1], [], []>} : vector<20x4xf32>, vector<4x5xf32>, vector<20x5xf32> -> vector<20x5xf32>
    %c0_206 = arith.constant 0 : index
    %c0_207 = arith.constant 0 : index
    %1441 = vector.load %arg14[%c0_206, %c0_207] : memref<5x24xf32, #tpu.memory_space<vmem>>, vector<5x24xf32>
    %cst_208 = arith.constant dense<0.000000e+00> : vector<20x24xf32>
    %1442 = tpu.matmul %1440, %1441, %cst_208 {dimension_numbers = #tpu.dot_dimension_numbers<[1], [0], [0], [1], [0, 0, 1, 1], [], []>} : vector<20x5xf32>, vector<5x24xf32>, vector<20x24xf32> -> vector<20x24xf32>
    %1443 = vector.shape_cast %1442 : vector<20x24xf32> to vector<1x20x24xf32>
    %1444 = vector.broadcast %1443 : vector<1x20x24xf32> to vector<4x20x24xf32>
    %1445 = arith.mulf %1, %1444 : vector<4x20x24xf32>
    %cst_209 = arith.constant 1.000000e+00 : f32
    %1446 = vector.broadcast %cst_209 : f32 to vector<1x20x24xf32>
    %1447 = arith.subf %1446, %1443 : vector<1x20x24xf32>
    %1448 = vector.broadcast %1447 : vector<1x20x24xf32> to vector<4x20x24xf32>
    %1449 = arith.mulf %3, %1448 : vector<4x20x24xf32>
    %1450 = arith.addf %1445, %1449 : vector<4x20x24xf32>
    %c0_210 = arith.constant 0 : index
    %c0_211 = arith.constant 0 : index
    %c0_212 = arith.constant 0 : index
    %c0_213 = arith.constant 0 : index
    %1451 = vector.load %arg15[%c0_210, %c0_211, %c0_212, %c0_213] : memref<1x4x20x24xf32, #tpu.memory_space<vmem>>, vector<1x4x20x24xf32>
    %1452 = vector.shape_cast %1451 : vector<1x4x20x24xf32> to vector<4x20x24xf32>
    %1453 = vector.shape_cast %1450 : vector<4x20x24xf32> to vector<1x4x20x24xf32>
    tpu.vector_store %arg15[%c0_210, %c0_211, %c0_212, %c0_213], %1453 {strides = array<i32>} : memref<1x4x20x24xf32, #tpu.memory_space<vmem>>, vector<1x4x20x24xf32>,
    return
  }
  func.func @transform_0(%arg0: i32) -> (i32, i32, i32, i32) {
    %c0_i32 = arith.constant 0 : i32
    %c0_i32_0 = arith.constant 0 : i32
    %c0_i32_1 = arith.constant 0 : i32
    %c0_i32_2 = arith.constant 0 : i32
    return %arg0, %c0_i32, %c0_i32_0, %c0_i32_1 : i32, i32, i32, i32
  }
  func.func @transform_1(%arg0: i32) -> (i32, i32, i32, i32) {
    %c0_i32 = arith.constant 0 : i32
    %c0_i32_0 = arith.constant 0 : i32
    %c0_i32_1 = arith.constant 0 : i32
    %c0_i32_2 = arith.constant 0 : i32
    return %arg0, %c0_i32, %c0_i32_0, %c0_i32_1 : i32, i32, i32, i32
  }
  func.func @transform_2(%arg0: i32) -> i32 {
    %c0_i32 = arith.constant 0 : i32
    %c0_i32_0 = arith.constant 0 : i32
    return %c0_i32 : i32
  }
  func.func @transform_3(%arg0: i32) -> i32 {
    %c0_i32 = arith.constant 0 : i32
    %c0_i32_0 = arith.constant 0 : i32
    return %c0_i32 : i32
  }
  func.func @transform_4(%arg0: i32) -> i32 {
    %c0_i32 = arith.constant 0 : i32
    %c0_i32_0 = arith.constant 0 : i32
    return %c0_i32 : i32
  }
  func.func @transform_5(%arg0: i32) -> i32 {
    %c0_i32 = arith.constant 0 : i32
    %c0_i32_0 = arith.constant 0 : i32
    return %c0_i32 : i32
  }
  func.func @transform_6(%arg0: i32) -> i32 {
    %c0_i32 = arith.constant 0 : i32
    %c0_i32_0 = arith.constant 0 : i32
    return %c0_i32 : i32
  }
  func.func @transform_7(%arg0: i32) -> i32 {
    %c0_i32 = arith.constant 0 : i32
    %c0_i32_0 = arith.constant 0 : i32
    return %c0_i32 : i32
  }
  func.func @transform_8(%arg0: i32) -> (i32, i32) {
    %c0_i32 = arith.constant 0 : i32
    %c0_i32_0 = arith.constant 0 : i32
    %c0_i32_1 = arith.constant 0 : i32
    return %c0_i32, %c0_i32_0 : i32, i32
  }
  func.func @transform_9(%arg0: i32) -> (i32, i32) {
    %c0_i32 = arith.constant 0 : i32
    %c0_i32_0 = arith.constant 0 : i32
    %c0_i32_1 = arith.constant 0 : i32
    return %c0_i32, %c0_i32_0 : i32, i32
  }
  func.func @transform_10(%arg0: i32) -> (i32, i32) {
    %c0_i32 = arith.constant 0 : i32
    %c0_i32_0 = arith.constant 0 : i32
    %c0_i32_1 = arith.constant 0 : i32
    return %c0_i32, %c0_i32_0 : i32, i32
  }
  func.func @transform_11(%arg0: i32) -> (i32, i32) {
    %c0_i32 = arith.constant 0 : i32
    %c0_i32_0 = arith.constant 0 : i32
    %c0_i32_1 = arith.constant 0 : i32
    return %c0_i32, %c0_i32_0 : i32, i32
  }
  func.func @transform_12(%arg0: i32) -> (i32, i32) {
    %c0_i32 = arith.constant 0 : i32
    %c0_i32_0 = arith.constant 0 : i32
    %c0_i32_1 = arith.constant 0 : i32
    return %c0_i32, %c0_i32_0 : i32, i32
  }
  func.func @transform_13(%arg0: i32) -> (i32, i32) {
    %c0_i32 = arith.constant 0 : i32
    %c0_i32_0 = arith.constant 0 : i32
    %c0_i32_1 = arith.constant 0 : i32
    return %c0_i32, %c0_i32_0 : i32, i32
  }
  func.func @transform_14(%arg0: i32) -> (i32, i32, i32, i32) {
    %c0_i32 = arith.constant 0 : i32
    %c0_i32_0 = arith.constant 0 : i32
    %c0_i32_1 = arith.constant 0 : i32
    %c0_i32_2 = arith.constant 0 : i32
    return %arg0, %c0_i32, %c0_i32_0, %c0_i32_1 : i32, i32, i32, i32
  }
}

</mosaic_0001>

<llo_original>
// kernel: tpu_custom_call.1
$region0: #{tpu_custom_call.1}
  #allocation0 [shape = 'u32[]', space=smem, size = 0x4, offset = 0x4, fixed_abs, tag = 'smem constant byte address 0x4 - core index']
  #allocation1 [shape = 'u32[144,128]{1,0:T(1,128)}', space=vmem, size = 0x12000, scoped, tag = 'internal scratch']
  %s0 = inlined_call_operand.hbm [shape: f32[2,4,20,24], index: 0, kind: input, shape index: {}]
  %s1 = inlined_call_operand.hbm [shape: f32[2,4,20,24], index: 1, kind: input, shape index: {}]
  %s2 = inlined_call_operand.hbm [shape: f32[16], index: 2, kind: input, shape index: {}]
  %s3 = inlined_call_operand.hbm [shape: f32[4], index: 3, kind: input, shape index: {}]
  %s4 = inlined_call_operand.hbm [shape: f32[98], index: 4, kind: input, shape index: {}]
  %s5 = inlined_call_operand.hbm [shape: f32[16], index: 5, kind: input, shape index: {}]
  %s6 = inlined_call_operand.hbm [shape: f32[4], index: 6, kind: input, shape index: {}]
  %s7 = inlined_call_operand.hbm [shape: f32[98], index: 7, kind: input, shape index: {}]
  %s8 = inlined_call_operand.hbm [shape: f32[4,16], index: 8, kind: input, shape index: {}]
  %s9 = inlined_call_operand.hbm [shape: f32[16,4], index: 9, kind: input, shape index: {}]
  %s10 = inlined_call_operand.hbm [shape: f32[20,5], index: 10, kind: input, shape index: {}]
  %s11 = inlined_call_operand.hbm [shape: f32[5,20], index: 11, kind: input, shape index: {}]
  %s12 = inlined_call_operand.hbm [shape: f32[20,4], index: 12, kind: input, shape index: {}]
  %s13 = inlined_call_operand.hbm [shape: f32[5,24], index: 13, kind: input, shape index: {}]
  %s14 = inlined_call_operand.hbm [shape: f32[2,4,20,24], index: 14, kind: output, shape index: {}]
  %s15 = sld [smem:[#allocation0]]
  $region145: #{tpu_custom_call.1} parent=0
    _
  %s17 = ssub.s32 1, %s15
  %s18 = scalar_select 0, %s17, %s15
  $region1: #{tpu_custom_call.1} parent=0
    #allocation2 [shape = 'u8[98304]{0}', space=vmem, size = 0x18000, scoped, tag = 'input window, operand 0']
    #allocation3 [shape = 's32[2]{0}', space=sflag, size = 0x8, scoped, tag = 'scoped memory for tpu_custom_call.1']
    #allocation4 [shape = 's32[2]{0}', space=sflag, size = 0x8, scoped, tag = 'scoped memory for tpu_custom_call.1']
    #allocation5 [shape = 's32[2]{0}', space=sflag, size = 0x8, scoped, tag = 'scoped memory for tpu_custom_call.1']
    #allocation6 [shape = 'u8[98304]{0}', space=vmem, size = 0x18000, scoped, tag = 'input window, operand 1']
    #allocation7 [shape = 's32[2]{0}', space=sflag, size = 0x8, scoped, tag = 'scoped memory for tpu_custom_call.1']
    #allocation8 [shape = 'u8[512]{0}', space=smem, size = 0x200, scoped, tag = 'input window, operand 2, single buffered']
    #allocation9 [shape = 'u8[512]{0}', space=smem, size = 0x200, scoped, tag = 'input window, operand 3, single buffered']
    #allocation10 [shape = 's32[1]{0}', space=sflag, size = 0x4, scoped, tag = 'scoped memory for tpu_custom_call.1']
    #allocation11 [shape = 'u8[512]{0}', space=smem, size = 0x200, scoped, tag = 'input window, operand 4, single buffered']
    #allocation12 [shape = 'u8[512]{0}', space=smem, size = 0x200, scoped, tag = 'input window, operand 5, single buffered']
    #allocation13 [shape = 's32[1]{0}', space=sflag, size = 0x4, scoped, tag = 'scoped memory for tpu_custom_call.1']
    #allocation14 [shape = 'u8[512]{0}', space=smem, size = 0x200, scoped, tag = 'input window, operand 6, single buffered']
    #allocation15 [shape = 'u8[512]{0}', space=smem, size = 0x200, scoped, tag = 'input window, operand 7, single buffered']
    #allocation16 [shape = 's32[1]{0}', space=sflag, size = 0x4, scoped, tag = 'scoped memory for tpu_custom_call.1']
    #allocation17 [shape = 'u8[2048]{0}', space=vmem, size = 0x800, scoped, tag = 'input window, operand 8, single buffered']
    #allocation18 [shape = 'u8[8192]{0}', space=vmem, size = 0x2000, scoped, tag = 'input window, operand 9, single buffered']
    #allocation19 [shape = 's32[1]{0}', space=sflag, size = 0x4, scoped, tag = 'scoped memory for tpu_custom_call.1']
    #allocation20 [shape = 'u8[12288]{0}', space=vmem, size = 0x3000, scoped, tag = 'input window, operand 10, single buffered']
    #allocation21 [shape = 'u8[4096]{0}', space=vmem, size = 0x1000, scoped, tag = 'input window, operand 11, single buffered']
    #allocation22 [shape = 's32[1]{0}', space=sflag, size = 0x4, scoped, tag = 'scoped memory for tpu_custom_call.1']
    #allocation23 [shape = 'u8[12288]{0}', space=vmem, size = 0x3000, scoped, tag = 'input window, operand 12, single buffered']
    #allocation24 [shape = 'u8[4096]{0}', space=vmem, size = 0x1000, scoped, tag = 'input window, operand 13, single buffered']
    #allocation25 [shape = 's32[1]{0}', space=sflag, size = 0x4, scoped, tag = 'scoped memory for tpu_custom_call.1']
    #allocation26 [shape = 'u8[98304]{0}', space=vmem, size = 0x18000, scoped, tag = 'output window, operand 0']
    %19 = vsyncpa [#allocation3], 0
    %s20 = scalar_lea.sflag [#allocation3], 1
    %21 = vsyncpa %s20, 0
    %22 = vsyncpa [#allocation7], 0
    %s23 = scalar_lea.sflag [#allocation7], 1
    %24 = vsyncpa %s23, 0
    %25 = vsyncpa [#allocation5], 0
    %26 = vsyncpa [#allocation10], 0
    %27 = vsyncpa [#allocation13], 0
    %28 = vsyncpa [#allocation16], 0
    %29 = vsyncpa [#allocation19], 0
    %30 = vsyncpa [#allocation22], 0
    %31 = vsyncpa [#allocation25], 0
    %32 = vsyncpa [#allocation4], 0
    %s33 = scalar_lea.sflag [#allocation4], 1
    %34 = vsyncpa %s33, 0
    loop: start=0, step=1, limit=4
    $region2: #{tpu_custom_call.1} parent=1 // loop_pre_header
      _
    $region3: #{tpu_custom_call.1} parent=1 // loop_header
      %s36 = sphi 0, %s40
      %p37 = scmp.ge.s32.totalorder %s36, 4
      %s46 = sphi 0, %s48
      %s49 = sphi 0, %s46
      %s50 = sphi 0, %s49
      %s66 = sphi 0, %s50
      %s72 = sphi 0, %s74
      %s75 = sphi 0, %s72
      %s76 = sphi 0, %s75
      %s92 = sphi 0, %s76
      %s96 = sphi 0, %s96
      %s98 = sphi 0, %s96
      %s99 = sphi 0, %s98
      %s113 = sphi 0, %s99
      %s117 = sphi 0, %s117
      %s119 = sphi 0, %s117
      %s120 = sphi 0, %s119
      %s134 = sphi 0, %s120
      %s138 = sphi 0, %s138
      %s140 = sphi 0, %s138
      %s141 = sphi 0, %s140
      %s155 = sphi 0, %s141
      %s159 = sphi 0, %s159
      %s161 = sphi 0, %s159
      %s162 = sphi 0, %s161
      %s176 = sphi 0, %s162
      %s180 = sphi 0, %s180
      %s182 = sphi 0, %s180
      %s183 = sphi 0, %s182
      %s197 = sphi 0, %s183
      %s201 = sphi 0, %s201
      %s203 = sphi 0, %s201
      %s204 = sphi 0, %s203
      %s218 = sphi 0, %s204
      %s222 = sphi 0, %s222
      %s224 = sphi 0, %s222
      %s225 = sphi 0, %s224
      %s239 = sphi 0, %s225
      %s243 = sphi 0, %s243
      %s245 = sphi 0, %s243
      %s246 = sphi 0, %s245
      %s260 = sphi 0, %s246
      %s264 = sphi 0, %s264
      %s266 = sphi 0, %s264
      %s267 = sphi 0, %s266
      %s281 = sphi 0, %s267
      %s285 = sphi 0, %s285
      %s287 = sphi 0, %s285
      %s288 = sphi 0, %s287
      %s302 = sphi 0, %s288
      %s306 = sphi 0, %s306
      %s308 = sphi 0, %s306
      %s309 = sphi 0, %s308
      %s323 = sphi 0, %s309
      %s327 = sphi 0, %s327
      %s329 = sphi 0, %s327
      %s330 = sphi 0, %s329
      %s344 = sphi 0, %s330
      %s350 = sphi 0, %s352
      %s353 = sphi 0, %s350
      %s354 = sphi 0, %s353
      %s370 = sphi 0, %s354
    $region4: #{tpu_custom_call.1} parent=1 // loop_header_branch
      %39 = sbr.rel (%p37) target = $region8
    $region5: #{tpu_custom_call.1} parent=1 // loop_body
      %s41 = ssub.s32 %s36, 1
      %s42 = ssub.s32 %s36, 2
      %s43 = sadd.s32 %s36, 1
      %s44 = ssub.s32 %s36, %s43
      %p45 = scmp.eq.s32.totalorder %s44, 0
      %s47 = sadd.s32 %s46, 1
      %s48 = scalar_select %p45, %s46, %s47
      %p51 = pneg %p45
      %p52 = scmp.eq.s32.totalorder %s36, 1
      %p53 = por %p51, %p52
      %p54 = scmp.ne.s32.totalorder %s46, %s49
      %p55 = scmp.eq.s32.totalorder %s36, 0
      %p56 = por %p54, %p55
      %p57 = scmp.ne.s32.totalorder %s46, %s49
      %p58 = scmp.eq.s32.totalorder %s41, 1
      %p59 = por %p57, %p58
      %p60 = scmp.ne.s32.totalorder %s49, %s50
      %p61 = scmp.eq.s32.totalorder %s41, 0
      %p62 = por %p60, %p61
      %p63 = scmp.ne.s32.totalorder %s49, %s50
      %p64 = scmp.eq.s32.totalorder %s42, 1
      %p65 = por %p63, %p64
      %p67 = scmp.ne.s32.totalorder %s50, %s66
      %p68 = scmp.eq.s32.totalorder %s42, 0
      %p69 = por %p67, %p68
      %s70 = ssub.s32 %s36, %s43
      %p71 = scmp.eq.s32.totalorder %s70, 0
      %s73 = sadd.s32 %s72, 1
      %s74 = scalar_select %p71, %s72, %s73
      %p77 = pneg %p71
      %p78 = scmp.eq.s32.totalorder %s36, 1
      %p79 = por %p77, %p78
      %p80 = scmp.ne.s32.totalorder %s72, %s75
      %p81 = scmp.eq.s32.totalorder %s36, 0
      %p82 = por %p80, %p81
      %p83 = scmp.ne.s32.totalorder %s72, %s75
      %p84 = scmp.eq.s32.totalorder %s41, 1
      %p85 = por %p83, %p84
      %p86 = scmp.ne.s32.totalorder %s75, %s76
      %p87 = scmp.eq.s32.totalorder %s41, 0
      %p88 = por %p86, %p87
      %p89 = scmp.ne.s32.totalorder %s75, %s76
      %p90 = scmp.eq.s32.totalorder %s42, 1
      %p91 = por %p89, %p90
      %p93 = scmp.ne.s32.totalorder %s76, %s92
      %p94 = scmp.eq.s32.totalorder %s42, 0
      %p95 = por %p93, %p94
      %s97 = sadd.s32 %s96, 1
      %p100 = scmp.eq.s32.totalorder %s36, 1
      %p101 = scmp.ne.s32.totalorder %s96, %s98
      %p102 = scmp.eq.s32.totalorder %s36, 0
      %p103 = por %p101, %p102
      %p104 = scmp.ne.s32.totalorder %s96, %s98
      %p105 = scmp.eq.s32.totalorder %s41, 1
      %p106 = por %p104, %p105
      %p107 = scmp.ne.s32.totalorder %s98, %s99
      %p108 = scmp.eq.s32.totalorder %s41, 0
      %p109 = por %p107, %p108
      %p110 = scmp.ne.s32.totalorder %s98, %s99
      %p111 = scmp.eq.s32.totalorder %s42, 1
      %p112 = por %p110, %p111
      %p114 = scmp.ne.s32.totalorder %s99, %s113
      %p115 = scmp.eq.s32.totalorder %s42, 0
      %p116 = por %p114, %p115
      %s118 = sadd.s32 %s117, 1
      %p121 = scmp.eq.s32.totalorder %s36, 1
      %p122 = scmp.ne.s32.totalorder %s117, %s119
      %p123 = scmp.eq.s32.totalorder %s36, 0
      %p124 = por %p122, %p123
      %p125 = scmp.ne.s32.totalorder %s117, %s119
      %p126 = scmp.eq.s32.totalorder %s41, 1
      %p127 = por %p125, %p126
      %p128 = scmp.ne.s32.totalorder %s119, %s120
      %p129 = scmp.eq.s32.totalorder %s41, 0
      %p130 = por %p128, %p129
      %p131 = scmp.ne.s32.totalorder %s119, %s120
      %p132 = scmp.eq.s32.totalorder %s42, 1
      %p133 = por %p131, %p132
      %p135 = scmp.ne.s32.totalorder %s120, %s134
      %p136 = scmp.eq.s32.totalorder %s42, 0
      %p137 = por %p135, %p136
      %s139 = sadd.s32 %s138, 1
      %p142 = scmp.eq.s32.totalorder %s36, 1
      %p143 = scmp.ne.s32.totalorder %s138, %s140
      %p144 = scmp.eq.s32.totalorder %s36, 0
      %p145 = por %p143, %p144
      %p146 = scmp.ne.s32.totalorder %s138, %s140
      %p147 = scmp.eq.s32.totalorder %s41, 1
      %p148 = por %p146, %p147
      %p149 = scmp.ne.s32.totalorder %s140, %s141
      %p150 = scmp.eq.s32.totalorder %s41, 0
      %p151 = por %p149, %p150
      %p152 = scmp.ne.s32.totalorder %s140, %s141
      %p153 = scmp.eq.s32.totalorder %s42, 1
      %p154 = por %p152, %p153
      %p156 = scmp.ne.s32.totalorder %s141, %s155
      %p157 = scmp.eq.s32.totalorder %s42, 0
      %p158 = por %p156, %p157
      %s160 = sadd.s32 %s159, 1
      %p163 = scmp.eq.s32.totalorder %s36, 1
      %p164 = scmp.ne.s32.totalorder %s159, %s161
      %p165 = scmp.eq.s32.totalorder %s36, 0
      %p166 = por %p164, %p165
      %p167 = scmp.ne.s32.totalorder %s159, %s161
      %p168 = scmp.eq.s32.totalorder %s41, 1
      %p169 = por %p167, %p168
      %p170 = scmp.ne.s32.totalorder %s161, %s162
      %p171 = scmp.eq.s32.totalorder %s41, 0
      %p172 = por %p170, %p171
      %p173 = scmp.ne.s32.totalorder %s161, %s162
      %p174 = scmp.eq.s32.totalorder %s42, 1
      %p175 = por %p173, %p174
      %p177 = scmp.ne.s32.totalorder %s162, %s176
      %p178 = scmp.eq.s32.totalorder %s42, 0
      %p179 = por %p177, %p178
      %s181 = sadd.s32 %s180, 1
      %p184 = scmp.eq.s32.totalorder %s36, 1
      %p185 = scmp.ne.s32.totalorder %s180, %s182
      %p186 = scmp.eq.s32.totalorder %s36, 0
      %p187 = por %p185, %p186
      %p188 = scmp.ne.s32.totalorder %s180, %s182
      %p189 = scmp.eq.s32.totalorder %s41, 1
      %p190 = por %p188, %p189
      %p191 = scmp.ne.s32.totalorder %s182, %s183
      %p192 = scmp.eq.s32.totalorder %s41, 0
      %p193 = por %p191, %p192
      %p194 = scmp.ne.s32.totalorder %s182, %s183
      %p195 = scmp.eq.s32.totalorder %s42, 1
      %p196 = por %p194, %p195
      %p198 = scmp.ne.s32.totalorder %s183, %s197
      %p199 = scmp.eq.s32.totalorder %s42, 0
      %p200 = por %p198, %p199
      %s202 = sadd.s32 %s201, 1
      %p205 = scmp.eq.s32.totalorder %s36, 1
      %p206 = scmp.ne.s32.totalorder %s201, %s203
      %p207 = scmp.eq.s32.totalorder %s36, 0
      %p208 = por %p206, %p207
      %p209 = scmp.ne.s32.totalorder %s201, %s203
      %p210 = scmp.eq.s32.totalorder %s41, 1
      %p211 = por %p209, %p210
      %p212 = scmp.ne.s32.totalorder %s203, %s204
      %p213 = scmp.eq.s32.totalorder %s41, 0
      %p214 = por %p212, %p213
      %p215 = scmp.ne.s32.totalorder %s203, %s204
      %p216 = scmp.eq.s32.totalorder %s42, 1
      %p217 = por %p215, %p216
      %p219 = scmp.ne.s32.totalorder %s204, %s218
      %p220 = scmp.eq.s32.totalorder %s42, 0
      %p221 = por %p219, %p220
      %s223 = sadd.s32 %s222, 1
      %p226 = scmp.eq.s32.totalorder %s36, 1
      %p227 = scmp.ne.s32.totalorder %s222, %s224
      %p228 = scmp.eq.s32.totalorder %s36, 0
      %p229 = por %p227, %p228
      %p230 = scmp.ne.s32.totalorder %s222, %s224
      %p231 = scmp.eq.s32.totalorder %s41, 1
      %p232 = por %p230, %p231
      %p233 = scmp.ne.s32.totalorder %s224, %s225
      %p234 = scmp.eq.s32.totalorder %s41, 0
      %p235 = por %p233, %p234
      %p236 = scmp.ne.s32.totalorder %s224, %s225
      %p237 = scmp.eq.s32.totalorder %s42, 1
      %p238 = por %p236, %p237
      %p240 = scmp.ne.s32.totalorder %s225, %s239
      %p241 = scmp.eq.s32.totalorder %s42, 0
      %p242 = por %p240, %p241
      %s244 = sadd.s32 %s243, 1
      %p247 = scmp.eq.s32.totalorder %s36, 1
      %p248 = scmp.ne.s32.totalorder %s243, %s245
      %p249 = scmp.eq.s32.totalorder %s36, 0
      %p250 = por %p248, %p249
      %p251 = scmp.ne.s32.totalorder %s243, %s245
      %p252 = scmp.eq.s32.totalorder %s41, 1
      %p253 = por %p251, %p252
      %p254 = scmp.ne.s32.totalorder %s245, %s246
      %p255 = scmp.eq.s32.totalorder %s41, 0
      %p256 = por %p254, %p255
      %p257 = scmp.ne.s32.totalorder %s245, %s246
      %p258 = scmp.eq.s32.totalorder %s42, 1
      %p259 = por %p257, %p258
      %p261 = scmp.ne.s32.totalorder %s246, %s260
      %p262 = scmp.eq.s32.totalorder %s42, 0
      %p263 = por %p261, %p262
      %s265 = sadd.s32 %s264, 1
      %p268 = scmp.eq.s32.totalorder %s36, 1
      %p269 = scmp.ne.s32.totalorder %s264, %s266
      %p270 = scmp.eq.s32.totalorder %s36, 0
      %p271 = por %p269, %p270
      %p272 = scmp.ne.s32.totalorder %s264, %s266
      %p273 = scmp.eq.s32.totalorder %s41, 1
      %p274 = por %p272, %p273
      %p275 = scmp.ne.s32.totalorder %s266, %s267
      %p276 = scmp.eq.s32.totalorder %s41, 0
      %p277 = por %p275, %p276
      %p278 = scmp.ne.s32.totalorder %s266, %s267
      %p279 = scmp.eq.s32.totalorder %s42, 1
      %p280 = por %p278, %p279
      %p282 = scmp.ne.s32.totalorder %s267, %s281
      %p283 = scmp.eq.s32.totalorder %s42, 0
      %p284 = por %p282, %p283
      %s286 = sadd.s32 %s285, 1
      %p289 = scmp.eq.s32.totalorder %s36, 1
      %p290 = scmp.ne.s32.totalorder %s285, %s287
      %p291 = scmp.eq.s32.totalorder %s36, 0
      %p292 = por %p290, %p291
      %p293 = scmp.ne.s32.totalorder %s285, %s287
      %p294 = scmp.eq.s32.totalorder %s41, 1
      %p295 = por %p293, %p294
      %p296 = scmp.ne.s32.totalorder %s287, %s288
      %p297 = scmp.eq.s32.totalorder %s41, 0
      %p298 = por %p296, %p297
      %p299 = scmp.ne.s32.totalorder %s287, %s288
      %p300 = scmp.eq.s32.totalorder %s42, 1
      %p301 = por %p299, %p300
      %p303 = scmp.ne.s32.totalorder %s288, %s302
      %p304 = scmp.eq.s32.totalorder %s42, 0
      %p305 = por %p303, %p304
      %s307 = sadd.s32 %s306, 1
      %p310 = scmp.eq.s32.totalorder %s36, 1
      %p311 = scmp.ne.s32.totalorder %s306, %s308
      %p312 = scmp.eq.s32.totalorder %s36, 0
      %p313 = por %p311, %p312
      %p314 = scmp.ne.s32.totalorder %s306, %s308
      %p315 = scmp.eq.s32.totalorder %s41, 1
      %p316 = por %p314, %p315
      %p317 = scmp.ne.s32.totalorder %s308, %s309
      %p318 = scmp.eq.s32.totalorder %s41, 0
      %p319 = por %p317, %p318
      %p320 = scmp.ne.s32.totalorder %s308, %s309
      %p321 = scmp.eq.s32.totalorder %s42, 1
      %p322 = por %p320, %p321
      %p324 = scmp.ne.s32.totalorder %s309, %s323
      %p325 = scmp.eq.s32.totalorder %s42, 0
      %p326 = por %p324, %p325
      %s328 = sadd.s32 %s327, 1
      %p331 = scmp.eq.s32.totalorder %s36, 1
      %p332 = scmp.ne.s32.totalorder %s327, %s329
      %p333 = scmp.eq.s32.totalorder %s36, 0
      %p334 = por %p332, %p333
      %p335 = scmp.ne.s32.totalorder %s327, %s329
      %p336 = scmp.eq.s32.totalorder %s41, 1
      %p337 = por %p335, %p336
      %p338 = scmp.ne.s32.totalorder %s329, %s330
      %p339 = scmp.eq.s32.totalorder %s41, 0
      %p340 = por %p338, %p339
      %p341 = scmp.ne.s32.totalorder %s329, %s330
      %p342 = scmp.eq.s32.totalorder %s42, 1
      %p343 = por %p341, %p342
      %p345 = scmp.ne.s32.totalorder %s330, %s344
      %p346 = scmp.eq.s32.totalorder %s42, 0
      %p347 = por %p345, %p346
      %s348 = ssub.s32 %s36, %s43
      %p349 = scmp.eq.s32.totalorder %s348, 0
      %s351 = sadd.s32 %s350, 1
      %s352 = scalar_select %p349, %s350, %s351
      %p355 = pneg %p349
      %p356 = scmp.eq.s32.totalorder %s36, 1
      %p357 = por %p355, %p356
      %p358 = scmp.ne.s32.totalorder %s350, %s353
      %p359 = scmp.eq.s32.totalorder %s36, 0
      %p360 = por %p358, %p359
      %p361 = scmp.ne.s32.totalorder %s350, %s353
      %p362 = scmp.eq.s32.totalorder %s41, 1
      %p363 = por %p361, %p362
      %p364 = scmp.ne.s32.totalorder %s353, %s354
      %p365 = scmp.eq.s32.totalorder %s41, 0
      %p366 = por %p364, %p365
      %p367 = scmp.ne.s32.totalorder %s353, %s354
      %p368 = scmp.eq.s32.totalorder %s42, 1
      %p369 = por %p367, %p368
      %p371 = scmp.ne.s32.totalorder %s354, %s370
      %p372 = scmp.eq.s32.totalorder %s42, 0
      %p373 = por %p371, %p372
      %p374 = scmp.le.s32.totalorder 1, %s36
      %p375 = scmp.lt.s32.totalorder %s36, 3
      %p376 = pnand %p374, %p375
      %p377 = pneg %p376
      // Predicated region
      $region9: #{tpu_custom_call.1} parent=5 // pred_check
        _
      $region10: #{tpu_custom_call.1} parent=5 // pred_check_branch
        %379 = sbr.rel (%p376) target = $region12
      $region11: #{tpu_custom_call.1} parent=5 // pred_region
        %s380 = ssub.s32 %s36, 1
        // Predicated region
        $region13: #{tpu_custom_call.1} parent=11 // pred_check
          %p381 = pneg %p109
        $region14: #{tpu_custom_call.1} parent=11 // pred_check_branch
          %383 = sbr.rel (%p381) target = $region16
        $region15: #{tpu_custom_call.1} parent=11 // pred_region
          %s385 = ssub.s32 16, 16
          %386 = vsyncadd [#allocation5], %s385
          %389 = dma.hbm_to_smem %s2, 16, [#allocation8], [#allocation5]
        $region16: #{tpu_custom_call.1} parent=11 // pred_fallthru
          _
        // Predicated region
        $region17: #{tpu_custom_call.1} parent=11 // pred_check
          %p390 = pneg %p130
        $region18: #{tpu_custom_call.1} parent=11 // pred_check_branch
          %392 = sbr.rel (%p390) target = $region20
        $region19: #{tpu_custom_call.1} parent=11 // pred_region
          %s394 = ssub.s32 16, 16
          %395 = vsyncadd [#allocation10], %s394
          %398 = dma.hbm_to_smem %s3, 16, [#allocation9], [#allocation10]
        $region20: #{tpu_custom_call.1} parent=11 // pred_fallthru
          _
        // Predicated region
        $region21: #{tpu_custom_call.1} parent=11 // pred_check
          %p399 = pneg %p151
        $region22: #{tpu_custom_call.1} parent=11 // pred_check_branch
          %401 = sbr.rel (%p399) target = $region24
        $region23: #{tpu_custom_call.1} parent=11 // pred_region
          %s403 = ssub.s32 16, 16
          %404 = vsyncadd [#allocation10], %s403
          %407 = dma.hbm_to_smem %s4, 16, [#allocation11], [#allocation10]
        $region24: #{tpu_custom_call.1} parent=11 // pred_fallthru
          _
        // Predicated region
        $region25: #{tpu_custom_call.1} parent=11 // pred_check
          %p408 = pneg %p172
        $region26: #{tpu_custom_call.1} parent=11 // pred_check_branch
          %410 = sbr.rel (%p408) target = $region28
        $region27: #{tpu_custom_call.1} parent=11 // pred_region
          %s412 = ssub.s32 16, 16
          %413 = vsyncadd [#allocation13], %s412
          %416 = dma.hbm_to_smem %s5, 16, [#allocation12], [#allocation13]
        $region28: #{tpu_custom_call.1} parent=11 // pred_fallthru
          _
        // Predicated region
        $region29: #{tpu_custom_call.1} parent=11 // pred_check
          %p417 = pneg %p193
        $region30: #{tpu_custom_call.1} parent=11 // pred_check_branch
          %419 = sbr.rel (%p417) target = $region32
        $region31: #{tpu_custom_call.1} parent=11 // pred_region
          %s421 = ssub.s32 16, 16
          %422 = vsyncadd [#allocation13], %s421
          %425 = dma.hbm_to_smem %s6, 16, [#allocation14], [#allocation13]
        $region32: #{tpu_custom_call.1} parent=11 // pred_fallthru
          _
        // Predicated region
        $region33: #{tpu_custom_call.1} parent=11 // pred_check
          %p426 = pneg %p214
        $region34: #{tpu_custom_call.1} parent=11 // pred_check_branch
          %428 = sbr.rel (%p426) target = $region36
        $region35: #{tpu_custom_call.1} parent=11 // pred_region
          %s430 = ssub.s32 16, 16
          %431 = vsyncadd [#allocation16], %s430
          %434 = dma.hbm_to_smem %s7, 16, [#allocation15], [#allocation16]
        $region36: #{tpu_custom_call.1} parent=11 // pred_fallthru
          _
        // Predicated region
        $region37: #{tpu_custom_call.1} parent=11 // pred_check
          %p435 = pneg %p235
        $region38: #{tpu_custom_call.1} parent=11 // pred_check_branch
          %437 = sbr.rel (%p435) target = $region40
        $region39: #{tpu_custom_call.1} parent=11 // pred_region
          %s439 = ssub.s32 64, 64
          %440 = vsyncadd [#allocation7], %s439
          %s442 = sshll.u32 [#allocation17], 4
          %s443 = int_to_ptr.vmem [resolvable:$true] %s442
          %445 = dma.hbm_to_vmem [thread:$0]  %s8, 64, %s443, [#allocation7]
        $region40: #{tpu_custom_call.1} parent=11 // pred_fallthru
          _
        // Predicated region
        $region41: #{tpu_custom_call.1} parent=11 // pred_check
          %p446 = pneg %p256
        $region42: #{tpu_custom_call.1} parent=11 // pred_check_branch
          %448 = sbr.rel (%p446) target = $region44
        $region43: #{tpu_custom_call.1} parent=11 // pred_region
          %s450 = ssub.s32 256, 256
          %451 = vsyncadd [#allocation19], %s450
          %s452 = sshll.u32 [#allocation18], 4
          %s453 = int_to_ptr.vmem [resolvable:$true] %s452
          %458 = dma.hbm_to_vmem [thread:$0]  %s9, 256, %s453, [#allocation19], 128, 128, 8
        $region44: #{tpu_custom_call.1} parent=11 // pred_fallthru
          _
        // Predicated region
        $region45: #{tpu_custom_call.1} parent=11 // pred_check
          %p459 = pneg %p277
        $region46: #{tpu_custom_call.1} parent=11 // pred_check_branch
          %461 = sbr.rel (%p459) target = $region48
        $region47: #{tpu_custom_call.1} parent=11 // pred_region
          %s463 = ssub.s32 384, 384
          %464 = vsyncadd [#allocation19], %s463
          %s465 = sshll.u32 [#allocation20], 4
          %s466 = int_to_ptr.vmem [resolvable:$true] %s465
          %471 = dma.hbm_to_vmem [thread:$0]  %s10, 384, %s466, [#allocation19], 128, 128, 8
        $region48: #{tpu_custom_call.1} parent=11 // pred_fallthru
          _
        // Predicated region
        $region49: #{tpu_custom_call.1} parent=11 // pred_check
          %p472 = pneg %p298
        $region50: #{tpu_custom_call.1} parent=11 // pred_check_branch
          %474 = sbr.rel (%p472) target = $region52
        $region51: #{tpu_custom_call.1} parent=11 // pred_region
          %s476 = ssub.s32 128, 128
          %477 = vsyncadd [#allocation22], %s476
          %s479 = sshll.u32 [#allocation21], 4
          %s480 = int_to_ptr.vmem [resolvable:$true] %s479
          %482 = dma.hbm_to_vmem [thread:$0]  %s11, 128, %s480, [#allocation22]
        $region52: #{tpu_custom_call.1} parent=11 // pred_fallthru
          _
        // Predicated region
        $region53: #{tpu_custom_call.1} parent=11 // pred_check
          %p483 = pneg %p319
        $region54: #{tpu_custom_call.1} parent=11 // pred_check_branch
          %485 = sbr.rel (%p483) target = $region56
        $region55: #{tpu_custom_call.1} parent=11 // pred_region
          %s487 = ssub.s32 384, 384
          %488 = vsyncadd [#allocation22], %s487
          %s489 = sshll.u32 [#allocation23], 4
          %s490 = int_to_ptr.vmem [resolvable:$true] %s489
          %495 = dma.hbm_to_vmem [thread:$0]  %s12, 384, %s490, [#allocation22], 128, 128, 8
        $region56: #{tpu_custom_call.1} parent=11 // pred_fallthru
          _
        // Predicated region
        $region57: #{tpu_custom_call.1} parent=11 // pred_check
          %p496 = pneg %p340
        $region58: #{tpu_custom_call.1} parent=11 // pred_check_branch
          %498 = sbr.rel (%p496) target = $region60
        $region59: #{tpu_custom_call.1} parent=11 // pred_region
          %s500 = ssub.s32 128, 128
          %501 = vsyncadd [#allocation25], %s500
          %s503 = sshll.u32 [#allocation24], 4
          %s504 = int_to_ptr.vmem [resolvable:$true] %s503
          %506 = dma.hbm_to_vmem [thread:$0]  %s13, 128, %s504, [#allocation25]
        $region60: #{tpu_custom_call.1} parent=11 // pred_fallthru
          _
      $region12: #{tpu_custom_call.1} parent=5 // pred_fallthru
        _
      %p507 = scmp.lt.s32.totalorder %s36, 2
      // Predicated region
      $region61: #{tpu_custom_call.1} parent=5 // pred_check
        %p508 = pneg %p507
      $region62: #{tpu_custom_call.1} parent=5 // pred_check_branch
        %510 = sbr.rel (%p508) target = $region64
      $region63: #{tpu_custom_call.1} parent=5 // pred_region
        // Predicated region
        $region65: #{tpu_custom_call.1} parent=63 // pred_check
          %p511 = pneg %p56
        $region66: #{tpu_custom_call.1} parent=63 // pred_check_branch
          %513 = sbr.rel (%p511) target = $region68
        $region67: #{tpu_custom_call.1} parent=63 // pred_region
          %s514 = sand.u32 %s46, 1
          %s515 = scalar_lea.sflag [#allocation3], %s514
          %s516 = sand.u32 %s46, 1
          %s517 = smul.addr %s516, 96
          %s518 = scalar_lea.vmem [#allocation2], %s517
          %s520 = ssub.s32 1536, 1536
          %521 = vsyncadd %s515, %s520
          %s522 = smul.addr %s36, 12
          %s523 = smul.addr %s522, 128
          %s524 = scalar_lea.hbm %s0, %s523
          %s525 = sshll.u32 %s518, 4
          %s526 = int_to_ptr.vmem [resolvable:$true] %s525
          %531 = dma.hbm_to_vmem [thread:$0]  %s524, 1536, %s526, %s515, 128, 128, 8
        $region68: #{tpu_custom_call.1} parent=63 // pred_fallthru
          _
        // Predicated region
        $region69: #{tpu_custom_call.1} parent=63 // pred_check
          %p532 = pneg %p82
        $region70: #{tpu_custom_call.1} parent=63 // pred_check_branch
          %534 = sbr.rel (%p532) target = $region72
        $region71: #{tpu_custom_call.1} parent=63 // pred_region
          %s535 = sand.u32 %s36, 1
          %s536 = scalar_lea.sflag [#allocation7], %s535
          %s537 = sand.u32 %s72, 1
          %s538 = smul.addr %s537, 96
          %s539 = scalar_lea.vmem [#allocation6], %s538
          %s541 = ssub.s32 1536, 1536
          %542 = vsyncadd %s536, %s541
          %s543 = smul.addr %s36, 12
          %s544 = smul.addr %s543, 128
          %s545 = scalar_lea.hbm %s1, %s544
          %s546 = sshll.u32 %s539, 4
          %s547 = int_to_ptr.vmem [resolvable:$true] %s546
          %552 = dma.hbm_to_vmem [thread:$0]  %s545, 1536, %s547, %s536, 128, 128, 8
        $region72: #{tpu_custom_call.1} parent=63 // pred_fallthru
          _
      $region64: #{tpu_custom_call.1} parent=5 // pred_fallthru
        _
      %p553 = scmp.le.s32.totalorder 1, %s36
      %p554 = scmp.lt.s32.totalorder %s36, 3
      %p555 = pnand %p553, %p554
      %p556 = pneg %p555
      // Predicated region
      $region73: #{tpu_custom_call.1} parent=5 // pred_check
        _
      $region74: #{tpu_custom_call.1} parent=5 // pred_check_branch
        %558 = sbr.rel (%p555) target = $region76
      $region75: #{tpu_custom_call.1} parent=5 // pred_region
        %s559 = ssub.s32 %s36, 1
        %s560 = sand.u32 %s49, 1
        %s561 = scalar_lea.sflag [#allocation3], %s560
        %s562 = sand.u32 %s49, 1
        %s563 = smul.addr %s562, 96
        %s564 = scalar_lea.vmem [#allocation2], %s563
        // Predicated region
        $region77: #{tpu_custom_call.1} parent=75 // pred_check
          %p565 = pneg %p62
        $region78: #{tpu_custom_call.1} parent=75 // pred_check_branch
          %567 = sbr.rel (%p565) target = $region80
        $region79: #{tpu_custom_call.1} parent=75 // pred_region
          %568 = dma.done %s561, 1536
        $region80: #{tpu_custom_call.1} parent=75 // pred_fallthru
          _
        %s569 = sand.u32 %s41, 1
        %s570 = scalar_lea.sflag [#allocation7], %s569
        %s571 = sand.u32 %s75, 1
        %s572 = smul.addr %s571, 96
        %s573 = scalar_lea.vmem [#allocation6], %s572
        // Predicated region
        $region81: #{tpu_custom_call.1} parent=75 // pred_check
          %p574 = pneg %p88
        $region82: #{tpu_custom_call.1} parent=75 // pred_check_branch
          %576 = sbr.rel (%p574) target = $region84
        $region83: #{tpu_custom_call.1} parent=75 // pred_region
          %577 = dma.done %s570, 1536
        $region84: #{tpu_custom_call.1} parent=75 // pred_fallthru
          _
        // Predicated region
        $region85: #{tpu_custom_call.1} parent=75 // pred_check
          %p578 = pneg %p109
        $region86: #{tpu_custom_call.1} parent=75 // pred_check_branch
          %580 = sbr.rel (%p578) target = $region88
        $region87: #{tpu_custom_call.1} parent=75 // pred_region
          %581 = dma.done [#allocation5], 16
        $region88: #{tpu_custom_call.1} parent=75 // pred_fallthru
          _
        // Predicated region
        $region89: #{tpu_custom_call.1} parent=75 // pred_check
          %p582 = pneg %p130
        $region90: #{tpu_custom_call.1} parent=75 // pred_check_branch
          %584 = sbr.rel (%p582) target = $region92
        $region91: #{tpu_custom_call.1} parent=75 // pred_region
          %585 = dma.done [#allocation10], 16
        $region92: #{tpu_custom_call.1} parent=75 // pred_fallthru
          _
        // Predicated region
        $region93: #{tpu_custom_call.1} parent=75 // pred_check
          %p586 = pneg %p151
        $region94: #{tpu_custom_call.1} parent=75 // pred_check_branch
          %588 = sbr.rel (%p586) target = $region96
        $region95: #{tpu_custom_call.1} parent=75 // pred_region
          %589 = dma.done [#allocation10], 16
        $region96: #{tpu_custom_call.1} parent=75 // pred_fallthru
          _
        // Predicated region
        $region97: #{tpu_custom_call.1} parent=75 // pred_check
          %p590 = pneg %p172
        $region98: #{tpu_custom_call.1} parent=75 // pred_check_branch
          %592 = sbr.rel (%p590) target = $region100
        $region99: #{tpu_custom_call.1} parent=75 // pred_region
          %593 = dma.done [#allocation13], 16
        $region100: #{tpu_custom_call.1} parent=75 // pred_fallthru
          _
        // Predicated region
        $region101: #{tpu_custom_call.1} parent=75 // pred_check
          %p594 = pneg %p193
        $region102: #{tpu_custom_call.1} parent=75 // pred_check_branch
          %596 = sbr.rel (%p594) target = $region104
        $region103: #{tpu_custom_call.1} parent=75 // pred_region
          %597 = dma.done [#allocation13], 16
        $region104: #{tpu_custom_call.1} parent=75 // pred_fallthru
          _
        // Predicated region
        $region105: #{tpu_custom_call.1} parent=75 // pred_check
          %p598 = pneg %p214
        $region106: #{tpu_custom_call.1} parent=75 // pred_check_branch
          %600 = sbr.rel (%p598) target = $region108
        $region107: #{tpu_custom_call.1} parent=75 // pred_region
          %601 = dma.done [#allocation16], 16
        $region108: #{tpu_custom_call.1} parent=75 // pred_fallthru
          _
        // Predicated region
        $region109: #{tpu_custom_call.1} parent=75 // pred_check
          %p602 = pneg %p235
        $region110: #{tpu_custom_call.1} parent=75 // pred_check_branch
          %604 = sbr.rel (%p602) target = $region112
        $region111: #{tpu_custom_call.1} parent=75 // pred_region
          %605 = dma.done [#allocation7], 64
        $region112: #{tpu_custom_call.1} parent=75 // pred_fallthru
          _
        // Predicated region
        $region113: #{tpu_custom_call.1} parent=75 // pred_check
          %p606 = pneg %p256
        $region114: #{tpu_custom_call.1} parent=75 // pred_check_branch
          %608 = sbr.rel (%p606) target = $region116
        $region115: #{tpu_custom_call.1} parent=75 // pred_region
          %609 = dma.done [#allocation19], 256
        $region116: #{tpu_custom_call.1} parent=75 // pred_fallthru
          _
        // Predicated region
        $region117: #{tpu_custom_call.1} parent=75 // pred_check
          %p610 = pneg %p277
        $region118: #{tpu_custom_call.1} parent=75 // pred_check_branch
          %612 = sbr.rel (%p610) target = $region120
        $region119: #{tpu_custom_call.1} parent=75 // pred_region
          %613 = dma.done [#allocation19], 384
        $region120: #{tpu_custom_call.1} parent=75 // pred_fallthru
          _
        // Predicated region
        $region121: #{tpu_custom_call.1} parent=75 // pred_check
          %p614 = pneg %p298
        $region122: #{tpu_custom_call.1} parent=75 // pred_check_branch
          %616 = sbr.rel (%p614) target = $region124
        $region123: #{tpu_custom_call.1} parent=75 // pred_region
          %617 = dma.done [#allocation22], 128
        $region124: #{tpu_custom_call.1} parent=75 // pred_fallthru
          _
        // Predicated region
        $region125: #{tpu_custom_call.1} parent=75 // pred_check
          %p618 = pneg %p319
        $region126: #{tpu_custom_call.1} parent=75 // pred_check_branch
          %620 = sbr.rel (%p618) target = $region128
        $region127: #{tpu_custom_call.1} parent=75 // pred_region
          %621 = dma.done [#allocation22], 384
        $region128: #{tpu_custom_call.1} parent=75 // pred_fallthru
          _
        // Predicated region
        $region129: #{tpu_custom_call.1} parent=75 // pred_check
          %p622 = pneg %p340
        $region130: #{tpu_custom_call.1} parent=75 // pred_check_branch
          %624 = sbr.rel (%p622) target = $region132
        $region131: #{tpu_custom_call.1} parent=75 // pred_region
          %625 = dma.done [#allocation25], 128
        $region132: #{tpu_custom_call.1} parent=75 // pred_fallthru
          _
        %626 = sfence
        %s627 = sand.u32 %s49, 1
        %s628 = scalar_lea.sflag [#allocation3], %s627
        %s629 = sand.u32 %s49, 1
        %s630 = smul.addr %s629, 96
        %s631 = scalar_lea.vmem [#allocation2], %s630
        %p632 = pneg %p62
        %p633 = pneg %p59
        %s634 = sand.u32 %s41, 1
        %s635 = scalar_lea.sflag [#allocation7], %s634
        %s636 = sand.u32 %s75, 1
        %s637 = smul.addr %s636, 96
        %s638 = scalar_lea.vmem [#allocation6], %s637
        %p639 = pneg %p88
        %p640 = pneg %p85
        %p641 = pneg %p109
        %p642 = pneg %p106
        %p643 = pneg %p130
        %p644 = pneg %p127
        %p645 = pneg %p151
        %p646 = pneg %p148
        %p647 = pneg %p172
        %p648 = pneg %p169
        %p649 = pneg %p193
        %p650 = pneg %p190
        %p651 = pneg %p214
        %p652 = pneg %p211
        %p653 = pneg %p235
        %p654 = pneg %p232
        %p655 = pneg %p256
        %p656 = pneg %p253
        %p657 = pneg %p277
        %p658 = pneg %p274
        %p659 = pneg %p298
        %p660 = pneg %p295
        %p661 = pneg %p319
        %p662 = pneg %p316
        %p663 = pneg %p340
        %p664 = pneg %p337
        %p665 = pneg %p366
        %p666 = pneg %p363
        %s667 = sand.u32 %s353, 1
        %s668 = scalar_lea.sflag [#allocation4], %s667
        %s669 = sand.u32 %s353, 1
        %s670 = smul.addr %s669, 96
        %s671 = scalar_lea.vmem [#allocation26], %s670
        %v672 = vld [vmem:[%s564] sm:$0xff]
        %v673 = vld [vmem:[%s564 + $0x8] sm:$0xff]
        %v674 = vld [vmem:[%s564 + $0x10] sm:$0xf]
        %v675 = vld [vmem:[%s564 + $0x18] sm:$0xff]
        %v676 = vld [vmem:[%s564 + $0x20] sm:$0xff]
        %v677 = vld [vmem:[%s564 + $0x28] sm:$0xf]
        %v678 = vld [vmem:[%s564 + $0x30] sm:$0xff]
        %v679 = vld [vmem:[%s564 + $0x38] sm:$0xff]
        %v680 = vld [vmem:[%s564 + $0x40] sm:$0xf]
        %v681 = vld [vmem:[%s564 + $0x48] sm:$0xff]
        %v682 = vld [vmem:[%s564 + $0x50] sm:$0xff]
        %v683 = vld [vmem:[%s564 + $0x58] sm:$0xf]
        %v684 = vld [vmem:[%s573] sm:$0xff]
        %v685 = vld [vmem:[%s573 + $0x8] sm:$0xff]
        %v686 = vld [vmem:[%s573 + $0x10] sm:$0xf]
        %v687 = vld [vmem:[%s573 + $0x18] sm:$0xff]
        %v688 = vld [vmem:[%s573 + $0x20] sm:$0xff]
        %v689 = vld [vmem:[%s573 + $0x28] sm:$0xf]
        %v690 = vld [vmem:[%s573 + $0x30] sm:$0xff]
        %v691 = vld [vmem:[%s573 + $0x38] sm:$0xff]
        %v692 = vld [vmem:[%s573 + $0x40] sm:$0xf]
        %v693 = vld [vmem:[%s573 + $0x48] sm:$0xff]
        %v694 = vld [vmem:[%s573 + $0x50] sm:$0xff]
        %v695 = vld [vmem:[%s573 + $0x58] sm:$0xf]
        %v696 = vld [vmem:[#allocation17] sm:$0xf]
        %v697 = vld [vmem:[#allocation18] sm:$0xff]
        %v698 = vld [vmem:[#allocation18 + $0x8] sm:$0xff]
        %v699 = vld [vmem:[#allocation20] sm:$0xff]
        %v700 = vld [vmem:[#allocation20 + $0x8] sm:$0xff]
        %v701 = vld [vmem:[#allocation20 + $0x10] sm:$0xf]
        %v702 = vld [vmem:[#allocation21] sm:$0x1f]
        %v703 = vlaneseq
        %v704 = vand.u32 %v703, 127
        %v705 = vcvt.s32.f32 %v704
        %v706 = vlaneseq
        %v707 = vshrl.u32 %v706, 7
        %v708 = vadd.s32 %v707, 8
        %v709 = vcvt.s32.f32 %v707
        %v710 = vcvt.s32.f32 %v708
        %v711 = vrcp.pop 4.0
        %v712 = vmul.f32 %v705, %v711
        %v713 = vfloor.f32 %v712
        %v714 = vmul.f32 %v713, 4.0
        %v715 = vsub.f32 %v705, %v714
        %v716 = vmul.f32 %v709, %v711
        %v717 = vmul.f32 %v710, %v711
        %v718 = vfloor.f32 %v716
        %v719 = vfloor.f32 %v717
        %v720 = vmul.f32 %v718, 4.0
        %v721 = vmul.f32 %v719, 4.0
        %v722 = vsub.f32 %v709, %v720
        %v723 = vsub.f32 %v710, %v721
        %vm724 = vcmp.lt.f32.partialorder %v715, 0.5
        %vm725 = vcmp.gt.f32.partialorder %v715, 2.5
        %vm726 = vcmp.lt.f32.partialorder %v722, 0.5
        %vm727 = vcmp.lt.f32.partialorder %v723, 0.5
        %vm728 = vcmp.gt.f32.partialorder %v722, 2.5
        %vm729 = vcmp.gt.f32.partialorder %v723, 2.5
        %s730 = sld [smem:[#allocation8]]
        %v731 = vstv %s730
        %v732 = vmul.f32 %v672, %v731
        %v733 = vmul.f32 %v673, %v731
        %v734 = vmul.f32 %v674, %v731
        %s735 = sld [smem:[#allocation8 + $0x1]]
        %v736 = vstv %s735
        %v737 = vmul.f32 %v675, %v736
        %v738 = vmul.f32 %v676, %v736
        %v739 = vmul.f32 %v677, %v736
        %v740 = vadd.f32 %v732, %v737
        %v741 = vadd.f32 %v733, %v738
        %v742 = vadd.f32 %v734, %v739
        %s743 = sld [smem:[#allocation8 + $0x2]]
        %v744 = vstv %s743
        %v745 = vmul.f32 %v678, %v744
        %v746 = vmul.f32 %v679, %v744
        %v747 = vmul.f32 %v680, %v744
        %v748 = vadd.f32 %v740, %v745
        %v749 = vadd.f32 %v741, %v746
        %v750 = vadd.f32 %v742, %v747
        %s751 = sld [smem:[#allocation8 + $0x3]]
        %v752 = vstv %s751
        %v753 = vmul.f32 %v681, %v752
        %v754 = vmul.f32 %v682, %v752
        %v755 = vmul.f32 %v683, %v752
        %v756 = vadd.f32 %v748, %v753
        %v757 = vadd.f32 %v749, %v754
        %v758 = vadd.f32 %v750, %v755
        %s759 = sld [smem:[#allocation9]]
        %v760 = vstv %s759
        %v761 = vadd.f32 %v756, %v760
        %v762 = vadd.f32 %v757, %v760
        %v763 = vadd.f32 %v758, %v760
        %s764 = sld [smem:[#allocation8 + $0x4]]
        %v765 = vstv %s764
        %v766 = vmul.f32 %v672, %v765
        %v767 = vmul.f32 %v673, %v765
        %v768 = vmul.f32 %v674, %v765
        %s769 = sld [smem:[#allocation8 + $0x5]]
        %v770 = vstv %s769
        %v771 = vmul.f32 %v675, %v770
        %v772 = vmul.f32 %v676, %v770
        %v773 = vmul.f32 %v677, %v770
        %v774 = vadd.f32 %v766, %v771
        %v775 = vadd.f32 %v767, %v772
        %v776 = vadd.f32 %v768, %v773
        %s777 = sld [smem:[#allocation8 + $0x6]]
        %v778 = vstv %s777
        %v779 = vmul.f32 %v678, %v778
        %v780 = vmul.f32 %v679, %v778
        %v781 = vmul.f32 %v680, %v778
        %v782 = vadd.f32 %v774, %v779
        %v783 = vadd.f32 %v775, %v780
        %v784 = vadd.f32 %v776, %v781
        %s785 = sld [smem:[#allocation8 + $0x7]]
        %v786 = vstv %s785
        %v787 = vmul.f32 %v681, %v786
        %v788 = vmul.f32 %v682, %v786
        %v789 = vmul.f32 %v683, %v786
        %v790 = vadd.f32 %v782, %v787
        %v791 = vadd.f32 %v783, %v788
        %v792 = vadd.f32 %v784, %v789
        %s793 = sld [smem:[#allocation9 + $0x1]]
        %v794 = vstv %s793
        %v795 = vadd.f32 %v790, %v794
        %v796 = vadd.f32 %v791, %v794
        %v797 = vadd.f32 %v792, %v794
        %v798 = vadd.f32 %v761, %v795
        %v799 = vadd.f32 %v762, %v796
        %v800 = vadd.f32 %v763, %v797
        %v801 = vmax.f32 %v761, %v795
        %v802 = vmax.f32 %v762, %v796
        %v803 = vmax.f32 %v763, %v797
        %s804 = sld [smem:[#allocation8 + $0x8]]
        %v805 = vstv %s804
        %v806 = vmul.f32 %v672, %v805
        %v807 = vmul.f32 %v673, %v805
        %v808 = vmul.f32 %v674, %v805
        %s809 = sld [smem:[#allocation8 + $0x9]]
        %v810 = vstv %s809
        %v811 = vmul.f32 %v675, %v810
        %v812 = vmul.f32 %v676, %v810
        %v813 = vmul.f32 %v677, %v810
        %v814 = vadd.f32 %v806, %v811
        %v815 = vadd.f32 %v807, %v812
        %v816 = vadd.f32 %v808, %v813
        %s817 = sld [smem:[#allocation8 + $0xa]]
        %v818 = vstv %s817
        %v819 = vmul.f32 %v678, %v818
        %v820 = vmul.f32 %v679, %v818
        %v821 = vmul.f32 %v680, %v818
        %v822 = vadd.f32 %v814, %v819
        %v823 = vadd.f32 %v815, %v820
        %v824 = vadd.f32 %v816, %v821
        %s825 = sld [smem:[#allocation8 + $0xb]]
        %v826 = vstv %s825
        %v827 = vmul.f32 %v681, %v826
        %v828 = vmul.f32 %v682, %v826
        %v829 = vmul.f32 %v683, %v826
        %v830 = vadd.f32 %v822, %v827
        %v831 = vadd.f32 %v823, %v828
        %v832 = vadd.f32 %v824, %v829
        %s833 = sld [smem:[#allocation9 + $0x2]]
        %v834 = vstv %s833
        %v835 = vadd.f32 %v830, %v834
        %v836 = vadd.f32 %v831, %v834
        %v837 = vadd.f32 %v832, %v834
        %v838 = vadd.f32 %v798, %v835
        %v839 = vadd.f32 %v799, %v836
        %v840 = vadd.f32 %v800, %v837
        %v841 = vmax.f32 %v801, %v835
        %v842 = vmax.f32 %v802, %v836
        %v843 = vmax.f32 %v803, %v837
        %s844 = sld [smem:[#allocation8 + $0xc]]
        %v845 = vstv %s844
        %v846 = vmul.f32 %v672, %v845
        %v847 = vmul.f32 %v673, %v845
        %v848 = vmul.f32 %v674, %v845
        %s849 = sld [smem:[#allocation8 + $0xd]]
        %v850 = vstv %s849
        %v851 = vmul.f32 %v675, %v850
        %v852 = vmul.f32 %v676, %v850
        %v853 = vmul.f32 %v677, %v850
        %v854 = vadd.f32 %v846, %v851
        %v855 = vadd.f32 %v847, %v852
        %v856 = vadd.f32 %v848, %v853
        %s857 = sld [smem:[#allocation8 + $0xe]]
        %v858 = vstv %s857
        %v859 = vmul.f32 %v678, %v858
        %v860 = vmul.f32 %v679, %v858
        %v861 = vmul.f32 %v680, %v858
        %v862 = vadd.f32 %v854, %v859
        %v863 = vadd.f32 %v855, %v860
        %v864 = vadd.f32 %v856, %v861
        %s865 = sld [smem:[#allocation8 + $0xf]]
        %v866 = vstv %s865
        %v867 = vmul.f32 %v681, %v866
        %v868 = vmul.f32 %v682, %v866
        %v869 = vmul.f32 %v683, %v866
        %v870 = vadd.f32 %v862, %v867
        %v871 = vadd.f32 %v863, %v868
        %v872 = vadd.f32 %v864, %v869
        %s873 = sld [smem:[#allocation9 + $0x3]]
        %v874 = vstv %s873
        %v875 = vadd.f32 %v870, %v874
        %v876 = vadd.f32 %v871, %v874
        %v877 = vadd.f32 %v872, %v874
        %v878 = vadd.f32 %v838, %v875
        %v879 = vadd.f32 %v839, %v876
        %v880 = vadd.f32 %v840, %v877
        %v881 = vmax.f32 %v841, %v875
        %v882 = vmax.f32 %v842, %v876
        %v883 = vmax.f32 %v843, %v877
        %v884 = vmul.f32 %v878, 0.25
        %v885 = vmul.f32 %v879, 0.25
        %v886 = vmul.f32 %v880, 0.25
        %vm890 = vcmask 1045504
        %v891 = vrot.slane %v884, 2
        %v892 = vrot.slane %v885, 2
        %v893 = vsel %vm890, %v891, %v892
        %v894 = vrot.slane %v886, 2
        %v895 = vsel %vm890, %v892, %v894
        %896 = vrot.lane.b32.xlu0 %v893, 1
        %v897 = vpop.permute.xlu0 %896
        %898 = vrot.lane.b32.xlu0 %v895, 1
        %v899 = vpop.permute.xlu0 %898
        %vm902 = vcmask 23552
        %v903 = vsel %vm902, 0.0, %v897
        %v904 = vsel %vm902, 0.0, %v899
        %vm905 = vcmask 187392
        %v906 = vsel %vm905, %v903, 0.0
        %v907 = vsel %vm905, %v904, 0.0
        %vm910 = vcmask 1042432
        %v911 = vrot.slane %v906, 5
        %v912 = vrot.slane %v907, 5
        %v913 = vsel %vm910, %v911, %v912
        %v917 = vsel %vm910, 0.0, %v911
        %v918 = vsel %vm910, %v912, 0.0
        %s919 = sld [smem:[#allocation11]]
        %v920 = vstv %s919
        %v921 = vmul.f32 %v917, %v920
        %v922 = vmul.f32 %v913, %v920
        %v923 = vadd.f32 %v921, 0.0
        %v924 = vadd.f32 %v922, 0.0
        %s925 = sld [smem:[#allocation11 + $0x1]]
        %v926 = vstv %s925
        %v927 = vmul.f32 %v917, %v926
        %v928 = vmul.f32 %v913, %v926
        %931 = vrot.lane.b32.xlu0 %v927, 127
        %v932 = vpop.permute.xlu0 %931
        %933 = vrot.lane.b32.xlu0 %v928, 127
        %v934 = vpop.permute.xlu0 %933
        %v937 = vadd.f32 %v923, %v932
        %v938 = vadd.f32 %v924, %v934
        %s939 = sld [smem:[#allocation11 + $0x2]]
        %v940 = vstv %s939
        %v941 = vmul.f32 %v917, %v940
        %v942 = vmul.f32 %v913, %v940
        %945 = vrot.lane.b32.xlu0 %v941, 126
        %v946 = vpop.permute.xlu0 %945
        %947 = vrot.lane.b32.xlu0 %v942, 126
        %v948 = vpop.permute.xlu0 %947
        %v951 = vadd.f32 %v937, %v946
        %v952 = vadd.f32 %v938, %v948
        %s953 = sld [smem:[#allocation11 + $0x3]]
        %v954 = vstv %s953
        %v955 = vmul.f32 %v917, %v954
        %v956 = vmul.f32 %v913, %v954
        %959 = vrot.lane.b32.xlu0 %v955, 125
        %v960 = vpop.permute.xlu0 %959
        %961 = vrot.lane.b32.xlu0 %v956, 125
        %v962 = vpop.permute.xlu0 %961
        %v965 = vadd.f32 %v951, %v960
        %v966 = vadd.f32 %v952, %v962
        %s967 = sld [smem:[#allocation11 + $0x4]]
        %v968 = vstv %s967
        %v969 = vmul.f32 %v917, %v968
        %v970 = vmul.f32 %v913, %v968
        %973 = vrot.lane.b32.xlu0 %v969, 124
        %v974 = vpop.permute.xlu0 %973
        %975 = vrot.lane.b32.xlu0 %v970, 124
        %v976 = vpop.permute.xlu0 %975
        %v979 = vadd.f32 %v965, %v974
        %v980 = vadd.f32 %v966, %v976
        %s981 = sld [smem:[#allocation11 + $0x5]]
        %v982 = vstv %s981
        %v983 = vmul.f32 %v917, %v982
        %v984 = vmul.f32 %v913, %v982
        %987 = vrot.lane.b32.xlu0 %v983, 123
        %v988 = vpop.permute.xlu0 %987
        %989 = vrot.lane.b32.xlu0 %v984, 123
        %v990 = vpop.permute.xlu0 %989
        %v993 = vadd.f32 %v979, %v988
        %v994 = vadd.f32 %v980, %v990
        %s995 = sld [smem:[#allocation11 + $0x6]]
        %v996 = vstv %s995
        %v997 = vmul.f32 %v917, %v996
        %v998 = vmul.f32 %v913, %v996
        %1001 = vrot.lane.b32.xlu0 %v997, 122
        %v1002 = vpop.permute.xlu0 %1001
        %1003 = vrot.lane.b32.xlu0 %v998, 122
        %v1004 = vpop.permute.xlu0 %1003
        %v1007 = vadd.f32 %v993, %v1002
        %v1008 = vadd.f32 %v994, %v1004
        %s1009 = sld [smem:[#allocation11 + $0x7]]
        %v1010 = vstv %s1009
        %v1011 = vmul.f32 %v917, %v1010
        %v1012 = vmul.f32 %v913, %v1010
        %v1013 = vmul.f32 %v918, %v1010
        %vm1017 = vcmask 1046528
        %v1018 = vrot.slane %v1011, 1
        %v1019 = vrot.slane %v1012, 1
        %v1020 = vsel %vm1017, %v1018, %v1019
        %v1021 = vrot.slane %v1013, 1
        %v1022 = vsel %vm1017, %v1019, %v1021
        %v1025 = vadd.f32 %v1007, %v1020
        %v1026 = vadd.f32 %v1008, %v1022
        %s1027 = sld [smem:[#allocation11 + $0x8]]
        %v1028 = vstv %s1027
        %v1029 = vmul.f32 %v917, %v1028
        %v1030 = vmul.f32 %v913, %v1028
        %v1031 = vmul.f32 %v918, %v1028
        %v1035 = vrot.slane %v1029, 1
        %v1036 = vrot.slane %v1030, 1
        %v1037 = vsel %vm1017, %v1035, %v1036
        %v1038 = vrot.slane %v1031, 1
        %v1039 = vsel %vm1017, %v1036, %v1038
        %1040 = vrot.lane.b32.xlu0 %v1037, 127
        %v1041 = vpop.permute.xlu0 %1040
        %1042 = vrot.lane.b32.xlu0 %v1039, 127
        %v1043 = vpop.permute.xlu0 %1042
        %v1046 = vadd.f32 %v1025, %v1041
        %v1047 = vadd.f32 %v1026, %v1043
        %s1048 = sld [smem:[#allocation11 + $0x9]]
        %v1049 = vstv %s1048
        %v1050 = vmul.f32 %v917, %v1049
        %v1051 = vmul.f32 %v913, %v1049
        %v1052 = vmul.f32 %v918, %v1049
        %v1056 = vrot.slane %v1050, 1
        %v1057 = vrot.slane %v1051, 1
        %v1058 = vsel %vm1017, %v1056, %v1057
        %v1059 = vrot.slane %v1052, 1
        %v1060 = vsel %vm1017, %v1057, %v1059
        %1061 = vrot.lane.b32.xlu0 %v1058, 126
        %v1062 = vpop.permute.xlu0 %1061
        %1063 = vrot.lane.b32.xlu0 %v1060, 126
        %v1064 = vpop.permute.xlu0 %1063
        %v1067 = vadd.f32 %v1046, %v1062
        %v1068 = vadd.f32 %v1047, %v1064
        %s1069 = sld [smem:[#allocation11 + $0xa]]
        %v1070 = vstv %s1069
        %v1071 = vmul.f32 %v917, %v1070
        %v1072 = vmul.f32 %v913, %v1070
        %v1073 = vmul.f32 %v918, %v1070
        %v1077 = vrot.slane %v1071, 1
        %v1078 = vrot.slane %v1072, 1
        %v1079 = vsel %vm1017, %v1077, %v1078
        %v1080 = vrot.slane %v1073, 1
        %v1081 = vsel %vm1017, %v1078, %v1080
        %1082 = vrot.lane.b32.xlu0 %v1079, 125
        %v1083 = vpop.permute.xlu0 %1082
        %1084 = vrot.lane.b32.xlu0 %v1081, 125
        %v1085 = vpop.permute.xlu0 %1084
        %v1088 = vadd.f32 %v1067, %v1083
        %v1089 = vadd.f32 %v1068, %v1085
        %s1090 = sld [smem:[#allocation11 + $0xb]]
        %v1091 = vstv %s1090
        %v1092 = vmul.f32 %v917, %v1091
        %v1093 = vmul.f32 %v913, %v1091
        %v1094 = vmul.f32 %v918, %v1091
        %v1098 = vrot.slane %v1092, 1
        %v1099 = vrot.slane %v1093, 1
        %v1100 = vsel %vm1017, %v1098, %v1099
        %v1101 = vrot.slane %v1094, 1
        %v1102 = vsel %vm1017, %v1099, %v1101
        %1103 = vrot.lane.b32.xlu0 %v1100, 124
        %v1104 = vpop.permute.xlu0 %1103
        %1105 = vrot.lane.b32.xlu0 %v1102, 124
        %v1106 = vpop.permute.xlu0 %1105
        %v1109 = vadd.f32 %v1088, %v1104
        %v1110 = vadd.f32 %v1089, %v1106
        %s1111 = sld [smem:[#allocation11 + $0xc]]
        %v1112 = vstv %s1111
        %v1113 = vmul.f32 %v917, %v1112
        %v1114 = vmul.f32 %v913, %v1112
        %v1115 = vmul.f32 %v918, %v1112
        %v1119 = vrot.slane %v1113, 1
        %v1120 = vrot.slane %v1114, 1
        %v1121 = vsel %vm1017, %v1119, %v1120
        %v1122 = vrot.slane %v1115, 1
        %v1123 = vsel %vm1017, %v1120, %v1122
        %1124 = vrot.lane.b32.xlu0 %v1121, 123
        %v1125 = vpop.permute.xlu0 %1124
        %1126 = vrot.lane.b32.xlu0 %v1123, 123
        %v1127 = vpop.permute.xlu0 %1126
        %v1130 = vadd.f32 %v1109, %v1125
        %v1131 = vadd.f32 %v1110, %v1127
        %s1132 = sld [smem:[#allocation11 + $0xd]]
        %v1133 = vstv %s1132
        %v1134 = vmul.f32 %v917, %v1133
        %v1135 = vmul.f32 %v913, %v1133
        %v1136 = vmul.f32 %v918, %v1133
        %v1140 = vrot.slane %v1134, 1
        %v1141 = vrot.slane %v1135, 1
        %v1142 = vsel %vm1017, %v1140, %v1141
        %v1143 = vrot.slane %v1136, 1
        %v1144 = vsel %vm1017, %v1141, %v1143
        %1145 = vrot.lane.b32.xlu0 %v1142, 122
        %v1146 = vpop.permute.xlu0 %1145
        %1147 = vrot.lane.b32.xlu0 %v1144, 122
        %v1148 = vpop.permute.xlu0 %1147
        %v1151 = vadd.f32 %v1130, %v1146
        %v1152 = vadd.f32 %v1131, %v1148
        %s1153 = sld [smem:[#allocation11 + $0xe]]
        %v1154 = vstv %s1153
        %v1155 = vmul.f32 %v917, %v1154
        %v1156 = vmul.f32 %v913, %v1154
        %v1157 = vmul.f32 %v918, %v1154
        %v1161 = vrot.slane %v1155, 2
        %v1162 = vrot.slane %v1156, 2
        %v1163 = vsel %vm890, %v1161, %v1162
        %v1164 = vrot.slane %v1157, 2
        %v1165 = vsel %vm890, %v1162, %v1164
        %v1168 = vadd.f32 %v1151, %v1163
        %v1169 = vadd.f32 %v1152, %v1165
        %s1170 = sld [smem:[#allocation11 + $0xf]]
        %v1171 = vstv %s1170
        %v1172 = vmul.f32 %v917, %v1171
        %v1173 = vmul.f32 %v913, %v1171
        %v1174 = vmul.f32 %v918, %v1171
        %v1178 = vrot.slane %v1172, 2
        %v1179 = vrot.slane %v1173, 2
        %v1180 = vsel %vm890, %v1178, %v1179
        %v1181 = vrot.slane %v1174, 2
        %v1182 = vsel %vm890, %v1179, %v1181
        %1183 = vrot.lane.b32.xlu0 %v1180, 127
        %v1184 = vpop.permute.xlu0 %1183
        %1185 = vrot.lane.b32.xlu0 %v1182, 127
        %v1186 = vpop.permute.xlu0 %1185
        %v1189 = vadd.f32 %v1168, %v1184
        %v1190 = vadd.f32 %v1169, %v1186
        %s1191 = sld [smem:[#allocation11 + $0x10]]
        %v1192 = vstv %s1191
        %v1193 = vmul.f32 %v917, %v1192
        %v1194 = vmul.f32 %v913, %v1192
        %v1195 = vmul.f32 %v918, %v1192
        %v1199 = vrot.slane %v1193, 2
        %v1200 = vrot.slane %v1194, 2
        %v1201 = vsel %vm890, %v1199, %v1200
        %v1202 = vrot.slane %v1195, 2
        %v1203 = vsel %vm890, %v1200, %v1202
        %1204 = vrot.lane.b32.xlu0 %v1201, 126
        %v1205 = vpop.permute.xlu0 %1204
        %1206 = vrot.lane.b32.xlu0 %v1203, 126
        %v1207 = vpop.permute.xlu0 %1206
        %v1210 = vadd.f32 %v1189, %v1205
        %v1211 = vadd.f32 %v1190, %v1207
        %s1212 = sld [smem:[#allocation11 + $0x11]]
        %v1213 = vstv %s1212
        %v1214 = vmul.f32 %v917, %v1213
        %v1215 = vmul.f32 %v913, %v1213
        %v1216 = vmul.f32 %v918, %v1213
        %v1220 = vrot.slane %v1214, 2
        %v1221 = vrot.slane %v1215, 2
        %v1222 = vsel %vm890, %v1220, %v1221
        %v1223 = vrot.slane %v1216, 2
        %v1224 = vsel %vm890, %v1221, %v1223
        %1225 = vrot.lane.b32.xlu0 %v1222, 125
        %v1226 = vpop.permute.xlu0 %1225
        %1227 = vrot.lane.b32.xlu0 %v1224, 125
        %v1228 = vpop.permute.xlu0 %1227
        %v1231 = vadd.f32 %v1210, %v1226
        %v1232 = vadd.f32 %v1211, %v1228
        %s1233 = sld [smem:[#allocation11 + $0x12]]
        %v1234 = vstv %s1233
        %v1235 = vmul.f32 %v917, %v1234
        %v1236 = vmul.f32 %v913, %v1234
        %v1237 = vmul.f32 %v918, %v1234
        %v1241 = vrot.slane %v1235, 2
        %v1242 = vrot.slane %v1236, 2
        %v1243 = vsel %vm890, %v1241, %v1242
        %v1244 = vrot.slane %v1237, 2
        %v1245 = vsel %vm890, %v1242, %v1244
        %1246 = vrot.lane.b32.xlu0 %v1243, 124
        %v1247 = vpop.permute.xlu0 %1246
        %1248 = vrot.lane.b32.xlu0 %v1245, 124
        %v1249 = vpop.permute.xlu0 %1248
        %v1252 = vadd.f32 %v1231, %v1247
        %v1253 = vadd.f32 %v1232, %v1249
        %s1254 = sld [smem:[#allocation11 + $0x13]]
        %v1255 = vstv %s1254
        %v1256 = vmul.f32 %v917, %v1255
        %v1257 = vmul.f32 %v913, %v1255
        %v1258 = vmul.f32 %v918, %v1255
        %v1262 = vrot.slane %v1256, 2
        %v1263 = vrot.slane %v1257, 2
        %v1264 = vsel %vm890, %v1262, %v1263
        %v1265 = vrot.slane %v1258, 2
        %v1266 = vsel %vm890, %v1263, %v1265
        %1267 = vrot.lane.b32.xlu0 %v1264, 123
        %v1268 = vpop.permute.xlu0 %1267
        %1269 = vrot.lane.b32.xlu0 %v1266, 123
        %v1270 = vpop.permute.xlu0 %1269
        %v1273 = vadd.f32 %v1252, %v1268
        %v1274 = vadd.f32 %v1253, %v1270
        %s1275 = sld [smem:[#allocation11 + $0x14]]
        %v1276 = vstv %s1275
        %v1277 = vmul.f32 %v917, %v1276
        %v1278 = vmul.f32 %v913, %v1276
        %v1279 = vmul.f32 %v918, %v1276
        %v1283 = vrot.slane %v1277, 2
        %v1284 = vrot.slane %v1278, 2
        %v1285 = vsel %vm890, %v1283, %v1284
        %v1286 = vrot.slane %v1279, 2
        %v1287 = vsel %vm890, %v1284, %v1286
        %1288 = vrot.lane.b32.xlu0 %v1285, 122
        %v1289 = vpop.permute.xlu0 %1288
        %1290 = vrot.lane.b32.xlu0 %v1287, 122
        %v1291 = vpop.permute.xlu0 %1290
        %v1294 = vadd.f32 %v1273, %v1289
        %v1295 = vadd.f32 %v1274, %v1291
        %s1296 = sld [smem:[#allocation11 + $0x15]]
        %v1297 = vstv %s1296
        %v1298 = vmul.f32 %v917, %v1297
        %v1299 = vmul.f32 %v913, %v1297
        %v1300 = vmul.f32 %v918, %v1297
        %vm1304 = vcmask 1044480
        %v1305 = vrot.slane %v1298, 3
        %v1306 = vrot.slane %v1299, 3
        %v1307 = vsel %vm1304, %v1305, %v1306
        %v1308 = vrot.slane %v1300, 3
        %v1309 = vsel %vm1304, %v1306, %v1308
        %v1312 = vadd.f32 %v1294, %v1307
        %v1313 = vadd.f32 %v1295, %v1309
        %s1314 = sld [smem:[#allocation11 + $0x16]]
        %v1315 = vstv %s1314
        %v1316 = vmul.f32 %v917, %v1315
        %v1317 = vmul.f32 %v913, %v1315
        %v1318 = vmul.f32 %v918, %v1315
        %v1322 = vrot.slane %v1316, 3
        %v1323 = vrot.slane %v1317, 3
        %v1324 = vsel %vm1304, %v1322, %v1323
        %v1325 = vrot.slane %v1318, 3
        %v1326 = vsel %vm1304, %v1323, %v1325
        %1327 = vrot.lane.b32.xlu0 %v1324, 127
        %v1328 = vpop.permute.xlu0 %1327
        %1329 = vrot.lane.b32.xlu0 %v1326, 127
        %v1330 = vpop.permute.xlu0 %1329
        %v1333 = vadd.f32 %v1312, %v1328
        %v1334 = vadd.f32 %v1313, %v1330
        %s1335 = sld [smem:[#allocation11 + $0x17]]
        %v1336 = vstv %s1335
        %v1337 = vmul.f32 %v917, %v1336
        %v1338 = vmul.f32 %v913, %v1336
        %v1339 = vmul.f32 %v918, %v1336
        %v1343 = vrot.slane %v1337, 3
        %v1344 = vrot.slane %v1338, 3
        %v1345 = vsel %vm1304, %v1343, %v1344
        %v1346 = vrot.slane %v1339, 3
        %v1347 = vsel %vm1304, %v1344, %v1346
        %1348 = vrot.lane.b32.xlu0 %v1345, 126
        %v1349 = vpop.permute.xlu0 %1348
        %1350 = vrot.lane.b32.xlu0 %v1347, 126
        %v1351 = vpop.permute.xlu0 %1350
        %v1354 = vadd.f32 %v1333, %v1349
        %v1355 = vadd.f32 %v1334, %v1351
        %s1356 = sld [smem:[#allocation11 + $0x18]]
        %v1357 = vstv %s1356
        %v1358 = vmul.f32 %v917, %v1357
        %v1359 = vmul.f32 %v913, %v1357
        %v1360 = vmul.f32 %v918, %v1357
        %v1364 = vrot.slane %v1358, 3
        %v1365 = vrot.slane %v1359, 3
        %v1366 = vsel %vm1304, %v1364, %v1365
        %v1367 = vrot.slane %v1360, 3
        %v1368 = vsel %vm1304, %v1365, %v1367
        %1369 = vrot.lane.b32.xlu0 %v1366, 125
        %v1370 = vpop.permute.xlu0 %1369
        %1371 = vrot.lane.b32.xlu0 %v1368, 125
        %v1372 = vpop.permute.xlu0 %1371
        %v1375 = vadd.f32 %v1354, %v1370
        %v1376 = vadd.f32 %v1355, %v1372
        %s1377 = sld [smem:[#allocation11 + $0x19]]
        %v1378 = vstv %s1377
        %v1379 = vmul.f32 %v917, %v1378
        %v1380 = vmul.f32 %v913, %v1378
        %v1381 = vmul.f32 %v918, %v1378
        %v1385 = vrot.slane %v1379, 3
        %v1386 = vrot.slane %v1380, 3
        %v1387 = vsel %vm1304, %v1385, %v1386
        %v1388 = vrot.slane %v1381, 3
        %v1389 = vsel %vm1304, %v1386, %v1388
        %1390 = vrot.lane.b32.xlu0 %v1387, 124
        %v1391 = vpop.permute.xlu0 %1390
        %1392 = vrot.lane.b32.xlu0 %v1389, 124
        %v1393 = vpop.permute.xlu0 %1392
        %v1396 = vadd.f32 %v1375, %v1391
        %v1397 = vadd.f32 %v1376, %v1393
        %s1398 = sld [smem:[#allocation11 + $0x1a]]
        %v1399 = vstv %s1398
        %v1400 = vmul.f32 %v917, %v1399
        %v1401 = vmul.f32 %v913, %v1399
        %v1402 = vmul.f32 %v918, %v1399
        %v1406 = vrot.slane %v1400, 3
        %v1407 = vrot.slane %v1401, 3
        %v1408 = vsel %vm1304, %v1406, %v1407
        %v1409 = vrot.slane %v1402, 3
        %v1410 = vsel %vm1304, %v1407, %v1409
        %1411 = vrot.lane.b32.xlu0 %v1408, 123
        %v1412 = vpop.permute.xlu0 %1411
        %1413 = vrot.lane.b32.xlu0 %v1410, 123
        %v1414 = vpop.permute.xlu0 %1413
        %v1417 = vadd.f32 %v1396, %v1412
        %v1418 = vadd.f32 %v1397, %v1414
        %s1419 = sld [smem:[#allocation11 + $0x1b]]
        %v1420 = vstv %s1419
        %v1421 = vmul.f32 %v917, %v1420
        %v1422 = vmul.f32 %v913, %v1420
        %v1423 = vmul.f32 %v918, %v1420
        %v1427 = vrot.slane %v1421, 3
        %v1428 = vrot.slane %v1422, 3
        %v1429 = vsel %vm1304, %v1427, %v1428
        %v1430 = vrot.slane %v1423, 3
        %v1431 = vsel %vm1304, %v1428, %v1430
        %1432 = vrot.lane.b32.xlu0 %v1429, 122
        %v1433 = vpop.permute.xlu0 %1432
        %1434 = vrot.lane.b32.xlu0 %v1431, 122
        %v1435 = vpop.permute.xlu0 %1434
        %v1438 = vadd.f32 %v1417, %v1433
        %v1439 = vadd.f32 %v1418, %v1435
        %s1440 = sld [smem:[#allocation11 + $0x1c]]
        %v1441 = vstv %s1440
        %v1442 = vmul.f32 %v917, %v1441
        %v1443 = vmul.f32 %v913, %v1441
        %v1444 = vmul.f32 %v918, %v1441
        %vm1448 = vcmask 1043456
        %v1449 = vrot.slane %v1442, 4
        %v1450 = vrot.slane %v1443, 4
        %v1451 = vsel %vm1448, %v1449, %v1450
        %v1452 = vrot.slane %v1444, 4
        %v1453 = vsel %vm1448, %v1450, %v1452
        %v1456 = vadd.f32 %v1438, %v1451
        %v1457 = vadd.f32 %v1439, %v1453
        %s1458 = sld [smem:[#allocation11 + $0x1d]]
        %v1459 = vstv %s1458
        %v1460 = vmul.f32 %v917, %v1459
        %v1461 = vmul.f32 %v913, %v1459
        %v1462 = vmul.f32 %v918, %v1459
        %v1466 = vrot.slane %v1460, 4
        %v1467 = vrot.slane %v1461, 4
        %v1468 = vsel %vm1448, %v1466, %v1467
        %v1469 = vrot.slane %v1462, 4
        %v1470 = vsel %vm1448, %v1467, %v1469
        %1471 = vrot.lane.b32.xlu0 %v1468, 127
        %v1472 = vpop.permute.xlu0 %1471
        %1473 = vrot.lane.b32.xlu0 %v1470, 127
        %v1474 = vpop.permute.xlu0 %1473
        %v1477 = vadd.f32 %v1456, %v1472
        %v1478 = vadd.f32 %v1457, %v1474
        %s1479 = sld [smem:[#allocation11 + $0x1e]]
        %v1480 = vstv %s1479
        %v1481 = vmul.f32 %v917, %v1480
        %v1482 = vmul.f32 %v913, %v1480
        %v1483 = vmul.f32 %v918, %v1480
        %v1487 = vrot.slane %v1481, 4
        %v1488 = vrot.slane %v1482, 4
        %v1489 = vsel %vm1448, %v1487, %v1488
        %v1490 = vrot.slane %v1483, 4
        %v1491 = vsel %vm1448, %v1488, %v1490
        %1492 = vrot.lane.b32.xlu0 %v1489, 126
        %v1493 = vpop.permute.xlu0 %1492
        %1494 = vrot.lane.b32.xlu0 %v1491, 126
        %v1495 = vpop.permute.xlu0 %1494
        %v1498 = vadd.f32 %v1477, %v1493
        %v1499 = vadd.f32 %v1478, %v1495
        %s1500 = sld [smem:[#allocation11 + $0x1f]]
        %v1501 = vstv %s1500
        %v1502 = vmul.f32 %v917, %v1501
        %v1503 = vmul.f32 %v913, %v1501
        %v1504 = vmul.f32 %v918, %v1501
        %v1508 = vrot.slane %v1502, 4
        %v1509 = vrot.slane %v1503, 4
        %v1510 = vsel %vm1448, %v1508, %v1509
        %v1511 = vrot.slane %v1504, 4
        %v1512 = vsel %vm1448, %v1509, %v1511
        %1513 = vrot.lane.b32.xlu0 %v1510, 125
        %v1514 = vpop.permute.xlu0 %1513
        %1515 = vrot.lane.b32.xlu0 %v1512, 125
        %v1516 = vpop.permute.xlu0 %1515
        %v1519 = vadd.f32 %v1498, %v1514
        %v1520 = vadd.f32 %v1499, %v1516
        %s1521 = sld [smem:[#allocation11 + $0x20]]
        %v1522 = vstv %s1521
        %v1523 = vmul.f32 %v917, %v1522
        %v1524 = vmul.f32 %v913, %v1522
        %v1525 = vmul.f32 %v918, %v1522
        %v1529 = vrot.slane %v1523, 4
        %v1530 = vrot.slane %v1524, 4
        %v1531 = vsel %vm1448, %v1529, %v1530
        %v1532 = vrot.slane %v1525, 4
        %v1533 = vsel %vm1448, %v1530, %v1532
        %1534 = vrot.lane.b32.xlu0 %v1531, 124
        %v1535 = vpop.permute.xlu0 %1534
        %1536 = vrot.lane.b32.xlu0 %v1533, 124
        %v1537 = vpop.permute.xlu0 %1536
        %v1540 = vadd.f32 %v1519, %v1535
        %v1541 = vadd.f32 %v1520, %v1537
        %s1542 = sld [smem:[#allocation11 + $0x21]]
        %v1543 = vstv %s1542
        %v1544 = vmul.f32 %v917, %v1543
        %v1545 = vmul.f32 %v913, %v1543
        %v1546 = vmul.f32 %v918, %v1543
        %v1550 = vrot.slane %v1544, 4
        %v1551 = vrot.slane %v1545, 4
        %v1552 = vsel %vm1448, %v1550, %v1551
        %v1553 = vrot.slane %v1546, 4
        %v1554 = vsel %vm1448, %v1551, %v1553
        %1555 = vrot.lane.b32.xlu0 %v1552, 123
        %v1556 = vpop.permute.xlu0 %1555
        %1557 = vrot.lane.b32.xlu0 %v1554, 123
        %v1558 = vpop.permute.xlu0 %1557
        %v1561 = vadd.f32 %v1540, %v1556
        %v1562 = vadd.f32 %v1541, %v1558
        %s1563 = sld [smem:[#allocation11 + $0x22]]
        %v1564 = vstv %s1563
        %v1565 = vmul.f32 %v917, %v1564
        %v1566 = vmul.f32 %v913, %v1564
        %v1567 = vmul.f32 %v918, %v1564
        %v1571 = vrot.slane %v1565, 4
        %v1572 = vrot.slane %v1566, 4
        %v1573 = vsel %vm1448, %v1571, %v1572
        %v1574 = vrot.slane %v1567, 4
        %v1575 = vsel %vm1448, %v1572, %v1574
        %1576 = vrot.lane.b32.xlu0 %v1573, 122
        %v1577 = vpop.permute.xlu0 %1576
        %1578 = vrot.lane.b32.xlu0 %v1575, 122
        %v1579 = vpop.permute.xlu0 %1578
        %v1582 = vadd.f32 %v1561, %v1577
        %v1583 = vadd.f32 %v1562, %v1579
        %s1584 = sld [smem:[#allocation11 + $0x23]]
        %v1585 = vstv %s1584
        %v1586 = vmul.f32 %v917, %v1585
        %v1587 = vmul.f32 %v913, %v1585
        %v1588 = vmul.f32 %v918, %v1585
        %v1592 = vrot.slane %v1586, 5
        %v1593 = vrot.slane %v1587, 5
        %v1594 = vsel %vm910, %v1592, %v1593
        %v1595 = vrot.slane %v1588, 5
        %v1596 = vsel %vm910, %v1593, %v1595
        %v1599 = vadd.f32 %v1582, %v1594
        %v1600 = vadd.f32 %v1583, %v1596
        %s1601 = sld [smem:[#allocation11 + $0x24]]
        %v1602 = vstv %s1601
        %v1603 = vmul.f32 %v917, %v1602
        %v1604 = vmul.f32 %v913, %v1602
        %v1605 = vmul.f32 %v918, %v1602
        %v1609 = vrot.slane %v1603, 5
        %v1610 = vrot.slane %v1604, 5
        %v1611 = vsel %vm910, %v1609, %v1610
        %v1612 = vrot.slane %v1605, 5
        %v1613 = vsel %vm910, %v1610, %v1612
        %1614 = vrot.lane.b32.xlu0 %v1611, 127
        %v1615 = vpop.permute.xlu0 %1614
        %1616 = vrot.lane.b32.xlu0 %v1613, 127
        %v1617 = vpop.permute.xlu0 %1616
        %v1620 = vadd.f32 %v1599, %v1615
        %v1621 = vadd.f32 %v1600, %v1617
        %s1622 = sld [smem:[#allocation11 + $0x25]]
        %v1623 = vstv %s1622
        %v1624 = vmul.f32 %v917, %v1623
        %v1625 = vmul.f32 %v913, %v1623
        %v1626 = vmul.f32 %v918, %v1623
        %v1630 = vrot.slane %v1624, 5
        %v1631 = vrot.slane %v1625, 5
        %v1632 = vsel %vm910, %v1630, %v1631
        %v1633 = vrot.slane %v1626, 5
        %v1634 = vsel %vm910, %v1631, %v1633
        %1635 = vrot.lane.b32.xlu0 %v1632, 126
        %v1636 = vpop.permute.xlu0 %1635
        %1637 = vrot.lane.b32.xlu0 %v1634, 126
        %v1638 = vpop.permute.xlu0 %1637
        %v1641 = vadd.f32 %v1620, %v1636
        %v1642 = vadd.f32 %v1621, %v1638
        %s1643 = sld [smem:[#allocation11 + $0x26]]
        %v1644 = vstv %s1643
        %v1645 = vmul.f32 %v917, %v1644
        %v1646 = vmul.f32 %v913, %v1644
        %v1647 = vmul.f32 %v918, %v1644
        %v1651 = vrot.slane %v1645, 5
        %v1652 = vrot.slane %v1646, 5
        %v1653 = vsel %vm910, %v1651, %v1652
        %v1654 = vrot.slane %v1647, 5
        %v1655 = vsel %vm910, %v1652, %v1654
        %1656 = vrot.lane.b32.xlu0 %v1653, 125
        %v1657 = vpop.permute.xlu0 %1656
        %1658 = vrot.lane.b32.xlu0 %v1655, 125
        %v1659 = vpop.permute.xlu0 %1658
        %v1662 = vadd.f32 %v1641, %v1657
        %v1663 = vadd.f32 %v1642, %v1659
        %s1664 = sld [smem:[#allocation11 + $0x27]]
        %v1665 = vstv %s1664
        %v1666 = vmul.f32 %v917, %v1665
        %v1667 = vmul.f32 %v913, %v1665
        %v1668 = vmul.f32 %v918, %v1665
        %v1672 = vrot.slane %v1666, 5
        %v1673 = vrot.slane %v1667, 5
        %v1674 = vsel %vm910, %v1672, %v1673
        %v1675 = vrot.slane %v1668, 5
        %v1676 = vsel %vm910, %v1673, %v1675
        %1677 = vrot.lane.b32.xlu0 %v1674, 124
        %v1678 = vpop.permute.xlu0 %1677
        %1679 = vrot.lane.b32.xlu0 %v1676, 124
        %v1680 = vpop.permute.xlu0 %1679
        %v1683 = vadd.f32 %v1662, %v1678
        %v1684 = vadd.f32 %v1663, %v1680
        %s1685 = sld [smem:[#allocation11 + $0x28]]
        %v1686 = vstv %s1685
        %v1687 = vmul.f32 %v917, %v1686
        %v1688 = vmul.f32 %v913, %v1686
        %v1689 = vmul.f32 %v918, %v1686
        %v1693 = vrot.slane %v1687, 5
        %v1694 = vrot.slane %v1688, 5
        %v1695 = vsel %vm910, %v1693, %v1694
        %v1696 = vrot.slane %v1689, 5
        %v1697 = vsel %vm910, %v1694, %v1696
        %1698 = vrot.lane.b32.xlu0 %v1695, 123
        %v1699 = vpop.permute.xlu0 %1698
        %1700 = vrot.lane.b32.xlu0 %v1697, 123
        %v1701 = vpop.permute.xlu0 %1700
        %v1704 = vadd.f32 %v1683, %v1699
        %v1705 = vadd.f32 %v1684, %v1701
        %s1706 = sld [smem:[#allocation11 + $0x29]]
        %v1707 = vstv %s1706
        %v1708 = vmul.f32 %v917, %v1707
        %v1709 = vmul.f32 %v913, %v1707
        %v1710 = vmul.f32 %v918, %v1707
        %v1714 = vrot.slane %v1708, 5
        %v1715 = vrot.slane %v1709, 5
        %v1716 = vsel %vm910, %v1714, %v1715
        %v1717 = vrot.slane %v1710, 5
        %v1718 = vsel %vm910, %v1715, %v1717
        %1719 = vrot.lane.b32.xlu0 %v1716, 122
        %v1720 = vpop.permute.xlu0 %1719
        %1721 = vrot.lane.b32.xlu0 %v1718, 122
        %v1722 = vpop.permute.xlu0 %1721
        %v1725 = vadd.f32 %v1704, %v1720
        %v1726 = vadd.f32 %v1705, %v1722
        %s1727 = sld [smem:[#allocation11 + $0x2a]]
        %v1728 = vstv %s1727
        %v1729 = vmul.f32 %v917, %v1728
        %v1730 = vmul.f32 %v913, %v1728
        %v1731 = vmul.f32 %v918, %v1728
        %vm1735 = vcmask 1041408
        %v1736 = vrot.slane %v1729, 6
        %v1737 = vrot.slane %v1730, 6
        %v1738 = vsel %vm1735, %v1736, %v1737
        %v1739 = vrot.slane %v1731, 6
        %v1740 = vsel %vm1735, %v1737, %v1739
        %v1743 = vadd.f32 %v1725, %v1738
        %v1744 = vadd.f32 %v1726, %v1740
        %s1745 = sld [smem:[#allocation11 + $0x2b]]
        %v1746 = vstv %s1745
        %v1747 = vmul.f32 %v917, %v1746
        %v1748 = vmul.f32 %v913, %v1746
        %v1749 = vmul.f32 %v918, %v1746
        %v1753 = vrot.slane %v1747, 6
        %v1754 = vrot.slane %v1748, 6
        %v1755 = vsel %vm1735, %v1753, %v1754
        %v1756 = vrot.slane %v1749, 6
        %v1757 = vsel %vm1735, %v1754, %v1756
        %1758 = vrot.lane.b32.xlu0 %v1755, 127
        %v1759 = vpop.permute.xlu0 %1758
        %1760 = vrot.lane.b32.xlu0 %v1757, 127
        %v1761 = vpop.permute.xlu0 %1760
        %v1764 = vadd.f32 %v1743, %v1759
        %v1765 = vadd.f32 %v1744, %v1761
        %s1766 = sld [smem:[#allocation11 + $0x2c]]
        %v1767 = vstv %s1766
        %v1768 = vmul.f32 %v917, %v1767
        %v1769 = vmul.f32 %v913, %v1767
        %v1770 = vmul.f32 %v918, %v1767
        %v1774 = vrot.slane %v1768, 6
        %v1775 = vrot.slane %v1769, 6
        %v1776 = vsel %vm1735, %v1774, %v1775
        %v1777 = vrot.slane %v1770, 6
        %v1778 = vsel %vm1735, %v1775, %v1777
        %1779 = vrot.lane.b32.xlu0 %v1776, 126
        %v1780 = vpop.permute.xlu0 %1779
        %1781 = vrot.lane.b32.xlu0 %v1778, 126
        %v1782 = vpop.permute.xlu0 %1781
        %v1785 = vadd.f32 %v1764, %v1780
        %v1786 = vadd.f32 %v1765, %v1782
        %s1787 = sld [smem:[#allocation11 + $0x2d]]
        %v1788 = vstv %s1787
        %v1789 = vmul.f32 %v917, %v1788
        %v1790 = vmul.f32 %v913, %v1788
        %v1791 = vmul.f32 %v918, %v1788
        %v1795 = vrot.slane %v1789, 6
        %v1796 = vrot.slane %v1790, 6
        %v1797 = vsel %vm1735, %v1795, %v1796
        %v1798 = vrot.slane %v1791, 6
        %v1799 = vsel %vm1735, %v1796, %v1798
        %1800 = vrot.lane.b32.xlu0 %v1797, 125
        %v1801 = vpop.permute.xlu0 %1800
        %1802 = vrot.lane.b32.xlu0 %v1799, 125
        %v1803 = vpop.permute.xlu0 %1802
        %v1806 = vadd.f32 %v1785, %v1801
        %v1807 = vadd.f32 %v1786, %v1803
        %s1808 = sld [smem:[#allocation11 + $0x2e]]
        %v1809 = vstv %s1808
        %v1810 = vmul.f32 %v917, %v1809
        %v1811 = vmul.f32 %v913, %v1809
        %v1812 = vmul.f32 %v918, %v1809
        %v1816 = vrot.slane %v1810, 6
        %v1817 = vrot.slane %v1811, 6
        %v1818 = vsel %vm1735, %v1816, %v1817
        %v1819 = vrot.slane %v1812, 6
        %v1820 = vsel %vm1735, %v1817, %v1819
        %1821 = vrot.lane.b32.xlu0 %v1818, 124
        %v1822 = vpop.permute.xlu0 %1821
        %1823 = vrot.lane.b32.xlu0 %v1820, 124
        %v1824 = vpop.permute.xlu0 %1823
        %v1827 = vadd.f32 %v1806, %v1822
        %v1828 = vadd.f32 %v1807, %v1824
        %s1829 = sld [smem:[#allocation11 + $0x2f]]
        %v1830 = vstv %s1829
        %v1831 = vmul.f32 %v917, %v1830
        %v1832 = vmul.f32 %v913, %v1830
        %v1833 = vmul.f32 %v918, %v1830
        %v1837 = vrot.slane %v1831, 6
        %v1838 = vrot.slane %v1832, 6
        %v1839 = vsel %vm1735, %v1837, %v1838
        %v1840 = vrot.slane %v1833, 6
        %v1841 = vsel %vm1735, %v1838, %v1840
        %1842 = vrot.lane.b32.xlu0 %v1839, 123
        %v1843 = vpop.permute.xlu0 %1842
        %1844 = vrot.lane.b32.xlu0 %v1841, 123
        %v1845 = vpop.permute.xlu0 %1844
        %v1848 = vadd.f32 %v1827, %v1843
        %v1849 = vadd.f32 %v1828, %v1845
        %s1850 = sld [smem:[#allocation11 + $0x30]]
        %v1851 = vstv %s1850
        %v1852 = vmul.f32 %v917, %v1851
        %v1853 = vmul.f32 %v913, %v1851
        %v1854 = vmul.f32 %v918, %v1851
        %v1858 = vrot.slane %v1852, 6
        %v1859 = vrot.slane %v1853, 6
        %v1860 = vsel %vm1735, %v1858, %v1859
        %v1861 = vrot.slane %v1854, 6
        %v1862 = vsel %vm1735, %v1859, %v1861
        %1863 = vrot.lane.b32.xlu0 %v1860, 122
        %v1864 = vpop.permute.xlu0 %1863
        %1865 = vrot.lane.b32.xlu0 %v1862, 122
        %v1866 = vpop.permute.xlu0 %1865
        %v1869 = vadd.f32 %v1848, %v1864
        %v1870 = vadd.f32 %v1849, %v1866
        %v1874 = vrot.slane %v881, 2
        %v1875 = vrot.slane %v882, 2
        %v1876 = vsel %vm890, %v1874, %v1875
        %v1877 = vrot.slane %v883, 2
        %v1878 = vsel %vm890, %v1875, %v1877
        %1879 = vrot.lane.b32.xlu0 %v1876, 1
        %v1880 = vpop.permute.xlu0 %1879
        %1881 = vrot.lane.b32.xlu0 %v1878, 1
        %v1882 = vpop.permute.xlu0 %1881
        %v1885 = vsel %vm902, 0.0, %v1880
        %v1886 = vsel %vm902, 0.0, %v1882
        %v1887 = vsel %vm905, %v1885, 0.0
        %v1888 = vsel %vm905, %v1886, 0.0
        %v1891 = vrot.slane %v1887, 5
        %v1892 = vrot.slane %v1888, 5
        %v1893 = vsel %vm910, %v1891, %v1892
        %v1897 = vsel %vm910, 0.0, %v1891
        %v1898 = vsel %vm910, %v1892, 0.0
        %s1899 = sld [smem:[#allocation11 + $0x31]]
        %v1900 = vstv %s1899
        %v1901 = vmul.f32 %v1897, %v1900
        %v1902 = vmul.f32 %v1893, %v1900
        %v1903 = vadd.f32 %v1869, %v1901
        %v1904 = vadd.f32 %v1870, %v1902
        %s1905 = sld [smem:[#allocation11 + $0x32]]
        %v1906 = vstv %s1905
        %v1907 = vmul.f32 %v1897, %v1906
        %v1908 = vmul.f32 %v1893, %v1906
        %1911 = vrot.lane.b32.xlu0 %v1907, 127
        %v1912 = vpop.permute.xlu0 %1911
        %1913 = vrot.lane.b32.xlu0 %v1908, 127
        %v1914 = vpop.permute.xlu0 %1913
        %v1917 = vadd.f32 %v1903, %v1912
        %v1918 = vadd.f32 %v1904, %v1914
        %s1919 = sld [smem:[#allocation11 + $0x33]]
        %v1920 = vstv %s1919
        %v1921 = vmul.f32 %v1897, %v1920
        %v1922 = vmul.f32 %v1893, %v1920
        %1925 = vrot.lane.b32.xlu0 %v1921, 126
        %v1926 = vpop.permute.xlu0 %1925
        %1927 = vrot.lane.b32.xlu0 %v1922, 126
        %v1928 = vpop.permute.xlu0 %1927
        %v1931 = vadd.f32 %v1917, %v1926
        %v1932 = vadd.f32 %v1918, %v1928
        %s1933 = sld [smem:[#allocation11 + $0x34]]
        %v1934 = vstv %s1933
        %v1935 = vmul.f32 %v1897, %v1934
        %v1936 = vmul.f32 %v1893, %v1934
        %1939 = vrot.lane.b32.xlu0 %v1935, 125
        %v1940 = vpop.permute.xlu0 %1939
        %1941 = vrot.lane.b32.xlu0 %v1936, 125
        %v1942 = vpop.permute.xlu0 %1941
        %v1945 = vadd.f32 %v1931, %v1940
        %v1946 = vadd.f32 %v1932, %v1942
        %s1947 = sld [smem:[#allocation11 + $0x35]]
        %v1948 = vstv %s1947
        %v1949 = vmul.f32 %v1897, %v1948
        %v1950 = vmul.f32 %v1893, %v1948
        %1953 = vrot.lane.b32.xlu0 %v1949, 124
        %v1954 = vpop.permute.xlu0 %1953
        %1955 = vrot.lane.b32.xlu0 %v1950, 124
        %v1956 = vpop.permute.xlu0 %1955
        %v1959 = vadd.f32 %v1945, %v1954
        %v1960 = vadd.f32 %v1946, %v1956
        %s1961 = sld [smem:[#allocation11 + $0x36]]
        %v1962 = vstv %s1961
        %v1963 = vmul.f32 %v1897, %v1962
        %v1964 = vmul.f32 %v1893, %v1962
        %1967 = vrot.lane.b32.xlu0 %v1963, 123
        %v1968 = vpop.permute.xlu0 %1967
        %1969 = vrot.lane.b32.xlu0 %v1964, 123
        %v1970 = vpop.permute.xlu0 %1969
        %v1973 = vadd.f32 %v1959, %v1968
        %v1974 = vadd.f32 %v1960, %v1970
        %s1975 = sld [smem:[#allocation11 + $0x37]]
        %v1976 = vstv %s1975
        %v1977 = vmul.f32 %v1897, %v1976
        %v1978 = vmul.f32 %v1893, %v1976
        %1981 = vrot.lane.b32.xlu0 %v1977, 122
        %v1982 = vpop.permute.xlu0 %1981
        %1983 = vrot.lane.b32.xlu0 %v1978, 122
        %v1984 = vpop.permute.xlu0 %1983
        %v1987 = vadd.f32 %v1973, %v1982
        %v1988 = vadd.f32 %v1974, %v1984
        %s1989 = sld [smem:[#allocation11 + $0x38]]
        %v1990 = vstv %s1989
        %v1991 = vmul.f32 %v1897, %v1990
        %v1992 = vmul.f32 %v1893, %v1990
        %v1993 = vmul.f32 %v1898, %v1990
        %v1997 = vrot.slane %v1991, 1
        %v1998 = vrot.slane %v1992, 1
        %v1999 = vsel %vm1017, %v1997, %v1998
        %v2000 = vrot.slane %v1993, 1
        %v2001 = vsel %vm1017, %v1998, %v2000
        %v2004 = vadd.f32 %v1987, %v1999
        %v2005 = vadd.f32 %v1988, %v2001
        %s2006 = sld [smem:[#allocation11 + $0x39]]
        %v2007 = vstv %s2006
        %v2008 = vmul.f32 %v1897, %v2007
        %v2009 = vmul.f32 %v1893, %v2007
        %v2010 = vmul.f32 %v1898, %v2007
        %v2014 = vrot.slane %v2008, 1
        %v2015 = vrot.slane %v2009, 1
        %v2016 = vsel %vm1017, %v2014, %v2015
        %v2017 = vrot.slane %v2010, 1
        %v2018 = vsel %vm1017, %v2015, %v2017
        %2019 = vrot.lane.b32.xlu0 %v2016, 127
        %v2020 = vpop.permute.xlu0 %2019
        %2021 = vrot.lane.b32.xlu0 %v2018, 127
        %v2022 = vpop.permute.xlu0 %2021
        %v2025 = vadd.f32 %v2004, %v2020
        %v2026 = vadd.f32 %v2005, %v2022
        %s2027 = sld [smem:[#allocation11 + $0x3a]]
        %v2028 = vstv %s2027
        %v2029 = vmul.f32 %v1897, %v2028
        %v2030 = vmul.f32 %v1893, %v2028
        %v2031 = vmul.f32 %v1898, %v2028
        %v2035 = vrot.slane %v2029, 1
        %v2036 = vrot.slane %v2030, 1
        %v2037 = vsel %vm1017, %v2035, %v2036
        %v2038 = vrot.slane %v2031, 1
        %v2039 = vsel %vm1017, %v2036, %v2038
        %2040 = vrot.lane.b32.xlu0 %v2037, 126
        %v2041 = vpop.permute.xlu0 %2040
        %2042 = vrot.lane.b32.xlu0 %v2039, 126
        %v2043 = vpop.permute.xlu0 %2042
        %v2046 = vadd.f32 %v2025, %v2041
        %v2047 = vadd.f32 %v2026, %v2043
        %s2048 = sld [smem:[#allocation11 + $0x3b]]
        %v2049 = vstv %s2048
        %v2050 = vmul.f32 %v1897, %v2049
        %v2051 = vmul.f32 %v1893, %v2049
        %v2052 = vmul.f32 %v1898, %v2049
        %v2056 = vrot.slane %v2050, 1
        %v2057 = vrot.slane %v2051, 1
        %v2058 = vsel %vm1017, %v2056, %v2057
        %v2059 = vrot.slane %v2052, 1
        %v2060 = vsel %vm1017, %v2057, %v2059
        %2061 = vrot.lane.b32.xlu0 %v2058, 125
        %v2062 = vpop.permute.xlu0 %2061
        %2063 = vrot.lane.b32.xlu0 %v2060, 125
        %v2064 = vpop.permute.xlu0 %2063
        %v2067 = vadd.f32 %v2046, %v2062
        %v2068 = vadd.f32 %v2047, %v2064
        %s2069 = sld [smem:[#allocation11 + $0x3c]]
        %v2070 = vstv %s2069
        %v2071 = vmul.f32 %v1897, %v2070
        %v2072 = vmul.f32 %v1893, %v2070
        %v2073 = vmul.f32 %v1898, %v2070
        %v2077 = vrot.slane %v2071, 1
        %v2078 = vrot.slane %v2072, 1
        %v2079 = vsel %vm1017, %v2077, %v2078
        %v2080 = vrot.slane %v2073, 1
        %v2081 = vsel %vm1017, %v2078, %v2080
        %2082 = vrot.lane.b32.xlu0 %v2079, 124
        %v2083 = vpop.permute.xlu0 %2082
        %2084 = vrot.lane.b32.xlu0 %v2081, 124
        %v2085 = vpop.permute.xlu0 %2084
        %v2088 = vadd.f32 %v2067, %v2083
        %v2089 = vadd.f32 %v2068, %v2085
        %s2090 = sld [smem:[#allocation11 + $0x3d]]
        %v2091 = vstv %s2090
        %v2092 = vmul.f32 %v1897, %v2091
        %v2093 = vmul.f32 %v1893, %v2091
        %v2094 = vmul.f32 %v1898, %v2091
        %v2098 = vrot.slane %v2092, 1
        %v2099 = vrot.slane %v2093, 1
        %v2100 = vsel %vm1017, %v2098, %v2099
        %v2101 = vrot.slane %v2094, 1
        %v2102 = vsel %vm1017, %v2099, %v2101
        %2103 = vrot.lane.b32.xlu0 %v2100, 123
        %v2104 = vpop.permute.xlu0 %2103
        %2105 = vrot.lane.b32.xlu0 %v2102, 123
        %v2106 = vpop.permute.xlu0 %2105
        %v2109 = vadd.f32 %v2088, %v2104
        %v2110 = vadd.f32 %v2089, %v2106
        %s2111 = sld [smem:[#allocation11 + $0x3e]]
        %v2112 = vstv %s2111
        %v2113 = vmul.f32 %v1897, %v2112
        %v2114 = vmul.f32 %v1893, %v2112
        %v2115 = vmul.f32 %v1898, %v2112
        %v2119 = vrot.slane %v2113, 1
        %v2120 = vrot.slane %v2114, 1
        %v2121 = vsel %vm1017, %v2119, %v2120
        %v2122 = vrot.slane %v2115, 1
        %v2123 = vsel %vm1017, %v2120, %v2122
        %2124 = vrot.lane.b32.xlu0 %v2121, 122
        %v2125 = vpop.permute.xlu0 %2124
        %2126 = vrot.lane.b32.xlu0 %v2123, 122
        %v2127 = vpop.permute.xlu0 %2126
        %v2130 = vadd.f32 %v2109, %v2125
        %v2131 = vadd.f32 %v2110, %v2127
        %s2132 = sld [smem:[#allocation11 + $0x3f]]
        %v2133 = vstv %s2132
        %v2134 = vmul.f32 %v1897, %v2133
        %v2135 = vmul.f32 %v1893, %v2133
        %v2136 = vmul.f32 %v1898, %v2133
        %v2140 = vrot.slane %v2134, 2
        %v2141 = vrot.slane %v2135, 2
        %v2142 = vsel %vm890, %v2140, %v2141
        %v2143 = vrot.slane %v2136, 2
        %v2144 = vsel %vm890, %v2141, %v2143
        %v2147 = vadd.f32 %v2130, %v2142
        %v2148 = vadd.f32 %v2131, %v2144
        %s2149 = sld [smem:[#allocation11 + $0x40]]
        %v2150 = vstv %s2149
        %v2151 = vmul.f32 %v1897, %v2150
        %v2152 = vmul.f32 %v1893, %v2150
        %v2153 = vmul.f32 %v1898, %v2150
        %v2157 = vrot.slane %v2151, 2
        %v2158 = vrot.slane %v2152, 2
        %v2159 = vsel %vm890, %v2157, %v2158
        %v2160 = vrot.slane %v2153, 2
        %v2161 = vsel %vm890, %v2158, %v2160
        %2162 = vrot.lane.b32.xlu0 %v2159, 127
        %v2163 = vpop.permute.xlu0 %2162
        %2164 = vrot.lane.b32.xlu0 %v2161, 127
        %v2165 = vpop.permute.xlu0 %2164
        %v2168 = vadd.f32 %v2147, %v2163
        %v2169 = vadd.f32 %v2148, %v2165
        %s2170 = sld [smem:[#allocation11 + $0x41]]
        %v2171 = vstv %s2170
        %v2172 = vmul.f32 %v1897, %v2171
        %v2173 = vmul.f32 %v1893, %v2171
        %v2174 = vmul.f32 %v1898, %v2171
        %v2178 = vrot.slane %v2172, 2
        %v2179 = vrot.slane %v2173, 2
        %v2180 = vsel %vm890, %v2178, %v2179
        %v2181 = vrot.slane %v2174, 2
        %v2182 = vsel %vm890, %v2179, %v2181
        %2183 = vrot.lane.b32.xlu0 %v2180, 126
        %v2184 = vpop.permute.xlu0 %2183
        %2185 = vrot.lane.b32.xlu0 %v2182, 126
        %v2186 = vpop.permute.xlu0 %2185
        %v2189 = vadd.f32 %v2168, %v2184
        %v2190 = vadd.f32 %v2169, %v2186
        %s2191 = sld [smem:[#allocation11 + $0x42]]
        %v2192 = vstv %s2191
        %v2193 = vmul.f32 %v1897, %v2192
        %v2194 = vmul.f32 %v1893, %v2192
        %v2195 = vmul.f32 %v1898, %v2192
        %v2199 = vrot.slane %v2193, 2
        %v2200 = vrot.slane %v2194, 2
        %v2201 = vsel %vm890, %v2199, %v2200
        %v2202 = vrot.slane %v2195, 2
        %v2203 = vsel %vm890, %v2200, %v2202
        %2204 = vrot.lane.b32.xlu0 %v2201, 125
        %v2205 = vpop.permute.xlu0 %2204
        %2206 = vrot.lane.b32.xlu0 %v2203, 125
        %v2207 = vpop.permute.xlu0 %2206
        %v2210 = vadd.f32 %v2189, %v2205
        %v2211 = vadd.f32 %v2190, %v2207
        %s2212 = sld [smem:[#allocation11 + $0x43]]
        %v2213 = vstv %s2212
        %v2214 = vmul.f32 %v1897, %v2213
        %v2215 = vmul.f32 %v1893, %v2213
        %v2216 = vmul.f32 %v1898, %v2213
        %v2220 = vrot.slane %v2214, 2
        %v2221 = vrot.slane %v2215, 2
        %v2222 = vsel %vm890, %v2220, %v2221
        %v2223 = vrot.slane %v2216, 2
        %v2224 = vsel %vm890, %v2221, %v2223
        %2225 = vrot.lane.b32.xlu0 %v2222, 124
        %v2226 = vpop.permute.xlu0 %2225
        %2227 = vrot.lane.b32.xlu0 %v2224, 124
        %v2228 = vpop.permute.xlu0 %2227
        %v2231 = vadd.f32 %v2210, %v2226
        %v2232 = vadd.f32 %v2211, %v2228
        %s2233 = sld [smem:[#allocation11 + $0x44]]
        %v2234 = vstv %s2233
        %v2235 = vmul.f32 %v1897, %v2234
        %v2236 = vmul.f32 %v1893, %v2234
        %v2237 = vmul.f32 %v1898, %v2234
        %v2241 = vrot.slane %v2235, 2
        %v2242 = vrot.slane %v2236, 2
        %v2243 = vsel %vm890, %v2241, %v2242
        %v2244 = vrot.slane %v2237, 2
        %v2245 = vsel %vm890, %v2242, %v2244
        %2246 = vrot.lane.b32.xlu0 %v2243, 123
        %v2247 = vpop.permute.xlu0 %2246
        %2248 = vrot.lane.b32.xlu0 %v2245, 123
        %v2249 = vpop.permute.xlu0 %2248
        %v2252 = vadd.f32 %v2231, %v2247
        %v2253 = vadd.f32 %v2232, %v2249
        %s2254 = sld [smem:[#allocation11 + $0x45]]
        %v2255 = vstv %s2254
        %v2256 = vmul.f32 %v1897, %v2255
        %v2257 = vmul.f32 %v1893, %v2255
        %v2258 = vmul.f32 %v1898, %v2255
        %v2262 = vrot.slane %v2256, 2
        %v2263 = vrot.slane %v2257, 2
        %v2264 = vsel %vm890, %v2262, %v2263
        %v2265 = vrot.slane %v2258, 2
        %v2266 = vsel %vm890, %v2263, %v2265
        %2267 = vrot.lane.b32.xlu0 %v2264, 122
        %v2268 = vpop.permute.xlu0 %2267
        %2269 = vrot.lane.b32.xlu0 %v2266, 122
        %v2270 = vpop.permute.xlu0 %2269
        %v2273 = vadd.f32 %v2252, %v2268
        %v2274 = vadd.f32 %v2253, %v2270
        %s2275 = sld [smem:[#allocation11 + $0x46]]
        %v2276 = vstv %s2275
        %v2277 = vmul.f32 %v1897, %v2276
        %v2278 = vmul.f32 %v1893, %v2276
        %v2279 = vmul.f32 %v1898, %v2276
        %v2283 = vrot.slane %v2277, 3
        %v2284 = vrot.slane %v2278, 3
        %v2285 = vsel %vm1304, %v2283, %v2284
        %v2286 = vrot.slane %v2279, 3
        %v2287 = vsel %vm1304, %v2284, %v2286
        %v2290 = vadd.f32 %v2273, %v2285
        %v2291 = vadd.f32 %v2274, %v2287
        %s2292 = sld [smem:[#allocation11 + $0x47]]
        %v2293 = vstv %s2292
        %v2294 = vmul.f32 %v1897, %v2293
        %v2295 = vmul.f32 %v1893, %v2293
        %v2296 = vmul.f32 %v1898, %v2293
        %v2300 = vrot.slane %v2294, 3
        %v2301 = vrot.slane %v2295, 3
        %v2302 = vsel %vm1304, %v2300, %v2301
        %v2303 = vrot.slane %v2296, 3
        %v2304 = vsel %vm1304, %v2301, %v2303
        %2305 = vrot.lane.b32.xlu0 %v2302, 127
        %v2306 = vpop.permute.xlu0 %2305
        %2307 = vrot.lane.b32.xlu0 %v2304, 127
        %v2308 = vpop.permute.xlu0 %2307
        %v2311 = vadd.f32 %v2290, %v2306
        %v2312 = vadd.f32 %v2291, %v2308
        %s2313 = sld [smem:[#allocation11 + $0x48]]
        %v2314 = vstv %s2313
        %v2315 = vmul.f32 %v1897, %v2314
        %v2316 = vmul.f32 %v1893, %v2314
        %v2317 = vmul.f32 %v1898, %v2314
        %v2321 = vrot.slane %v2315, 3
        %v2322 = vrot.slane %v2316, 3
        %v2323 = vsel %vm1304, %v2321, %v2322
        %v2324 = vrot.slane %v2317, 3
        %v2325 = vsel %vm1304, %v2322, %v2324
        %2326 = vrot.lane.b32.xlu0 %v2323, 126
        %v2327 = vpop.permute.xlu0 %2326
        %2328 = vrot.lane.b32.xlu0 %v2325, 126
        %v2329 = vpop.permute.xlu0 %2328
        %v2332 = vadd.f32 %v2311, %v2327
        %v2333 = vadd.f32 %v2312, %v2329
        %s2334 = sld [smem:[#allocation11 + $0x49]]
        %v2335 = vstv %s2334
        %v2336 = vmul.f32 %v1897, %v2335
        %v2337 = vmul.f32 %v1893, %v2335
        %v2338 = vmul.f32 %v1898, %v2335
        %v2342 = vrot.slane %v2336, 3
        %v2343 = vrot.slane %v2337, 3
        %v2344 = vsel %vm1304, %v2342, %v2343
        %v2345 = vrot.slane %v2338, 3
        %v2346 = vsel %vm1304, %v2343, %v2345
        %2347 = vrot.lane.b32.xlu0 %v2344, 125
        %v2348 = vpop.permute.xlu0 %2347
        %2349 = vrot.lane.b32.xlu0 %v2346, 125
        %v2350 = vpop.permute.xlu0 %2349
        %v2353 = vadd.f32 %v2332, %v2348
        %v2354 = vadd.f32 %v2333, %v2350
        %s2355 = sld [smem:[#allocation11 + $0x4a]]
        %v2356 = vstv %s2355
        %v2357 = vmul.f32 %v1897, %v2356
        %v2358 = vmul.f32 %v1893, %v2356
        %v2359 = vmul.f32 %v1898, %v2356
        %v2363 = vrot.slane %v2357, 3
        %v2364 = vrot.slane %v2358, 3
        %v2365 = vsel %vm1304, %v2363, %v2364
        %v2366 = vrot.slane %v2359, 3
        %v2367 = vsel %vm1304, %v2364, %v2366
        %2368 = vrot.lane.b32.xlu0 %v2365, 124
        %v2369 = vpop.permute.xlu0 %2368
        %2370 = vrot.lane.b32.xlu0 %v2367, 124
        %v2371 = vpop.permute.xlu0 %2370
        %v2374 = vadd.f32 %v2353, %v2369
        %v2375 = vadd.f32 %v2354, %v2371
        %s2376 = sld [smem:[#allocation11 + $0x4b]]
        %v2377 = vstv %s2376
        %v2378 = vmul.f32 %v1897, %v2377
        %v2379 = vmul.f32 %v1893, %v2377
        %v2380 = vmul.f32 %v1898, %v2377
        %v2384 = vrot.slane %v2378, 3
        %v2385 = vrot.slane %v2379, 3
        %v2386 = vsel %vm1304, %v2384, %v2385
        %v2387 = vrot.slane %v2380, 3
        %v2388 = vsel %vm1304, %v2385, %v2387
        %2389 = vrot.lane.b32.xlu0 %v2386, 123
        %v2390 = vpop.permute.xlu0 %2389
        %2391 = vrot.lane.b32.xlu0 %v2388, 123
        %v2392 = vpop.permute.xlu0 %2391
        %v2395 = vadd.f32 %v2374, %v2390
        %v2396 = vadd.f32 %v2375, %v2392
        %s2397 = sld [smem:[#allocation11 + $0x4c]]
        %v2398 = vstv %s2397
        %v2399 = vmul.f32 %v1897, %v2398
        %v2400 = vmul.f32 %v1893, %v2398
        %v2401 = vmul.f32 %v1898, %v2398
        %v2405 = vrot.slane %v2399, 3
        %v2406 = vrot.slane %v2400, 3
        %v2407 = vsel %vm1304, %v2405, %v2406
        %v2408 = vrot.slane %v2401, 3
        %v2409 = vsel %vm1304, %v2406, %v2408
        %2410 = vrot.lane.b32.xlu0 %v2407, 122
        %v2411 = vpop.permute.xlu0 %2410
        %2412 = vrot.lane.b32.xlu0 %v2409, 122
        %v2413 = vpop.permute.xlu0 %2412
        %v2416 = vadd.f32 %v2395, %v2411
        %v2417 = vadd.f32 %v2396, %v2413
        %s2418 = sld [smem:[#allocation11 + $0x4d]]
        %v2419 = vstv %s2418
        %v2420 = vmul.f32 %v1897, %v2419
        %v2421 = vmul.f32 %v1893, %v2419
        %v2422 = vmul.f32 %v1898, %v2419
        %v2426 = vrot.slane %v2420, 4
        %v2427 = vrot.slane %v2421, 4
        %v2428 = vsel %vm1448, %v2426, %v2427
        %v2429 = vrot.slane %v2422, 4
        %v2430 = vsel %vm1448, %v2427, %v2429
        %v2433 = vadd.f32 %v2416, %v2428
        %v2434 = vadd.f32 %v2417, %v2430
        %s2435 = sld [smem:[#allocation11 + $0x4e]]
        %v2436 = vstv %s2435
        %v2437 = vmul.f32 %v1897, %v2436
        %v2438 = vmul.f32 %v1893, %v2436
        %v2439 = vmul.f32 %v1898, %v2436
        %v2443 = vrot.slane %v2437, 4
        %v2444 = vrot.slane %v2438, 4
        %v2445 = vsel %vm1448, %v2443, %v2444
        %v2446 = vrot.slane %v2439, 4
        %v2447 = vsel %vm1448, %v2444, %v2446
        %2448 = vrot.lane.b32.xlu0 %v2445, 127
        %v2449 = vpop.permute.xlu0 %2448
        %2450 = vrot.lane.b32.xlu0 %v2447, 127
        %v2451 = vpop.permute.xlu0 %2450
        %v2454 = vadd.f32 %v2433, %v2449
        %v2455 = vadd.f32 %v2434, %v2451
        %s2456 = sld [smem:[#allocation11 + $0x4f]]
        %v2457 = vstv %s2456
        %v2458 = vmul.f32 %v1897, %v2457
        %v2459 = vmul.f32 %v1893, %v2457
        %v2460 = vmul.f32 %v1898, %v2457
        %v2464 = vrot.slane %v2458, 4
        %v2465 = vrot.slane %v2459, 4
        %v2466 = vsel %vm1448, %v2464, %v2465
        %v2467 = vrot.slane %v2460, 4
        %v2468 = vsel %vm1448, %v2465, %v2467
        %2469 = vrot.lane.b32.xlu0 %v2466, 126
        %v2470 = vpop.permute.xlu0 %2469
        %2471 = vrot.lane.b32.xlu0 %v2468, 126
        %v2472 = vpop.permute.xlu0 %2471
        %v2475 = vadd.f32 %v2454, %v2470
        %v2476 = vadd.f32 %v2455, %v2472
        %s2477 = sld [smem:[#allocation11 + $0x50]]
        %v2478 = vstv %s2477
        %v2479 = vmul.f32 %v1897, %v2478
        %v2480 = vmul.f32 %v1893, %v2478
        %v2481 = vmul.f32 %v1898, %v2478
        %v2485 = vrot.slane %v2479, 4
        %v2486 = vrot.slane %v2480, 4
        %v2487 = vsel %vm1448, %v2485, %v2486
        %v2488 = vrot.slane %v2481, 4
        %v2489 = vsel %vm1448, %v2486, %v2488
        %2490 = vrot.lane.b32.xlu0 %v2487, 125
        %v2491 = vpop.permute.xlu0 %2490
        %2492 = vrot.lane.b32.xlu0 %v2489, 125
        %v2493 = vpop.permute.xlu0 %2492
        %v2496 = vadd.f32 %v2475, %v2491
        %v2497 = vadd.f32 %v2476, %v2493
        %s2498 = sld [smem:[#allocation11 + $0x51]]
        %v2499 = vstv %s2498
        %v2500 = vmul.f32 %v1897, %v2499
        %v2501 = vmul.f32 %v1893, %v2499
        %v2502 = vmul.f32 %v1898, %v2499
        %v2506 = vrot.slane %v2500, 4
        %v2507 = vrot.slane %v2501, 4
        %v2508 = vsel %vm1448, %v2506, %v2507
        %v2509 = vrot.slane %v2502, 4
        %v2510 = vsel %vm1448, %v2507, %v2509
        %2511 = vrot.lane.b32.xlu0 %v2508, 124
        %v2512 = vpop.permute.xlu0 %2511
        %2513 = vrot.lane.b32.xlu0 %v2510, 124
        %v2514 = vpop.permute.xlu0 %2513
        %v2517 = vadd.f32 %v2496, %v2512
        %v2518 = vadd.f32 %v2497, %v2514
        %s2519 = sld [smem:[#allocation11 + $0x52]]
        %v2520 = vstv %s2519
        %v2521 = vmul.f32 %v1897, %v2520
        %v2522 = vmul.f32 %v1893, %v2520
        %v2523 = vmul.f32 %v1898, %v2520
        %v2527 = vrot.slane %v2521, 4
        %v2528 = vrot.slane %v2522, 4
        %v2529 = vsel %vm1448, %v2527, %v2528
        %v2530 = vrot.slane %v2523, 4
        %v2531 = vsel %vm1448, %v2528, %v2530
        %2532 = vrot.lane.b32.xlu0 %v2529, 123
        %v2533 = vpop.permute.xlu0 %2532
        %2534 = vrot.lane.b32.xlu0 %v2531, 123
        %v2535 = vpop.permute.xlu0 %2534
        %v2538 = vadd.f32 %v2517, %v2533
        %v2539 = vadd.f32 %v2518, %v2535
        %s2540 = sld [smem:[#allocation11 + $0x53]]
        %v2541 = vstv %s2540
        %v2542 = vmul.f32 %v1897, %v2541
        %v2543 = vmul.f32 %v1893, %v2541
        %v2544 = vmul.f32 %v1898, %v2541
        %v2548 = vrot.slane %v2542, 4
        %v2549 = vrot.slane %v2543, 4
        %v2550 = vsel %vm1448, %v2548, %v2549
        %v2551 = vrot.slane %v2544, 4
        %v2552 = vsel %vm1448, %v2549, %v2551
        %2553 = vrot.lane.b32.xlu0 %v2550, 122
        %v2554 = vpop.permute.xlu0 %2553
        %2555 = vrot.lane.b32.xlu0 %v2552, 122
        %v2556 = vpop.permute.xlu0 %2555
        %v2559 = vadd.f32 %v2538, %v2554
        %v2560 = vadd.f32 %v2539, %v2556
        %s2561 = sld [smem:[#allocation11 + $0x54]]
        %v2562 = vstv %s2561
        %v2563 = vmul.f32 %v1897, %v2562
        %v2564 = vmul.f32 %v1893, %v2562
        %v2565 = vmul.f32 %v1898, %v2562
        %v2569 = vrot.slane %v2563, 5
        %v2570 = vrot.slane %v2564, 5
        %v2571 = vsel %vm910, %v2569, %v2570
        %v2572 = vrot.slane %v2565, 5
        %v2573 = vsel %vm910, %v2570, %v2572
        %v2576 = vadd.f32 %v2559, %v2571
        %v2577 = vadd.f32 %v2560, %v2573
        %s2578 = sld [smem:[#allocation11 + $0x55]]
        %v2579 = vstv %s2578
        %v2580 = vmul.f32 %v1897, %v2579
        %v2581 = vmul.f32 %v1893, %v2579
        %v2582 = vmul.f32 %v1898, %v2579
        %v2586 = vrot.slane %v2580, 5
        %v2587 = vrot.slane %v2581, 5
        %v2588 = vsel %vm910, %v2586, %v2587
        %v2589 = vrot.slane %v2582, 5
        %v2590 = vsel %vm910, %v2587, %v2589
        %2591 = vrot.lane.b32.xlu0 %v2588, 127
        %v2592 = vpop.permute.xlu0 %2591
        %2593 = vrot.lane.b32.xlu0 %v2590, 127
        %v2594 = vpop.permute.xlu0 %2593
        %v2597 = vadd.f32 %v2576, %v2592
        %v2598 = vadd.f32 %v2577, %v2594
        %s2599 = sld [smem:[#allocation11 + $0x56]]
        %v2600 = vstv %s2599
        %v2601 = vmul.f32 %v1897, %v2600
        %v2602 = vmul.f32 %v1893, %v2600
        %v2603 = vmul.f32 %v1898, %v2600
        %v2607 = vrot.slane %v2601, 5
        %v2608 = vrot.slane %v2602, 5
        %v2609 = vsel %vm910, %v2607, %v2608
        %v2610 = vrot.slane %v2603, 5
        %v2611 = vsel %vm910, %v2608, %v2610
        %2612 = vrot.lane.b32.xlu0 %v2609, 126
        %v2613 = vpop.permute.xlu0 %2612
        %2614 = vrot.lane.b32.xlu0 %v2611, 126
        %v2615 = vpop.permute.xlu0 %2614
        %v2618 = vadd.f32 %v2597, %v2613
        %v2619 = vadd.f32 %v2598, %v2615
        %s2620 = sld [smem:[#allocation11 + $0x57]]
        %v2621 = vstv %s2620
        %v2622 = vmul.f32 %v1897, %v2621
        %v2623 = vmul.f32 %v1893, %v2621
        %v2624 = vmul.f32 %v1898, %v2621
        %v2628 = vrot.slane %v2622, 5
        %v2629 = vrot.slane %v2623, 5
        %v2630 = vsel %vm910, %v2628, %v2629
        %v2631 = vrot.slane %v2624, 5
        %v2632 = vsel %vm910, %v2629, %v2631
        %2633 = vrot.lane.b32.xlu0 %v2630, 125
        %v2634 = vpop.permute.xlu0 %2633
        %2635 = vrot.lane.b32.xlu0 %v2632, 125
        %v2636 = vpop.permute.xlu0 %2635
        %v2639 = vadd.f32 %v2618, %v2634
        %v2640 = vadd.f32 %v2619, %v2636
        %s2641 = sld [smem:[#allocation11 + $0x58]]
        %v2642 = vstv %s2641
        %v2643 = vmul.f32 %v1897, %v2642
        %v2644 = vmul.f32 %v1893, %v2642
        %v2645 = vmul.f32 %v1898, %v2642
        %v2649 = vrot.slane %v2643, 5
        %v2650 = vrot.slane %v2644, 5
        %v2651 = vsel %vm910, %v2649, %v2650
        %v2652 = vrot.slane %v2645, 5
        %v2653 = vsel %vm910, %v2650, %v2652
        %2654 = vrot.lane.b32.xlu0 %v2651, 124
        %v2655 = vpop.permute.xlu0 %2654
        %2656 = vrot.lane.b32.xlu0 %v2653, 124
        %v2657 = vpop.permute.xlu0 %2656
        %v2660 = vadd.f32 %v2639, %v2655
        %v2661 = vadd.f32 %v2640, %v2657
        %s2662 = sld [smem:[#allocation11 + $0x59]]
        %v2663 = vstv %s2662
        %v2664 = vmul.f32 %v1897, %v2663
        %v2665 = vmul.f32 %v1893, %v2663
        %v2666 = vmul.f32 %v1898, %v2663
        %v2670 = vrot.slane %v2664, 5
        %v2671 = vrot.slane %v2665, 5
        %v2672 = vsel %vm910, %v2670, %v2671
        %v2673 = vrot.slane %v2666, 5
        %v2674 = vsel %vm910, %v2671, %v2673
        %2675 = vrot.lane.b32.xlu0 %v2672, 123
        %v2676 = vpop.permute.xlu0 %2675
        %2677 = vrot.lane.b32.xlu0 %v2674, 123
        %v2678 = vpop.permute.xlu0 %2677
        %v2681 = vadd.f32 %v2660, %v2676
        %v2682 = vadd.f32 %v2661, %v2678
        %s2683 = sld [smem:[#allocation11 + $0x5a]]
        %v2684 = vstv %s2683
        %v2685 = vmul.f32 %v1897, %v2684
        %v2686 = vmul.f32 %v1893, %v2684
        %v2687 = vmul.f32 %v1898, %v2684
        %v2691 = vrot.slane %v2685, 5
        %v2692 = vrot.slane %v2686, 5
        %v2693 = vsel %vm910, %v2691, %v2692
        %v2694 = vrot.slane %v2687, 5
        %v2695 = vsel %vm910, %v2692, %v2694
        %2696 = vrot.lane.b32.xlu0 %v2693, 122
        %v2697 = vpop.permute.xlu0 %2696
        %2698 = vrot.lane.b32.xlu0 %v2695, 122
        %v2699 = vpop.permute.xlu0 %2698
        %v2702 = vadd.f32 %v2681, %v2697
        %v2703 = vadd.f32 %v2682, %v2699
        %s2704 = sld [smem:[#allocation11 + $0x5b]]
        %v2705 = vstv %s2704
        %v2706 = vmul.f32 %v1897, %v2705
        %v2707 = vmul.f32 %v1893, %v2705
        %v2708 = vmul.f32 %v1898, %v2705
        %v2712 = vrot.slane %v2706, 6
        %v2713 = vrot.slane %v2707, 6
        %v2714 = vsel %vm1735, %v2712, %v2713
        %v2715 = vrot.slane %v2708, 6
        %v2716 = vsel %vm1735, %v2713, %v2715
        %v2719 = vadd.f32 %v2702, %v2714
        %v2720 = vadd.f32 %v2703, %v2716
        %s2721 = sld [smem:[#allocation11 + $0x5c]]
        %v2722 = vstv %s2721
        %v2723 = vmul.f32 %v1897, %v2722
        %v2724 = vmul.f32 %v1893, %v2722
        %v2725 = vmul.f32 %v1898, %v2722
        %v2729 = vrot.slane %v2723, 6
        %v2730 = vrot.slane %v2724, 6
        %v2731 = vsel %vm1735, %v2729, %v2730
        %v2732 = vrot.slane %v2725, 6
        %v2733 = vsel %vm1735, %v2730, %v2732
        %2734 = vrot.lane.b32.xlu0 %v2731, 127
        %v2735 = vpop.permute.xlu0 %2734
        %2736 = vrot.lane.b32.xlu0 %v2733, 127
        %v2737 = vpop.permute.xlu0 %2736
        %v2740 = vadd.f32 %v2719, %v2735
        %v2741 = vadd.f32 %v2720, %v2737
        %s2742 = sld [smem:[#allocation11 + $0x5d]]
        %v2743 = vstv %s2742
        %v2744 = vmul.f32 %v1897, %v2743
        %v2745 = vmul.f32 %v1893, %v2743
        %v2746 = vmul.f32 %v1898, %v2743
        %v2750 = vrot.slane %v2744, 6
        %v2751 = vrot.slane %v2745, 6
        %v2752 = vsel %vm1735, %v2750, %v2751
        %v2753 = vrot.slane %v2746, 6
        %v2754 = vsel %vm1735, %v2751, %v2753
        %2755 = vrot.lane.b32.xlu0 %v2752, 126
        %v2756 = vpop.permute.xlu0 %2755
        %2757 = vrot.lane.b32.xlu0 %v2754, 126
        %v2758 = vpop.permute.xlu0 %2757
        %v2761 = vadd.f32 %v2740, %v2756
        %v2762 = vadd.f32 %v2741, %v2758
        %s2763 = sld [smem:[#allocation11 + $0x5e]]
        %v2764 = vstv %s2763
        %v2765 = vmul.f32 %v1897, %v2764
        %v2766 = vmul.f32 %v1893, %v2764
        %v2767 = vmul.f32 %v1898, %v2764
        %v2771 = vrot.slane %v2765, 6
        %v2772 = vrot.slane %v2766, 6
        %v2773 = vsel %vm1735, %v2771, %v2772
        %v2774 = vrot.slane %v2767, 6
        %v2775 = vsel %vm1735, %v2772, %v2774
        %2776 = vrot.lane.b32.xlu0 %v2773, 125
        %v2777 = vpop.permute.xlu0 %2776
        %2778 = vrot.lane.b32.xlu0 %v2775, 125
        %v2779 = vpop.permute.xlu0 %2778
        %v2782 = vadd.f32 %v2761, %v2777
        %v2783 = vadd.f32 %v2762, %v2779
        %s2784 = sld [smem:[#allocation11 + $0x5f]]
        %v2785 = vstv %s2784
        %v2786 = vmul.f32 %v1897, %v2785
        %v2787 = vmul.f32 %v1893, %v2785
        %v2788 = vmul.f32 %v1898, %v2785
        %v2792 = vrot.slane %v2786, 6
        %v2793 = vrot.slane %v2787, 6
        %v2794 = vsel %vm1735, %v2792, %v2793
        %v2795 = vrot.slane %v2788, 6
        %v2796 = vsel %vm1735, %v2793, %v2795
        %2797 = vrot.lane.b32.xlu0 %v2794, 124
        %v2798 = vpop.permute.xlu0 %2797
        %2799 = vrot.lane.b32.xlu0 %v2796, 124
        %v2800 = vpop.permute.xlu0 %2799
        %v2803 = vadd.f32 %v2782, %v2798
        %v2804 = vadd.f32 %v2783, %v2800
        %s2805 = sld [smem:[#allocation11 + $0x60]]
        %v2806 = vstv %s2805
        %v2807 = vmul.f32 %v1897, %v2806
        %v2808 = vmul.f32 %v1893, %v2806
        %v2809 = vmul.f32 %v1898, %v2806
        %v2813 = vrot.slane %v2807, 6
        %v2814 = vrot.slane %v2808, 6
        %v2815 = vsel %vm1735, %v2813, %v2814
        %v2816 = vrot.slane %v2809, 6
        %v2817 = vsel %vm1735, %v2814, %v2816
        %2818 = vrot.lane.b32.xlu0 %v2815, 123
        %v2819 = vpop.permute.xlu0 %2818
        %2820 = vrot.lane.b32.xlu0 %v2817, 123
        %v2821 = vpop.permute.xlu0 %2820
        %v2824 = vadd.f32 %v2803, %v2819
        %v2825 = vadd.f32 %v2804, %v2821
        %s2826 = sld [smem:[#allocation11 + $0x61]]
        %v2827 = vstv %s2826
        %v2828 = vmul.f32 %v1897, %v2827
        %v2829 = vmul.f32 %v1893, %v2827
        %v2830 = vmul.f32 %v1898, %v2827
        %v2834 = vrot.slane %v2828, 6
        %v2835 = vrot.slane %v2829, 6
        %v2836 = vsel %vm1735, %v2834, %v2835
        %v2837 = vrot.slane %v2830, 6
        %v2838 = vsel %vm1735, %v2835, %v2837
        %2839 = vrot.lane.b32.xlu0 %v2836, 122
        %v2840 = vpop.permute.xlu0 %2839
        %2841 = vrot.lane.b32.xlu0 %v2838, 122
        %v2842 = vpop.permute.xlu0 %2841
        %v2845 = vadd.f32 %v2824, %v2840
        %v2846 = vadd.f32 %v2825, %v2842
        %s2847 = sld [smem:[#allocation12]]
        %v2848 = vstv %s2847
        %v2849 = vmul.f32 %v684, %v2848
        %v2850 = vmul.f32 %v685, %v2848
        %v2851 = vmul.f32 %v686, %v2848
        %s2852 = sld [smem:[#allocation12 + $0x1]]
        %v2853 = vstv %s2852
        %v2854 = vmul.f32 %v687, %v2853
        %v2855 = vmul.f32 %v688, %v2853
        %v2856 = vmul.f32 %v689, %v2853
        %v2857 = vadd.f32 %v2849, %v2854
        %v2858 = vadd.f32 %v2850, %v2855
        %v2859 = vadd.f32 %v2851, %v2856
        %s2860 = sld [smem:[#allocation12 + $0x2]]
        %v2861 = vstv %s2860
        %v2862 = vmul.f32 %v690, %v2861
        %v2863 = vmul.f32 %v691, %v2861
        %v2864 = vmul.f32 %v692, %v2861
        %v2865 = vadd.f32 %v2857, %v2862
        %v2866 = vadd.f32 %v2858, %v2863
        %v2867 = vadd.f32 %v2859, %v2864
        %s2868 = sld [smem:[#allocation12 + $0x3]]
        %v2869 = vstv %s2868
        %v2870 = vmul.f32 %v693, %v2869
        %v2871 = vmul.f32 %v694, %v2869
        %v2872 = vmul.f32 %v695, %v2869
        %v2873 = vadd.f32 %v2865, %v2870
        %v2874 = vadd.f32 %v2866, %v2871
        %v2875 = vadd.f32 %v2867, %v2872
        %s2876 = sld [smem:[#allocation14]]
        %v2877 = vstv %s2876
        %v2878 = vadd.f32 %v2873, %v2877
        %v2879 = vadd.f32 %v2874, %v2877
        %v2880 = vadd.f32 %v2875, %v2877
        %s2881 = sld [smem:[#allocation12 + $0x4]]
        %v2882 = vstv %s2881
        %v2883 = vmul.f32 %v684, %v2882
        %v2884 = vmul.f32 %v685, %v2882
        %v2885 = vmul.f32 %v686, %v2882
        %s2886 = sld [smem:[#allocation12 + $0x5]]
        %v2887 = vstv %s2886
        %v2888 = vmul.f32 %v687, %v2887
        %v2889 = vmul.f32 %v688, %v2887
        %v2890 = vmul.f32 %v689, %v2887
        %v2891 = vadd.f32 %v2883, %v2888
        %v2892 = vadd.f32 %v2884, %v2889
        %v2893 = vadd.f32 %v2885, %v2890
        %s2894 = sld [smem:[#allocation12 + $0x6]]
        %v2895 = vstv %s2894
        %v2896 = vmul.f32 %v690, %v2895
        %v2897 = vmul.f32 %v691, %v2895
        %v2898 = vmul.f32 %v692, %v2895
        %v2899 = vadd.f32 %v2891, %v2896
        %v2900 = vadd.f32 %v2892, %v2897
        %v2901 = vadd.f32 %v2893, %v2898
        %s2902 = sld [smem:[#allocation12 + $0x7]]
        %v2903 = vstv %s2902
        %v2904 = vmul.f32 %v693, %v2903
        %v2905 = vmul.f32 %v694, %v2903
        %v2906 = vmul.f32 %v695, %v2903
        %v2907 = vadd.f32 %v2899, %v2904
        %v2908 = vadd.f32 %v2900, %v2905
        %v2909 = vadd.f32 %v2901, %v2906
        %s2910 = sld [smem:[#allocation14 + $0x1]]
        %v2911 = vstv %s2910
        %v2912 = vadd.f32 %v2907, %v2911
        %v2913 = vadd.f32 %v2908, %v2911
        %v2914 = vadd.f32 %v2909, %v2911
        %v2915 = vadd.f32 %v2878, %v2912
        %v2916 = vadd.f32 %v2879, %v2913
        %v2917 = vadd.f32 %v2880, %v2914
        %v2918 = vmax.f32 %v2878, %v2912
        %v2919 = vmax.f32 %v2879, %v2913
        %v2920 = vmax.f32 %v2880, %v2914
        %s2921 = sld [smem:[#allocation12 + $0x8]]
        %v2922 = vstv %s2921
        %v2923 = vmul.f32 %v684, %v2922
        %v2924 = vmul.f32 %v685, %v2922
        %v2925 = vmul.f32 %v686, %v2922
        %s2926 = sld [smem:[#allocation12 + $0x9]]
        %v2927 = vstv %s2926
        %v2928 = vmul.f32 %v687, %v2927
        %v2929 = vmul.f32 %v688, %v2927
        %v2930 = vmul.f32 %v689, %v2927
        %v2931 = vadd.f32 %v2923, %v2928
        %v2932 = vadd.f32 %v2924, %v2929
        %v2933 = vadd.f32 %v2925, %v2930
        %s2934 = sld [smem:[#allocation12 + $0xa]]
        %v2935 = vstv %s2934
        %v2936 = vmul.f32 %v690, %v2935
        %v2937 = vmul.f32 %v691, %v2935
        %v2938 = vmul.f32 %v692, %v2935
        %v2939 = vadd.f32 %v2931, %v2936
        %v2940 = vadd.f32 %v2932, %v2937
        %v2941 = vadd.f32 %v2933, %v2938
        %s2942 = sld [smem:[#allocation12 + $0xb]]
        %v2943 = vstv %s2942
        %v2944 = vmul.f32 %v693, %v2943
        %v2945 = vmul.f32 %v694, %v2943
        %v2946 = vmul.f32 %v695, %v2943
        %v2947 = vadd.f32 %v2939, %v2944
        %v2948 = vadd.f32 %v2940, %v2945
        %v2949 = vadd.f32 %v2941, %v2946
        %s2950 = sld [smem:[#allocation14 + $0x2]]
        %v2951 = vstv %s2950
        %v2952 = vadd.f32 %v2947, %v2951
        %v2953 = vadd.f32 %v2948, %v2951
        %v2954 = vadd.f32 %v2949, %v2951
        %v2955 = vadd.f32 %v2915, %v2952
        %v2956 = vadd.f32 %v2916, %v2953
        %v2957 = vadd.f32 %v2917, %v2954
        %v2958 = vmax.f32 %v2918, %v2952
        %v2959 = vmax.f32 %v2919, %v2953
        %v2960 = vmax.f32 %v2920, %v2954
        %s2961 = sld [smem:[#allocation12 + $0xc]]
        %v2962 = vstv %s2961
        %v2963 = vmul.f32 %v684, %v2962
        %v2964 = vmul.f32 %v685, %v2962
        %v2965 = vmul.f32 %v686, %v2962
        %s2966 = sld [smem:[#allocation12 + $0xd]]
        %v2967 = vstv %s2966
        %v2968 = vmul.f32 %v687, %v2967
        %v2969 = vmul.f32 %v688, %v2967
        %v2970 = vmul.f32 %v689, %v2967
        %v2971 = vadd.f32 %v2963, %v2968
        %v2972 = vadd.f32 %v2964, %v2969
        %v2973 = vadd.f32 %v2965, %v2970
        %s2974 = sld [smem:[#allocation12 + $0xe]]
        %v2975 = vstv %s2974
        %v2976 = vmul.f32 %v690, %v2975
        %v2977 = vmul.f32 %v691, %v2975
        %v2978 = vmul.f32 %v692, %v2975
        %v2979 = vadd.f32 %v2971, %v2976
        %v2980 = vadd.f32 %v2972, %v2977
        %v2981 = vadd.f32 %v2973, %v2978
        %s2982 = sld [smem:[#allocation12 + $0xf]]
        %v2983 = vstv %s2982
        %v2984 = vmul.f32 %v693, %v2983
        %v2985 = vmul.f32 %v694, %v2983
        %v2986 = vmul.f32 %v695, %v2983
        %v2987 = vadd.f32 %v2979, %v2984
        %v2988 = vadd.f32 %v2980, %v2985
        %v2989 = vadd.f32 %v2981, %v2986
        %s2990 = sld [smem:[#allocation14 + $0x3]]
        %v2991 = vstv %s2990
        %v2992 = vadd.f32 %v2987, %v2991
        %v2993 = vadd.f32 %v2988, %v2991
        %v2994 = vadd.f32 %v2989, %v2991
        %v2995 = vadd.f32 %v2955, %v2992
        %v2996 = vadd.f32 %v2956, %v2993
        %v2997 = vadd.f32 %v2957, %v2994
        %v2998 = vmax.f32 %v2958, %v2992
        %v2999 = vmax.f32 %v2959, %v2993
        %v3000 = vmax.f32 %v2960, %v2994
        %v3001 = vmul.f32 %v2995, 0.25
        %v3002 = vmul.f32 %v2996, 0.25
        %v3003 = vmul.f32 %v2997, 0.25
        %v3007 = vrot.slane %v3001, 2
        %v3008 = vrot.slane %v3002, 2
        %v3009 = vsel %vm890, %v3007, %v3008
        %v3010 = vrot.slane %v3003, 2
        %v3011 = vsel %vm890, %v3008, %v3010
        %3012 = vrot.lane.b32.xlu0 %v3009, 1
        %v3013 = vpop.permute.xlu0 %3012
        %3014 = vrot.lane.b32.xlu0 %v3011, 1
        %v3015 = vpop.permute.xlu0 %3014
        %v3018 = vsel %vm902, 0.0, %v3013
        %v3019 = vsel %vm902, 0.0, %v3015
        %v3020 = vsel %vm905, %v3018, 0.0
        %v3021 = vsel %vm905, %v3019, 0.0
        %v3024 = vrot.slane %v3020, 5
        %v3025 = vrot.slane %v3021, 5
        %v3026 = vsel %vm910, %v3024, %v3025
        %v3030 = vsel %vm910, 0.0, %v3024
        %v3031 = vsel %vm910, %v3025, 0.0
        %s3032 = sld [smem:[#allocation15]]
        %v3033 = vstv %s3032
        %v3034 = vmul.f32 %v3030, %v3033
        %v3035 = vmul.f32 %v3026, %v3033
        %v3036 = vadd.f32 %v3034, 0.0
        %v3037 = vadd.f32 %v3035, 0.0
        %s3038 = sld [smem:[#allocation15 + $0x1]]
        %v3039 = vstv %s3038
        %v3040 = vmul.f32 %v3030, %v3039
        %v3041 = vmul.f32 %v3026, %v3039
        %3044 = vrot.lane.b32.xlu0 %v3040, 127
        %v3045 = vpop.permute.xlu0 %3044
        %3046 = vrot.lane.b32.xlu0 %v3041, 127
        %v3047 = vpop.permute.xlu0 %3046
        %v3050 = vadd.f32 %v3036, %v3045
        %v3051 = vadd.f32 %v3037, %v3047
        %s3052 = sld [smem:[#allocation15 + $0x2]]
        %v3053 = vstv %s3052
        %v3054 = vmul.f32 %v3030, %v3053
        %v3055 = vmul.f32 %v3026, %v3053
        %3058 = vrot.lane.b32.xlu0 %v3054, 126
        %v3059 = vpop.permute.xlu0 %3058
        %3060 = vrot.lane.b32.xlu0 %v3055, 126
        %v3061 = vpop.permute.xlu0 %3060
        %v3064 = vadd.f32 %v3050, %v3059
        %v3065 = vadd.f32 %v3051, %v3061
        %s3066 = sld [smem:[#allocation15 + $0x3]]
        %v3067 = vstv %s3066
        %v3068 = vmul.f32 %v3030, %v3067
        %v3069 = vmul.f32 %v3026, %v3067
        %3072 = vrot.lane.b32.xlu0 %v3068, 125
        %v3073 = vpop.permute.xlu0 %3072
        %3074 = vrot.lane.b32.xlu0 %v3069, 125
        %v3075 = vpop.permute.xlu0 %3074
        %v3078 = vadd.f32 %v3064, %v3073
        %v3079 = vadd.f32 %v3065, %v3075
        %s3080 = sld [smem:[#allocation15 + $0x4]]
        %v3081 = vstv %s3080
        %v3082 = vmul.f32 %v3030, %v3081
        %v3083 = vmul.f32 %v3026, %v3081
        %3086 = vrot.lane.b32.xlu0 %v3082, 124
        %v3087 = vpop.permute.xlu0 %3086
        %3088 = vrot.lane.b32.xlu0 %v3083, 124
        %v3089 = vpop.permute.xlu0 %3088
        %v3092 = vadd.f32 %v3078, %v3087
        %v3093 = vadd.f32 %v3079, %v3089
        %s3094 = sld [smem:[#allocation15 + $0x5]]
        %v3095 = vstv %s3094
        %v3096 = vmul.f32 %v3030, %v3095
        %v3097 = vmul.f32 %v3026, %v3095
        %3100 = vrot.lane.b32.xlu0 %v3096, 123
        %v3101 = vpop.permute.xlu0 %3100
        %3102 = vrot.lane.b32.xlu0 %v3097, 123
        %v3103 = vpop.permute.xlu0 %3102
        %v3106 = vadd.f32 %v3092, %v3101
        %v3107 = vadd.f32 %v3093, %v3103
        %s3108 = sld [smem:[#allocation15 + $0x6]]
        %v3109 = vstv %s3108
        %v3110 = vmul.f32 %v3030, %v3109
        %v3111 = vmul.f32 %v3026, %v3109
        %3114 = vrot.lane.b32.xlu0 %v3110, 122
        %v3115 = vpop.permute.xlu0 %3114
        %3116 = vrot.lane.b32.xlu0 %v3111, 122
        %v3117 = vpop.permute.xlu0 %3116
        %v3120 = vadd.f32 %v3106, %v3115
        %v3121 = vadd.f32 %v3107, %v3117
        %s3122 = sld [smem:[#allocation15 + $0x7]]
        %v3123 = vstv %s3122
        %v3124 = vmul.f32 %v3030, %v3123
        %v3125 = vmul.f32 %v3026, %v3123
        %v3126 = vmul.f32 %v3031, %v3123
        %v3130 = vrot.slane %v3124, 1
        %v3131 = vrot.slane %v3125, 1
        %v3132 = vsel %vm1017, %v3130, %v3131
        %v3133 = vrot.slane %v3126, 1
        %v3134 = vsel %vm1017, %v3131, %v3133
        %v3137 = vadd.f32 %v3120, %v3132
        %v3138 = vadd.f32 %v3121, %v3134
        %s3139 = sld [smem:[#allocation15 + $0x8]]
        %v3140 = vstv %s3139
        %v3141 = vmul.f32 %v3030, %v3140
        %v3142 = vmul.f32 %v3026, %v3140
        %v3143 = vmul.f32 %v3031, %v3140
        %v3147 = vrot.slane %v3141, 1
        %v3148 = vrot.slane %v3142, 1
        %v3149 = vsel %vm1017, %v3147, %v3148
        %v3150 = vrot.slane %v3143, 1
        %v3151 = vsel %vm1017, %v3148, %v3150
        %3152 = vrot.lane.b32.xlu0 %v3149, 127
        %v3153 = vpop.permute.xlu0 %3152
        %3154 = vrot.lane.b32.xlu0 %v3151, 127
        %v3155 = vpop.permute.xlu0 %3154
        %v3158 = vadd.f32 %v3137, %v3153
        %v3159 = vadd.f32 %v3138, %v3155
        %s3160 = sld [smem:[#allocation15 + $0x9]]
        %v3161 = vstv %s3160
        %v3162 = vmul.f32 %v3030, %v3161
        %v3163 = vmul.f32 %v3026, %v3161
        %v3164 = vmul.f32 %v3031, %v3161
        %v3168 = vrot.slane %v3162, 1
        %v3169 = vrot.slane %v3163, 1
        %v3170 = vsel %vm1017, %v3168, %v3169
        %v3171 = vrot.slane %v3164, 1
        %v3172 = vsel %vm1017, %v3169, %v3171
        %3173 = vrot.lane.b32.xlu0 %v3170, 126
        %v3174 = vpop.permute.xlu0 %3173
        %3175 = vrot.lane.b32.xlu0 %v3172, 126
        %v3176 = vpop.permute.xlu0 %3175
        %v3179 = vadd.f32 %v3158, %v3174
        %v3180 = vadd.f32 %v3159, %v3176
        %s3181 = sld [smem:[#allocation15 + $0xa]]
        %v3182 = vstv %s3181
        %v3183 = vmul.f32 %v3030, %v3182
        %v3184 = vmul.f32 %v3026, %v3182
        %v3185 = vmul.f32 %v3031, %v3182
        %v3189 = vrot.slane %v3183, 1
        %v3190 = vrot.slane %v3184, 1
        %v3191 = vsel %vm1017, %v3189, %v3190
        %v3192 = vrot.slane %v3185, 1
        %v3193 = vsel %vm1017, %v3190, %v3192
        %3194 = vrot.lane.b32.xlu0 %v3191, 125
        %v3195 = vpop.permute.xlu0 %3194
        %3196 = vrot.lane.b32.xlu0 %v3193, 125
        %v3197 = vpop.permute.xlu0 %3196
        %v3200 = vadd.f32 %v3179, %v3195
        %v3201 = vadd.f32 %v3180, %v3197
        %s3202 = sld [smem:[#allocation15 + $0xb]]
        %v3203 = vstv %s3202
        %v3204 = vmul.f32 %v3030, %v3203
        %v3205 = vmul.f32 %v3026, %v3203
        %v3206 = vmul.f32 %v3031, %v3203
        %v3210 = vrot.slane %v3204, 1
        %v3211 = vrot.slane %v3205, 1
        %v3212 = vsel %vm1017, %v3210, %v3211
        %v3213 = vrot.slane %v3206, 1
        %v3214 = vsel %vm1017, %v3211, %v3213
        %3215 = vrot.lane.b32.xlu0 %v3212, 124
        %v3216 = vpop.permute.xlu0 %3215
        %3217 = vrot.lane.b32.xlu0 %v3214, 124
        %v3218 = vpop.permute.xlu0 %3217
        %v3221 = vadd.f32 %v3200, %v3216
        %v3222 = vadd.f32 %v3201, %v3218
        %s3223 = sld [smem:[#allocation15 + $0xc]]
        %v3224 = vstv %s3223
        %v3225 = vmul.f32 %v3030, %v3224
        %v3226 = vmul.f32 %v3026, %v3224
        %v3227 = vmul.f32 %v3031, %v3224
        %v3231 = vrot.slane %v3225, 1
        %v3232 = vrot.slane %v3226, 1
        %v3233 = vsel %vm1017, %v3231, %v3232
        %v3234 = vrot.slane %v3227, 1
        %v3235 = vsel %vm1017, %v3232, %v3234
        %3236 = vrot.lane.b32.xlu0 %v3233, 123
        %v3237 = vpop.permute.xlu0 %3236
        %3238 = vrot.lane.b32.xlu0 %v3235, 123
        %v3239 = vpop.permute.xlu0 %3238
        %v3242 = vadd.f32 %v3221, %v3237
        %v3243 = vadd.f32 %v3222, %v3239
        %s3244 = sld [smem:[#allocation15 + $0xd]]
        %v3245 = vstv %s3244
        %v3246 = vmul.f32 %v3030, %v3245
        %v3247 = vmul.f32 %v3026, %v3245
        %v3248 = vmul.f32 %v3031, %v3245
        %v3252 = vrot.slane %v3246, 1
        %v3253 = vrot.slane %v3247, 1
        %v3254 = vsel %vm1017, %v3252, %v3253
        %v3255 = vrot.slane %v3248, 1
        %v3256 = vsel %vm1017, %v3253, %v3255
        %3257 = vrot.lane.b32.xlu0 %v3254, 122
        %v3258 = vpop.permute.xlu0 %3257
        %3259 = vrot.lane.b32.xlu0 %v3256, 122
        %v3260 = vpop.permute.xlu0 %3259
        %v3263 = vadd.f32 %v3242, %v3258
        %v3264 = vadd.f32 %v3243, %v3260
        %s3265 = sld [smem:[#allocation15 + $0xe]]
        %v3266 = vstv %s3265
        %v3267 = vmul.f32 %v3030, %v3266
        %v3268 = vmul.f32 %v3026, %v3266
        %v3269 = vmul.f32 %v3031, %v3266
        %v3273 = vrot.slane %v3267, 2
        %v3274 = vrot.slane %v3268, 2
        %v3275 = vsel %vm890, %v3273, %v3274
        %v3276 = vrot.slane %v3269, 2
        %v3277 = vsel %vm890, %v3274, %v3276
        %v3280 = vadd.f32 %v3263, %v3275
        %v3281 = vadd.f32 %v3264, %v3277
        %s3282 = sld [smem:[#allocation15 + $0xf]]
        %v3283 = vstv %s3282
        %v3284 = vmul.f32 %v3030, %v3283
        %v3285 = vmul.f32 %v3026, %v3283
        %v3286 = vmul.f32 %v3031, %v3283
        %v3290 = vrot.slane %v3284, 2
        %v3291 = vrot.slane %v3285, 2
        %v3292 = vsel %vm890, %v3290, %v3291
        %v3293 = vrot.slane %v3286, 2
        %v3294 = vsel %vm890, %v3291, %v3293
        %3295 = vrot.lane.b32.xlu0 %v3292, 127
        %v3296 = vpop.permute.xlu0 %3295
        %3297 = vrot.lane.b32.xlu0 %v3294, 127
        %v3298 = vpop.permute.xlu0 %3297
        %v3301 = vadd.f32 %v3280, %v3296
        %v3302 = vadd.f32 %v3281, %v3298
        %s3303 = sld [smem:[#allocation15 + $0x10]]
        %v3304 = vstv %s3303
        %v3305 = vmul.f32 %v3030, %v3304
        %v3306 = vmul.f32 %v3026, %v3304
        %v3307 = vmul.f32 %v3031, %v3304
        %v3311 = vrot.slane %v3305, 2
        %v3312 = vrot.slane %v3306, 2
        %v3313 = vsel %vm890, %v3311, %v3312
        %v3314 = vrot.slane %v3307, 2
        %v3315 = vsel %vm890, %v3312, %v3314
        %3316 = vrot.lane.b32.xlu0 %v3313, 126
        %v3317 = vpop.permute.xlu0 %3316
        %3318 = vrot.lane.b32.xlu0 %v3315, 126
        %v3319 = vpop.permute.xlu0 %3318
        %v3322 = vadd.f32 %v3301, %v3317
        %v3323 = vadd.f32 %v3302, %v3319
        %s3324 = sld [smem:[#allocation15 + $0x11]]
        %v3325 = vstv %s3324
        %v3326 = vmul.f32 %v3030, %v3325
        %v3327 = vmul.f32 %v3026, %v3325
        %v3328 = vmul.f32 %v3031, %v3325
        %v3332 = vrot.slane %v3326, 2
        %v3333 = vrot.slane %v3327, 2
        %v3334 = vsel %vm890, %v3332, %v3333
        %v3335 = vrot.slane %v3328, 2
        %v3336 = vsel %vm890, %v3333, %v3335
        %3337 = vrot.lane.b32.xlu0 %v3334, 125
        %v3338 = vpop.permute.xlu0 %3337
        %3339 = vrot.lane.b32.xlu0 %v3336, 125
        %v3340 = vpop.permute.xlu0 %3339
        %v3343 = vadd.f32 %v3322, %v3338
        %v3344 = vadd.f32 %v3323, %v3340
        %s3345 = sld [smem:[#allocation15 + $0x12]]
        %v3346 = vstv %s3345
        %v3347 = vmul.f32 %v3030, %v3346
        %v3348 = vmul.f32 %v3026, %v3346
        %v3349 = vmul.f32 %v3031, %v3346
        %v3353 = vrot.slane %v3347, 2
        %v3354 = vrot.slane %v3348, 2
        %v3355 = vsel %vm890, %v3353, %v3354
        %v3356 = vrot.slane %v3349, 2
        %v3357 = vsel %vm890, %v3354, %v3356
        %3358 = vrot.lane.b32.xlu0 %v3355, 124
        %v3359 = vpop.permute.xlu0 %3358
        %3360 = vrot.lane.b32.xlu0 %v3357, 124
        %v3361 = vpop.permute.xlu0 %3360
        %v3364 = vadd.f32 %v3343, %v3359
        %v3365 = vadd.f32 %v3344, %v3361
        %s3366 = sld [smem:[#allocation15 + $0x13]]
        %v3367 = vstv %s3366
        %v3368 = vmul.f32 %v3030, %v3367
        %v3369 = vmul.f32 %v3026, %v3367
        %v3370 = vmul.f32 %v3031, %v3367
        %v3374 = vrot.slane %v3368, 2
        %v3375 = vrot.slane %v3369, 2
        %v3376 = vsel %vm890, %v3374, %v3375
        %v3377 = vrot.slane %v3370, 2
        %v3378 = vsel %vm890, %v3375, %v3377
        %3379 = vrot.lane.b32.xlu0 %v3376, 123
        %v3380 = vpop.permute.xlu0 %3379
        %3381 = vrot.lane.b32.xlu0 %v3378, 123
        %v3382 = vpop.permute.xlu0 %3381
        %v3385 = vadd.f32 %v3364, %v3380
        %v3386 = vadd.f32 %v3365, %v3382
        %s3387 = sld [smem:[#allocation15 + $0x14]]
        %v3388 = vstv %s3387
        %v3389 = vmul.f32 %v3030, %v3388
        %v3390 = vmul.f32 %v3026, %v3388
        %v3391 = vmul.f32 %v3031, %v3388
        %v3395 = vrot.slane %v3389, 2
        %v3396 = vrot.slane %v3390, 2
        %v3397 = vsel %vm890, %v3395, %v3396
        %v3398 = vrot.slane %v3391, 2
        %v3399 = vsel %vm890, %v3396, %v3398
        %3400 = vrot.lane.b32.xlu0 %v3397, 122
        %v3401 = vpop.permute.xlu0 %3400
        %3402 = vrot.lane.b32.xlu0 %v3399, 122
        %v3403 = vpop.permute.xlu0 %3402
        %v3406 = vadd.f32 %v3385, %v3401
        %v3407 = vadd.f32 %v3386, %v3403
        %s3408 = sld [smem:[#allocation15 + $0x15]]
        %v3409 = vstv %s3408
        %v3410 = vmul.f32 %v3030, %v3409
        %v3411 = vmul.f32 %v3026, %v3409
        %v3412 = vmul.f32 %v3031, %v3409
        %v3416 = vrot.slane %v3410, 3
        %v3417 = vrot.slane %v3411, 3
        %v3418 = vsel %vm1304, %v3416, %v3417
        %v3419 = vrot.slane %v3412, 3
        %v3420 = vsel %vm1304, %v3417, %v3419
        %v3423 = vadd.f32 %v3406, %v3418
        %v3424 = vadd.f32 %v3407, %v3420
        %s3425 = sld [smem:[#allocation15 + $0x16]]
        %v3426 = vstv %s3425
        %v3427 = vmul.f32 %v3030, %v3426
        %v3428 = vmul.f32 %v3026, %v3426
        %v3429 = vmul.f32 %v3031, %v3426
        %v3433 = vrot.slane %v3427, 3
        %v3434 = vrot.slane %v3428, 3
        %v3435 = vsel %vm1304, %v3433, %v3434
        %v3436 = vrot.slane %v3429, 3
        %v3437 = vsel %vm1304, %v3434, %v3436
        %3438 = vrot.lane.b32.xlu0 %v3435, 127
        %v3439 = vpop.permute.xlu0 %3438
        %3440 = vrot.lane.b32.xlu0 %v3437, 127
        %v3441 = vpop.permute.xlu0 %3440
        %v3444 = vadd.f32 %v3423, %v3439
        %v3445 = vadd.f32 %v3424, %v3441
        %s3446 = sld [smem:[#allocation15 + $0x17]]
        %v3447 = vstv %s3446
        %v3448 = vmul.f32 %v3030, %v3447
        %v3449 = vmul.f32 %v3026, %v3447
        %v3450 = vmul.f32 %v3031, %v3447
        %v3454 = vrot.slane %v3448, 3
        %v3455 = vrot.slane %v3449, 3
        %v3456 = vsel %vm1304, %v3454, %v3455
        %v3457 = vrot.slane %v3450, 3
        %v3458 = vsel %vm1304, %v3455, %v3457
        %3459 = vrot.lane.b32.xlu0 %v3456, 126
        %v3460 = vpop.permute.xlu0 %3459
        %3461 = vrot.lane.b32.xlu0 %v3458, 126
        %v3462 = vpop.permute.xlu0 %3461
        %v3465 = vadd.f32 %v3444, %v3460
        %v3466 = vadd.f32 %v3445, %v3462
        %s3467 = sld [smem:[#allocation15 + $0x18]]
        %v3468 = vstv %s3467
        %v3469 = vmul.f32 %v3030, %v3468
        %v3470 = vmul.f32 %v3026, %v3468
        %v3471 = vmul.f32 %v3031, %v3468
        %v3475 = vrot.slane %v3469, 3
        %v3476 = vrot.slane %v3470, 3
        %v3477 = vsel %vm1304, %v3475, %v3476
        %v3478 = vrot.slane %v3471, 3
        %v3479 = vsel %vm1304, %v3476, %v3478
        %3480 = vrot.lane.b32.xlu0 %v3477, 125
        %v3481 = vpop.permute.xlu0 %3480
        %3482 = vrot.lane.b32.xlu0 %v3479, 125
        %v3483 = vpop.permute.xlu0 %3482
        %v3486 = vadd.f32 %v3465, %v3481
        %v3487 = vadd.f32 %v3466, %v3483
        %s3488 = sld [smem:[#allocation15 + $0x19]]
        %v3489 = vstv %s3488
        %v3490 = vmul.f32 %v3030, %v3489
        %v3491 = vmul.f32 %v3026, %v3489
        %v3492 = vmul.f32 %v3031, %v3489
        %v3496 = vrot.slane %v3490, 3
        %v3497 = vrot.slane %v3491, 3
        %v3498 = vsel %vm1304, %v3496, %v3497
        %v3499 = vrot.slane %v3492, 3
        %v3500 = vsel %vm1304, %v3497, %v3499
        %3501 = vrot.lane.b32.xlu0 %v3498, 124
        %v3502 = vpop.permute.xlu0 %3501
        %3503 = vrot.lane.b32.xlu0 %v3500, 124
        %v3504 = vpop.permute.xlu0 %3503
        %v3507 = vadd.f32 %v3486, %v3502
        %v3508 = vadd.f32 %v3487, %v3504
        %s3509 = sld [smem:[#allocation15 + $0x1a]]
        %v3510 = vstv %s3509
        %v3511 = vmul.f32 %v3030, %v3510
        %v3512 = vmul.f32 %v3026, %v3510
        %v3513 = vmul.f32 %v3031, %v3510
        %v3517 = vrot.slane %v3511, 3
        %v3518 = vrot.slane %v3512, 3
        %v3519 = vsel %vm1304, %v3517, %v3518
        %v3520 = vrot.slane %v3513, 3
        %v3521 = vsel %vm1304, %v3518, %v3520
        %3522 = vrot.lane.b32.xlu0 %v3519, 123
        %v3523 = vpop.permute.xlu0 %3522
        %3524 = vrot.lane.b32.xlu0 %v3521, 123
        %v3525 = vpop.permute.xlu0 %3524
        %v3528 = vadd.f32 %v3507, %v3523
        %v3529 = vadd.f32 %v3508, %v3525
        %s3530 = sld [smem:[#allocation15 + $0x1b]]
        %v3531 = vstv %s3530
        %v3532 = vmul.f32 %v3030, %v3531
        %v3533 = vmul.f32 %v3026, %v3531
        %v3534 = vmul.f32 %v3031, %v3531
        %v3538 = vrot.slane %v3532, 3
        %v3539 = vrot.slane %v3533, 3
        %v3540 = vsel %vm1304, %v3538, %v3539
        %v3541 = vrot.slane %v3534, 3
        %v3542 = vsel %vm1304, %v3539, %v3541
        %3543 = vrot.lane.b32.xlu0 %v3540, 122
        %v3544 = vpop.permute.xlu0 %3543
        %3545 = vrot.lane.b32.xlu0 %v3542, 122
        %v3546 = vpop.permute.xlu0 %3545
        %v3549 = vadd.f32 %v3528, %v3544
        %v3550 = vadd.f32 %v3529, %v3546
        %s3551 = sld [smem:[#allocation15 + $0x1c]]
        %v3552 = vstv %s3551
        %v3553 = vmul.f32 %v3030, %v3552
        %v3554 = vmul.f32 %v3026, %v3552
        %v3555 = vmul.f32 %v3031, %v3552
        %v3559 = vrot.slane %v3553, 4
        %v3560 = vrot.slane %v3554, 4
        %v3561 = vsel %vm1448, %v3559, %v3560
        %v3562 = vrot.slane %v3555, 4
        %v3563 = vsel %vm1448, %v3560, %v3562
        %v3566 = vadd.f32 %v3549, %v3561
        %v3567 = vadd.f32 %v3550, %v3563
        %s3568 = sld [smem:[#allocation15 + $0x1d]]
        %v3569 = vstv %s3568
        %v3570 = vmul.f32 %v3030, %v3569
        %v3571 = vmul.f32 %v3026, %v3569
        %v3572 = vmul.f32 %v3031, %v3569
        %v3576 = vrot.slane %v3570, 4
        %v3577 = vrot.slane %v3571, 4
        %v3578 = vsel %vm1448, %v3576, %v3577
        %v3579 = vrot.slane %v3572, 4
        %v3580 = vsel %vm1448, %v3577, %v3579
        %3581 = vrot.lane.b32.xlu0 %v3578, 127
        %v3582 = vpop.permute.xlu0 %3581
        %3583 = vrot.lane.b32.xlu0 %v3580, 127
        %v3584 = vpop.permute.xlu0 %3583
        %v3587 = vadd.f32 %v3566, %v3582
        %v3588 = vadd.f32 %v3567, %v3584
        %s3589 = sld [smem:[#allocation15 + $0x1e]]
        %v3590 = vstv %s3589
        %v3591 = vmul.f32 %v3030, %v3590
        %v3592 = vmul.f32 %v3026, %v3590
        %v3593 = vmul.f32 %v3031, %v3590
        %v3597 = vrot.slane %v3591, 4
        %v3598 = vrot.slane %v3592, 4
        %v3599 = vsel %vm1448, %v3597, %v3598
        %v3600 = vrot.slane %v3593, 4
        %v3601 = vsel %vm1448, %v3598, %v3600
        %3602 = vrot.lane.b32.xlu0 %v3599, 126
        %v3603 = vpop.permute.xlu0 %3602
        %3604 = vrot.lane.b32.xlu0 %v3601, 126
        %v3605 = vpop.permute.xlu0 %3604
        %v3608 = vadd.f32 %v3587, %v3603
        %v3609 = vadd.f32 %v3588, %v3605
        %s3610 = sld [smem:[#allocation15 + $0x1f]]
        %v3611 = vstv %s3610
        %v3612 = vmul.f32 %v3030, %v3611
        %v3613 = vmul.f32 %v3026, %v3611
        %v3614 = vmul.f32 %v3031, %v3611
        %v3618 = vrot.slane %v3612, 4
        %v3619 = vrot.slane %v3613, 4
        %v3620 = vsel %vm1448, %v3618, %v3619
        %v3621 = vrot.slane %v3614, 4
        %v3622 = vsel %vm1448, %v3619, %v3621
        %3623 = vrot.lane.b32.xlu0 %v3620, 125
        %v3624 = vpop.permute.xlu0 %3623
        %3625 = vrot.lane.b32.xlu0 %v3622, 125
        %v3626 = vpop.permute.xlu0 %3625
        %v3629 = vadd.f32 %v3608, %v3624
        %v3630 = vadd.f32 %v3609, %v3626
        %s3631 = sld [smem:[#allocation15 + $0x20]]
        %v3632 = vstv %s3631
        %v3633 = vmul.f32 %v3030, %v3632
        %v3634 = vmul.f32 %v3026, %v3632
        %v3635 = vmul.f32 %v3031, %v3632
        %v3639 = vrot.slane %v3633, 4
        %v3640 = vrot.slane %v3634, 4
        %v3641 = vsel %vm1448, %v3639, %v3640
        %v3642 = vrot.slane %v3635, 4
        %v3643 = vsel %vm1448, %v3640, %v3642
        %3644 = vrot.lane.b32.xlu0 %v3641, 124
        %v3645 = vpop.permute.xlu0 %3644
        %3646 = vrot.lane.b32.xlu0 %v3643, 124
        %v3647 = vpop.permute.xlu0 %3646
        %v3650 = vadd.f32 %v3629, %v3645
        %v3651 = vadd.f32 %v3630, %v3647
        %s3652 = sld [smem:[#allocation15 + $0x21]]
        %v3653 = vstv %s3652
        %v3654 = vmul.f32 %v3030, %v3653
        %v3655 = vmul.f32 %v3026, %v3653
        %v3656 = vmul.f32 %v3031, %v3653
        %v3660 = vrot.slane %v3654, 4
        %v3661 = vrot.slane %v3655, 4
        %v3662 = vsel %vm1448, %v3660, %v3661
        %v3663 = vrot.slane %v3656, 4
        %v3664 = vsel %vm1448, %v3661, %v3663
        %3665 = vrot.lane.b32.xlu0 %v3662, 123
        %v3666 = vpop.permute.xlu0 %3665
        %3667 = vrot.lane.b32.xlu0 %v3664, 123
        %v3668 = vpop.permute.xlu0 %3667
        %v3671 = vadd.f32 %v3650, %v3666
        %v3672 = vadd.f32 %v3651, %v3668
        %s3673 = sld [smem:[#allocation15 + $0x22]]
        %v3674 = vstv %s3673
        %v3675 = vmul.f32 %v3030, %v3674
        %v3676 = vmul.f32 %v3026, %v3674
        %v3677 = vmul.f32 %v3031, %v3674
        %v3681 = vrot.slane %v3675, 4
        %v3682 = vrot.slane %v3676, 4
        %v3683 = vsel %vm1448, %v3681, %v3682
        %v3684 = vrot.slane %v3677, 4
        %v3685 = vsel %vm1448, %v3682, %v3684
        %3686 = vrot.lane.b32.xlu0 %v3683, 122
        %v3687 = vpop.permute.xlu0 %3686
        %3688 = vrot.lane.b32.xlu0 %v3685, 122
        %v3689 = vpop.permute.xlu0 %3688
        %v3692 = vadd.f32 %v3671, %v3687
        %v3693 = vadd.f32 %v3672, %v3689
        %s3694 = sld [smem:[#allocation15 + $0x23]]
        %v3695 = vstv %s3694
        %v3696 = vmul.f32 %v3030, %v3695
        %v3697 = vmul.f32 %v3026, %v3695
        %v3698 = vmul.f32 %v3031, %v3695
        %v3702 = vrot.slane %v3696, 5
        %v3703 = vrot.slane %v3697, 5
        %v3704 = vsel %vm910, %v3702, %v3703
        %v3705 = vrot.slane %v3698, 5
        %v3706 = vsel %vm910, %v3703, %v3705
        %v3709 = vadd.f32 %v3692, %v3704
        %v3710 = vadd.f32 %v3693, %v3706
        %s3711 = sld [smem:[#allocation15 + $0x24]]
        %v3712 = vstv %s3711
        %v3713 = vmul.f32 %v3030, %v3712
        %v3714 = vmul.f32 %v3026, %v3712
        %v3715 = vmul.f32 %v3031, %v3712
        %v3719 = vrot.slane %v3713, 5
        %v3720 = vrot.slane %v3714, 5
        %v3721 = vsel %vm910, %v3719, %v3720
        %v3722 = vrot.slane %v3715, 5
        %v3723 = vsel %vm910, %v3720, %v3722
        %3724 = vrot.lane.b32.xlu0 %v3721, 127
        %v3725 = vpop.permute.xlu0 %3724
        %3726 = vrot.lane.b32.xlu0 %v3723, 127
        %v3727 = vpop.permute.xlu0 %3726
        %v3730 = vadd.f32 %v3709, %v3725
        %v3731 = vadd.f32 %v3710, %v3727
        %s3732 = sld [smem:[#allocation15 + $0x25]]
        %v3733 = vstv %s3732
        %v3734 = vmul.f32 %v3030, %v3733
        %v3735 = vmul.f32 %v3026, %v3733
        %v3736 = vmul.f32 %v3031, %v3733
        %v3740 = vrot.slane %v3734, 5
        %v3741 = vrot.slane %v3735, 5
        %v3742 = vsel %vm910, %v3740, %v3741
        %v3743 = vrot.slane %v3736, 5
        %v3744 = vsel %vm910, %v3741, %v3743
        %3745 = vrot.lane.b32.xlu0 %v3742, 126
        %v3746 = vpop.permute.xlu0 %3745
        %3747 = vrot.lane.b32.xlu0 %v3744, 126
        %v3748 = vpop.permute.xlu0 %3747
        %v3751 = vadd.f32 %v3730, %v3746
        %v3752 = vadd.f32 %v3731, %v3748
        %s3753 = sld [smem:[#allocation15 + $0x26]]
        %v3754 = vstv %s3753
        %v3755 = vmul.f32 %v3030, %v3754
        %v3756 = vmul.f32 %v3026, %v3754
        %v3757 = vmul.f32 %v3031, %v3754
        %v3761 = vrot.slane %v3755, 5
        %v3762 = vrot.slane %v3756, 5
        %v3763 = vsel %vm910, %v3761, %v3762
        %v3764 = vrot.slane %v3757, 5
        %v3765 = vsel %vm910, %v3762, %v3764
        %3766 = vrot.lane.b32.xlu0 %v3763, 125
        %v3767 = vpop.permute.xlu0 %3766
        %3768 = vrot.lane.b32.xlu0 %v3765, 125
        %v3769 = vpop.permute.xlu0 %3768
        %v3772 = vadd.f32 %v3751, %v3767
        %v3773 = vadd.f32 %v3752, %v3769
        %s3774 = sld [smem:[#allocation15 + $0x27]]
        %v3775 = vstv %s3774
        %v3776 = vmul.f32 %v3030, %v3775
        %v3777 = vmul.f32 %v3026, %v3775
        %v3778 = vmul.f32 %v3031, %v3775
        %v3782 = vrot.slane %v3776, 5
        %v3783 = vrot.slane %v3777, 5
        %v3784 = vsel %vm910, %v3782, %v3783
        %v3785 = vrot.slane %v3778, 5
        %v3786 = vsel %vm910, %v3783, %v3785
        %3787 = vrot.lane.b32.xlu0 %v3784, 124
        %v3788 = vpop.permute.xlu0 %3787
        %3789 = vrot.lane.b32.xlu0 %v3786, 124
        %v3790 = vpop.permute.xlu0 %3789
        %v3793 = vadd.f32 %v3772, %v3788
        %v3794 = vadd.f32 %v3773, %v3790
        %s3795 = sld [smem:[#allocation15 + $0x28]]
        %v3796 = vstv %s3795
        %v3797 = vmul.f32 %v3030, %v3796
        %v3798 = vmul.f32 %v3026, %v3796
        %v3799 = vmul.f32 %v3031, %v3796
        %v3803 = vrot.slane %v3797, 5
        %v3804 = vrot.slane %v3798, 5
        %v3805 = vsel %vm910, %v3803, %v3804
        %v3806 = vrot.slane %v3799, 5
        %v3807 = vsel %vm910, %v3804, %v3806
        %3808 = vrot.lane.b32.xlu0 %v3805, 123
        %v3809 = vpop.permute.xlu0 %3808
        %3810 = vrot.lane.b32.xlu0 %v3807, 123
        %v3811 = vpop.permute.xlu0 %3810
        %v3814 = vadd.f32 %v3793, %v3809
        %v3815 = vadd.f32 %v3794, %v3811
        %s3816 = sld [smem:[#allocation15 + $0x29]]
        %v3817 = vstv %s3816
        %v3818 = vmul.f32 %v3030, %v3817
        %v3819 = vmul.f32 %v3026, %v3817
        %v3820 = vmul.f32 %v3031, %v3817
        %v3824 = vrot.slane %v3818, 5
        %v3825 = vrot.slane %v3819, 5
        %v3826 = vsel %vm910, %v3824, %v3825
        %v3827 = vrot.slane %v3820, 5
        %v3828 = vsel %vm910, %v3825, %v3827
        %3829 = vrot.lane.b32.xlu0 %v3826, 122
        %v3830 = vpop.permute.xlu0 %3829
        %3831 = vrot.lane.b32.xlu0 %v3828, 122
        %v3832 = vpop.permute.xlu0 %3831
        %v3835 = vadd.f32 %v3814, %v3830
        %v3836 = vadd.f32 %v3815, %v3832
        %s3837 = sld [smem:[#allocation15 + $0x2a]]
        %v3838 = vstv %s3837
        %v3839 = vmul.f32 %v3030, %v3838
        %v3840 = vmul.f32 %v3026, %v3838
        %v3841 = vmul.f32 %v3031, %v3838
        %v3845 = vrot.slane %v3839, 6
        %v3846 = vrot.slane %v3840, 6
        %v3847 = vsel %vm1735, %v3845, %v3846
        %v3848 = vrot.slane %v3841, 6
        %v3849 = vsel %vm1735, %v3846, %v3848
        %v3852 = vadd.f32 %v3835, %v3847
        %v3853 = vadd.f32 %v3836, %v3849
        %s3854 = sld [smem:[#allocation15 + $0x2b]]
        %v3855 = vstv %s3854
        %v3856 = vmul.f32 %v3030, %v3855
        %v3857 = vmul.f32 %v3026, %v3855
        %v3858 = vmul.f32 %v3031, %v3855
        %v3862 = vrot.slane %v3856, 6
        %v3863 = vrot.slane %v3857, 6
        %v3864 = vsel %vm1735, %v3862, %v3863
        %v3865 = vrot.slane %v3858, 6
        %v3866 = vsel %vm1735, %v3863, %v3865
        %3867 = vrot.lane.b32.xlu0 %v3864, 127
        %v3868 = vpop.permute.xlu0 %3867
        %3869 = vrot.lane.b32.xlu0 %v3866, 127
        %v3870 = vpop.permute.xlu0 %3869
        %v3873 = vadd.f32 %v3852, %v3868
        %v3874 = vadd.f32 %v3853, %v3870
        %s3875 = sld [smem:[#allocation15 + $0x2c]]
        %v3876 = vstv %s3875
        %v3877 = vmul.f32 %v3030, %v3876
        %v3878 = vmul.f32 %v3026, %v3876
        %v3879 = vmul.f32 %v3031, %v3876
        %v3883 = vrot.slane %v3877, 6
        %v3884 = vrot.slane %v3878, 6
        %v3885 = vsel %vm1735, %v3883, %v3884
        %v3886 = vrot.slane %v3879, 6
        %v3887 = vsel %vm1735, %v3884, %v3886
        %3888 = vrot.lane.b32.xlu0 %v3885, 126
        %v3889 = vpop.permute.xlu0 %3888
        %3890 = vrot.lane.b32.xlu0 %v3887, 126
        %v3891 = vpop.permute.xlu0 %3890
        %v3894 = vadd.f32 %v3873, %v3889
        %v3895 = vadd.f32 %v3874, %v3891
        %s3896 = sld [smem:[#allocation15 + $0x2d]]
        %v3897 = vstv %s3896
        %v3898 = vmul.f32 %v3030, %v3897
        %v3899 = vmul.f32 %v3026, %v3897
        %v3900 = vmul.f32 %v3031, %v3897
        %v3904 = vrot.slane %v3898, 6
        %v3905 = vrot.slane %v3899, 6
        %v3906 = vsel %vm1735, %v3904, %v3905
        %v3907 = vrot.slane %v3900, 6
        %v3908 = vsel %vm1735, %v3905, %v3907
        %3909 = vrot.lane.b32.xlu0 %v3906, 125
        %v3910 = vpop.permute.xlu0 %3909
        %3911 = vrot.lane.b32.xlu0 %v3908, 125
        %v3912 = vpop.permute.xlu0 %3911
        %v3915 = vadd.f32 %v3894, %v3910
        %v3916 = vadd.f32 %v3895, %v3912
        %s3917 = sld [smem:[#allocation15 + $0x2e]]
        %v3918 = vstv %s3917
        %v3919 = vmul.f32 %v3030, %v3918
        %v3920 = vmul.f32 %v3026, %v3918
        %v3921 = vmul.f32 %v3031, %v3918
        %v3925 = vrot.slane %v3919, 6
        %v3926 = vrot.slane %v3920, 6
        %v3927 = vsel %vm1735, %v3925, %v3926
        %v3928 = vrot.slane %v3921, 6
        %v3929 = vsel %vm1735, %v3926, %v3928
        %3930 = vrot.lane.b32.xlu0 %v3927, 124
        %v3931 = vpop.permute.xlu0 %3930
        %3932 = vrot.lane.b32.xlu0 %v3929, 124
        %v3933 = vpop.permute.xlu0 %3932
        %v3936 = vadd.f32 %v3915, %v3931
        %v3937 = vadd.f32 %v3916, %v3933
        %s3938 = sld [smem:[#allocation15 + $0x2f]]
        %v3939 = vstv %s3938
        %v3940 = vmul.f32 %v3030, %v3939
        %v3941 = vmul.f32 %v3026, %v3939
        %v3942 = vmul.f32 %v3031, %v3939
        %v3946 = vrot.slane %v3940, 6
        %v3947 = vrot.slane %v3941, 6
        %v3948 = vsel %vm1735, %v3946, %v3947
        %v3949 = vrot.slane %v3942, 6
        %v3950 = vsel %vm1735, %v3947, %v3949
        %3951 = vrot.lane.b32.xlu0 %v3948, 123
        %v3952 = vpop.permute.xlu0 %3951
        %3953 = vrot.lane.b32.xlu0 %v3950, 123
        %v3954 = vpop.permute.xlu0 %3953
        %v3957 = vadd.f32 %v3936, %v3952
        %v3958 = vadd.f32 %v3937, %v3954
        %s3959 = sld [smem:[#allocation15 + $0x30]]
        %v3960 = vstv %s3959
        %v3961 = vmul.f32 %v3030, %v3960
        %v3962 = vmul.f32 %v3026, %v3960
        %v3963 = vmul.f32 %v3031, %v3960
        %v3967 = vrot.slane %v3961, 6
        %v3968 = vrot.slane %v3962, 6
        %v3969 = vsel %vm1735, %v3967, %v3968
        %v3970 = vrot.slane %v3963, 6
        %v3971 = vsel %vm1735, %v3968, %v3970
        %3972 = vrot.lane.b32.xlu0 %v3969, 122
        %v3973 = vpop.permute.xlu0 %3972
        %3974 = vrot.lane.b32.xlu0 %v3971, 122
        %v3975 = vpop.permute.xlu0 %3974
        %v3978 = vadd.f32 %v3957, %v3973
        %v3979 = vadd.f32 %v3958, %v3975
        %v3983 = vrot.slane %v2998, 2
        %v3984 = vrot.slane %v2999, 2
        %v3985 = vsel %vm890, %v3983, %v3984
        %v3986 = vrot.slane %v3000, 2
        %v3987 = vsel %vm890, %v3984, %v3986
        %3988 = vrot.lane.b32.xlu0 %v3985, 1
        %v3989 = vpop.permute.xlu0 %3988
        %3990 = vrot.lane.b32.xlu0 %v3987, 1
        %v3991 = vpop.permute.xlu0 %3990
        %v3994 = vsel %vm902, 0.0, %v3989
        %v3995 = vsel %vm902, 0.0, %v3991
        %v3996 = vsel %vm905, %v3994, 0.0
        %v3997 = vsel %vm905, %v3995, 0.0
        %v4000 = vrot.slane %v3996, 5
        %v4001 = vrot.slane %v3997, 5
        %v4002 = vsel %vm910, %v4000, %v4001
        %v4006 = vsel %vm910, 0.0, %v4000
        %v4007 = vsel %vm910, %v4001, 0.0
        %s4008 = sld [smem:[#allocation15 + $0x31]]
        %v4009 = vstv %s4008
        %v4010 = vmul.f32 %v4006, %v4009
        %v4011 = vmul.f32 %v4002, %v4009
        %v4012 = vadd.f32 %v3978, %v4010
        %v4013 = vadd.f32 %v3979, %v4011
        %s4014 = sld [smem:[#allocation15 + $0x32]]
        %v4015 = vstv %s4014
        %v4016 = vmul.f32 %v4006, %v4015
        %v4017 = vmul.f32 %v4002, %v4015
        %4020 = vrot.lane.b32.xlu0 %v4016, 127
        %v4021 = vpop.permute.xlu0 %4020
        %4022 = vrot.lane.b32.xlu0 %v4017, 127
        %v4023 = vpop.permute.xlu0 %4022
        %v4026 = vadd.f32 %v4012, %v4021
        %v4027 = vadd.f32 %v4013, %v4023
        %s4028 = sld [smem:[#allocation15 + $0x33]]
        %v4029 = vstv %s4028
        %v4030 = vmul.f32 %v4006, %v4029
        %v4031 = vmul.f32 %v4002, %v4029
        %4034 = vrot.lane.b32.xlu0 %v4030, 126
        %v4035 = vpop.permute.xlu0 %4034
        %4036 = vrot.lane.b32.xlu0 %v4031, 126
        %v4037 = vpop.permute.xlu0 %4036
        %v4040 = vadd.f32 %v4026, %v4035
        %v4041 = vadd.f32 %v4027, %v4037
        %s4042 = sld [smem:[#allocation15 + $0x34]]
        %v4043 = vstv %s4042
        %v4044 = vmul.f32 %v4006, %v4043
        %v4045 = vmul.f32 %v4002, %v4043
        %4048 = vrot.lane.b32.xlu0 %v4044, 125
        %v4049 = vpop.permute.xlu0 %4048
        %4050 = vrot.lane.b32.xlu0 %v4045, 125
        %v4051 = vpop.permute.xlu0 %4050
        %v4054 = vadd.f32 %v4040, %v4049
        %v4055 = vadd.f32 %v4041, %v4051
        %s4056 = sld [smem:[#allocation15 + $0x35]]
        %v4057 = vstv %s4056
        %v4058 = vmul.f32 %v4006, %v4057
        %v4059 = vmul.f32 %v4002, %v4057
        %4062 = vrot.lane.b32.xlu0 %v4058, 124
        %v4063 = vpop.permute.xlu0 %4062
        %4064 = vrot.lane.b32.xlu0 %v4059, 124
        %v4065 = vpop.permute.xlu0 %4064
        %v4068 = vadd.f32 %v4054, %v4063
        %v4069 = vadd.f32 %v4055, %v4065
        %s4070 = sld [smem:[#allocation15 + $0x36]]
        %v4071 = vstv %s4070
        %v4072 = vmul.f32 %v4006, %v4071
        %v4073 = vmul.f32 %v4002, %v4071
        %4076 = vrot.lane.b32.xlu0 %v4072, 123
        %v4077 = vpop.permute.xlu0 %4076
        %4078 = vrot.lane.b32.xlu0 %v4073, 123
        %v4079 = vpop.permute.xlu0 %4078
        %v4082 = vadd.f32 %v4068, %v4077
        %v4083 = vadd.f32 %v4069, %v4079
        %s4084 = sld [smem:[#allocation15 + $0x37]]
        %v4085 = vstv %s4084
        %v4086 = vmul.f32 %v4006, %v4085
        %v4087 = vmul.f32 %v4002, %v4085
        %4090 = vrot.lane.b32.xlu0 %v4086, 122
        %v4091 = vpop.permute.xlu0 %4090
        %4092 = vrot.lane.b32.xlu0 %v4087, 122
        %v4093 = vpop.permute.xlu0 %4092
        %v4096 = vadd.f32 %v4082, %v4091
        %v4097 = vadd.f32 %v4083, %v4093
        %s4098 = sld [smem:[#allocation15 + $0x38]]
        %v4099 = vstv %s4098
        %v4100 = vmul.f32 %v4006, %v4099
        %v4101 = vmul.f32 %v4002, %v4099
        %v4102 = vmul.f32 %v4007, %v4099
        %v4106 = vrot.slane %v4100, 1
        %v4107 = vrot.slane %v4101, 1
        %v4108 = vsel %vm1017, %v4106, %v4107
        %v4109 = vrot.slane %v4102, 1
        %v4110 = vsel %vm1017, %v4107, %v4109
        %v4113 = vadd.f32 %v4096, %v4108
        %v4114 = vadd.f32 %v4097, %v4110
        %s4115 = sld [smem:[#allocation15 + $0x39]]
        %v4116 = vstv %s4115
        %v4117 = vmul.f32 %v4006, %v4116
        %v4118 = vmul.f32 %v4002, %v4116
        %v4119 = vmul.f32 %v4007, %v4116
        %v4123 = vrot.slane %v4117, 1
        %v4124 = vrot.slane %v4118, 1
        %v4125 = vsel %vm1017, %v4123, %v4124
        %v4126 = vrot.slane %v4119, 1
        %v4127 = vsel %vm1017, %v4124, %v4126
        %4128 = vrot.lane.b32.xlu0 %v4125, 127
        %v4129 = vpop.permute.xlu0 %4128
        %4130 = vrot.lane.b32.xlu0 %v4127, 127
        %v4131 = vpop.permute.xlu0 %4130
        %v4134 = vadd.f32 %v4113, %v4129
        %v4135 = vadd.f32 %v4114, %v4131
        %s4136 = sld [smem:[#allocation15 + $0x3a]]
        %v4137 = vstv %s4136
        %v4138 = vmul.f32 %v4006, %v4137
        %v4139 = vmul.f32 %v4002, %v4137
        %v4140 = vmul.f32 %v4007, %v4137
        %v4144 = vrot.slane %v4138, 1
        %v4145 = vrot.slane %v4139, 1
        %v4146 = vsel %vm1017, %v4144, %v4145
        %v4147 = vrot.slane %v4140, 1
        %v4148 = vsel %vm1017, %v4145, %v4147
        %4149 = vrot.lane.b32.xlu0 %v4146, 126
        %v4150 = vpop.permute.xlu0 %4149
        %4151 = vrot.lane.b32.xlu0 %v4148, 126
        %v4152 = vpop.permute.xlu0 %4151
        %v4155 = vadd.f32 %v4134, %v4150
        %v4156 = vadd.f32 %v4135, %v4152
        %s4157 = sld [smem:[#allocation15 + $0x3b]]
        %v4158 = vstv %s4157
        %v4159 = vmul.f32 %v4006, %v4158
        %v4160 = vmul.f32 %v4002, %v4158
        %v4161 = vmul.f32 %v4007, %v4158
        %v4165 = vrot.slane %v4159, 1
        %v4166 = vrot.slane %v4160, 1
        %v4167 = vsel %vm1017, %v4165, %v4166
        %v4168 = vrot.slane %v4161, 1
        %v4169 = vsel %vm1017, %v4166, %v4168
        %4170 = vrot.lane.b32.xlu0 %v4167, 125
        %v4171 = vpop.permute.xlu0 %4170
        %4172 = vrot.lane.b32.xlu0 %v4169, 125
        %v4173 = vpop.permute.xlu0 %4172
        %v4176 = vadd.f32 %v4155, %v4171
        %v4177 = vadd.f32 %v4156, %v4173
        %s4178 = sld [smem:[#allocation15 + $0x3c]]
        %v4179 = vstv %s4178
        %v4180 = vmul.f32 %v4006, %v4179
        %v4181 = vmul.f32 %v4002, %v4179
        %v4182 = vmul.f32 %v4007, %v4179
        %v4186 = vrot.slane %v4180, 1
        %v4187 = vrot.slane %v4181, 1
        %v4188 = vsel %vm1017, %v4186, %v4187
        %v4189 = vrot.slane %v4182, 1
        %v4190 = vsel %vm1017, %v4187, %v4189
        %4191 = vrot.lane.b32.xlu0 %v4188, 124
        %v4192 = vpop.permute.xlu0 %4191
        %4193 = vrot.lane.b32.xlu0 %v4190, 124
        %v4194 = vpop.permute.xlu0 %4193
        %v4197 = vadd.f32 %v4176, %v4192
        %v4198 = vadd.f32 %v4177, %v4194
        %s4199 = sld [smem:[#allocation15 + $0x3d]]
        %v4200 = vstv %s4199
        %v4201 = vmul.f32 %v4006, %v4200
        %v4202 = vmul.f32 %v4002, %v4200
        %v4203 = vmul.f32 %v4007, %v4200
        %v4207 = vrot.slane %v4201, 1
        %v4208 = vrot.slane %v4202, 1
        %v4209 = vsel %vm1017, %v4207, %v4208
        %v4210 = vrot.slane %v4203, 1
        %v4211 = vsel %vm1017, %v4208, %v4210
        %4212 = vrot.lane.b32.xlu0 %v4209, 123
        %v4213 = vpop.permute.xlu0 %4212
        %4214 = vrot.lane.b32.xlu0 %v4211, 123
        %v4215 = vpop.permute.xlu0 %4214
        %v4218 = vadd.f32 %v4197, %v4213
        %v4219 = vadd.f32 %v4198, %v4215
        %s4220 = sld [smem:[#allocation15 + $0x3e]]
        %v4221 = vstv %s4220
        %v4222 = vmul.f32 %v4006, %v4221
        %v4223 = vmul.f32 %v4002, %v4221
        %v4224 = vmul.f32 %v4007, %v4221
        %v4228 = vrot.slane %v4222, 1
        %v4229 = vrot.slane %v4223, 1
        %v4230 = vsel %vm1017, %v4228, %v4229
        %v4231 = vrot.slane %v4224, 1
        %v4232 = vsel %vm1017, %v4229, %v4231
        %4233 = vrot.lane.b32.xlu0 %v4230, 122
        %v4234 = vpop.permute.xlu0 %4233
        %4235 = vrot.lane.b32.xlu0 %v4232, 122
        %v4236 = vpop.permute.xlu0 %4235
        %v4239 = vadd.f32 %v4218, %v4234
        %v4240 = vadd.f32 %v4219, %v4236
        %s4241 = sld [smem:[#allocation15 + $0x3f]]
        %v4242 = vstv %s4241
        %v4243 = vmul.f32 %v4006, %v4242
        %v4244 = vmul.f32 %v4002, %v4242
        %v4245 = vmul.f32 %v4007, %v4242
        %v4249 = vrot.slane %v4243, 2
        %v4250 = vrot.slane %v4244, 2
        %v4251 = vsel %vm890, %v4249, %v4250
        %v4252 = vrot.slane %v4245, 2
        %v4253 = vsel %vm890, %v4250, %v4252
        %v4256 = vadd.f32 %v4239, %v4251
        %v4257 = vadd.f32 %v4240, %v4253
        %s4258 = sld [smem:[#allocation15 + $0x40]]
        %v4259 = vstv %s4258
        %v4260 = vmul.f32 %v4006, %v4259
        %v4261 = vmul.f32 %v4002, %v4259
        %v4262 = vmul.f32 %v4007, %v4259
        %v4266 = vrot.slane %v4260, 2
        %v4267 = vrot.slane %v4261, 2
        %v4268 = vsel %vm890, %v4266, %v4267
        %v4269 = vrot.slane %v4262, 2
        %v4270 = vsel %vm890, %v4267, %v4269
        %4271 = vrot.lane.b32.xlu0 %v4268, 127
        %v4272 = vpop.permute.xlu0 %4271
        %4273 = vrot.lane.b32.xlu0 %v4270, 127
        %v4274 = vpop.permute.xlu0 %4273
        %v4277 = vadd.f32 %v4256, %v4272
        %v4278 = vadd.f32 %v4257, %v4274
        %s4279 = sld [smem:[#allocation15 + $0x41]]
        %v4280 = vstv %s4279
        %v4281 = vmul.f32 %v4006, %v4280
        %v4282 = vmul.f32 %v4002, %v4280
        %v4283 = vmul.f32 %v4007, %v4280
        %v4287 = vrot.slane %v4281, 2
        %v4288 = vrot.slane %v4282, 2
        %v4289 = vsel %vm890, %v4287, %v4288
        %v4290 = vrot.slane %v4283, 2
        %v4291 = vsel %vm890, %v4288, %v4290
        %4292 = vrot.lane.b32.xlu0 %v4289, 126
        %v4293 = vpop.permute.xlu0 %4292
        %4294 = vrot.lane.b32.xlu0 %v4291, 126
        %v4295 = vpop.permute.xlu0 %4294
        %v4298 = vadd.f32 %v4277, %v4293
        %v4299 = vadd.f32 %v4278, %v4295
        %s4300 = sld [smem:[#allocation15 + $0x42]]
        %v4301 = vstv %s4300
        %v4302 = vmul.f32 %v4006, %v4301
        %v4303 = vmul.f32 %v4002, %v4301
        %v4304 = vmul.f32 %v4007, %v4301
        %v4308 = vrot.slane %v4302, 2
        %v4309 = vrot.slane %v4303, 2
        %v4310 = vsel %vm890, %v4308, %v4309
        %v4311 = vrot.slane %v4304, 2
        %v4312 = vsel %vm890, %v4309, %v4311
        %4313 = vrot.lane.b32.xlu0 %v4310, 125
        %v4314 = vpop.permute.xlu0 %4313
        %4315 = vrot.lane.b32.xlu0 %v4312, 125
        %v4316 = vpop.permute.xlu0 %4315
        %v4319 = vadd.f32 %v4298, %v4314
        %v4320 = vadd.f32 %v4299, %v4316
        %s4321 = sld [smem:[#allocation15 + $0x43]]
        %v4322 = vstv %s4321
        %v4323 = vmul.f32 %v4006, %v4322
        %v4324 = vmul.f32 %v4002, %v4322
        %v4325 = vmul.f32 %v4007, %v4322
        %v4329 = vrot.slane %v4323, 2
        %v4330 = vrot.slane %v4324, 2
        %v4331 = vsel %vm890, %v4329, %v4330
        %v4332 = vrot.slane %v4325, 2
        %v4333 = vsel %vm890, %v4330, %v4332
        %4334 = vrot.lane.b32.xlu0 %v4331, 124
        %v4335 = vpop.permute.xlu0 %4334
        %4336 = vrot.lane.b32.xlu0 %v4333, 124
        %v4337 = vpop.permute.xlu0 %4336
        %v4340 = vadd.f32 %v4319, %v4335
        %v4341 = vadd.f32 %v4320, %v4337
        %s4342 = sld [smem:[#allocation15 + $0x44]]
        %v4343 = vstv %s4342
        %v4344 = vmul.f32 %v4006, %v4343
        %v4345 = vmul.f32 %v4002, %v4343
        %v4346 = vmul.f32 %v4007, %v4343
        %v4350 = vrot.slane %v4344, 2
        %v4351 = vrot.slane %v4345, 2
        %v4352 = vsel %vm890, %v4350, %v4351
        %v4353 = vrot.slane %v4346, 2
        %v4354 = vsel %vm890, %v4351, %v4353
        %4355 = vrot.lane.b32.xlu0 %v4352, 123
        %v4356 = vpop.permute.xlu0 %4355
        %4357 = vrot.lane.b32.xlu0 %v4354, 123
        %v4358 = vpop.permute.xlu0 %4357
        %v4361 = vadd.f32 %v4340, %v4356
        %v4362 = vadd.f32 %v4341, %v4358
        %s4363 = sld [smem:[#allocation15 + $0x45]]
        %v4364 = vstv %s4363
        %v4365 = vmul.f32 %v4006, %v4364
        %v4366 = vmul.f32 %v4002, %v4364
        %v4367 = vmul.f32 %v4007, %v4364
        %v4371 = vrot.slane %v4365, 2
        %v4372 = vrot.slane %v4366, 2
        %v4373 = vsel %vm890, %v4371, %v4372
        %v4374 = vrot.slane %v4367, 2
        %v4375 = vsel %vm890, %v4372, %v4374
        %4376 = vrot.lane.b32.xlu0 %v4373, 122
        %v4377 = vpop.permute.xlu0 %4376
        %4378 = vrot.lane.b32.xlu0 %v4375, 122
        %v4379 = vpop.permute.xlu0 %4378
        %v4382 = vadd.f32 %v4361, %v4377
        %v4383 = vadd.f32 %v4362, %v4379
        %s4384 = sld [smem:[#allocation15 + $0x46]]
        %v4385 = vstv %s4384
        %v4386 = vmul.f32 %v4006, %v4385
        %v4387 = vmul.f32 %v4002, %v4385
        %v4388 = vmul.f32 %v4007, %v4385
        %v4392 = vrot.slane %v4386, 3
        %v4393 = vrot.slane %v4387, 3
        %v4394 = vsel %vm1304, %v4392, %v4393
        %v4395 = vrot.slane %v4388, 3
        %v4396 = vsel %vm1304, %v4393, %v4395
        %v4399 = vadd.f32 %v4382, %v4394
        %v4400 = vadd.f32 %v4383, %v4396
        %s4401 = sld [smem:[#allocation15 + $0x47]]
        %v4402 = vstv %s4401
        %v4403 = vmul.f32 %v4006, %v4402
        %v4404 = vmul.f32 %v4002, %v4402
        %v4405 = vmul.f32 %v4007, %v4402
        %v4409 = vrot.slane %v4403, 3
        %v4410 = vrot.slane %v4404, 3
        %v4411 = vsel %vm1304, %v4409, %v4410
        %v4412 = vrot.slane %v4405, 3
        %v4413 = vsel %vm1304, %v4410, %v4412
        %4414 = vrot.lane.b32.xlu0 %v4411, 127
        %v4415 = vpop.permute.xlu0 %4414
        %4416 = vrot.lane.b32.xlu0 %v4413, 127
        %v4417 = vpop.permute.xlu0 %4416
        %v4420 = vadd.f32 %v4399, %v4415
        %v4421 = vadd.f32 %v4400, %v4417
        %s4422 = sld [smem:[#allocation15 + $0x48]]
        %v4423 = vstv %s4422
        %v4424 = vmul.f32 %v4006, %v4423
        %v4425 = vmul.f32 %v4002, %v4423
        %v4426 = vmul.f32 %v4007, %v4423
        %v4430 = vrot.slane %v4424, 3
        %v4431 = vrot.slane %v4425, 3
        %v4432 = vsel %vm1304, %v4430, %v4431
        %v4433 = vrot.slane %v4426, 3
        %v4434 = vsel %vm1304, %v4431, %v4433
        %4435 = vrot.lane.b32.xlu0 %v4432, 126
        %v4436 = vpop.permute.xlu0 %4435
        %4437 = vrot.lane.b32.xlu0 %v4434, 126
        %v4438 = vpop.permute.xlu0 %4437
        %v4441 = vadd.f32 %v4420, %v4436
        %v4442 = vadd.f32 %v4421, %v4438
        %s4443 = sld [smem:[#allocation15 + $0x49]]
        %v4444 = vstv %s4443
        %v4445 = vmul.f32 %v4006, %v4444
        %v4446 = vmul.f32 %v4002, %v4444
        %v4447 = vmul.f32 %v4007, %v4444
        %v4451 = vrot.slane %v4445, 3
        %v4452 = vrot.slane %v4446, 3
        %v4453 = vsel %vm1304, %v4451, %v4452
        %v4454 = vrot.slane %v4447, 3
        %v4455 = vsel %vm1304, %v4452, %v4454
        %4456 = vrot.lane.b32.xlu0 %v4453, 125
        %v4457 = vpop.permute.xlu0 %4456
        %4458 = vrot.lane.b32.xlu0 %v4455, 125
        %v4459 = vpop.permute.xlu0 %4458
        %v4462 = vadd.f32 %v4441, %v4457
        %v4463 = vadd.f32 %v4442, %v4459
        %s4464 = sld [smem:[#allocation15 + $0x4a]]
        %v4465 = vstv %s4464
        %v4466 = vmul.f32 %v4006, %v4465
        %v4467 = vmul.f32 %v4002, %v4465
        %v4468 = vmul.f32 %v4007, %v4465
        %v4472 = vrot.slane %v4466, 3
        %v4473 = vrot.slane %v4467, 3
        %v4474 = vsel %vm1304, %v4472, %v4473
        %v4475 = vrot.slane %v4468, 3
        %v4476 = vsel %vm1304, %v4473, %v4475
        %4477 = vrot.lane.b32.xlu0 %v4474, 124
        %v4478 = vpop.permute.xlu0 %4477
        %4479 = vrot.lane.b32.xlu0 %v4476, 124
        %v4480 = vpop.permute.xlu0 %4479
        %v4483 = vadd.f32 %v4462, %v4478
        %v4484 = vadd.f32 %v4463, %v4480
        %s4485 = sld [smem:[#allocation15 + $0x4b]]
        %v4486 = vstv %s4485
        %v4487 = vmul.f32 %v4006, %v4486
        %v4488 = vmul.f32 %v4002, %v4486
        %v4489 = vmul.f32 %v4007, %v4486
        %v4493 = vrot.slane %v4487, 3
        %v4494 = vrot.slane %v4488, 3
        %v4495 = vsel %vm1304, %v4493, %v4494
        %v4496 = vrot.slane %v4489, 3
        %v4497 = vsel %vm1304, %v4494, %v4496
        %4498 = vrot.lane.b32.xlu0 %v4495, 123
        %v4499 = vpop.permute.xlu0 %4498
        %4500 = vrot.lane.b32.xlu0 %v4497, 123
        %v4501 = vpop.permute.xlu0 %4500
        %v4504 = vadd.f32 %v4483, %v4499
        %v4505 = vadd.f32 %v4484, %v4501
        %s4506 = sld [smem:[#allocation15 + $0x4c]]
        %v4507 = vstv %s4506
        %v4508 = vmul.f32 %v4006, %v4507
        %v4509 = vmul.f32 %v4002, %v4507
        %v4510 = vmul.f32 %v4007, %v4507
        %v4514 = vrot.slane %v4508, 3
        %v4515 = vrot.slane %v4509, 3
        %v4516 = vsel %vm1304, %v4514, %v4515
        %v4517 = vrot.slane %v4510, 3
        %v4518 = vsel %vm1304, %v4515, %v4517
        %4519 = vrot.lane.b32.xlu0 %v4516, 122
        %v4520 = vpop.permute.xlu0 %4519
        %4521 = vrot.lane.b32.xlu0 %v4518, 122
        %v4522 = vpop.permute.xlu0 %4521
        %v4525 = vadd.f32 %v4504, %v4520
        %v4526 = vadd.f32 %v4505, %v4522
        %s4527 = sld [smem:[#allocation15 + $0x4d]]
        %v4528 = vstv %s4527
        %v4529 = vmul.f32 %v4006, %v4528
        %v4530 = vmul.f32 %v4002, %v4528
        %v4531 = vmul.f32 %v4007, %v4528
        %v4535 = vrot.slane %v4529, 4
        %v4536 = vrot.slane %v4530, 4
        %v4537 = vsel %vm1448, %v4535, %v4536
        %v4538 = vrot.slane %v4531, 4
        %v4539 = vsel %vm1448, %v4536, %v4538
        %v4542 = vadd.f32 %v4525, %v4537
        %v4543 = vadd.f32 %v4526, %v4539
        %s4544 = sld [smem:[#allocation15 + $0x4e]]
        %v4545 = vstv %s4544
        %v4546 = vmul.f32 %v4006, %v4545
        %v4547 = vmul.f32 %v4002, %v4545
        %v4548 = vmul.f32 %v4007, %v4545
        %v4552 = vrot.slane %v4546, 4
        %v4553 = vrot.slane %v4547, 4
        %v4554 = vsel %vm1448, %v4552, %v4553
        %v4555 = vrot.slane %v4548, 4
        %v4556 = vsel %vm1448, %v4553, %v4555
        %4557 = vrot.lane.b32.xlu0 %v4554, 127
        %v4558 = vpop.permute.xlu0 %4557
        %4559 = vrot.lane.b32.xlu0 %v4556, 127
        %v4560 = vpop.permute.xlu0 %4559
        %v4563 = vadd.f32 %v4542, %v4558
        %v4564 = vadd.f32 %v4543, %v4560
        %s4565 = sld [smem:[#allocation15 + $0x4f]]
        %v4566 = vstv %s4565
        %v4567 = vmul.f32 %v4006, %v4566
        %v4568 = vmul.f32 %v4002, %v4566
        %v4569 = vmul.f32 %v4007, %v4566
        %v4573 = vrot.slane %v4567, 4
        %v4574 = vrot.slane %v4568, 4
        %v4575 = vsel %vm1448, %v4573, %v4574
        %v4576 = vrot.slane %v4569, 4
        %v4577 = vsel %vm1448, %v4574, %v4576
        %4578 = vrot.lane.b32.xlu0 %v4575, 126
        %v4579 = vpop.permute.xlu0 %4578
        %4580 = vrot.lane.b32.xlu0 %v4577, 126
        %v4581 = vpop.permute.xlu0 %4580
        %v4584 = vadd.f32 %v4563, %v4579
        %v4585 = vadd.f32 %v4564, %v4581
        %s4586 = sld [smem:[#allocation15 + $0x50]]
        %v4587 = vstv %s4586
        %v4588 = vmul.f32 %v4006, %v4587
        %v4589 = vmul.f32 %v4002, %v4587
        %v4590 = vmul.f32 %v4007, %v4587
        %v4594 = vrot.slane %v4588, 4
        %v4595 = vrot.slane %v4589, 4
        %v4596 = vsel %vm1448, %v4594, %v4595
        %v4597 = vrot.slane %v4590, 4
        %v4598 = vsel %vm1448, %v4595, %v4597
        %4599 = vrot.lane.b32.xlu0 %v4596, 125
        %v4600 = vpop.permute.xlu0 %4599
        %4601 = vrot.lane.b32.xlu0 %v4598, 125
        %v4602 = vpop.permute.xlu0 %4601
        %v4605 = vadd.f32 %v4584, %v4600
        %v4606 = vadd.f32 %v4585, %v4602
        %s4607 = sld [smem:[#allocation15 + $0x51]]
        %v4608 = vstv %s4607
        %v4609 = vmul.f32 %v4006, %v4608
        %v4610 = vmul.f32 %v4002, %v4608
        %v4611 = vmul.f32 %v4007, %v4608
        %v4615 = vrot.slane %v4609, 4
        %v4616 = vrot.slane %v4610, 4
        %v4617 = vsel %vm1448, %v4615, %v4616
        %v4618 = vrot.slane %v4611, 4
        %v4619 = vsel %vm1448, %v4616, %v4618
        %4620 = vrot.lane.b32.xlu0 %v4617, 124
        %v4621 = vpop.permute.xlu0 %4620
        %4622 = vrot.lane.b32.xlu0 %v4619, 124
        %v4623 = vpop.permute.xlu0 %4622
        %v4626 = vadd.f32 %v4605, %v4621
        %v4627 = vadd.f32 %v4606, %v4623
        %s4628 = sld [smem:[#allocation15 + $0x52]]
        %v4629 = vstv %s4628
        %v4630 = vmul.f32 %v4006, %v4629
        %v4631 = vmul.f32 %v4002, %v4629
        %v4632 = vmul.f32 %v4007, %v4629
        %v4636 = vrot.slane %v4630, 4
        %v4637 = vrot.slane %v4631, 4
        %v4638 = vsel %vm1448, %v4636, %v4637
        %v4639 = vrot.slane %v4632, 4
        %v4640 = vsel %vm1448, %v4637, %v4639
        %4641 = vrot.lane.b32.xlu0 %v4638, 123
        %v4642 = vpop.permute.xlu0 %4641
        %4643 = vrot.lane.b32.xlu0 %v4640, 123
        %v4644 = vpop.permute.xlu0 %4643
        %v4647 = vadd.f32 %v4626, %v4642
        %v4648 = vadd.f32 %v4627, %v4644
        %s4649 = sld [smem:[#allocation15 + $0x53]]
        %v4650 = vstv %s4649
        %v4651 = vmul.f32 %v4006, %v4650
        %v4652 = vmul.f32 %v4002, %v4650
        %v4653 = vmul.f32 %v4007, %v4650
        %v4657 = vrot.slane %v4651, 4
        %v4658 = vrot.slane %v4652, 4
        %v4659 = vsel %vm1448, %v4657, %v4658
        %v4660 = vrot.slane %v4653, 4
        %v4661 = vsel %vm1448, %v4658, %v4660
        %4662 = vrot.lane.b32.xlu0 %v4659, 122
        %v4663 = vpop.permute.xlu0 %4662
        %4664 = vrot.lane.b32.xlu0 %v4661, 122
        %v4665 = vpop.permute.xlu0 %4664
        %v4668 = vadd.f32 %v4647, %v4663
        %v4669 = vadd.f32 %v4648, %v4665
        %s4670 = sld [smem:[#allocation15 + $0x54]]
        %v4671 = vstv %s4670
        %v4672 = vmul.f32 %v4006, %v4671
        %v4673 = vmul.f32 %v4002, %v4671
        %v4674 = vmul.f32 %v4007, %v4671
        %v4678 = vrot.slane %v4672, 5
        %v4679 = vrot.slane %v4673, 5
        %v4680 = vsel %vm910, %v4678, %v4679
        %v4681 = vrot.slane %v4674, 5
        %v4682 = vsel %vm910, %v4679, %v4681
        %v4685 = vadd.f32 %v4668, %v4680
        %v4686 = vadd.f32 %v4669, %v4682
        %s4687 = sld [smem:[#allocation15 + $0x55]]
        %v4688 = vstv %s4687
        %v4689 = vmul.f32 %v4006, %v4688
        %v4690 = vmul.f32 %v4002, %v4688
        %v4691 = vmul.f32 %v4007, %v4688
        %v4695 = vrot.slane %v4689, 5
        %v4696 = vrot.slane %v4690, 5
        %v4697 = vsel %vm910, %v4695, %v4696
        %v4698 = vrot.slane %v4691, 5
        %v4699 = vsel %vm910, %v4696, %v4698
        %4700 = vrot.lane.b32.xlu0 %v4697, 127
        %v4701 = vpop.permute.xlu0 %4700
        %4702 = vrot.lane.b32.xlu0 %v4699, 127
        %v4703 = vpop.permute.xlu0 %4702
        %v4706 = vadd.f32 %v4685, %v4701
        %v4707 = vadd.f32 %v4686, %v4703
        %s4708 = sld [smem:[#allocation15 + $0x56]]
        %v4709 = vstv %s4708
        %v4710 = vmul.f32 %v4006, %v4709
        %v4711 = vmul.f32 %v4002, %v4709
        %v4712 = vmul.f32 %v4007, %v4709
        %v4716 = vrot.slane %v4710, 5
        %v4717 = vrot.slane %v4711, 5
        %v4718 = vsel %vm910, %v4716, %v4717
        %v4719 = vrot.slane %v4712, 5
        %v4720 = vsel %vm910, %v4717, %v4719
        %4721 = vrot.lane.b32.xlu0 %v4718, 126
        %v4722 = vpop.permute.xlu0 %4721
        %4723 = vrot.lane.b32.xlu0 %v4720, 126
        %v4724 = vpop.permute.xlu0 %4723
        %v4727 = vadd.f32 %v4706, %v4722
        %v4728 = vadd.f32 %v4707, %v4724
        %s4729 = sld [smem:[#allocation15 + $0x57]]
        %v4730 = vstv %s4729
        %v4731 = vmul.f32 %v4006, %v4730
        %v4732 = vmul.f32 %v4002, %v4730
        %v4733 = vmul.f32 %v4007, %v4730
        %v4737 = vrot.slane %v4731, 5
        %v4738 = vrot.slane %v4732, 5
        %v4739 = vsel %vm910, %v4737, %v4738
        %v4740 = vrot.slane %v4733, 5
        %v4741 = vsel %vm910, %v4738, %v4740
        %4742 = vrot.lane.b32.xlu0 %v4739, 125
        %v4743 = vpop.permute.xlu0 %4742
        %4744 = vrot.lane.b32.xlu0 %v4741, 125
        %v4745 = vpop.permute.xlu0 %4744
        %v4748 = vadd.f32 %v4727, %v4743
        %v4749 = vadd.f32 %v4728, %v4745
        %s4750 = sld [smem:[#allocation15 + $0x58]]
        %v4751 = vstv %s4750
        %v4752 = vmul.f32 %v4006, %v4751
        %v4753 = vmul.f32 %v4002, %v4751
        %v4754 = vmul.f32 %v4007, %v4751
        %v4758 = vrot.slane %v4752, 5
        %v4759 = vrot.slane %v4753, 5
        %v4760 = vsel %vm910, %v4758, %v4759
        %v4761 = vrot.slane %v4754, 5
        %v4762 = vsel %vm910, %v4759, %v4761
        %4763 = vrot.lane.b32.xlu0 %v4760, 124
        %v4764 = vpop.permute.xlu0 %4763
        %4765 = vrot.lane.b32.xlu0 %v4762, 124
        %v4766 = vpop.permute.xlu0 %4765
        %v4769 = vadd.f32 %v4748, %v4764
        %v4770 = vadd.f32 %v4749, %v4766
        %s4771 = sld [smem:[#allocation15 + $0x59]]
        %v4772 = vstv %s4771
        %v4773 = vmul.f32 %v4006, %v4772
        %v4774 = vmul.f32 %v4002, %v4772
        %v4775 = vmul.f32 %v4007, %v4772
        %v4779 = vrot.slane %v4773, 5
        %v4780 = vrot.slane %v4774, 5
        %v4781 = vsel %vm910, %v4779, %v4780
        %v4782 = vrot.slane %v4775, 5
        %v4783 = vsel %vm910, %v4780, %v4782
        %4784 = vrot.lane.b32.xlu0 %v4781, 123
        %v4785 = vpop.permute.xlu0 %4784
        %4786 = vrot.lane.b32.xlu0 %v4783, 123
        %v4787 = vpop.permute.xlu0 %4786
        %v4790 = vadd.f32 %v4769, %v4785
        %v4791 = vadd.f32 %v4770, %v4787
        %s4792 = sld [smem:[#allocation15 + $0x5a]]
        %v4793 = vstv %s4792
        %v4794 = vmul.f32 %v4006, %v4793
        %v4795 = vmul.f32 %v4002, %v4793
        %v4796 = vmul.f32 %v4007, %v4793
        %v4800 = vrot.slane %v4794, 5
        %v4801 = vrot.slane %v4795, 5
        %v4802 = vsel %vm910, %v4800, %v4801
        %v4803 = vrot.slane %v4796, 5
        %v4804 = vsel %vm910, %v4801, %v4803
        %4805 = vrot.lane.b32.xlu0 %v4802, 122
        %v4806 = vpop.permute.xlu0 %4805
        %4807 = vrot.lane.b32.xlu0 %v4804, 122
        %v4808 = vpop.permute.xlu0 %4807
        %v4811 = vadd.f32 %v4790, %v4806
        %v4812 = vadd.f32 %v4791, %v4808
        %s4813 = sld [smem:[#allocation15 + $0x5b]]
        %v4814 = vstv %s4813
        %v4815 = vmul.f32 %v4006, %v4814
        %v4816 = vmul.f32 %v4002, %v4814
        %v4817 = vmul.f32 %v4007, %v4814
        %v4821 = vrot.slane %v4815, 6
        %v4822 = vrot.slane %v4816, 6
        %v4823 = vsel %vm1735, %v4821, %v4822
        %v4824 = vrot.slane %v4817, 6
        %v4825 = vsel %vm1735, %v4822, %v4824
        %v4828 = vadd.f32 %v4811, %v4823
        %v4829 = vadd.f32 %v4812, %v4825
        %s4830 = sld [smem:[#allocation15 + $0x5c]]
        %v4831 = vstv %s4830
        %v4832 = vmul.f32 %v4006, %v4831
        %v4833 = vmul.f32 %v4002, %v4831
        %v4834 = vmul.f32 %v4007, %v4831
        %v4838 = vrot.slane %v4832, 6
        %v4839 = vrot.slane %v4833, 6
        %v4840 = vsel %vm1735, %v4838, %v4839
        %v4841 = vrot.slane %v4834, 6
        %v4842 = vsel %vm1735, %v4839, %v4841
        %4843 = vrot.lane.b32.xlu0 %v4840, 127
        %v4844 = vpop.permute.xlu0 %4843
        %4845 = vrot.lane.b32.xlu0 %v4842, 127
        %v4846 = vpop.permute.xlu0 %4845
        %v4849 = vadd.f32 %v4828, %v4844
        %v4850 = vadd.f32 %v4829, %v4846
        %s4851 = sld [smem:[#allocation15 + $0x5d]]
        %v4852 = vstv %s4851
        %v4853 = vmul.f32 %v4006, %v4852
        %v4854 = vmul.f32 %v4002, %v4852
        %v4855 = vmul.f32 %v4007, %v4852
        %v4859 = vrot.slane %v4853, 6
        %v4860 = vrot.slane %v4854, 6
        %v4861 = vsel %vm1735, %v4859, %v4860
        %v4862 = vrot.slane %v4855, 6
        %v4863 = vsel %vm1735, %v4860, %v4862
        %4864 = vrot.lane.b32.xlu0 %v4861, 126
        %v4865 = vpop.permute.xlu0 %4864
        %4866 = vrot.lane.b32.xlu0 %v4863, 126
        %v4867 = vpop.permute.xlu0 %4866
        %v4870 = vadd.f32 %v4849, %v4865
        %v4871 = vadd.f32 %v4850, %v4867
        %s4872 = sld [smem:[#allocation15 + $0x5e]]
        %v4873 = vstv %s4872
        %v4874 = vmul.f32 %v4006, %v4873
        %v4875 = vmul.f32 %v4002, %v4873
        %v4876 = vmul.f32 %v4007, %v4873
        %v4880 = vrot.slane %v4874, 6
        %v4881 = vrot.slane %v4875, 6
        %v4882 = vsel %vm1735, %v4880, %v4881
        %v4883 = vrot.slane %v4876, 6
        %v4884 = vsel %vm1735, %v4881, %v4883
        %4885 = vrot.lane.b32.xlu0 %v4882, 125
        %v4886 = vpop.permute.xlu0 %4885
        %4887 = vrot.lane.b32.xlu0 %v4884, 125
        %v4888 = vpop.permute.xlu0 %4887
        %v4891 = vadd.f32 %v4870, %v4886
        %v4892 = vadd.f32 %v4871, %v4888
        %s4893 = sld [smem:[#allocation15 + $0x5f]]
        %v4894 = vstv %s4893
        %v4895 = vmul.f32 %v4006, %v4894
        %v4896 = vmul.f32 %v4002, %v4894
        %v4897 = vmul.f32 %v4007, %v4894
        %v4901 = vrot.slane %v4895, 6
        %v4902 = vrot.slane %v4896, 6
        %v4903 = vsel %vm1735, %v4901, %v4902
        %v4904 = vrot.slane %v4897, 6
        %v4905 = vsel %vm1735, %v4902, %v4904
        %4906 = vrot.lane.b32.xlu0 %v4903, 124
        %v4907 = vpop.permute.xlu0 %4906
        %4908 = vrot.lane.b32.xlu0 %v4905, 124
        %v4909 = vpop.permute.xlu0 %4908
        %v4912 = vadd.f32 %v4891, %v4907
        %v4913 = vadd.f32 %v4892, %v4909
        %s4914 = sld [smem:[#allocation15 + $0x60]]
        %v4915 = vstv %s4914
        %v4916 = vmul.f32 %v4006, %v4915
        %v4917 = vmul.f32 %v4002, %v4915
        %v4918 = vmul.f32 %v4007, %v4915
        %v4922 = vrot.slane %v4916, 6
        %v4923 = vrot.slane %v4917, 6
        %v4924 = vsel %vm1735, %v4922, %v4923
        %v4925 = vrot.slane %v4918, 6
        %v4926 = vsel %vm1735, %v4923, %v4925
        %4927 = vrot.lane.b32.xlu0 %v4924, 123
        %v4928 = vpop.permute.xlu0 %4927
        %4929 = vrot.lane.b32.xlu0 %v4926, 123
        %v4930 = vpop.permute.xlu0 %4929
        %v4933 = vadd.f32 %v4912, %v4928
        %v4934 = vadd.f32 %v4913, %v4930
        %s4935 = sld [smem:[#allocation15 + $0x61]]
        %v4936 = vstv %s4935
        %v4937 = vmul.f32 %v4006, %v4936
        %v4938 = vmul.f32 %v4002, %v4936
        %v4939 = vmul.f32 %v4007, %v4936
        %v4943 = vrot.slane %v4937, 6
        %v4944 = vrot.slane %v4938, 6
        %v4945 = vsel %vm1735, %v4943, %v4944
        %v4946 = vrot.slane %v4939, 6
        %v4947 = vsel %vm1735, %v4944, %v4946
        %4948 = vrot.lane.b32.xlu0 %v4945, 122
        %v4949 = vpop.permute.xlu0 %4948
        %4950 = vrot.lane.b32.xlu0 %v4947, 122
        %v4951 = vpop.permute.xlu0 %4950
        %v4954 = vadd.f32 %v4933, %v4949
        %v4955 = vadd.f32 %v4934, %v4951
        %vm4956 = vcmask 130048
        %v4958 = vsel %vm4956, %v696, 0
        %4960 = vmatprep.subr.mxu0 0.0
        %4961 = vmatpush1.msra.mxu0 %v2845
        %4962 = vmatprep.subr.mxu0 0.0
        %4963 = vmatpush1.msra.mxu0 %v2846
        %4964 = vmatprep.subr.mxu0 0.0
        %4965 = vmatpush1.msra.mxu0 0.0
        %4966 = vmatprep.subr.mxu0 0.0
        %4967 = vmatpush1.msra.mxu0 0.0
        %4968 = vmatprep.subr.mxu0 0.0
        %4969 = vmatpush1.msra.mxu0 0.0
        %4970 = vmatprep.subr.mxu0 0.0
        %4971 = vmatpush1.msra.mxu0 0.0
        %4972 = vmatprep.subr.mxu0 0.0
        %4973 = vmatpush1.msra.mxu0 0.0
        %4974 = vmatprep.subr.mxu0 0.0
        %4975 = vmatpush1.msra.mxu0 0.0
        %4976 = vmatprep.subr.mxu0 0.0
        %4977 = vmatpush1.msra.mxu0 0.0
        %4978 = vmatprep.subr.mxu0 0.0
        %4979 = vmatpush1.msra.mxu0 0.0
        %4980 = vmatprep.subr.mxu0 0.0
        %4981 = vmatpush1.msra.mxu0 0.0
        %4982 = vmatprep.subr.mxu0 0.0
        %4983 = vmatpush1.msra.mxu0 0.0
        %4984 = vmatprep.subr.mxu0 0.0
        %4985 = vmatpush1.msra.mxu0 0.0
        %4986 = vmatprep.subr.mxu0 0.0
        %4987 = vmatpush1.msra.mxu0 0.0
        %4988 = vmatprep.subr.mxu0 0.0
        %4989 = vmatpush1.msra.mxu0 0.0
        %4990 = vmatprep.subr.mxu0 0.0
        %4991 = vmatpush1.msra.mxu0 0.0
        %4992 = vmatprep.subr.mxu0 0.0
        %4993 = vmatpush1.msra.mxu0 0.0
        %4994 = vmatprep.subr.mxu0 0.0
        %4995 = vmatpush1.msra.mxu0 0.0
        %4996 = vmatprep.subr.mxu0 0.0
        %4997 = vmatpush1.msra.mxu0 0.0
        %4998 = vmatprep.subr.mxu0 0.0
        %4999 = vmatpush1.msra.mxu0 0.0
        %5000 = vmatprep.subr.mxu0 0.0
        %5001 = vmatpush1.msra.mxu0 0.0
        %5002 = vmatprep.subr.mxu0 0.0
        %5003 = vmatpush1.msra.mxu0 0.0
        %5004 = vmatprep.subr.mxu0 0.0
        %5005 = vmatpush1.msra.mxu0 0.0
        %5006 = vmatprep.subr.mxu0 0.0
        %5007 = vmatpush1.msra.mxu0 0.0
        %5008 = vmatprep.subr.mxu0 0.0
        %5009 = vmatpush1.msra.mxu0 0.0
        %5010 = vmatprep.subr.mxu0 0.0
        %5011 = vmatpush1.msra.mxu0 0.0
        %5012 = vmatprep.subr.mxu0 0.0
        %5013 = vmatpush1.msra.mxu0 0.0
        %5014 = vmatprep.subr.mxu0 0.0
        %5015 = vmatpush1.msra.mxu0 0.0
        %5016 = vmatprep.subr.mxu0 0.0
        %5017 = vmatpush1.msra.mxu0 0.0
        %5018 = vmatprep.subr.mxu0 0.0
        %5019 = vmatpush1.msra.mxu0 0.0
        %5020 = vmatprep.subr.mxu0 0.0
        %5021 = vmatpush1.msra.mxu0 0.0
        %5022 = vmatprep.subr.mxu0 0.0
        %5023 = vmatpush1.msra.mxu0 0.0
        %5024 = vmatprep.mubr.f32.mxu0 0.0
        %5025 = vmatmul.mubr.f32.gmra.mrb[0].mxu0 %v4958
        %v5026 = vpop.f32.mrb[0].mxu0
        %v5027 = vadd.f32 0.0, %v5026
        %v5028 = vpop.f32.mrb[0].mxu0
        %5029 = vdwg.mxu0
        %vm5030 = vcmask 162816
        %v5032 = vsel %vm5030, %v5027, 0
        %v5035 = vsel %vm1448, %v701, 0
        %5037 = vmatprep.subr.mxu0 0.0
        %5038 = vmatpush1.msra.mxu0 %v699
        %5039 = vmatprep.subr.mxu0 0.0
        %5040 = vmatpush1.msra.mxu0 %v700
        %5041 = vmatprep.subr.mxu0 0.0
        %5042 = vmatpush1.msra.mxu0 %v5035
        %5043 = vmatprep.subr.mxu0 0.0
        %5044 = vmatpush1.msra.mxu0 0.0
        %5045 = vmatprep.subr.mxu0 0.0
        %5046 = vmatpush1.msra.mxu0 0.0
        %5047 = vmatprep.subr.mxu0 0.0
        %5048 = vmatpush1.msra.mxu0 0.0
        %5049 = vmatprep.subr.mxu0 0.0
        %5050 = vmatpush1.msra.mxu0 0.0
        %5051 = vmatprep.subr.mxu0 0.0
        %5052 = vmatpush1.msra.mxu0 0.0
        %5053 = vmatprep.subr.mxu0 0.0
        %5054 = vmatpush1.msra.mxu0 0.0
        %5055 = vmatprep.subr.mxu0 0.0
        %5056 = vmatpush1.msra.mxu0 0.0
        %5057 = vmatprep.subr.mxu0 0.0
        %5058 = vmatpush1.msra.mxu0 0.0
        %5059 = vmatprep.subr.mxu0 0.0
        %5060 = vmatpush1.msra.mxu0 0.0
        %5061 = vmatprep.subr.mxu0 0.0
        %5062 = vmatpush1.msra.mxu0 0.0
        %5063 = vmatprep.subr.mxu0 0.0
        %5064 = vmatpush1.msra.mxu0 0.0
        %5065 = vmatprep.subr.mxu0 0.0
        %5066 = vmatpush1.msra.mxu0 0.0
        %5067 = vmatprep.subr.mxu0 0.0
        %5068 = vmatpush1.msra.mxu0 0.0
        %5069 = vmatprep.subr.mxu0 0.0
        %5070 = vmatpush1.msra.mxu0 0.0
        %5071 = vmatprep.subr.mxu0 0.0
        %5072 = vmatpush1.msra.mxu0 0.0
        %5073 = vmatprep.subr.mxu0 0.0
        %5074 = vmatpush1.msra.mxu0 0.0
        %5075 = vmatprep.subr.mxu0 0.0
        %5076 = vmatpush1.msra.mxu0 0.0
        %5077 = vmatprep.subr.mxu0 0.0
        %5078 = vmatpush1.msra.mxu0 0.0
        %5079 = vmatprep.subr.mxu0 0.0
        %5080 = vmatpush1.msra.mxu0 0.0
        %5081 = vmatprep.subr.mxu0 0.0
        %5082 = vmatpush1.msra.mxu0 0.0
        %5083 = vmatprep.subr.mxu0 0.0
        %5084 = vmatpush1.msra.mxu0 0.0
        %5085 = vmatprep.subr.mxu0 0.0
        %5086 = vmatpush1.msra.mxu0 0.0
        %5087 = vmatprep.subr.mxu0 0.0
        %5088 = vmatpush1.msra.mxu0 0.0
        %5089 = vmatprep.subr.mxu0 0.0
        %5090 = vmatpush1.msra.mxu0 0.0
        %5091 = vmatprep.subr.mxu0 0.0
        %5092 = vmatpush1.msra.mxu0 0.0
        %5093 = vmatprep.subr.mxu0 0.0
        %5094 = vmatpush1.msra.mxu0 0.0
        %5095 = vmatprep.subr.mxu0 0.0
        %5096 = vmatpush1.msra.mxu0 0.0
        %5097 = vmatprep.subr.mxu0 0.0
        %5098 = vmatpush1.msra.mxu0 0.0
        %5099 = vmatprep.subr.mxu0 0.0
        %5100 = vmatpush1.msra.mxu0 0.0
        %5101 = vmatprep.mubr.f32.mxu0 0.0
        %5102 = vmatmul.mubr.f32.gmra.mrb[0].mxu0 %v5032
        %v5103 = vpop.f32.mrb[0].mxu0
        %v5104 = vadd.f32 0.0, %v5103
        %v5105 = vpop.f32.mrb[0].mxu0
        %5106 = vdwg.mxu0
        %v5107 = vmul.f32 %v5104, 0.0625
        %vm5108 = vcmask 31744
        %v5110 = vsel %vm5108, %v697, 0
        %v5113 = vsel %vm5108, %v698, 0
        %v5116 = vsel %vm1448, %v5107, 0
        %5118 = vmatprep.subr.mxu0 0.0
        %5119 = vmatpush1.msra.mxu0 %v5116
        %5120 = vmatprep.subr.mxu0 0.0
        %5121 = vmatpush1.msra.mxu0 0.0
        %5122 = vmatprep.subr.mxu0 0.0
        %5123 = vmatpush1.msra.mxu0 0.0
        %5124 = vmatprep.subr.mxu0 0.0
        %5125 = vmatpush1.msra.mxu0 0.0
        %5126 = vmatprep.subr.mxu0 0.0
        %5127 = vmatpush1.msra.mxu0 0.0
        %5128 = vmatprep.subr.mxu0 0.0
        %5129 = vmatpush1.msra.mxu0 0.0
        %5130 = vmatprep.subr.mxu0 0.0
        %5131 = vmatpush1.msra.mxu0 0.0
        %5132 = vmatprep.subr.mxu0 0.0
        %5133 = vmatpush1.msra.mxu0 0.0
        %5134 = vmatprep.subr.mxu0 0.0
        %5135 = vmatpush1.msra.mxu0 0.0
        %5136 = vmatprep.subr.mxu0 0.0
        %5137 = vmatpush1.msra.mxu0 0.0
        %5138 = vmatprep.subr.mxu0 0.0
        %5139 = vmatpush1.msra.mxu0 0.0
        %5140 = vmatprep.subr.mxu0 0.0
        %5141 = vmatpush1.msra.mxu0 0.0
        %5142 = vmatprep.subr.mxu0 0.0
        %5143 = vmatpush1.msra.mxu0 0.0
        %5144 = vmatprep.subr.mxu0 0.0
        %5145 = vmatpush1.msra.mxu0 0.0
        %5146 = vmatprep.subr.mxu0 0.0
        %5147 = vmatpush1.msra.mxu0 0.0
        %5148 = vmatprep.subr.mxu0 0.0
        %5149 = vmatpush1.msra.mxu0 0.0
        %5150 = vmatprep.subr.mxu0 0.0
        %5151 = vmatpush1.msra.mxu0 0.0
        %5152 = vmatprep.subr.mxu0 0.0
        %5153 = vmatpush1.msra.mxu0 0.0
        %5154 = vmatprep.subr.mxu0 0.0
        %5155 = vmatpush1.msra.mxu0 0.0
        %5156 = vmatprep.subr.mxu0 0.0
        %5157 = vmatpush1.msra.mxu0 0.0
        %5158 = vmatprep.subr.mxu0 0.0
        %5159 = vmatpush1.msra.mxu0 0.0
        %5160 = vmatprep.subr.mxu0 0.0
        %5161 = vmatpush1.msra.mxu0 0.0
        %5162 = vmatprep.subr.mxu0 0.0
        %5163 = vmatpush1.msra.mxu0 0.0
        %5164 = vmatprep.subr.mxu0 0.0
        %5165 = vmatpush1.msra.mxu0 0.0
        %5166 = vmatprep.subr.mxu0 0.0
        %5167 = vmatpush1.msra.mxu0 0.0
        %5168 = vmatprep.subr.mxu0 0.0
        %5169 = vmatpush1.msra.mxu0 0.0
        %5170 = vmatprep.subr.mxu0 0.0
        %5171 = vmatpush1.msra.mxu0 0.0
        %5172 = vmatprep.subr.mxu0 0.0
        %5173 = vmatpush1.msra.mxu0 0.0
        %5174 = vmatprep.subr.mxu0 0.0
        %5175 = vmatpush1.msra.mxu0 0.0
        %5176 = vmatprep.subr.mxu0 0.0
        %5177 = vmatpush1.msra.mxu0 0.0
        %5178 = vmatprep.subr.mxu0 0.0
        %5179 = vmatpush1.msra.mxu0 0.0
        %5180 = vmatprep.subr.mxu0 0.0
        %5181 = vmatpush1.msra.mxu0 0.0
        %5182 = vmatprep.mubr.f32.mxu0 0.0
        %5183 = vmatmul.mubr.f32.gmra.mrb[0].mxu0 %v5110
        %v5184 = vpop.f32.mrb[0].mxu0
        %v5185 = vadd.f32 0.0, %v5184
        %v5186 = vpop.f32.mrb[0].mxu0
        %5187 = vmatprep.mubr.f32.mxu0 0.0
        %5188 = vmatmul.mubr.f32.gmra.mrb[0].mxu0 %v5113
        %v5189 = vpop.f32.mrb[0].mxu0
        %v5190 = vadd.f32 0.0, %v5189
        %v5191 = vpop.f32.mrb[0].mxu0
        %5192 = vdwg.mxu0
        %vm5193 = vcmask 39936
        %v5195 = vsel %vm5193, %v5185, 0
        %v5198 = vsel %vm5193, %v5190, 0
        %v5201 = vsel %vm1304, %v702, 0
        %5203 = vmatprep.subr.mxu0 0.0
        %5204 = vmatpush1.msra.mxu0 %v5201
        %5205 = vmatprep.subr.mxu0 0.0
        %5206 = vmatpush1.msra.mxu0 0.0
        %5207 = vmatprep.subr.mxu0 0.0
        %5208 = vmatpush1.msra.mxu0 0.0
        %5209 = vmatprep.subr.mxu0 0.0
        %5210 = vmatpush1.msra.mxu0 0.0
        %5211 = vmatprep.subr.mxu0 0.0
        %5212 = vmatpush1.msra.mxu0 0.0
        %5213 = vmatprep.subr.mxu0 0.0
        %5214 = vmatpush1.msra.mxu0 0.0
        %5215 = vmatprep.subr.mxu0 0.0
        %5216 = vmatpush1.msra.mxu0 0.0
        %5217 = vmatprep.subr.mxu0 0.0
        %5218 = vmatpush1.msra.mxu0 0.0
        %5219 = vmatprep.subr.mxu0 0.0
        %5220 = vmatpush1.msra.mxu0 0.0
        %5221 = vmatprep.subr.mxu0 0.0
        %5222 = vmatpush1.msra.mxu0 0.0
        %5223 = vmatprep.subr.mxu0 0.0
        %5224 = vmatpush1.msra.mxu0 0.0
        %5225 = vmatprep.subr.mxu0 0.0
        %5226 = vmatpush1.msra.mxu0 0.0
        %5227 = vmatprep.subr.mxu0 0.0
        %5228 = vmatpush1.msra.mxu0 0.0
        %5229 = vmatprep.subr.mxu0 0.0
        %5230 = vmatpush1.msra.mxu0 0.0
        %5231 = vmatprep.subr.mxu0 0.0
        %5232 = vmatpush1.msra.mxu0 0.0
        %5233 = vmatprep.subr.mxu0 0.0
        %5234 = vmatpush1.msra.mxu0 0.0
        %5235 = vmatprep.subr.mxu0 0.0
        %5236 = vmatpush1.msra.mxu0 0.0
        %5237 = vmatprep.subr.mxu0 0.0
        %5238 = vmatpush1.msra.mxu0 0.0
        %5239 = vmatprep.subr.mxu0 0.0
        %5240 = vmatpush1.msra.mxu0 0.0
        %5241 = vmatprep.subr.mxu0 0.0
        %5242 = vmatpush1.msra.mxu0 0.0
        %5243 = vmatprep.subr.mxu0 0.0
        %5244 = vmatpush1.msra.mxu0 0.0
        %5245 = vmatprep.subr.mxu0 0.0
        %5246 = vmatpush1.msra.mxu0 0.0
        %5247 = vmatprep.subr.mxu0 0.0
        %5248 = vmatpush1.msra.mxu0 0.0
        %5249 = vmatprep.subr.mxu0 0.0
        %5250 = vmatpush1.msra.mxu0 0.0
        %5251 = vmatprep.subr.mxu0 0.0
        %5252 = vmatpush1.msra.mxu0 0.0
        %5253 = vmatprep.subr.mxu0 0.0
        %5254 = vmatpush1.msra.mxu0 0.0
        %5255 = vmatprep.subr.mxu0 0.0
        %5256 = vmatpush1.msra.mxu0 0.0
        %5257 = vmatprep.subr.mxu0 0.0
        %5258 = vmatpush1.msra.mxu0 0.0
        %5259 = vmatprep.subr.mxu0 0.0
        %5260 = vmatpush1.msra.mxu0 0.0
        %5261 = vmatprep.subr.mxu0 0.0
        %5262 = vmatpush1.msra.mxu0 0.0
        %5263 = vmatprep.subr.mxu0 0.0
        %5264 = vmatpush1.msra.mxu0 0.0
        %5265 = vmatprep.subr.mxu0 0.0
        %5266 = vmatpush1.msra.mxu0 0.0
        %5267 = vmatprep.mubr.f32.mxu0 0.0
        %5268 = vmatmul.mubr.f32.gmra.mrb[0].mxu0 %v5195
        %v5269 = vpop.f32.mrb[0].mxu0
        %v5270 = vadd.f32 0.0, %v5269
        %v5271 = vpop.f32.mrb[0].mxu0
        %5272 = vmatprep.mubr.f32.mxu0 0.0
        %5273 = vmatmul.mubr.f32.gmra.mrb[0].mxu0 %v5198
        %v5274 = vpop.f32.mrb[0].mxu0
        %v5275 = vadd.f32 0.0, %v5274
        %v5276 = vpop.f32.mrb[0].mxu0
        %5277 = vdwg.mxu0
        %v5278 = vsub.f32 %v2845, %v5270
        %v5279 = vsub.f32 %v2846, %v5275
        %v5280 = vmul.f32 %v5278, %v5278
        %v5281 = vmul.f32 %v5279, %v5279
        %5282 = vmatprep.subr.mxu0 0.0
        %5283 = vmatpush1.msra.mxu0 %v5280
        %5284 = vmatprep.subr.mxu0 0.0
        %5285 = vmatpush1.msra.mxu0 %v5281
        %5286 = vmatprep.subr.mxu0 0.0
        %5287 = vmatpush1.msra.mxu0 0.0
        %5288 = vmatprep.subr.mxu0 0.0
        %5289 = vmatpush1.msra.mxu0 0.0
        %5290 = vmatprep.subr.mxu0 0.0
        %5291 = vmatpush1.msra.mxu0 0.0
        %5292 = vmatprep.subr.mxu0 0.0
        %5293 = vmatpush1.msra.mxu0 0.0
        %5294 = vmatprep.subr.mxu0 0.0
        %5295 = vmatpush1.msra.mxu0 0.0
        %5296 = vmatprep.subr.mxu0 0.0
        %5297 = vmatpush1.msra.mxu0 0.0
        %5298 = vmatprep.subr.mxu0 0.0
        %5299 = vmatpush1.msra.mxu0 0.0
        %5300 = vmatprep.subr.mxu0 0.0
        %5301 = vmatpush1.msra.mxu0 0.0
        %5302 = vmatprep.subr.mxu0 0.0
        %5303 = vmatpush1.msra.mxu0 0.0
        %5304 = vmatprep.subr.mxu0 0.0
        %5305 = vmatpush1.msra.mxu0 0.0
        %5306 = vmatprep.subr.mxu0 0.0
        %5307 = vmatpush1.msra.mxu0 0.0
        %5308 = vmatprep.subr.mxu0 0.0
        %5309 = vmatpush1.msra.mxu0 0.0
        %5310 = vmatprep.subr.mxu0 0.0
        %5311 = vmatpush1.msra.mxu0 0.0
        %5312 = vmatprep.subr.mxu0 0.0
        %5313 = vmatpush1.msra.mxu0 0.0
        %5314 = vmatprep.subr.mxu0 0.0
        %5315 = vmatpush1.msra.mxu0 0.0
        %5316 = vmatprep.subr.mxu0 0.0
        %5317 = vmatpush1.msra.mxu0 0.0
        %5318 = vmatprep.subr.mxu0 0.0
        %5319 = vmatpush1.msra.mxu0 0.0
        %5320 = vmatprep.subr.mxu0 0.0
        %5321 = vmatpush1.msra.mxu0 0.0
        %5322 = vmatprep.subr.mxu0 0.0
        %5323 = vmatpush1.msra.mxu0 0.0
        %5324 = vmatprep.subr.mxu0 0.0
        %5325 = vmatpush1.msra.mxu0 0.0
        %5326 = vmatprep.subr.mxu0 0.0
        %5327 = vmatpush1.msra.mxu0 0.0
        %5328 = vmatprep.subr.mxu0 0.0
        %5329 = vmatpush1.msra.mxu0 0.0
        %5330 = vmatprep.subr.mxu0 0.0
        %5331 = vmatpush1.msra.mxu0 0.0
        %5332 = vmatprep.subr.mxu0 0.0
        %5333 = vmatpush1.msra.mxu0 0.0
        %5334 = vmatprep.subr.mxu0 0.0
        %5335 = vmatpush1.msra.mxu0 0.0
        %5336 = vmatprep.subr.mxu0 0.0
        %5337 = vmatpush1.msra.mxu0 0.0
        %5338 = vmatprep.subr.mxu0 0.0
        %5339 = vmatpush1.msra.mxu0 0.0
        %5340 = vmatprep.subr.mxu0 0.0
        %5341 = vmatpush1.msra.mxu0 0.0
        %5342 = vmatprep.subr.mxu0 0.0
        %5343 = vmatpush1.msra.mxu0 0.0
        %5344 = vmatprep.subr.mxu0 0.0
        %5345 = vmatpush1.msra.mxu0 0.0
        %5346 = vmatprep.mubr.f32.mxu0 0.0
        %5347 = vmatmul.mubr.f32.gmra.mrb[0].mxu0 %v4958
        %v5348 = vpop.f32.mrb[0].mxu0
        %v5349 = vadd.f32 0.0, %v5348
        %v5350 = vpop.f32.mrb[0].mxu0
        %5351 = vdwg.mxu0
        %v5353 = vsel %vm5030, %v5349, 0
        %5355 = vmatprep.subr.mxu0 0.0
        %5356 = vmatpush1.msra.mxu0 %v699
        %5357 = vmatprep.subr.mxu0 0.0
        %5358 = vmatpush1.msra.mxu0 %v700
        %5359 = vmatprep.subr.mxu0 0.0
        %5360 = vmatpush1.msra.mxu0 %v5035
        %5361 = vmatprep.subr.mxu0 0.0
        %5362 = vmatpush1.msra.mxu0 0.0
        %5363 = vmatprep.subr.mxu0 0.0
        %5364 = vmatpush1.msra.mxu0 0.0
        %5365 = vmatprep.subr.mxu0 0.0
        %5366 = vmatpush1.msra.mxu0 0.0
        %5367 = vmatprep.subr.mxu0 0.0
        %5368 = vmatpush1.msra.mxu0 0.0
        %5369 = vmatprep.subr.mxu0 0.0
        %5370 = vmatpush1.msra.mxu0 0.0
        %5371 = vmatprep.subr.mxu0 0.0
        %5372 = vmatpush1.msra.mxu0 0.0
        %5373 = vmatprep.subr.mxu0 0.0
        %5374 = vmatpush1.msra.mxu0 0.0
        %5375 = vmatprep.subr.mxu0 0.0
        %5376 = vmatpush1.msra.mxu0 0.0
        %5377 = vmatprep.subr.mxu0 0.0
        %5378 = vmatpush1.msra.mxu0 0.0
        %5379 = vmatprep.subr.mxu0 0.0
        %5380 = vmatpush1.msra.mxu0 0.0
        %5381 = vmatprep.subr.mxu0 0.0
        %5382 = vmatpush1.msra.mxu0 0.0
        %5383 = vmatprep.subr.mxu0 0.0
        %5384 = vmatpush1.msra.mxu0 0.0
        %5385 = vmatprep.subr.mxu0 0.0
        %5386 = vmatpush1.msra.mxu0 0.0
        %5387 = vmatprep.subr.mxu0 0.0
        %5388 = vmatpush1.msra.mxu0 0.0
        %5389 = vmatprep.subr.mxu0 0.0
        %5390 = vmatpush1.msra.mxu0 0.0
        %5391 = vmatprep.subr.mxu0 0.0
        %5392 = vmatpush1.msra.mxu0 0.0
        %5393 = vmatprep.subr.mxu0 0.0
        %5394 = vmatpush1.msra.mxu0 0.0
        %5395 = vmatprep.subr.mxu0 0.0
        %5396 = vmatpush1.msra.mxu0 0.0
        %5397 = vmatprep.subr.mxu0 0.0
        %5398 = vmatpush1.msra.mxu0 0.0
        %5399 = vmatprep.subr.mxu0 0.0
        %5400 = vmatpush1.msra.mxu0 0.0
        %5401 = vmatprep.subr.mxu0 0.0
        %5402 = vmatpush1.msra.mxu0 0.0
        %5403 = vmatprep.subr.mxu0 0.0
        %5404 = vmatpush1.msra.mxu0 0.0
        %5405 = vmatprep.subr.mxu0 0.0
        %5406 = vmatpush1.msra.mxu0 0.0
        %5407 = vmatprep.subr.mxu0 0.0
        %5408 = vmatpush1.msra.mxu0 0.0
        %5409 = vmatprep.subr.mxu0 0.0
        %5410 = vmatpush1.msra.mxu0 0.0
        %5411 = vmatprep.subr.mxu0 0.0
        %5412 = vmatpush1.msra.mxu0 0.0
        %5413 = vmatprep.subr.mxu0 0.0
        %5414 = vmatpush1.msra.mxu0 0.0
        %5415 = vmatprep.subr.mxu0 0.0
        %5416 = vmatpush1.msra.mxu0 0.0
        %5417 = vmatprep.subr.mxu0 0.0
        %5418 = vmatpush1.msra.mxu0 0.0
        %5419 = vmatprep.mubr.f32.mxu0 0.0
        %5420 = vmatmul.mubr.f32.gmra.mrb[0].mxu0 %v5353
        %v5421 = vpop.f32.mrb[0].mxu0
        %v5422 = vadd.f32 0.0, %v5421
        %v5423 = vpop.f32.mrb[0].mxu0
        %5424 = vdwg.mxu0
        %v5425 = vmul.f32 %v5422, 0.06666667
        %v5426 = vmax.f32 %v5425, 0.0
        %v5427 = vrsqrt.pop %v5426
        %v5428 = vmul.f32 %v5426, %v5427
        %vm5429 = vcmp.eq.f32.partialorder %v5426, inf
        %v5430 = vsel %vm5429, %v5426, %v5428
        %vm5431 = vcmp.eq.f32.partialorder %v5426, 0.0
        %v5432 = vand.u32 %v5426, 2147483648
        %v5433 = vsel %vm5431, %v5432, %v5430
        %5436 = vrot.lane.b32.xlu0 %v2845, 109
        %v5437 = vpop.permute.xlu0 %5436
        %5438 = vrot.lane.b32.xlu0 %v2846, 109
        %v5439 = vpop.permute.xlu0 %5438
        %5442 = vrot.lane.b32.xlu0 %v2845, 1
        %v5443 = vpop.permute.xlu0 %5442
        %5444 = vrot.lane.b32.xlu0 %v2846, 1
        %v5445 = vpop.permute.xlu0 %5444
        %vm5448 = vcmask 7168
        %v5449 = vsel %vm5448, %v5437, %v5443
        %v5450 = vsel %vm5448, %v5439, %v5445
        %5451 = vrot.lane.b32.xlu0 %v2845, 127
        %v5452 = vpop.permute.xlu0 %5451
        %5453 = vrot.lane.b32.xlu0 %v2846, 127
        %v5454 = vpop.permute.xlu0 %5453
        %5457 = vrot.lane.b32.xlu0 %v2845, 19
        %v5458 = vpop.permute.xlu0 %5457
        %5459 = vrot.lane.b32.xlu0 %v2846, 19
        %v5460 = vpop.permute.xlu0 %5459
        %vm5463 = vcmask 154624
        %v5464 = vsel %vm5463, %v5452, %v5458
        %v5465 = vsel %vm5463, %v5454, %v5460
        %v5466 = vsel %vm724, %v5464, %v5449
        %v5467 = vsel %vm724, %v5465, %v5450
        %v5468 = vsel %vm725, %v5449, %v5464
        %v5469 = vsel %vm725, %v5450, %v5465
        %v5470 = vrot.slane %v2846, 7
        %vm5472 = vcmask 1040384
        %v5473 = vrot.slane %v2845, 7
        %v5474 = vsel %vm5472, %v5473, %v5470
        %v5477 = vsel %vm5472, %v5470, %v5473
        %v5478 = vrot.slane %v2845, 1
        %v5479 = vrot.slane %v2846, 1
        %v5480 = vsel %vm1017, %v5478, %v5479
        %v5484 = vsel %vm1017, %v5479, %v5478
        %v5485 = vsel %vm726, %v5480, %v5477
        %v5486 = vsel %vm727, %v5484, %v5474
        %v5487 = vsel %vm728, %v5477, %v5480
        %v5488 = vsel %vm729, %v5474, %v5484
        %v5490 = vrot.slane %v5467, 7
        %v5493 = vrot.slane %v5466, 7
        %v5494 = vsel %vm5472, %v5493, %v5490
        %v5497 = vsel %vm5472, %v5490, %v5493
        %v5498 = vrot.slane %v5466, 1
        %v5499 = vrot.slane %v5467, 1
        %v5500 = vsel %vm1017, %v5498, %v5499
        %v5504 = vsel %vm1017, %v5499, %v5498
        %v5505 = vsel %vm726, %v5500, %v5497
        %v5506 = vsel %vm727, %v5504, %v5494
        %v5507 = vsel %vm728, %v5497, %v5500
        %v5508 = vsel %vm729, %v5494, %v5504
        %v5510 = vrot.slane %v5469, 7
        %v5513 = vrot.slane %v5468, 7
        %v5514 = vsel %vm5472, %v5513, %v5510
        %v5517 = vsel %vm5472, %v5510, %v5513
        %v5518 = vrot.slane %v5468, 1
        %v5519 = vrot.slane %v5469, 1
        %v5520 = vsel %vm1017, %v5518, %v5519
        %v5524 = vsel %vm1017, %v5519, %v5518
        %v5525 = vsel %vm726, %v5520, %v5517
        %v5526 = vsel %vm727, %v5524, %v5514
        %v5527 = vsel %vm728, %v5517, %v5520
        %v5528 = vsel %vm729, %v5514, %v5524
        %v5529 = vsub.f32 0.0, %v5505
        %v5530 = vsub.f32 0.0, %v5506
        %v5531 = vadd.f32 %v5529, %v5525
        %v5532 = vadd.f32 %v5530, %v5526
        %v5533 = vmul.f32 %v5466, 2.0
        %v5534 = vmul.f32 %v5467, 2.0
        %v5535 = vsub.f32 %v5531, %v5533
        %v5536 = vsub.f32 %v5532, %v5534
        %v5537 = vmul.f32 %v5468, 2.0
        %v5538 = vmul.f32 %v5469, 2.0
        %v5539 = vadd.f32 %v5535, %v5537
        %v5540 = vadd.f32 %v5536, %v5538
        %v5541 = vsub.f32 %v5539, %v5507
        %v5542 = vsub.f32 %v5540, %v5508
        %v5543 = vadd.f32 %v5541, %v5527
        %v5544 = vadd.f32 %v5542, %v5528
        %v5545 = vmul.f32 %v5485, 2.0
        %v5546 = vmul.f32 %v5486, 2.0
        %v5547 = vsub.f32 %v5529, %v5545
        %v5548 = vsub.f32 %v5530, %v5546
        %v5549 = vsub.f32 %v5547, %v5525
        %v5550 = vsub.f32 %v5548, %v5526
        %v5551 = vadd.f32 %v5549, %v5507
        %v5552 = vadd.f32 %v5550, %v5508
        %v5553 = vmul.f32 %v5487, 2.0
        %v5554 = vmul.f32 %v5488, 2.0
        %v5555 = vadd.f32 %v5551, %v5553
        %v5556 = vadd.f32 %v5552, %v5554
        %v5557 = vadd.f32 %v5555, %v5527
        %v5558 = vadd.f32 %v5556, %v5528
        %v5559 = vand.u32 2147483647, %v5543
        %v5560 = vand.u32 2147483647, %v5544
        %v5561 = vand.u32 2147483647, %v5557
        %v5562 = vand.u32 2147483647, %v5558
        %v5563 = vadd.f32 %v5559, %v5561
        %v5564 = vadd.f32 %v5560, %v5562
        %5565 = vmatprep.subr.mxu0 0.0
        %5566 = vmatpush1.msra.mxu0 %v5563
        %5567 = vmatprep.subr.mxu0 0.0
        %5568 = vmatpush1.msra.mxu0 %v5564
        %5569 = vmatprep.subr.mxu0 0.0
        %5570 = vmatpush1.msra.mxu0 0.0
        %5571 = vmatprep.subr.mxu0 0.0
        %5572 = vmatpush1.msra.mxu0 0.0
        %5573 = vmatprep.subr.mxu0 0.0
        %5574 = vmatpush1.msra.mxu0 0.0
        %5575 = vmatprep.subr.mxu0 0.0
        %5576 = vmatpush1.msra.mxu0 0.0
        %5577 = vmatprep.subr.mxu0 0.0
        %5578 = vmatpush1.msra.mxu0 0.0
        %5579 = vmatprep.subr.mxu0 0.0
        %5580 = vmatpush1.msra.mxu0 0.0
        %5581 = vmatprep.subr.mxu0 0.0
        %5582 = vmatpush1.msra.mxu0 0.0
        %5583 = vmatprep.subr.mxu0 0.0
        %5584 = vmatpush1.msra.mxu0 0.0
        %5585 = vmatprep.subr.mxu0 0.0
        %5586 = vmatpush1.msra.mxu0 0.0
        %5587 = vmatprep.subr.mxu0 0.0
        %5588 = vmatpush1.msra.mxu0 0.0
        %5589 = vmatprep.subr.mxu0 0.0
        %5590 = vmatpush1.msra.mxu0 0.0
        %5591 = vmatprep.subr.mxu0 0.0
        %5592 = vmatpush1.msra.mxu0 0.0
        %5593 = vmatprep.subr.mxu0 0.0
        %5594 = vmatpush1.msra.mxu0 0.0
        %5595 = vmatprep.subr.mxu0 0.0
        %5596 = vmatpush1.msra.mxu0 0.0
        %5597 = vmatprep.subr.mxu0 0.0
        %5598 = vmatpush1.msra.mxu0 0.0
        %5599 = vmatprep.subr.mxu0 0.0
        %5600 = vmatpush1.msra.mxu0 0.0
        %5601 = vmatprep.subr.mxu0 0.0
        %5602 = vmatpush1.msra.mxu0 0.0
        %5603 = vmatprep.subr.mxu0 0.0
        %5604 = vmatpush1.msra.mxu0 0.0
        %5605 = vmatprep.subr.mxu0 0.0
        %5606 = vmatpush1.msra.mxu0 0.0
        %5607 = vmatprep.subr.mxu0 0.0
        %5608 = vmatpush1.msra.mxu0 0.0
        %5609 = vmatprep.subr.mxu0 0.0
        %5610 = vmatpush1.msra.mxu0 0.0
        %5611 = vmatprep.subr.mxu0 0.0
        %5612 = vmatpush1.msra.mxu0 0.0
        %5613 = vmatprep.subr.mxu0 0.0
        %5614 = vmatpush1.msra.mxu0 0.0
        %5615 = vmatprep.subr.mxu0 0.0
        %5616 = vmatpush1.msra.mxu0 0.0
        %5617 = vmatprep.subr.mxu0 0.0
        %5618 = vmatpush1.msra.mxu0 0.0
        %5619 = vmatprep.subr.mxu0 0.0
        %5620 = vmatpush1.msra.mxu0 0.0
        %5621 = vmatprep.subr.mxu0 0.0
        %5622 = vmatpush1.msra.mxu0 0.0
        %5623 = vmatprep.subr.mxu0 0.0
        %5624 = vmatpush1.msra.mxu0 0.0
        %5625 = vmatprep.subr.mxu0 0.0
        %5626 = vmatpush1.msra.mxu0 0.0
        %5627 = vmatprep.subr.mxu0 0.0
        %5628 = vmatpush1.msra.mxu0 0.0
        %5629 = vmatprep.mubr.f32.mxu0 0.0
        %5630 = vmatmul.mubr.f32.gmra.mrb[0].mxu0 %v4958
        %v5631 = vpop.f32.mrb[0].mxu0
        %v5632 = vadd.f32 0.0, %v5631
        %v5633 = vpop.f32.mrb[0].mxu0
        %5634 = vdwg.mxu0
        %v5636 = vsel %vm5030, %v5632, 0
        %5638 = vmatprep.subr.mxu0 0.0
        %5639 = vmatpush1.msra.mxu0 %v699
        %5640 = vmatprep.subr.mxu0 0.0
        %5641 = vmatpush1.msra.mxu0 %v700
        %5642 = vmatprep.subr.mxu0 0.0
        %5643 = vmatpush1.msra.mxu0 %v5035
        %5644 = vmatprep.subr.mxu0 0.0
        %5645 = vmatpush1.msra.mxu0 0.0
        %5646 = vmatprep.subr.mxu0 0.0
        %5647 = vmatpush1.msra.mxu0 0.0
        %5648 = vmatprep.subr.mxu0 0.0
        %5649 = vmatpush1.msra.mxu0 0.0
        %5650 = vmatprep.subr.mxu0 0.0
        %5651 = vmatpush1.msra.mxu0 0.0
        %5652 = vmatprep.subr.mxu0 0.0
        %5653 = vmatpush1.msra.mxu0 0.0
        %5654 = vmatprep.subr.mxu0 0.0
        %5655 = vmatpush1.msra.mxu0 0.0
        %5656 = vmatprep.subr.mxu0 0.0
        %5657 = vmatpush1.msra.mxu0 0.0
        %5658 = vmatprep.subr.mxu0 0.0
        %5659 = vmatpush1.msra.mxu0 0.0
        %5660 = vmatprep.subr.mxu0 0.0
        %5661 = vmatpush1.msra.mxu0 0.0
        %5662 = vmatprep.subr.mxu0 0.0
        %5663 = vmatpush1.msra.mxu0 0.0
        %5664 = vmatprep.subr.mxu0 0.0
        %5665 = vmatpush1.msra.mxu0 0.0
        %5666 = vmatprep.subr.mxu0 0.0
        %5667 = vmatpush1.msra.mxu0 0.0
        %5668 = vmatprep.subr.mxu0 0.0
        %5669 = vmatpush1.msra.mxu0 0.0
        %5670 = vmatprep.subr.mxu0 0.0
        %5671 = vmatpush1.msra.mxu0 0.0
        %5672 = vmatprep.subr.mxu0 0.0
        %5673 = vmatpush1.msra.mxu0 0.0
        %5674 = vmatprep.subr.mxu0 0.0
        %5675 = vmatpush1.msra.mxu0 0.0
        %5676 = vmatprep.subr.mxu0 0.0
        %5677 = vmatpush1.msra.mxu0 0.0
        %5678 = vmatprep.subr.mxu0 0.0
        %5679 = vmatpush1.msra.mxu0 0.0
        %5680 = vmatprep.subr.mxu0 0.0
        %5681 = vmatpush1.msra.mxu0 0.0
        %5682 = vmatprep.subr.mxu0 0.0
        %5683 = vmatpush1.msra.mxu0 0.0
        %5684 = vmatprep.subr.mxu0 0.0
        %5685 = vmatpush1.msra.mxu0 0.0
        %5686 = vmatprep.subr.mxu0 0.0
        %5687 = vmatpush1.msra.mxu0 0.0
        %5688 = vmatprep.subr.mxu0 0.0
        %5689 = vmatpush1.msra.mxu0 0.0
        %5690 = vmatprep.subr.mxu0 0.0
        %5691 = vmatpush1.msra.mxu0 0.0
        %5692 = vmatprep.subr.mxu0 0.0
        %5693 = vmatpush1.msra.mxu0 0.0
        %5694 = vmatprep.subr.mxu0 0.0
        %5695 = vmatpush1.msra.mxu0 0.0
        %5696 = vmatprep.subr.mxu0 0.0
        %5697 = vmatpush1.msra.mxu0 0.0
        %5698 = vmatprep.subr.mxu0 0.0
        %5699 = vmatpush1.msra.mxu0 0.0
        %5700 = vmatprep.subr.mxu0 0.0
        %5701 = vmatpush1.msra.mxu0 0.0
        %5702 = vmatprep.mubr.f32.mxu0 0.0
        %5703 = vmatmul.mubr.f32.gmra.mrb[0].mxu0 %v5636
        %v5704 = vpop.f32.mrb[0].mxu0
        %v5705 = vadd.f32 0.0, %v5704
        %v5706 = vpop.f32.mrb[0].mxu0
        %5707 = vdwg.mxu0
        %v5708 = vmul.f32 %v5705, 0.0625
        %v5709 = vadd.f32 %v5433, %v5708
        %5710 = vmatprep.subr.mxu0 0.0
        %5711 = vmatpush1.msra.mxu0 %v4954
        %5712 = vmatprep.subr.mxu0 0.0
        %5713 = vmatpush1.msra.mxu0 %v4955
        %5714 = vmatprep.subr.mxu0 0.0
        %5715 = vmatpush1.msra.mxu0 0.0
        %5716 = vmatprep.subr.mxu0 0.0
        %5717 = vmatpush1.msra.mxu0 0.0
        %5718 = vmatprep.subr.mxu0 0.0
        %5719 = vmatpush1.msra.mxu0 0.0
        %5720 = vmatprep.subr.mxu0 0.0
        %5721 = vmatpush1.msra.mxu0 0.0
        %5722 = vmatprep.subr.mxu0 0.0
        %5723 = vmatpush1.msra.mxu0 0.0
        %5724 = vmatprep.subr.mxu0 0.0
        %5725 = vmatpush1.msra.mxu0 0.0
        %5726 = vmatprep.subr.mxu0 0.0
        %5727 = vmatpush1.msra.mxu0 0.0
        %5728 = vmatprep.subr.mxu0 0.0
        %5729 = vmatpush1.msra.mxu0 0.0
        %5730 = vmatprep.subr.mxu0 0.0
        %5731 = vmatpush1.msra.mxu0 0.0
        %5732 = vmatprep.subr.mxu0 0.0
        %5733 = vmatpush1.msra.mxu0 0.0
        %5734 = vmatprep.subr.mxu0 0.0
        %5735 = vmatpush1.msra.mxu0 0.0
        %5736 = vmatprep.subr.mxu0 0.0
        %5737 = vmatpush1.msra.mxu0 0.0
        %5738 = vmatprep.subr.mxu0 0.0
        %5739 = vmatpush1.msra.mxu0 0.0
        %5740 = vmatprep.subr.mxu0 0.0
        %5741 = vmatpush1.msra.mxu0 0.0
        %5742 = vmatprep.subr.mxu0 0.0
        %5743 = vmatpush1.msra.mxu0 0.0
        %5744 = vmatprep.subr.mxu0 0.0
        %5745 = vmatpush1.msra.mxu0 0.0
        %5746 = vmatprep.subr.mxu0 0.0
        %5747 = vmatpush1.msra.mxu0 0.0
        %5748 = vmatprep.subr.mxu0 0.0
        %5749 = vmatpush1.msra.mxu0 0.0
        %5750 = vmatprep.subr.mxu0 0.0
        %5751 = vmatpush1.msra.mxu0 0.0
        %5752 = vmatprep.subr.mxu0 0.0
        %5753 = vmatpush1.msra.mxu0 0.0
        %5754 = vmatprep.subr.mxu0 0.0
        %5755 = vmatpush1.msra.mxu0 0.0
        %5756 = vmatprep.subr.mxu0 0.0
        %5757 = vmatpush1.msra.mxu0 0.0
        %5758 = vmatprep.subr.mxu0 0.0
        %5759 = vmatpush1.msra.mxu0 0.0
        %5760 = vmatprep.subr.mxu0 0.0
        %5761 = vmatpush1.msra.mxu0 0.0
        %5762 = vmatprep.subr.mxu0 0.0
        %5763 = vmatpush1.msra.mxu0 0.0
        %5764 = vmatprep.subr.mxu0 0.0
        %5765 = vmatpush1.msra.mxu0 0.0
        %5766 = vmatprep.subr.mxu0 0.0
        %5767 = vmatpush1.msra.mxu0 0.0
        %5768 = vmatprep.subr.mxu0 0.0
        %5769 = vmatpush1.msra.mxu0 0.0
        %5770 = vmatprep.subr.mxu0 0.0
        %5771 = vmatpush1.msra.mxu0 0.0
        %5772 = vmatprep.subr.mxu0 0.0
        %5773 = vmatpush1.msra.mxu0 0.0
        %5774 = vmatprep.mubr.f32.mxu0 0.0
        %5775 = vmatmul.mubr.f32.gmra.mrb[0].mxu0 %v4958
        %v5776 = vpop.f32.mrb[0].mxu0
        %v5777 = vadd.f32 0.0, %v5776
        %v5778 = vpop.f32.mrb[0].mxu0
        %5779 = vdwg.mxu0
        %v5781 = vsel %vm5030, %v5777, 0
        %5783 = vmatprep.subr.mxu0 0.0
        %5784 = vmatpush1.msra.mxu0 %v699
        %5785 = vmatprep.subr.mxu0 0.0
        %5786 = vmatpush1.msra.mxu0 %v700
        %5787 = vmatprep.subr.mxu0 0.0
        %5788 = vmatpush1.msra.mxu0 %v5035
        %5789 = vmatprep.subr.mxu0 0.0
        %5790 = vmatpush1.msra.mxu0 0.0
        %5791 = vmatprep.subr.mxu0 0.0
        %5792 = vmatpush1.msra.mxu0 0.0
        %5793 = vmatprep.subr.mxu0 0.0
        %5794 = vmatpush1.msra.mxu0 0.0
        %5795 = vmatprep.subr.mxu0 0.0
        %5796 = vmatpush1.msra.mxu0 0.0
        %5797 = vmatprep.subr.mxu0 0.0
        %5798 = vmatpush1.msra.mxu0 0.0
        %5799 = vmatprep.subr.mxu0 0.0
        %5800 = vmatpush1.msra.mxu0 0.0
        %5801 = vmatprep.subr.mxu0 0.0
        %5802 = vmatpush1.msra.mxu0 0.0
        %5803 = vmatprep.subr.mxu0 0.0
        %5804 = vmatpush1.msra.mxu0 0.0
        %5805 = vmatprep.subr.mxu0 0.0
        %5806 = vmatpush1.msra.mxu0 0.0
        %5807 = vmatprep.subr.mxu0 0.0
        %5808 = vmatpush1.msra.mxu0 0.0
        %5809 = vmatprep.subr.mxu0 0.0
        %5810 = vmatpush1.msra.mxu0 0.0
        %5811 = vmatprep.subr.mxu0 0.0
        %5812 = vmatpush1.msra.mxu0 0.0
        %5813 = vmatprep.subr.mxu0 0.0
        %5814 = vmatpush1.msra.mxu0 0.0
        %5815 = vmatprep.subr.mxu0 0.0
        %5816 = vmatpush1.msra.mxu0 0.0
        %5817 = vmatprep.subr.mxu0 0.0
        %5818 = vmatpush1.msra.mxu0 0.0
        %5819 = vmatprep.subr.mxu0 0.0
        %5820 = vmatpush1.msra.mxu0 0.0
        %5821 = vmatprep.subr.mxu0 0.0
        %5822 = vmatpush1.msra.mxu0 0.0
        %5823 = vmatprep.subr.mxu0 0.0
        %5824 = vmatpush1.msra.mxu0 0.0
        %5825 = vmatprep.subr.mxu0 0.0
        %5826 = vmatpush1.msra.mxu0 0.0
        %5827 = vmatprep.subr.mxu0 0.0
        %5828 = vmatpush1.msra.mxu0 0.0
        %5829 = vmatprep.subr.mxu0 0.0
        %5830 = vmatpush1.msra.mxu0 0.0
        %5831 = vmatprep.subr.mxu0 0.0
        %5832 = vmatpush1.msra.mxu0 0.0
        %5833 = vmatprep.subr.mxu0 0.0
        %5834 = vmatpush1.msra.mxu0 0.0
        %5835 = vmatprep.subr.mxu0 0.0
        %5836 = vmatpush1.msra.mxu0 0.0
        %5837 = vmatprep.subr.mxu0 0.0
        %5838 = vmatpush1.msra.mxu0 0.0
        %5839 = vmatprep.subr.mxu0 0.0
        %5840 = vmatpush1.msra.mxu0 0.0
        %5841 = vmatprep.subr.mxu0 0.0
        %5842 = vmatpush1.msra.mxu0 0.0
        %5843 = vmatprep.subr.mxu0 0.0
        %5844 = vmatpush1.msra.mxu0 0.0
        %5845 = vmatprep.subr.mxu0 0.0
        %5846 = vmatpush1.msra.mxu0 0.0
        %5847 = vmatprep.mubr.f32.mxu0 0.0
        %5848 = vmatmul.mubr.f32.gmra.mrb[0].mxu0 %v5781
        %v5849 = vpop.f32.mrb[0].mxu0
        %v5850 = vadd.f32 0.0, %v5849
        %v5851 = vpop.f32.mrb[0].mxu0
        %5852 = vdwg.mxu0
        %v5853 = vmul.f32 %v5850, 0.0625
        %v5855 = vsel %vm1448, %v5853, 0
        %5857 = vmatprep.subr.mxu0 0.0
        %5858 = vmatpush1.msra.mxu0 %v5855
        %5859 = vmatprep.subr.mxu0 0.0
        %5860 = vmatpush1.msra.mxu0 0.0
        %5861 = vmatprep.subr.mxu0 0.0
        %5862 = vmatpush1.msra.mxu0 0.0
        %5863 = vmatprep.subr.mxu0 0.0
        %5864 = vmatpush1.msra.mxu0 0.0
        %5865 = vmatprep.subr.mxu0 0.0
        %5866 = vmatpush1.msra.mxu0 0.0
        %5867 = vmatprep.subr.mxu0 0.0
        %5868 = vmatpush1.msra.mxu0 0.0
        %5869 = vmatprep.subr.mxu0 0.0
        %5870 = vmatpush1.msra.mxu0 0.0
        %5871 = vmatprep.subr.mxu0 0.0
        %5872 = vmatpush1.msra.mxu0 0.0
        %5873 = vmatprep.subr.mxu0 0.0
        %5874 = vmatpush1.msra.mxu0 0.0
        %5875 = vmatprep.subr.mxu0 0.0
        %5876 = vmatpush1.msra.mxu0 0.0
        %5877 = vmatprep.subr.mxu0 0.0
        %5878 = vmatpush1.msra.mxu0 0.0
        %5879 = vmatprep.subr.mxu0 0.0
        %5880 = vmatpush1.msra.mxu0 0.0
        %5881 = vmatprep.subr.mxu0 0.0
        %5882 = vmatpush1.msra.mxu0 0.0
        %5883 = vmatprep.subr.mxu0 0.0
        %5884 = vmatpush1.msra.mxu0 0.0
        %5885 = vmatprep.subr.mxu0 0.0
        %5886 = vmatpush1.msra.mxu0 0.0
        %5887 = vmatprep.subr.mxu0 0.0
        %5888 = vmatpush1.msra.mxu0 0.0
        %5889 = vmatprep.subr.mxu0 0.0
        %5890 = vmatpush1.msra.mxu0 0.0
        %5891 = vmatprep.subr.mxu0 0.0
        %5892 = vmatpush1.msra.mxu0 0.0
        %5893 = vmatprep.subr.mxu0 0.0
        %5894 = vmatpush1.msra.mxu0 0.0
        %5895 = vmatprep.subr.mxu0 0.0
        %5896 = vmatpush1.msra.mxu0 0.0
        %5897 = vmatprep.subr.mxu0 0.0
        %5898 = vmatpush1.msra.mxu0 0.0
        %5899 = vmatprep.subr.mxu0 0.0
        %5900 = vmatpush1.msra.mxu0 0.0
        %5901 = vmatprep.subr.mxu0 0.0
        %5902 = vmatpush1.msra.mxu0 0.0
        %5903 = vmatprep.subr.mxu0 0.0
        %5904 = vmatpush1.msra.mxu0 0.0
        %5905 = vmatprep.subr.mxu0 0.0
        %5906 = vmatpush1.msra.mxu0 0.0
        %5907 = vmatprep.subr.mxu0 0.0
        %5908 = vmatpush1.msra.mxu0 0.0
        %5909 = vmatprep.subr.mxu0 0.0
        %5910 = vmatpush1.msra.mxu0 0.0
        %5911 = vmatprep.subr.mxu0 0.0
        %5912 = vmatpush1.msra.mxu0 0.0
        %5913 = vmatprep.subr.mxu0 0.0
        %5914 = vmatpush1.msra.mxu0 0.0
        %5915 = vmatprep.subr.mxu0 0.0
        %5916 = vmatpush1.msra.mxu0 0.0
        %5917 = vmatprep.subr.mxu0 0.0
        %5918 = vmatpush1.msra.mxu0 0.0
        %5919 = vmatprep.subr.mxu0 0.0
        %5920 = vmatpush1.msra.mxu0 0.0
        %5921 = vmatprep.mubr.f32.mxu0 0.0
        %5922 = vmatmul.mubr.f32.gmra.mrb[0].mxu0 %v5110
        %v5923 = vpop.f32.mrb[0].mxu0
        %v5924 = vadd.f32 0.0, %v5923
        %v5925 = vpop.f32.mrb[0].mxu0
        %5926 = vmatprep.mubr.f32.mxu0 0.0
        %5927 = vmatmul.mubr.f32.gmra.mrb[0].mxu0 %v5113
        %v5928 = vpop.f32.mrb[0].mxu0
        %v5929 = vadd.f32 0.0, %v5928
        %v5930 = vpop.f32.mrb[0].mxu0
        %5931 = vdwg.mxu0
        %v5933 = vsel %vm5193, %v5924, 0
        %v5936 = vsel %vm5193, %v5929, 0
        %5938 = vmatprep.subr.mxu0 0.0
        %5939 = vmatpush1.msra.mxu0 %v5201
        %5940 = vmatprep.subr.mxu0 0.0
        %5941 = vmatpush1.msra.mxu0 0.0
        %5942 = vmatprep.subr.mxu0 0.0
        %5943 = vmatpush1.msra.mxu0 0.0
        %5944 = vmatprep.subr.mxu0 0.0
        %5945 = vmatpush1.msra.mxu0 0.0
        %5946 = vmatprep.subr.mxu0 0.0
        %5947 = vmatpush1.msra.mxu0 0.0
        %5948 = vmatprep.subr.mxu0 0.0
        %5949 = vmatpush1.msra.mxu0 0.0
        %5950 = vmatprep.subr.mxu0 0.0
        %5951 = vmatpush1.msra.mxu0 0.0
        %5952 = vmatprep.subr.mxu0 0.0
        %5953 = vmatpush1.msra.mxu0 0.0
        %5954 = vmatprep.subr.mxu0 0.0
        %5955 = vmatpush1.msra.mxu0 0.0
        %5956 = vmatprep.subr.mxu0 0.0
        %5957 = vmatpush1.msra.mxu0 0.0
        %5958 = vmatprep.subr.mxu0 0.0
        %5959 = vmatpush1.msra.mxu0 0.0
        %5960 = vmatprep.subr.mxu0 0.0
        %5961 = vmatpush1.msra.mxu0 0.0
        %5962 = vmatprep.subr.mxu0 0.0
        %5963 = vmatpush1.msra.mxu0 0.0
        %5964 = vmatprep.subr.mxu0 0.0
        %5965 = vmatpush1.msra.mxu0 0.0
        %5966 = vmatprep.subr.mxu0 0.0
        %5967 = vmatpush1.msra.mxu0 0.0
        %5968 = vmatprep.subr.mxu0 0.0
        %5969 = vmatpush1.msra.mxu0 0.0
        %5970 = vmatprep.subr.mxu0 0.0
        %5971 = vmatpush1.msra.mxu0 0.0
        %5972 = vmatprep.subr.mxu0 0.0
        %5973 = vmatpush1.msra.mxu0 0.0
        %5974 = vmatprep.subr.mxu0 0.0
        %5975 = vmatpush1.msra.mxu0 0.0
        %5976 = vmatprep.subr.mxu0 0.0
        %5977 = vmatpush1.msra.mxu0 0.0
        %5978 = vmatprep.subr.mxu0 0.0
        %5979 = vmatpush1.msra.mxu0 0.0
        %5980 = vmatprep.subr.mxu0 0.0
        %5981 = vmatpush1.msra.mxu0 0.0
        %5982 = vmatprep.subr.mxu0 0.0
        %5983 = vmatpush1.msra.mxu0 0.0
        %5984 = vmatprep.subr.mxu0 0.0
        %5985 = vmatpush1.msra.mxu0 0.0
        %5986 = vmatprep.subr.mxu0 0.0
        %5987 = vmatpush1.msra.mxu0 0.0
        %5988 = vmatprep.subr.mxu0 0.0
        %5989 = vmatpush1.msra.mxu0 0.0
        %5990 = vmatprep.subr.mxu0 0.0
        %5991 = vmatpush1.msra.mxu0 0.0
        %5992 = vmatprep.subr.mxu0 0.0
        %5993 = vmatpush1.msra.mxu0 0.0
        %5994 = vmatprep.subr.mxu0 0.0
        %5995 = vmatpush1.msra.mxu0 0.0
        %5996 = vmatprep.subr.mxu0 0.0
        %5997 = vmatpush1.msra.mxu0 0.0
        %5998 = vmatprep.subr.mxu0 0.0
        %5999 = vmatpush1.msra.mxu0 0.0
        %6000 = vmatprep.subr.mxu0 0.0
        %6001 = vmatpush1.msra.mxu0 0.0
        %6002 = vmatprep.mubr.f32.mxu0 0.0
        %6003 = vmatmul.mubr.f32.gmra.mrb[0].mxu0 %v5933
        %v6004 = vpop.f32.mrb[0].mxu0
        %v6005 = vadd.f32 0.0, %v6004
        %v6006 = vpop.f32.mrb[0].mxu0
        %6007 = vmatprep.mubr.f32.mxu0 0.0
        %6008 = vmatmul.mubr.f32.gmra.mrb[0].mxu0 %v5936
        %v6009 = vpop.f32.mrb[0].mxu0
        %v6010 = vadd.f32 0.0, %v6009
        %v6011 = vpop.f32.mrb[0].mxu0
        %6012 = vdwg.mxu0
        %v6013 = vsub.f32 %v4954, %v6005
        %v6014 = vsub.f32 %v4955, %v6010
        %v6015 = vmul.f32 %v6013, %v6013
        %v6016 = vmul.f32 %v6014, %v6014
        %6017 = vmatprep.subr.mxu0 0.0
        %6018 = vmatpush1.msra.mxu0 %v6015
        %6019 = vmatprep.subr.mxu0 0.0
        %6020 = vmatpush1.msra.mxu0 %v6016
        %6021 = vmatprep.subr.mxu0 0.0
        %6022 = vmatpush1.msra.mxu0 0.0
        %6023 = vmatprep.subr.mxu0 0.0
        %6024 = vmatpush1.msra.mxu0 0.0
        %6025 = vmatprep.subr.mxu0 0.0
        %6026 = vmatpush1.msra.mxu0 0.0
        %6027 = vmatprep.subr.mxu0 0.0
        %6028 = vmatpush1.msra.mxu0 0.0
        %6029 = vmatprep.subr.mxu0 0.0
        %6030 = vmatpush1.msra.mxu0 0.0
        %6031 = vmatprep.subr.mxu0 0.0
        %6032 = vmatpush1.msra.mxu0 0.0
        %6033 = vmatprep.subr.mxu0 0.0
        %6034 = vmatpush1.msra.mxu0 0.0
        %6035 = vmatprep.subr.mxu0 0.0
        %6036 = vmatpush1.msra.mxu0 0.0
        %6037 = vmatprep.subr.mxu0 0.0
        %6038 = vmatpush1.msra.mxu0 0.0
        %6039 = vmatprep.subr.mxu0 0.0
        %6040 = vmatpush1.msra.mxu0 0.0
        %6041 = vmatprep.subr.mxu0 0.0
        %6042 = vmatpush1.msra.mxu0 0.0
        %6043 = vmatprep.subr.mxu0 0.0
        %6044 = vmatpush1.msra.mxu0 0.0
        %6045 = vmatprep.subr.mxu0 0.0
        %6046 = vmatpush1.msra.mxu0 0.0
        %6047 = vmatprep.subr.mxu0 0.0
        %6048 = vmatpush1.msra.mxu0 0.0
        %6049 = vmatprep.subr.mxu0 0.0
        %6050 = vmatpush1.msra.mxu0 0.0
        %6051 = vmatprep.subr.mxu0 0.0
        %6052 = vmatpush1.msra.mxu0 0.0
        %6053 = vmatprep.subr.mxu0 0.0
        %6054 = vmatpush1.msra.mxu0 0.0
        %6055 = vmatprep.subr.mxu0 0.0
        %6056 = vmatpush1.msra.mxu0 0.0
        %6057 = vmatprep.subr.mxu0 0.0
        %6058 = vmatpush1.msra.mxu0 0.0
        %6059 = vmatprep.subr.mxu0 0.0
        %6060 = vmatpush1.msra.mxu0 0.0
        %6061 = vmatprep.subr.mxu0 0.0
        %6062 = vmatpush1.msra.mxu0 0.0
        %6063 = vmatprep.subr.mxu0 0.0
        %6064 = vmatpush1.msra.mxu0 0.0
        %6065 = vmatprep.subr.mxu0 0.0
        %6066 = vmatpush1.msra.mxu0 0.0
        %6067 = vmatprep.subr.mxu0 0.0
        %6068 = vmatpush1.msra.mxu0 0.0
        %6069 = vmatprep.subr.mxu0 0.0
        %6070 = vmatpush1.msra.mxu0 0.0
        %6071 = vmatprep.subr.mxu0 0.0
        %6072 = vmatpush1.msra.mxu0 0.0
        %6073 = vmatprep.subr.mxu0 0.0
        %6074 = vmatpush1.msra.mxu0 0.0
        %6075 = vmatprep.subr.mxu0 0.0
        %6076 = vmatpush1.msra.mxu0 0.0
        %6077 = vmatprep.subr.mxu0 0.0
        %6078 = vmatpush1.msra.mxu0 0.0
        %6079 = vmatprep.subr.mxu0 0.0
        %6080 = vmatpush1.msra.mxu0 0.0
        %6081 = vmatprep.mubr.f32.mxu0 0.0
        %6082 = vmatmul.mubr.f32.gmra.mrb[0].mxu0 %v4958
        %v6083 = vpop.f32.mrb[0].mxu0
        %v6084 = vadd.f32 0.0, %v6083
        %v6085 = vpop.f32.mrb[0].mxu0
        %6086 = vdwg.mxu0
        %v6088 = vsel %vm5030, %v6084, 0
        %6090 = vmatprep.subr.mxu0 0.0
        %6091 = vmatpush1.msra.mxu0 %v699
        %6092 = vmatprep.subr.mxu0 0.0
        %6093 = vmatpush1.msra.mxu0 %v700
        %6094 = vmatprep.subr.mxu0 0.0
        %6095 = vmatpush1.msra.mxu0 %v5035
        %6096 = vmatprep.subr.mxu0 0.0
        %6097 = vmatpush1.msra.mxu0 0.0
        %6098 = vmatprep.subr.mxu0 0.0
        %6099 = vmatpush1.msra.mxu0 0.0
        %6100 = vmatprep.subr.mxu0 0.0
        %6101 = vmatpush1.msra.mxu0 0.0
        %6102 = vmatprep.subr.mxu0 0.0
        %6103 = vmatpush1.msra.mxu0 0.0
        %6104 = vmatprep.subr.mxu0 0.0
        %6105 = vmatpush1.msra.mxu0 0.0
        %6106 = vmatprep.subr.mxu0 0.0
        %6107 = vmatpush1.msra.mxu0 0.0
        %6108 = vmatprep.subr.mxu0 0.0
        %6109 = vmatpush1.msra.mxu0 0.0
        %6110 = vmatprep.subr.mxu0 0.0
        %6111 = vmatpush1.msra.mxu0 0.0
        %6112 = vmatprep.subr.mxu0 0.0
        %6113 = vmatpush1.msra.mxu0 0.0
        %6114 = vmatprep.subr.mxu0 0.0
        %6115 = vmatpush1.msra.mxu0 0.0
        %6116 = vmatprep.subr.mxu0 0.0
        %6117 = vmatpush1.msra.mxu0 0.0
        %6118 = vmatprep.subr.mxu0 0.0
        %6119 = vmatpush1.msra.mxu0 0.0
        %6120 = vmatprep.subr.mxu0 0.0
        %6121 = vmatpush1.msra.mxu0 0.0
        %6122 = vmatprep.subr.mxu0 0.0
        %6123 = vmatpush1.msra.mxu0 0.0
        %6124 = vmatprep.subr.mxu0 0.0
        %6125 = vmatpush1.msra.mxu0 0.0
        %6126 = vmatprep.subr.mxu0 0.0
        %6127 = vmatpush1.msra.mxu0 0.0
        %6128 = vmatprep.subr.mxu0 0.0
        %6129 = vmatpush1.msra.mxu0 0.0
        %6130 = vmatprep.subr.mxu0 0.0
        %6131 = vmatpush1.msra.mxu0 0.0
        %6132 = vmatprep.subr.mxu0 0.0
        %6133 = vmatpush1.msra.mxu0 0.0
        %6134 = vmatprep.subr.mxu0 0.0
        %6135 = vmatpush1.msra.mxu0 0.0
        %6136 = vmatprep.subr.mxu0 0.0
        %6137 = vmatpush1.msra.mxu0 0.0
        %6138 = vmatprep.subr.mxu0 0.0
        %6139 = vmatpush1.msra.mxu0 0.0
        %6140 = vmatprep.subr.mxu0 0.0
        %6141 = vmatpush1.msra.mxu0 0.0
        %6142 = vmatprep.subr.mxu0 0.0
        %6143 = vmatpush1.msra.mxu0 0.0
        %6144 = vmatprep.subr.mxu0 0.0
        %6145 = vmatpush1.msra.mxu0 0.0
        %6146 = vmatprep.subr.mxu0 0.0
        %6147 = vmatpush1.msra.mxu0 0.0
        %6148 = vmatprep.subr.mxu0 0.0
        %6149 = vmatpush1.msra.mxu0 0.0
        %6150 = vmatprep.subr.mxu0 0.0
        %6151 = vmatpush1.msra.mxu0 0.0
        %6152 = vmatprep.subr.mxu0 0.0
        %6153 = vmatpush1.msra.mxu0 0.0
        %6154 = vmatprep.mubr.f32.mxu0 0.0
        %6155 = vmatmul.mubr.f32.gmra.mrb[0].mxu0 %v6088
        %v6156 = vpop.f32.mrb[0].mxu0
        %v6157 = vadd.f32 0.0, %v6156
        %v6158 = vpop.f32.mrb[0].mxu0
        %6159 = vdwg.mxu0
        %v6160 = vmul.f32 %v6157, 0.06666667
        %v6161 = vmax.f32 %v6160, 0.0
        %v6162 = vrsqrt.pop %v6161
        %v6163 = vmul.f32 %v6161, %v6162
        %vm6164 = vcmp.eq.f32.partialorder %v6161, inf
        %v6165 = vsel %vm6164, %v6161, %v6163
        %vm6166 = vcmp.eq.f32.partialorder %v6161, 0.0
        %v6167 = vand.u32 %v6161, 2147483648
        %v6168 = vsel %vm6166, %v6167, %v6165
        %6171 = vrot.lane.b32.xlu0 %v4954, 109
        %v6172 = vpop.permute.xlu0 %6171
        %6173 = vrot.lane.b32.xlu0 %v4955, 109
        %v6174 = vpop.permute.xlu0 %6173
        %6177 = vrot.lane.b32.xlu0 %v4954, 1
        %v6178 = vpop.permute.xlu0 %6177
        %6179 = vrot.lane.b32.xlu0 %v4955, 1
        %v6180 = vpop.permute.xlu0 %6179
        %v6183 = vsel %vm5448, %v6172, %v6178
        %v6184 = vsel %vm5448, %v6174, %v6180
        %6185 = vrot.lane.b32.xlu0 %v4954, 127
        %v6186 = vpop.permute.xlu0 %6185
        %6187 = vrot.lane.b32.xlu0 %v4955, 127
        %v6188 = vpop.permute.xlu0 %6187
        %6191 = vrot.lane.b32.xlu0 %v4954, 19
        %v6192 = vpop.permute.xlu0 %6191
        %6193 = vrot.lane.b32.xlu0 %v4955, 19
        %v6194 = vpop.permute.xlu0 %6193
        %v6197 = vsel %vm5463, %v6186, %v6192
        %v6198 = vsel %vm5463, %v6188, %v6194
        %v6199 = vsel %vm724, %v6197, %v6183
        %v6200 = vsel %vm724, %v6198, %v6184
        %v6201 = vsel %vm725, %v6183, %v6197
        %v6202 = vsel %vm725, %v6184, %v6198
        %v6203 = vrot.slane %v4955, 7
        %v6205 = vrot.slane %v4954, 7
        %v6206 = vsel %vm5472, %v6205, %v6203
        %v6209 = vsel %vm5472, %v6203, %v6205
        %v6210 = vrot.slane %v4954, 1
        %v6211 = vrot.slane %v4955, 1
        %v6212 = vsel %vm1017, %v6210, %v6211
        %v6216 = vsel %vm1017, %v6211, %v6210
        %v6217 = vsel %vm726, %v6212, %v6209
        %v6218 = vsel %vm727, %v6216, %v6206
        %v6219 = vsel %vm728, %v6209, %v6212
        %v6220 = vsel %vm729, %v6206, %v6216
        %v6222 = vrot.slane %v6200, 7
        %v6225 = vrot.slane %v6199, 7
        %v6226 = vsel %vm5472, %v6225, %v6222
        %v6229 = vsel %vm5472, %v6222, %v6225
        %v6230 = vrot.slane %v6199, 1
        %v6231 = vrot.slane %v6200, 1
        %v6232 = vsel %vm1017, %v6230, %v6231
        %v6236 = vsel %vm1017, %v6231, %v6230
        %v6237 = vsel %vm726, %v6232, %v6229
        %v6238 = vsel %vm727, %v6236, %v6226
        %v6239 = vsel %vm728, %v6229, %v6232
        %v6240 = vsel %vm729, %v6226, %v6236
        %v6242 = vrot.slane %v6202, 7
        %v6245 = vrot.slane %v6201, 7
        %v6246 = vsel %vm5472, %v6245, %v6242
        %v6249 = vsel %vm5472, %v6242, %v6245
        %v6250 = vrot.slane %v6201, 1
        %v6251 = vrot.slane %v6202, 1
        %v6252 = vsel %vm1017, %v6250, %v6251
        %v6256 = vsel %vm1017, %v6251, %v6250
        %v6257 = vsel %vm726, %v6252, %v6249
        %v6258 = vsel %vm727, %v6256, %v6246
        %v6259 = vsel %vm728, %v6249, %v6252
        %v6260 = vsel %vm729, %v6246, %v6256
        %v6261 = vsub.f32 0.0, %v6237
        %v6262 = vsub.f32 0.0, %v6238
        %v6263 = vadd.f32 %v6261, %v6257
        %v6264 = vadd.f32 %v6262, %v6258
        %v6265 = vmul.f32 %v6199, 2.0
        %v6266 = vmul.f32 %v6200, 2.0
        %v6267 = vsub.f32 %v6263, %v6265
        %v6268 = vsub.f32 %v6264, %v6266
        %v6269 = vmul.f32 %v6201, 2.0
        %v6270 = vmul.f32 %v6202, 2.0
        %v6271 = vadd.f32 %v6267, %v6269
        %v6272 = vadd.f32 %v6268, %v6270
        %v6273 = vsub.f32 %v6271, %v6239
        %v6274 = vsub.f32 %v6272, %v6240
        %v6275 = vadd.f32 %v6273, %v6259
        %v6276 = vadd.f32 %v6274, %v6260
        %v6277 = vmul.f32 %v6217, 2.0
        %v6278 = vmul.f32 %v6218, 2.0
        %v6279 = vsub.f32 %v6261, %v6277
        %v6280 = vsub.f32 %v6262, %v6278
        %v6281 = vsub.f32 %v6279, %v6257
        %v6282 = vsub.f32 %v6280, %v6258
        %v6283 = vadd.f32 %v6281, %v6239
        %v6284 = vadd.f32 %v6282, %v6240
        %v6285 = vmul.f32 %v6219, 2.0
        %v6286 = vmul.f32 %v6220, 2.0
        %v6287 = vadd.f32 %v6283, %v6285
        %v6288 = vadd.f32 %v6284, %v6286
        %v6289 = vadd.f32 %v6287, %v6259
        %v6290 = vadd.f32 %v6288, %v6260
        %v6291 = vand.u32 2147483647, %v6275
        %v6292 = vand.u32 2147483647, %v6276
        %v6293 = vand.u32 2147483647, %v6289
        %v6294 = vand.u32 2147483647, %v6290
        %v6295 = vadd.f32 %v6291, %v6293
        %v6296 = vadd.f32 %v6292, %v6294
        %6297 = vmatprep.subr.mxu0 0.0
        %6298 = vmatpush1.msra.mxu0 %v6295
        %6299 = vmatprep.subr.mxu0 0.0
        %6300 = vmatpush1.msra.mxu0 %v6296
        %6301 = vmatprep.subr.mxu0 0.0
        %6302 = vmatpush1.msra.mxu0 0.0
        %6303 = vmatprep.subr.mxu0 0.0
        %6304 = vmatpush1.msra.mxu0 0.0
        %6305 = vmatprep.subr.mxu0 0.0
        %6306 = vmatpush1.msra.mxu0 0.0
        %6307 = vmatprep.subr.mxu0 0.0
        %6308 = vmatpush1.msra.mxu0 0.0
        %6309 = vmatprep.subr.mxu0 0.0
        %6310 = vmatpush1.msra.mxu0 0.0
        %6311 = vmatprep.subr.mxu0 0.0
        %6312 = vmatpush1.msra.mxu0 0.0
        %6313 = vmatprep.subr.mxu0 0.0
        %6314 = vmatpush1.msra.mxu0 0.0
        %6315 = vmatprep.subr.mxu0 0.0
        %6316 = vmatpush1.msra.mxu0 0.0
        %6317 = vmatprep.subr.mxu0 0.0
        %6318 = vmatpush1.msra.mxu0 0.0
        %6319 = vmatprep.subr.mxu0 0.0
        %6320 = vmatpush1.msra.mxu0 0.0
        %6321 = vmatprep.subr.mxu0 0.0
        %6322 = vmatpush1.msra.mxu0 0.0
        %6323 = vmatprep.subr.mxu0 0.0
        %6324 = vmatpush1.msra.mxu0 0.0
        %6325 = vmatprep.subr.mxu0 0.0
        %6326 = vmatpush1.msra.mxu0 0.0
        %6327 = vmatprep.subr.mxu0 0.0
        %6328 = vmatpush1.msra.mxu0 0.0
        %6329 = vmatprep.subr.mxu0 0.0
        %6330 = vmatpush1.msra.mxu0 0.0
        %6331 = vmatprep.subr.mxu0 0.0
        %6332 = vmatpush1.msra.mxu0 0.0
        %6333 = vmatprep.subr.mxu0 0.0
        %6334 = vmatpush1.msra.mxu0 0.0
        %6335 = vmatprep.subr.mxu0 0.0
        %6336 = vmatpush1.msra.mxu0 0.0
        %6337 = vmatprep.subr.mxu0 0.0
        %6338 = vmatpush1.msra.mxu0 0.0
        %6339 = vmatprep.subr.mxu0 0.0
        %6340 = vmatpush1.msra.mxu0 0.0
        %6341 = vmatprep.subr.mxu0 0.0
        %6342 = vmatpush1.msra.mxu0 0.0
        %6343 = vmatprep.subr.mxu0 0.0
        %6344 = vmatpush1.msra.mxu0 0.0
        %6345 = vmatprep.subr.mxu0 0.0
        %6346 = vmatpush1.msra.mxu0 0.0
        %6347 = vmatprep.subr.mxu0 0.0
        %6348 = vmatpush1.msra.mxu0 0.0
        %6349 = vmatprep.subr.mxu0 0.0
        %6350 = vmatpush1.msra.mxu0 0.0
        %6351 = vmatprep.subr.mxu0 0.0
        %6352 = vmatpush1.msra.mxu0 0.0
        %6353 = vmatprep.subr.mxu0 0.0
        %6354 = vmatpush1.msra.mxu0 0.0
        %6355 = vmatprep.subr.mxu0 0.0
        %6356 = vmatpush1.msra.mxu0 0.0
        %6357 = vmatprep.subr.mxu0 0.0
        %6358 = vmatpush1.msra.mxu0 0.0
        %6359 = vmatprep.subr.mxu0 0.0
        %6360 = vmatpush1.msra.mxu0 0.0
        %6361 = vmatprep.mubr.f32.mxu0 0.0
        %6362 = vmatmul.mubr.f32.gmra.mrb[0].mxu0 %v4958
        %v6363 = vpop.f32.mrb[0].mxu0
        %v6364 = vadd.f32 0.0, %v6363
        %v6365 = vpop.f32.mrb[0].mxu0
        %6366 = vdwg.mxu0
        %v6368 = vsel %vm5030, %v6364, 0
        %6370 = vmatprep.subr.mxu0 0.0
        %6371 = vmatpush1.msra.mxu0 %v699
        %6372 = vmatprep.subr.mxu0 0.0
        %6373 = vmatpush1.msra.mxu0 %v700
        %6374 = vmatprep.subr.mxu0 0.0
        %6375 = vmatpush1.msra.mxu0 %v5035
        %6376 = vmatprep.subr.mxu0 0.0
        %6377 = vmatpush1.msra.mxu0 0.0
        %6378 = vmatprep.subr.mxu0 0.0
        %6379 = vmatpush1.msra.mxu0 0.0
        %6380 = vmatprep.subr.mxu0 0.0
        %6381 = vmatpush1.msra.mxu0 0.0
        %6382 = vmatprep.subr.mxu0 0.0
        %6383 = vmatpush1.msra.mxu0 0.0
        %6384 = vmatprep.subr.mxu0 0.0
        %6385 = vmatpush1.msra.mxu0 0.0
        %6386 = vmatprep.subr.mxu0 0.0
        %6387 = vmatpush1.msra.mxu0 0.0
        %6388 = vmatprep.subr.mxu0 0.0
        %6389 = vmatpush1.msra.mxu0 0.0
        %6390 = vmatprep.subr.mxu0 0.0
        %6391 = vmatpush1.msra.mxu0 0.0
        %6392 = vmatprep.subr.mxu0 0.0
        %6393 = vmatpush1.msra.mxu0 0.0
        %6394 = vmatprep.subr.mxu0 0.0
        %6395 = vmatpush1.msra.mxu0 0.0
        %6396 = vmatprep.subr.mxu0 0.0
        %6397 = vmatpush1.msra.mxu0 0.0
        %6398 = vmatprep.subr.mxu0 0.0
        %6399 = vmatpush1.msra.mxu0 0.0
        %6400 = vmatprep.subr.mxu0 0.0
        %6401 = vmatpush1.msra.mxu0 0.0
        %6402 = vmatprep.subr.mxu0 0.0
        %6403 = vmatpush1.msra.mxu0 0.0
        %6404 = vmatprep.subr.mxu0 0.0
        %6405 = vmatpush1.msra.mxu0 0.0
        %6406 = vmatprep.subr.mxu0 0.0
        %6407 = vmatpush1.msra.mxu0 0.0
        %6408 = vmatprep.subr.mxu0 0.0
        %6409 = vmatpush1.msra.mxu0 0.0
        %6410 = vmatprep.subr.mxu0 0.0
        %6411 = vmatpush1.msra.mxu0 0.0
        %6412 = vmatprep.subr.mxu0 0.0
        %6413 = vmatpush1.msra.mxu0 0.0
        %6414 = vmatprep.subr.mxu0 0.0
        %6415 = vmatpush1.msra.mxu0 0.0
        %6416 = vmatprep.subr.mxu0 0.0
        %6417 = vmatpush1.msra.mxu0 0.0
        %6418 = vmatprep.subr.mxu0 0.0
        %6419 = vmatpush1.msra.mxu0 0.0
        %6420 = vmatprep.subr.mxu0 0.0
        %6421 = vmatpush1.msra.mxu0 0.0
        %6422 = vmatprep.subr.mxu0 0.0
        %6423 = vmatpush1.msra.mxu0 0.0
        %6424 = vmatprep.subr.mxu0 0.0
        %6425 = vmatpush1.msra.mxu0 0.0
        %6426 = vmatprep.subr.mxu0 0.0
        %6427 = vmatpush1.msra.mxu0 0.0
        %6428 = vmatprep.subr.mxu0 0.0
        %6429 = vmatpush1.msra.mxu0 0.0
        %6430 = vmatprep.subr.mxu0 0.0
        %6431 = vmatpush1.msra.mxu0 0.0
        %6432 = vmatprep.subr.mxu0 0.0
        %6433 = vmatpush1.msra.mxu0 0.0
        %6434 = vmatprep.mubr.f32.mxu0 0.0
        %6435 = vmatmul.mubr.f32.gmra.mrb[0].mxu0 %v6368
        %v6436 = vpop.f32.mrb[0].mxu0
        %v6437 = vadd.f32 0.0, %v6436
        %v6438 = vpop.f32.mrb[0].mxu0
        %6439 = vdwg.mxu0
        %v6440 = vmul.f32 %v6437, 0.0625
        %v6441 = vadd.f32 %v6168, %v6440
        %v6442 = vmax.f32 %v5709, %v6441
        %v6443 = vsub.f32 %v5709, %v6442
        %v6444 = vmul.f32 %v6443, 1.442695
        %v6445 = vpow.pop %v6444
        %v6446 = vsub.f32 %v6441, %v6442
        %v6447 = vmul.f32 %v6446, 1.442695
        %v6448 = vpow.pop %v6447
        %v6449 = vadd.f32 %v6445, %v6448
        %v6450 = vrcp.pop %v6449
        %v6451 = vmul.f32 %v6445, %v6450
        %v6452 = vld [vmem:[#allocation23] sm:$0xff]
        %v6453 = vld [vmem:[#allocation23 + $0x8] sm:$0xff]
        %v6454 = vld [vmem:[#allocation23 + $0x10] sm:$0xf]
        %v6456 = vsel %vm5108, %v6452, 0
        %v6459 = vsel %vm5108, %v6453, 0
        %v6462 = vsel %vm5108, %v6454, 0
        %v6465 = vsel %vm1448, %v6451, 0
        %6467 = vmatprep.subr.mxu0 0.0
        %6468 = vmatpush1.msra.mxu0 %v6465
        %6469 = vmatprep.subr.mxu0 0.0
        %6470 = vmatpush1.msra.mxu0 0.0
        %6471 = vmatprep.subr.mxu0 0.0
        %6472 = vmatpush1.msra.mxu0 0.0
        %6473 = vmatprep.subr.mxu0 0.0
        %6474 = vmatpush1.msra.mxu0 0.0
        %6475 = vmatprep.subr.mxu0 0.0
        %6476 = vmatpush1.msra.mxu0 0.0
        %6477 = vmatprep.subr.mxu0 0.0
        %6478 = vmatpush1.msra.mxu0 0.0
        %6479 = vmatprep.subr.mxu0 0.0
        %6480 = vmatpush1.msra.mxu0 0.0
        %6481 = vmatprep.subr.mxu0 0.0
        %6482 = vmatpush1.msra.mxu0 0.0
        %6483 = vmatprep.subr.mxu0 0.0
        %6484 = vmatpush1.msra.mxu0 0.0
        %6485 = vmatprep.subr.mxu0 0.0
        %6486 = vmatpush1.msra.mxu0 0.0
        %6487 = vmatprep.subr.mxu0 0.0
        %6488 = vmatpush1.msra.mxu0 0.0
        %6489 = vmatprep.subr.mxu0 0.0
        %6490 = vmatpush1.msra.mxu0 0.0
        %6491 = vmatprep.subr.mxu0 0.0
        %6492 = vmatpush1.msra.mxu0 0.0
        %6493 = vmatprep.subr.mxu0 0.0
        %6494 = vmatpush1.msra.mxu0 0.0
        %6495 = vmatprep.subr.mxu0 0.0
        %6496 = vmatpush1.msra.mxu0 0.0
        %6497 = vmatprep.subr.mxu0 0.0
        %6498 = vmatpush1.msra.mxu0 0.0
        %6499 = vmatprep.subr.mxu0 0.0
        %6500 = vmatpush1.msra.mxu0 0.0
        %6501 = vmatprep.subr.mxu0 0.0
        %6502 = vmatpush1.msra.mxu0 0.0
        %6503 = vmatprep.subr.mxu0 0.0
        %6504 = vmatpush1.msra.mxu0 0.0
        %6505 = vmatprep.subr.mxu0 0.0
        %6506 = vmatpush1.msra.mxu0 0.0
        %6507 = vmatprep.subr.mxu0 0.0
        %6508 = vmatpush1.msra.mxu0 0.0
        %6509 = vmatprep.subr.mxu0 0.0
        %6510 = vmatpush1.msra.mxu0 0.0
        %6511 = vmatprep.subr.mxu0 0.0
        %6512 = vmatpush1.msra.mxu0 0.0
        %6513 = vmatprep.subr.mxu0 0.0
        %6514 = vmatpush1.msra.mxu0 0.0
        %6515 = vmatprep.subr.mxu0 0.0
        %6516 = vmatpush1.msra.mxu0 0.0
        %6517 = vmatprep.subr.mxu0 0.0
        %6518 = vmatpush1.msra.mxu0 0.0
        %6519 = vmatprep.subr.mxu0 0.0
        %6520 = vmatpush1.msra.mxu0 0.0
        %6521 = vmatprep.subr.mxu0 0.0
        %6522 = vmatpush1.msra.mxu0 0.0
        %6523 = vmatprep.subr.mxu0 0.0
        %6524 = vmatpush1.msra.mxu0 0.0
        %6525 = vmatprep.subr.mxu0 0.0
        %6526 = vmatpush1.msra.mxu0 0.0
        %6527 = vmatprep.subr.mxu0 0.0
        %6528 = vmatpush1.msra.mxu0 0.0
        %6529 = vmatprep.subr.mxu0 0.0
        %6530 = vmatpush1.msra.mxu0 0.0
        %6531 = vmatprep.mubr.f32.mxu0 0.0
        %6532 = vmatmul.mubr.f32.gmra.mrb[0].mxu0 %v6456
        %v6533 = vpop.f32.mrb[0].mxu0
        %v6534 = vadd.f32 0.0, %v6533
        %v6535 = vpop.f32.mrb[0].mxu0
        %6536 = vmatprep.mubr.f32.mxu0 0.0
        %6537 = vmatmul.mubr.f32.gmra.mrb[0].mxu0 %v6459
        %v6538 = vpop.f32.mrb[0].mxu0
        %v6539 = vadd.f32 0.0, %v6538
        %v6540 = vpop.f32.mrb[0].mxu0
        %6541 = vmatprep.mubr.f32.mxu0 0.0
        %6542 = vmatmul.mubr.f32.gmra.mrb[0].mxu0 %v6462
        %v6543 = vpop.f32.mrb[0].mxu0
        %v6544 = vadd.f32 0.0, %v6543
        %v6545 = vpop.f32.mrb[0].mxu0
        %6546 = vdwg.mxu0
        %v6547 = vld [vmem:[#allocation24] sm:$0x1f]
        %v6549 = vsel %vm5193, %v6534, 0
        %v6552 = vsel %vm5193, %v6539, 0
        %v6555 = vsel %vm5193, %v6544, 0
        %v6558 = vsel %vm1304, %v6547, 0
        %6560 = vmatprep.subr.mxu0 0.0
        %6561 = vmatpush1.msra.mxu0 %v6558
        %6562 = vmatprep.subr.mxu0 0.0
        %6563 = vmatpush1.msra.mxu0 0.0
        %6564 = vmatprep.subr.mxu0 0.0
        %6565 = vmatpush1.msra.mxu0 0.0
        %6566 = vmatprep.subr.mxu0 0.0
        %6567 = vmatpush1.msra.mxu0 0.0
        %6568 = vmatprep.subr.mxu0 0.0
        %6569 = vmatpush1.msra.mxu0 0.0
        %6570 = vmatprep.subr.mxu0 0.0
        %6571 = vmatpush1.msra.mxu0 0.0
        %6572 = vmatprep.subr.mxu0 0.0
        %6573 = vmatpush1.msra.mxu0 0.0
        %6574 = vmatprep.subr.mxu0 0.0
        %6575 = vmatpush1.msra.mxu0 0.0
        %6576 = vmatprep.subr.mxu0 0.0
        %6577 = vmatpush1.msra.mxu0 0.0
        %6578 = vmatprep.subr.mxu0 0.0
        %6579 = vmatpush1.msra.mxu0 0.0
        %6580 = vmatprep.subr.mxu0 0.0
        %6581 = vmatpush1.msra.mxu0 0.0
        %6582 = vmatprep.subr.mxu0 0.0
        %6583 = vmatpush1.msra.mxu0 0.0
        %6584 = vmatprep.subr.mxu0 0.0
        %6585 = vmatpush1.msra.mxu0 0.0
        %6586 = vmatprep.subr.mxu0 0.0
        %6587 = vmatpush1.msra.mxu0 0.0
        %6588 = vmatprep.subr.mxu0 0.0
        %6589 = vmatpush1.msra.mxu0 0.0
        %6590 = vmatprep.subr.mxu0 0.0
        %6591 = vmatpush1.msra.mxu0 0.0
        %6592 = vmatprep.subr.mxu0 0.0
        %6593 = vmatpush1.msra.mxu0 0.0
        %6594 = vmatprep.subr.mxu0 0.0
        %6595 = vmatpush1.msra.mxu0 0.0
        %6596 = vmatprep.subr.mxu0 0.0
        %6597 = vmatpush1.msra.mxu0 0.0
        %6598 = vmatprep.subr.mxu0 0.0
        %6599 = vmatpush1.msra.mxu0 0.0
        %6600 = vmatprep.subr.mxu0 0.0
        %6601 = vmatpush1.msra.mxu0 0.0
        %6602 = vmatprep.subr.mxu0 0.0
        %6603 = vmatpush1.msra.mxu0 0.0
        %6604 = vmatprep.subr.mxu0 0.0
        %6605 = vmatpush1.msra.mxu0 0.0
        %6606 = vmatprep.subr.mxu0 0.0
        %6607 = vmatpush1.msra.mxu0 0.0
        %6608 = vmatprep.subr.mxu0 0.0
        %6609 = vmatpush1.msra.mxu0 0.0
        %6610 = vmatprep.subr.mxu0 0.0
        %6611 = vmatpush1.msra.mxu0 0.0
        %6612 = vmatprep.subr.mxu0 0.0
        %6613 = vmatpush1.msra.mxu0 0.0
        %6614 = vmatprep.subr.mxu0 0.0
        %6615 = vmatpush1.msra.mxu0 0.0
        %6616 = vmatprep.subr.mxu0 0.0
        %6617 = vmatpush1.msra.mxu0 0.0
        %6618 = vmatprep.subr.mxu0 0.0
        %6619 = vmatpush1.msra.mxu0 0.0
        %6620 = vmatprep.subr.mxu0 0.0
        %6621 = vmatpush1.msra.mxu0 0.0
        %6622 = vmatprep.subr.mxu0 0.0
        %6623 = vmatpush1.msra.mxu0 0.0
        %6624 = vmatprep.mubr.f32.mxu0 0.0
        %6625 = vmatmul.mubr.f32.gmra.mrb[0].mxu0 %v6549
        %v6626 = vpop.f32.mrb[0].mxu0
        %v6627 = vadd.f32 0.0, %v6626
        %v6628 = vpop.f32.mrb[0].mxu0
        %6629 = vmatprep.mubr.f32.mxu0 0.0
        %6630 = vmatmul.mubr.f32.gmra.mrb[0].mxu0 %v6552
        %v6631 = vpop.f32.mrb[0].mxu0
        %v6632 = vadd.f32 0.0, %v6631
        %v6633 = vpop.f32.mrb[0].mxu0
        %6634 = vmatprep.mubr.f32.mxu0 0.0
        %6635 = vmatmul.mubr.f32.gmra.mrb[0].mxu0 %v6555
        %v6636 = vpop.f32.mrb[0].mxu0
        %v6637 = vadd.f32 0.0, %v6636
        %v6638 = vpop.f32.mrb[0].mxu0
        %6639 = vdwg.mxu0
        %v6640 = vmul.f32 %v672, %v6627
        %v6641 = vmul.f32 %v673, %v6632
        %v6642 = vmul.f32 %v674, %v6637
        %v6643 = vmul.f32 %v675, %v6627
        %v6644 = vmul.f32 %v676, %v6632
        %v6645 = vmul.f32 %v677, %v6637
        %v6646 = vmul.f32 %v678, %v6627
        %v6647 = vmul.f32 %v679, %v6632
        %v6648 = vmul.f32 %v680, %v6637
        %v6649 = vmul.f32 %v681, %v6627
        %v6650 = vmul.f32 %v682, %v6632
        %v6651 = vmul.f32 %v683, %v6637
        %v6652 = vsub.f32 1.0, %v6627
        %v6653 = vsub.f32 1.0, %v6632
        %v6654 = vsub.f32 1.0, %v6637
        %v6655 = vmul.f32 %v684, %v6652
        %v6656 = vmul.f32 %v685, %v6653
        %v6657 = vmul.f32 %v686, %v6654
        %v6658 = vmul.f32 %v687, %v6652
        %v6659 = vmul.f32 %v688, %v6653
        %v6660 = vmul.f32 %v689, %v6654
        %v6661 = vmul.f32 %v690, %v6652
        %v6662 = vmul.f32 %v691, %v6653
        %v6663 = vmul.f32 %v692, %v6654
        %v6664 = vmul.f32 %v693, %v6652
        %v6665 = vmul.f32 %v694, %v6653
        %v6666 = vmul.f32 %v695, %v6654
        %v6667 = vadd.f32 %v6640, %v6655
        %v6668 = vadd.f32 %v6641, %v6656
        %v6669 = vadd.f32 %v6642, %v6657
        %v6670 = vadd.f32 %v6643, %v6658
        %v6671 = vadd.f32 %v6644, %v6659
        %v6672 = vadd.f32 %v6645, %v6660
        %v6673 = vadd.f32 %v6646, %v6661
        %v6674 = vadd.f32 %v6647, %v6662
        %v6675 = vadd.f32 %v6648, %v6663
        %v6676 = vadd.f32 %v6649, %v6664
        %v6677 = vadd.f32 %v6650, %v6665
        %v6678 = vadd.f32 %v6651, %v6666
        %vm6679 = vcmask 195584
        %6680 = vst.msk [vmem:[%s671] sm:$0xff] %vm6679, %v6667
        %6681 = vst.msk [vmem:[%s671 + $0x8] sm:$0xff] %vm6679, %v6668
        %vm6682 = vcmask 191488
        %6683 = vst.msk [vmem:[%s671 + $0x10] sm:$0xf] %vm6682, %v6669
        %6684 = vst.msk [vmem:[%s671 + $0x18] sm:$0xff] %vm6679, %v6670
        %6685 = vst.msk [vmem:[%s671 + $0x20] sm:$0xff] %vm6679, %v6671
        %6686 = vst.msk [vmem:[%s671 + $0x28] sm:$0xf] %vm6682, %v6672
        %6687 = vst.msk [vmem:[%s671 + $0x30] sm:$0xff] %vm6679, %v6673
        %6688 = vst.msk [vmem:[%s671 + $0x38] sm:$0xff] %vm6679, %v6674
        %6689 = vst.msk [vmem:[%s671 + $0x40] sm:$0xf] %vm6682, %v6675
        %6690 = vst.msk [vmem:[%s671 + $0x48] sm:$0xff] %vm6679, %v6676
        %6691 = vst.msk [vmem:[%s671 + $0x50] sm:$0xff] %vm6679, %v6677
        %6692 = vst.msk [vmem:[%s671 + $0x58] sm:$0xf] %vm6682, %v6678
        %s6693 = sand.u32 %s353, 1
        %s6694 = scalar_lea.sflag [#allocation4], %s6693
        %s6695 = sand.u32 %s353, 1
        %s6696 = smul.addr %s6695, 96
        %s6697 = scalar_lea.vmem [#allocation26], %s6696
        // Predicated region
        $region133: #{tpu_custom_call.1} parent=75 // pred_check
          %p6698 = pneg %p363
        $region134: #{tpu_custom_call.1} parent=75 // pred_check_branch
          %6700 = sbr.rel (%p6698) target = $region136
        $region135: #{tpu_custom_call.1} parent=75 // pred_region
          %s6702 = ssub.s32 1536, 1536
          %6703 = vsyncadd %s6694, %s6702
          %s6704 = smul.addr %s41, 12
          %s6705 = smul.addr %s6704, 128
          %s6706 = scalar_lea.hbm %s14, %s6705
          %s6707 = sshll.u32 %s6697, 4
          %s6708 = int_to_ptr.vmem [resolvable:$true] %s6707
          %6713 = dma.vmem_to_hbm [thread:$0]  %s6708, 1536, %s6706, %s6694, 128, 128, 8
        $region136: #{tpu_custom_call.1} parent=75 // pred_fallthru
          _
      $region76: #{tpu_custom_call.1} parent=5 // pred_fallthru
        _
      %p6714 = scmp.le.s32.totalorder 2, %s36
      // Predicated region
      $region137: #{tpu_custom_call.1} parent=5 // pred_check
        %p6715 = pneg %p6714
      $region138: #{tpu_custom_call.1} parent=5 // pred_check_branch
        %6717 = sbr.rel (%p6715) target = $region140
      $region139: #{tpu_custom_call.1} parent=5 // pred_region
        %s6718 = ssub.s32 %s36, 2
        // Predicated region
        $region141: #{tpu_custom_call.1} parent=139 // pred_check
          %p6719 = pneg %p369
        $region142: #{tpu_custom_call.1} parent=139 // pred_check_branch
          %6721 = sbr.rel (%p6719) target = $region144
        $region143: #{tpu_custom_call.1} parent=139 // pred_region
          %s6722 = sand.u32 %s354, 1
          %s6723 = scalar_lea.sflag [#allocation4], %s6722
          %s6724 = sand.u32 %s354, 1
          %s6725 = smul.addr %s6724, 96
          %s6726 = scalar_lea.vmem [#allocation26], %s6725
          %6727 = dma.done %s6723, 1536
        $region144: #{tpu_custom_call.1} parent=139 // pred_fallthru
          _
      $region140: #{tpu_custom_call.1} parent=5 // pred_fallthru
        _
    $region6: #{tpu_custom_call.1} parent=1 // loop_footer
      %s40 = sadd.s32 1, %s36
    $region7: #{tpu_custom_call.1} parent=1 // loop_footer_branch
      %35 = sbr.rel target = $region3
    $region8: #{tpu_custom_call.1} parent=1 // loop_exit
      _
    %6728 = vsyncpa [#allocation3], 1
    %s6729 = scalar_lea.sflag [#allocation3], 1
    %6730 = vsyncpa %s6729, 1
    %6731 = vsyncpa [#allocation7], 1
    %s6732 = scalar_lea.sflag [#allocation7], 1
    %6733 = vsyncpa %s6732, 1
    %6734 = vsyncpa [#allocation19], 1
    %6735 = vsyncpa [#allocation22], 1
    %6736 = vsyncpa [#allocation25], 1
    %6737 = vsyncpa [#allocation4], 1
    %s6738 = scalar_lea.sflag [#allocation4], 1
    %6739 = vsyncpa %s6738, 1
    %6740 = vsyncpa [#allocation5], 1
    %s6741 = scalar_lea.sflag [#allocation5], 1
    %6742 = vsyncpa %s6741, 1
    %6743 = vsyncpa [#allocation10], 1
    %6744 = vsyncpa [#allocation13], 1
    %6745 = vsyncpa [#allocation16], 1

</llo_original>
